<compile_context>
chip_gen: v5e
topology: v5e:2x2
jax: 0.10.0
libtpu: 0.0.40
codegen_flags: <defaults>
</compile_context>

<pallas_src>
import functools

import jax
import jax.numpy as jnp
from jax.experimental import pallas as pl
from jax.experimental.pallas import tpu as pltpu


# ----------------------------------------------------------------------------
# Kernel
# ----------------------------------------------------------------------------
def _fc_head_kernel(x_ref, w1_ref, b1_ref, w2_ref, o_ref, h_acc, *, tile_k):
    """out_g += leaky_relu(sum_k x[:, k] @ W1[k, h] + b1[h]) @ W2[h]  per group g."""
    h_i = pl.program_id(1)
    k_i = pl.program_id(2)
    n_k = pl.num_programs(2)

    # New group (output block index depends only on g): zero the resident
    # output block.
    @pl.when(jnp.logical_and(h_i == 0, k_i == 0))
    def _():
        o_ref[...] = jnp.zeros_like(o_ref)

    # New hidden tile: reset the hidden accumulator.
    @pl.when(k_i == 0)
    def _():
        h_acc[...] = jnp.zeros_like(h_acc)

    # x is fully VMEM-resident; slice the K-tile in-kernel.
    k_start = k_i * tile_k
    if tile_k % 128 == 0:
        k_start = pl.multiple_of(k_start, 128)
    x_blk = x_ref[:, pl.ds(k_start, tile_k)]

    # Partial first-layer matmul for this (hidden, K) tile; bf16 in, f32 acc.
    h_acc[...] += jnp.dot(x_blk, w1_ref[...], preferred_element_type=jnp.float32)

    # Hidden tile complete: bias + LeakyReLU(0.1), then second-layer matmul
    # accumulated directly into the resident output block.
    @pl.when(k_i == n_k - 1)
    def _():
        h = h_acc[...] + b1_ref[...]          # (B_pad, th) + (1, th) broadcast
        h = jnp.where(h > 0, h, 0.1 * h)      # LeakyReLU(negative_slope=0.1)
        # Dropout(0.5) -> identity (eval/inference mode).
        o_ref[...] += jnp.dot(h.astype(w2_ref.dtype), w2_ref[...],
                              preferred_element_type=jnp.float32)


# ----------------------------------------------------------------------------
# Config / weight preparation (done once, outside jit)
# ----------------------------------------------------------------------------
def _largest_aligned_divisor(n, max_val, align=128):
    """Largest multiple of `align` that divides `n` and is <= max_val."""
    if n <= max_val:
        return n
    best = 0
    m = align
    while m <= max_val:
        if n % m == 0:
            best = m
        m += align
    if best == 0:
        # Fall back to any divisor <= max_val (shapes in this model never hit this).
        d = max_val
        while d >= 1:
            if n % d == 0:
                return d
            d -= 1
        return n
    return best


def _vmem_capacity_bytes():
    try:
        info = pltpu.get_tpu_info()
        for attr in ("vmem_capacity_bytes", "vmem_bytes", "vmem_size_bytes"):
            v = getattr(info, attr, None)
            if v:
                return int(v)
    except Exception:
        pass
    return 0


def head_config(d_in, hidden, d_out):
    """Per-generation tiling choice for the FC head."""
    vmem = _vmem_capacity_bytes()
    big_vmem = vmem >= (100 << 20)          # v5e / v6e: 128 MiB VMEM
    if big_vmem:
        # One TensorCore owns the whole hidden dim; big contiguous W1 blocks.
        max_tile_k, tile_h_target, n_groups = 7168, 2048, 1
        vmem_limit = 100 << 20
    else:
        # v7x (64 MiB physical VMEM) or unknown chip: conservative tiles, two
        # hidden groups on the leading parallel axis (one per TensorCore).
        max_tile_k, tile_h_target, n_groups = 3584, 1024, 2
        vmem_limit = 48 << 20

    tile_k = _largest_aligned_divisor(d_in, max_tile_k, align=128)

    if hidden % n_groups != 0:
        n_groups = 1
    h_per_group = hidden // n_groups
    tile_h = _largest_aligned_divisor(h_per_group, min(tile_h_target, h_per_group),
                                      align=128)

    d_out_pad = ((d_out + 127) // 128) * 128
    return dict(tile_k=tile_k, tile_h=tile_h, n_groups=n_groups,
                d_out_pad=d_out_pad, vmem_limit=vmem_limit)


def prepare_head_params(params, cfg):
    """One-time weight prep: bf16 cast, lane-pad W2, pre-block W1 for contiguous DMA."""
    w1, b1, w2, b2 = params["w1"], params["b1"], params["w2"], params["b2"]
    d_in, hidden = w1.shape
    d_out = w2.shape[1]
    tile_k, tile_h, d_out_pad = cfg["tile_k"], cfg["tile_h"], cfg["d_out_pad"]
    assert d_in % tile_k == 0, (d_in, tile_k)
    assert hidden % tile_h == 0, (hidden, tile_h)
    n_k = d_in // tile_k
    n_hb = hidden // tile_h

    # [D_in, H] -> [n_hb, n_k, tile_k, tile_h]: each (tile_k, tile_h) grid block
    # is a contiguous HBM slab.
    w1_blk = (w1.astype(jnp.bfloat16)
                .reshape(n_k, tile_k, n_hb, tile_h)
                .transpose(2, 0, 1, 3))

    w2_bf = w2.astype(jnp.bfloat16)
    if d_out_pad != d_out:
        w2_bf = jnp.zeros((hidden, d_out_pad), jnp.bfloat16).at[:, :d_out].set(w2_bf)

    return {
        "w1_blk": w1_blk,                                   # [n_hb, n_k, tk, th] bf16
        "b1": b1.reshape(1, hidden).astype(jnp.float32),    # [1, H] f32
        "w2": w2_bf,                                        # [H, D_out_pad] bf16
        "b2": b2.astype(jnp.float32),                       # [D_out] f32
    }


# ----------------------------------------------------------------------------
# Fused FC head
# ----------------------------------------------------------------------------
def yolo_fc_head(x_flat, prep, cfg):
    """x_flat: [B, D_in] (f32). prep: output of prepare_head_params."""
    B, d_in = x_flat.shape
    w1_blk = prep["w1_blk"]
    b1_2d = prep["b1"]
    w2_bf = prep["w2"]
    b2 = prep["b2"]

    n_hb, n_k, tile_k, tile_h = w1_blk.shape
    hidden, d_out_pad = w2_bf.shape
    d_out = b2.shape[0]

    n_groups = cfg["n_groups"]
    assert n_hb % n_groups == 0, (n_hb, n_groups)
    n_h = n_hb // n_groups                    # hidden tiles per group

    # bf16 packs 16 sublanes per vreg: pad the batch to a multiple of 16.
    # NOTE: padded rows B..B_pad-1 compute bias-driven garbage; harmless since
    # we slice [:B] at the end.
    B_pad = max(16, ((B + 15) // 16) * 16)
    x_pad = jnp.zeros((B_pad, d_in), jnp.bfloat16).at[:B].set(
        x_flat.astype(jnp.bfloat16))

    # --- index maps -----------------------------------------------------------
    def x_map(g, h, k):          # x fully resident: constant block index
        return (0, 0)

    def w1_map(g, h, k):
        return (g * n_h + h, k, 0, 0)

    def b1_map(g, h, k):
        return (0, g * n_h + h)

    def w2_map(g, h, k):
        return (g * n_h + h, 0)

    def out_map(g, h, k):
        return (g, 0, 0)

    cost = pl.CostEstimate(
        flops=2 * B_pad * d_in * hidden + 2 * B_pad * hidden * d_out_pad,
        transcendentals=0,
        bytes_accessed=(B_pad * d_in * 2            # x (resident, DMA'd once)
                        + d_in * hidden * 2         # W1
                        + hidden * d_out_pad * 2    # W2
                        + hidden * 4                # b1
                        + n_groups * B_pad * d_out_pad * 4),   # partial outputs
    )

    partial = pl.pallas_call(
        functools.partial(_fc_head_kernel, tile_k=tile_k),
        out_shape=jax.ShapeDtypeStruct((n_groups, B_pad, d_out_pad), jnp.float32),
        grid_spec=pltpu.PrefetchScalarGridSpec(
            num_scalar_prefetch=0,
            grid=(n_groups, n_h, n_k),
            in_specs=[
                pl.BlockSpec((B_pad, d_in), x_map),                    # x (resident)
                pl.BlockSpec((None, None, tile_k, tile_h), w1_map),    # W1 block
                pl.BlockSpec((1, tile_h), b1_map),                     # b1 tile
                pl.BlockSpec((tile_h, d_out_pad), w2_map),             # W2 tile
            ],
            out_specs=pl.BlockSpec((None, B_pad, d_out_pad), out_map),
            scratch_shapes=[
                pltpu.VMEM((B_pad, tile_h), jnp.float32),              # hidden acc
            ],
        ),
        compiler_params=pltpu.CompilerParams(
            # Leading group axis is parallel (v7x: one hidden group per TC);
            # hidden and K axes are reductions into resident accumulators.
            dimension_semantics=("parallel", "arbitrary", "arbitrary"),
            vmem_limit_bytes=cfg["vmem_limit"],
        ),
        cost_estimate=cost,
    )(x_pad, w1_blk, b1_2d, w2_bf)

    # Combine per-group partials and add b2 here (one less stream in-kernel).
    out = partial.sum(axis=0)[:B, :d_out] + b2.reshape(1, d_out)
    return out


def yolo_forward(feat_nchw, prep, *, s, cell_out_ch, cfg):
    """feat_nchw: backbone output [B, 1024, s, s] (NCHW). Returns [B, s*s, cell_out_ch]."""
    B = feat_nchw.shape[0]
    x_flat = feat_nchw.reshape(B, -1)  # == torch.flatten(x, 1) on contiguous NCHW
    out = yolo_fc_head(x_flat, prep, cfg)
    return out.reshape(B, s * s, cell_out_ch)


# ----------------------------------------------------------------------------
# Parameter init / reference
# ----------------------------------------------------------------------------
def init_params(key, *, s, cell_out_ch):
    d_in = 1024 * s * s
    hidden = 4096
    d_out = s * s * cell_out_ch
    k1, k2, k3, k4 = jax.random.split(key, 4)
    # Weights stored as [in, out] (transposed vs torch nn.Linear).
    w1 = jax.random.normal(k1, (d_in, hidden), jnp.float32) * (1.0 / jnp.sqrt(d_in))
    b1 = jax.random.normal(k2, (hidden,), jnp.float32) * 0.01
    w2 = jax.random.normal(k3, (hidden, d_out), jnp.float32) * (1.0 / jnp.sqrt(hidden))
    b2 = jax.random.normal(k4, (d_out,), jnp.float32) * 0.01
    return {"w1": w1, "b1": b1, "w2": w2, "b2": b2}


def _reference_forward(feat_nchw, params, *, s, cell_out_ch):
    """Reference mirroring the kernel's bf16-stream / f32-accumulate arithmetic."""
    B = feat_nchw.shape[0]
    x = feat_nchw.reshape(B, -1).astype(jnp.bfloat16)
    w1 = params["w1"].astype(jnp.bfloat16)
    w2 = params["w2"].astype(jnp.bfloat16)
    h = jnp.dot(x, w1, preferred_element_type=jnp.float32) + params["b1"]
    h = jnp.where(h > 0, h, 0.1 * h)
    o = jnp.dot(h.astype(jnp.bfloat16), w2,
                preferred_element_type=jnp.float32) + params["b2"]
    return o.reshape(B, s * s, cell_out_ch)


if __name__ == "__main__":
    S = 2               # yolo grid size
    CELL_OUT_CH = 32    # per-cell output channels (s*s*cell_out_ch = 128)
    BATCH = 2

    key = jax.random.PRNGKey(0)
    k_feat, k_params = jax.random.split(key)

    # Backbone output feature map [B, 1024, s, s] (NCHW).
    feat = jax.random.normal(k_feat, (BATCH, 1024, S, S), jnp.float32)
    params = init_params(k_params, s=S, cell_out_ch=CELL_OUT_CH)

    cfg = head_config(1024 * S * S, 4096, S * S * CELL_OUT_CH)
    prep = prepare_head_params(params, cfg)   # one-time weight blocking, outside jit
    prep = jax.block_until_ready(prep)

    fwd = jax.jit(functools.partial(yolo_forward, s=S, cell_out_ch=CELL_OUT_CH, cfg=cfg))
    out = fwd(feat, prep)
    out = jax.block_until_ready(out)

    ref = _reference_forward(feat, params, s=S, cell_out_ch=CELL_OUT_CH)
    assert out.shape == (BATCH, S * S, CELL_OUT_CH), out.shape
    assert jnp.allclose(out, ref, atol=1e-2, rtol=1e-2), float(
        jnp.max(jnp.abs(out - ref)))

    print("KERNEL_OK")
</pallas_src>

<mosaic_0001>
module attributes {stable_mosaic.version = 11 : i64} {
  func.func @_fc_head_kernel(%arg0: i32, %arg1: i32, %arg2: i32, %arg3: memref<16x4096xbf16, #tpu.memory_space<vmem>>, %arg4: memref<1x1x2048x1024xbf16, #tpu.memory_space<vmem>>, %arg5: memref<1x1024xf32, #tpu.memory_space<vmem>>, %arg6: memref<1024x128xbf16, #tpu.memory_space<vmem>>, %arg7: memref<1x16x128xf32, #tpu.memory_space<vmem>>, %arg8: memref<16x1024xf32, #tpu.memory_space<vmem>>) attributes {dimension_semantics = [#tpu.dimension_semantics<parallel>, #tpu.dimension_semantics<arbitrary>, #tpu.dimension_semantics<arbitrary>], iteration_bounds = array<i64: 2, 2, 2>, scalar_prefetch = 0 : i64, scratch_operands = 1 : i64, tpu.core_type = #tpu.core_type<tc>, window_params = [{pipeline_mode = #tpu.pipeline_mode<synchronous>, transform_indices = @transform_0, window_bounds = array<i64: 16, 4096>}, {transform_indices = @transform_1, window_bounds = array<i64: 1, 1, 2048, 1024>}, {transform_indices = @transform_2, window_bounds = array<i64: 1, 1024>}, {transform_indices = @transform_3, window_bounds = array<i64: 1024, 128>}, {transform_indices = @transform_4, window_bounds = array<i64: 1, 16, 128>}]} {
    %c0_i32 = arith.constant 0 : i32
    %0 = arith.cmpi eq, %arg1, %c0_i32 : i32
    %c0_i32_0 = arith.constant 0 : i32
    %1 = arith.cmpi eq, %arg2, %c0_i32_0 : i32
    %2 = arith.andi %0, %1 : i1
    %3 = arith.extui %2 : i1 to i32
    %c0_i32_1 = arith.constant 0 : i32
    %4 = arith.cmpi ne, %3, %c0_i32_1 : i32
    scf.if %4 {
      %cst_13 = arith.constant 0.000000e+00 : f32
      %21 = vector.broadcast %cst_13 : f32 to vector<16x128xf32>
      %c0_14 = arith.constant 0 : index
      %c0_15 = arith.constant 0 : index
      %c0_16 = arith.constant 0 : index
      %22 = vector.load %arg7[%c0_14, %c0_15, %c0_16] : memref<1x16x128xf32, #tpu.memory_space<vmem>>, vector<1x16x128xf32>
      %23 = vector.shape_cast %22 : vector<1x16x128xf32> to vector<16x128xf32>
      %24 = vector.shape_cast %21 : vector<16x128xf32> to vector<1x16x128xf32>
      tpu.vector_store %arg7[%c0_14, %c0_15, %c0_16], %24 {strides = array<i32>} : memref<1x16x128xf32, #tpu.memory_space<vmem>>, vector<1x16x128xf32>,
    } else {
    }
    %c0_i32_2 = arith.constant 0 : i32
    %5 = arith.cmpi eq, %arg2, %c0_i32_2 : i32
    %6 = arith.extui %5 : i1 to i32
    %c0_i32_3 = arith.constant 0 : i32
    %7 = arith.cmpi ne, %6, %c0_i32_3 : i32
    scf.if %7 {
      %cst_13 = arith.constant 0.000000e+00 : f32
      %21 = vector.broadcast %cst_13 : f32 to vector<16x1024xf32>
      %c0_14 = arith.constant 0 : index
      %c0_15 = arith.constant 0 : index
      %22 = vector.load %arg8[%c0_14, %c0_15] : memref<16x1024xf32, #tpu.memory_space<vmem>>, vector<16x1024xf32>
      tpu.vector_store %arg8[%c0_14, %c0_15], %21 {strides = array<i32>} : memref<16x1024xf32, #tpu.memory_space<vmem>>, vector<16x1024xf32>,
    } else {
    }
    %c2048_i32 = arith.constant 2048 : i32
    %8 = arith.muli %arg2, %c2048_i32 : i32
    %9 = tpu.assume_multiple %8, 128 : i32
    %c0 = arith.constant 0 : index
    %10 = arith.index_cast %9 : i32 to index
    %11 = vector.load %arg3[%c0, %10] : memref<16x4096xbf16, #tpu.memory_space<vmem>>, vector<16x2048xbf16>
    %c0_4 = arith.constant 0 : index
    %c0_5 = arith.constant 0 : index
    %12 = vector.load %arg8[%c0_4, %c0_5] : memref<16x1024xf32, #tpu.memory_space<vmem>>, vector<16x1024xf32>
    %c0_6 = arith.constant 0 : index
    %c0_7 = arith.constant 0 : index
    %c0_8 = arith.constant 0 : index
    %c0_9 = arith.constant 0 : index
    %13 = vector.load %arg4[%c0_6, %c0_7, %c0_8, %c0_9] : memref<1x1x2048x1024xbf16, #tpu.memory_space<vmem>>, vector<1x1x2048x1024xbf16>
    %14 = vector.shape_cast %13 : vector<1x1x2048x1024xbf16> to vector<2048x1024xbf16>
    %cst = arith.constant dense<0.000000e+00> : vector<16x1024xf32>
    %15 = tpu.matmul %11, %14, %cst {dimension_numbers = #tpu.dot_dimension_numbers<[1], [0], [0], [1], [0, 0, 1, 1], [], []>} : vector<16x2048xbf16>, vector<2048x1024xbf16>, vector<16x1024xf32> -> vector<16x1024xf32>
    %16 = arith.addf %12, %15 : vector<16x1024xf32>
    %c0_10 = arith.constant 0 : index
    %c0_11 = arith.constant 0 : index
    %17 = vector.load %arg8[%c0_10, %c0_11] : memref<16x1024xf32, #tpu.memory_space<vmem>>, vector<16x1024xf32>
    tpu.vector_store %arg8[%c0_10, %c0_11], %16 {strides = array<i32>} : memref<16x1024xf32, #tpu.memory_space<vmem>>, vector<16x1024xf32>,
    %c1_i32 = arith.constant 1 : i32
    %18 = arith.cmpi eq, %arg2, %c1_i32 : i32
    %19 = arith.extui %18 : i1 to i32
    %c0_i32_12 = arith.constant 0 : i32
    %20 = arith.cmpi ne, %19, %c0_i32_12 : i32
    scf.if %20 {
      %c0_13 = arith.constant 0 : index
      %c0_14 = arith.constant 0 : index
      %21 = vector.load %arg8[%c0_13, %c0_14] : memref<16x1024xf32, #tpu.memory_space<vmem>>, vector<16x1024xf32>
      %c0_15 = arith.constant 0 : index
      %c0_16 = arith.constant 0 : index
      %22 = vector.load %arg5[%c0_15, %c0_16] : memref<1x1024xf32, #tpu.memory_space<vmem>>, vector<1x1024xf32>
      %23 = vector.broadcast %22 : vector<1x1024xf32> to vector<16x1024xf32>
      %24 = arith.addf %21, %23 : vector<16x1024xf32>
      %cst_17 = arith.constant 0.000000e+00 : f32
      %25 = vector.broadcast %cst_17 : f32 to vector<16x1024xf32>
      %26 = arith.cmpf ogt, %24, %25 : vector<16x1024xf32>
      %cst_18 = arith.constant 1.000000e-01 : f32
      %27 = vector.broadcast %cst_18 : f32 to vector<16x1024xf32>
      %28 = arith.mulf %27, %24 : vector<16x1024xf32>
      %29 = arith.select %26, %24, %28 : vector<16x1024xi1>, vector<16x1024xf32>
      %c0_19 = arith.constant 0 : index
      %c0_20 = arith.constant 0 : index
      %c0_21 = arith.constant 0 : index
      %30 = vector.load %arg7[%c0_19, %c0_20, %c0_21] : memref<1x16x128xf32, #tpu.memory_space<vmem>>, vector<1x16x128xf32>
      %31 = vector.shape_cast %30 : vector<1x16x128xf32> to vector<16x128xf32>
      %32 = arith.truncf %29 : vector<16x1024xf32> to vector<16x1024xbf16>
      %c0_22 = arith.constant 0 : index
      %c0_23 = arith.constant 0 : index
      %33 = vector.load %arg6[%c0_22, %c0_23] : memref<1024x128xbf16, #tpu.memory_space<vmem>>, vector<1024x128xbf16>
      %cst_24 = arith.constant dense<0.000000e+00> : vector<16x128xf32>
      %34 = tpu.matmul %32, %33, %cst_24 {dimension_numbers = #tpu.dot_dimension_numbers<[1], [0], [0], [1], [0, 0, 1, 1], [], []>} : vector<16x1024xbf16>, vector<1024x128xbf16>, vector<16x128xf32> -> vector<16x128xf32>
      %35 = arith.addf %31, %34 : vector<16x128xf32>
      %c0_25 = arith.constant 0 : index
      %c0_26 = arith.constant 0 : index
      %c0_27 = arith.constant 0 : index
      %36 = vector.load %arg7[%c0_25, %c0_26, %c0_27] : memref<1x16x128xf32, #tpu.memory_space<vmem>>, vector<1x16x128xf32>
      %37 = vector.shape_cast %36 : vector<1x16x128xf32> to vector<16x128xf32>
      %38 = vector.shape_cast %35 : vector<16x128xf32> to vector<1x16x128xf32>
      tpu.vector_store %arg7[%c0_25, %c0_26, %c0_27], %38 {strides = array<i32>} : memref<1x16x128xf32, #tpu.memory_space<vmem>>, vector<1x16x128xf32>,
    } else {
    }
    return
  }
  func.func @transform_0(%arg0: i32, %arg1: i32, %arg2: i32) -> (i32, i32) {
    %c0_i32 = arith.constant 0 : i32
    %c0_i32_0 = arith.constant 0 : i32
    %c0_i32_1 = arith.constant 0 : i32
    return %c0_i32, %c0_i32_0 : i32, i32
  }
  func.func @transform_1(%arg0: i32, %arg1: i32, %arg2: i32) -> (i32, i32, i32, i32) {
    %c2_i32 = arith.constant 2 : i32
    %0 = arith.muli %arg0, %c2_i32 : i32
    %1 = arith.addi %0, %arg1 : i32
    %c0_i32 = arith.constant 0 : i32
    %c0_i32_0 = arith.constant 0 : i32
    %c0_i32_1 = arith.constant 0 : i32
    return %1, %arg2, %c0_i32, %c0_i32_0 : i32, i32, i32, i32
  }
  func.func @transform_2(%arg0: i32, %arg1: i32, %arg2: i32) -> (i32, i32) {
    %c2_i32 = arith.constant 2 : i32
    %0 = arith.muli %arg0, %c2_i32 : i32
    %1 = arith.addi %0, %arg1 : i32
    %c0_i32 = arith.constant 0 : i32
    %c0_i32_0 = arith.constant 0 : i32
    return %c0_i32, %1 : i32, i32
  }
  func.func @transform_3(%arg0: i32, %arg1: i32, %arg2: i32) -> (i32, i32) {
    %c2_i32 = arith.constant 2 : i32
    %0 = arith.muli %arg0, %c2_i32 : i32
    %1 = arith.addi %0, %arg1 : i32
    %c0_i32 = arith.constant 0 : i32
    %c0_i32_0 = arith.constant 0 : i32
    return %1, %c0_i32 : i32, i32
  }
  func.func @transform_4(%arg0: i32, %arg1: i32, %arg2: i32) -> (i32, i32, i32) {
    %c0_i32 = arith.constant 0 : i32
    %c0_i32_0 = arith.constant 0 : i32
    %c0_i32_1 = arith.constant 0 : i32
    return %arg0, %c0_i32, %c0_i32_0 : i32, i32, i32
  }
}

</mosaic_0001>

<llo_original>
// kernel: yolo_forward.1
$region0: #{yolo_forward.1}
  #allocation0 [shape = 'u32[]', space=smem, size = 0x4, offset = 0x4, fixed_abs, tag = 'smem constant byte address 0x4 - core index']
  #allocation1 [shape = 'u32[72,128]{1,0:T(1,128)}', space=vmem, size = 0x9000, scoped, tag = 'internal scratch']
  #allocation2 [shape = 'f32[16,1024]{1,0:T(8,128)}', space=vmem, size = 0x10000, scoped, tag = 'scratch operand']
  %s0 = inlined_call_operand.vmem [shape: bf16[16,4096], index: 0, kind: input, shape index: {}]
  %s1 = inlined_call_operand.hbm [shape: bf16[4,2,2048,1024], index: 1, kind: input, shape index: {}]
  %s2 = inlined_call_operand.hbm [shape: f32[1,4096], index: 2, kind: input, shape index: {}]
  %s3 = inlined_call_operand.hbm [shape: bf16[4096,128], index: 3, kind: input, shape index: {}]
  %s4 = inlined_call_operand.vmem [shape: f32[2,16,128], index: 4, kind: output, shape index: {}]
  %s5 = sld [smem:[#allocation0]]
  $region73: #{yolo_forward.1} parent=0
    _
  %s7 = ssub.s32 1, %s5
  %s8 = scalar_select 0, %s7, %s5
  $region1: #{yolo_forward.1} parent=0
    #allocation3 [shape = 'u8[8388608]{0}', space=vmem, size = 0x800000, scoped, tag = 'input window, operand 1']
    #allocation4 [shape = 's32[2]{0}', space=sflag, size = 0x8, scoped, tag = 'scoped memory for yolo_forward.1']
    #allocation5 [shape = 'u8[8192]{0}', space=vmem, size = 0x2000, scoped, tag = 'input window, operand 2']
    #allocation6 [shape = 's32[2]{0}', space=sflag, size = 0x8, scoped, tag = 'scoped memory for yolo_forward.1']
    #allocation7 [shape = 'u8[524288]{0}', space=vmem, size = 0x80000, scoped, tag = 'input window, operand 3']
    %9 = vsyncpa [#allocation4], 0
    %s10 = scalar_lea.sflag [#allocation4], 1
    %11 = vsyncpa %s10, 0
    %12 = vsyncpa [#allocation6], 0
    %s13 = scalar_lea.sflag [#allocation6], 1
    %14 = vsyncpa %s13, 0
    loop: start=0, step=1, limit=10
    $region2: #{yolo_forward.1} parent=1 // loop_pre_header
      _
    $region3: #{yolo_forward.1} parent=1 // loop_header
      %s16 = sphi 0, %s20
      %p17 = scmp.ge.s32.totalorder %s16, 10
      %s23 = sphi 0, %s42
      %s24 = sphi 0, %s38
      %s25 = sphi 0, %s34
      %s26 = sphi 0, %s23
      %s27 = sphi 0, %s24
      %s28 = sphi 0, %s25
      %s29 = sphi 0, %s26
      %s30 = sphi 0, %s27
      %s31 = sphi 0, %s28
      %s43 = sphi 0, %s43
      %s45 = sphi 0, %s43
      %s46 = sphi 0, %s45
      %s60 = sphi 0, %s46
      %s72 = sphi 0, %s74
      %s75 = sphi 0, %s72
      %s76 = sphi 0, %s75
      %s92 = sphi 0, %s76
      %s102 = sphi 0, %s104
      %s105 = sphi 0, %s102
      %s106 = sphi 0, %s105
      %s122 = sphi 0, %s106
      %s132 = sphi 0, %s134
      %s135 = sphi 0, %s132
      %s136 = sphi 0, %s135
      %s152 = sphi 0, %s136
      %s158 = sphi 0, %s160
      %s161 = sphi 0, %s158
      %s162 = sphi 0, %s161
      %s178 = sphi 0, %s162
    $region4: #{yolo_forward.1} parent=1 // loop_header_branch
      %19 = sbr.rel (%p17) target = $region8
    $region5: #{yolo_forward.1} parent=1 // loop_body
      %s21 = ssub.s32 %s16, 1
      %s22 = ssub.s32 %s16, 2
      %s32 = sadd.s32 1, %s25
      %p33 = scmp.ge.s32.totalorder %s32, 2
      %s34 = scalar_select %p33, 0, %s32
      %s35 = sadd.s32 1, %s24
      %s36 = scalar_select %p33, %s35, %s24
      %p37 = scmp.ge.s32.totalorder %s36, 2
      %s38 = scalar_select %p37, 0, %s36
      %s39 = sadd.s32 1, %s23
      %s40 = scalar_select %p37, %s39, %s23
      %p41 = scmp.ge.s32.totalorder %s40, 2
      %s42 = scalar_select %p41, 0, %s40
      %s44 = sadd.s32 %s43, 1
      %p47 = scmp.eq.s32.totalorder %s16, 7
      %p48 = scmp.ne.s32.totalorder %s43, %s45
      %p49 = scmp.eq.s32.totalorder %s16, 0
      %p50 = por %p48, %p49
      %p51 = scmp.ne.s32.totalorder %s43, %s45
      %p52 = scmp.eq.s32.totalorder %s21, 7
      %p53 = por %p51, %p52
      %p54 = scmp.ne.s32.totalorder %s45, %s46
      %p55 = scmp.eq.s32.totalorder %s21, 0
      %p56 = por %p54, %p55
      %p57 = scmp.ne.s32.totalorder %s45, %s46
      %p58 = scmp.eq.s32.totalorder %s22, 7
      %p59 = por %p57, %p58
      %p61 = scmp.ne.s32.totalorder %s46, %s60
      %p62 = scmp.eq.s32.totalorder %s22, 0
      %p63 = por %p61, %p62
      %s64 = smul.u32 %s23, 2
      %s65 = sadd.s32 %s64, %s24
      %s66 = smul.u32 %s42, 2
      %s67 = sadd.s32 %s66, %s38
      %s68 = ssub.s32 %s65, %s67
      %s69 = ssub.s32 %s25, %s34
      %s70 = sor.u32 %s68, %s69
      %p71 = scmp.eq.s32.totalorder %s70, 0
      %s73 = sadd.s32 %s72, 1
      %s74 = scalar_select %p71, %s72, %s73
      %p77 = pneg %p71
      %p78 = scmp.eq.s32.totalorder %s16, 7
      %p79 = por %p77, %p78
      %p80 = scmp.ne.s32.totalorder %s72, %s75
      %p81 = scmp.eq.s32.totalorder %s16, 0
      %p82 = por %p80, %p81
      %p83 = scmp.ne.s32.totalorder %s72, %s75
      %p84 = scmp.eq.s32.totalorder %s21, 7
      %p85 = por %p83, %p84
      %p86 = scmp.ne.s32.totalorder %s75, %s76
      %p87 = scmp.eq.s32.totalorder %s21, 0
      %p88 = por %p86, %p87
      %p89 = scmp.ne.s32.totalorder %s75, %s76
      %p90 = scmp.eq.s32.totalorder %s22, 7
      %p91 = por %p89, %p90
      %p93 = scmp.ne.s32.totalorder %s76, %s92
      %p94 = scmp.eq.s32.totalorder %s22, 0
      %p95 = por %p93, %p94
      %s96 = smul.u32 %s23, 2
      %s97 = sadd.s32 %s96, %s24
      %s98 = smul.u32 %s42, 2
      %s99 = sadd.s32 %s98, %s38
      %s100 = ssub.s32 %s97, %s99
      %p101 = scmp.eq.s32.totalorder %s100, 0
      %s103 = sadd.s32 %s102, 1
      %s104 = scalar_select %p101, %s102, %s103
      %p107 = pneg %p101
      %p108 = scmp.eq.s32.totalorder %s16, 7
      %p109 = por %p107, %p108
      %p110 = scmp.ne.s32.totalorder %s102, %s105
      %p111 = scmp.eq.s32.totalorder %s16, 0
      %p112 = por %p110, %p111
      %p113 = scmp.ne.s32.totalorder %s102, %s105
      %p114 = scmp.eq.s32.totalorder %s21, 7
      %p115 = por %p113, %p114
      %p116 = scmp.ne.s32.totalorder %s105, %s106
      %p117 = scmp.eq.s32.totalorder %s21, 0
      %p118 = por %p116, %p117
      %p119 = scmp.ne.s32.totalorder %s105, %s106
      %p120 = scmp.eq.s32.totalorder %s22, 7
      %p121 = por %p119, %p120
      %p123 = scmp.ne.s32.totalorder %s106, %s122
      %p124 = scmp.eq.s32.totalorder %s22, 0
      %p125 = por %p123, %p124
      %s126 = smul.u32 %s23, 2
      %s127 = sadd.s32 %s126, %s24
      %s128 = smul.u32 %s42, 2
      %s129 = sadd.s32 %s128, %s38
      %s130 = ssub.s32 %s127, %s129
      %p131 = scmp.eq.s32.totalorder %s130, 0
      %s133 = sadd.s32 %s132, 1
      %s134 = scalar_select %p131, %s132, %s133
      %p137 = pneg %p131
      %p138 = scmp.eq.s32.totalorder %s16, 7
      %p139 = por %p137, %p138
      %p140 = scmp.ne.s32.totalorder %s132, %s135
      %p141 = scmp.eq.s32.totalorder %s16, 0
      %p142 = por %p140, %p141
      %p143 = scmp.ne.s32.totalorder %s132, %s135
      %p144 = scmp.eq.s32.totalorder %s21, 7
      %p145 = por %p143, %p144
      %p146 = scmp.ne.s32.totalorder %s135, %s136
      %p147 = scmp.eq.s32.totalorder %s21, 0
      %p148 = por %p146, %p147
      %p149 = scmp.ne.s32.totalorder %s135, %s136
      %p150 = scmp.eq.s32.totalorder %s22, 7
      %p151 = por %p149, %p150
      %p153 = scmp.ne.s32.totalorder %s136, %s152
      %p154 = scmp.eq.s32.totalorder %s22, 0
      %p155 = por %p153, %p154
      %s156 = ssub.s32 %s23, %s42
      %p157 = scmp.eq.s32.totalorder %s156, 0
      %s159 = sadd.s32 %s158, 1
      %s160 = scalar_select %p157, %s158, %s159
      %p163 = pneg %p157
      %p164 = scmp.eq.s32.totalorder %s16, 7
      %p165 = por %p163, %p164
      %p166 = scmp.ne.s32.totalorder %s158, %s161
      %p167 = scmp.eq.s32.totalorder %s16, 0
      %p168 = por %p166, %p167
      %p169 = scmp.ne.s32.totalorder %s158, %s161
      %p170 = scmp.eq.s32.totalorder %s21, 7
      %p171 = por %p169, %p170
      %p172 = scmp.ne.s32.totalorder %s161, %s162
      %p173 = scmp.eq.s32.totalorder %s21, 0
      %p174 = por %p172, %p173
      %p175 = scmp.ne.s32.totalorder %s161, %s162
      %p176 = scmp.eq.s32.totalorder %s22, 7
      %p177 = por %p175, %p176
      %p179 = scmp.ne.s32.totalorder %s162, %s178
      %p180 = scmp.eq.s32.totalorder %s22, 0
      %p181 = por %p179, %p180
      %p182 = scmp.le.s32.totalorder 1, %s16
      %p183 = scmp.lt.s32.totalorder %s16, 9
      %p184 = pnand %p182, %p183
      %p185 = pneg %p184
      // Predicated region
      $region9: #{yolo_forward.1} parent=5 // pred_check
        _
      $region10: #{yolo_forward.1} parent=5 // pred_check_branch
        %187 = sbr.rel (%p184) target = $region12
      $region11: #{yolo_forward.1} parent=5 // pred_region
        %s188 = ssub.s32 %s16, 1
        // Predicated region
        $region13: #{yolo_forward.1} parent=11 // pred_check
          %p189 = pneg %p56
        $region14: #{yolo_forward.1} parent=11 // pred_check_branch
          %191 = sbr.rel (%p189) target = $region16
        $region15: #{yolo_forward.1} parent=11 // pred_region
          _
        $region16: #{yolo_forward.1} parent=11 // pred_fallthru
          _
      $region12: #{yolo_forward.1} parent=5 // pred_fallthru
        _
      %p192 = scmp.lt.s32.totalorder %s16, 8
      // Predicated region
      $region17: #{yolo_forward.1} parent=5 // pred_check
        %p193 = pneg %p192
      $region18: #{yolo_forward.1} parent=5 // pred_check_branch
        %195 = sbr.rel (%p193) target = $region20
      $region19: #{yolo_forward.1} parent=5 // pred_region
        // Predicated region
        $region21: #{yolo_forward.1} parent=19 // pred_check
          %p196 = pneg %p82
        $region22: #{yolo_forward.1} parent=19 // pred_check_branch
          %198 = sbr.rel (%p196) target = $region24
        $region23: #{yolo_forward.1} parent=19 // pred_region
          %s199 = sand.u32 %s72, 1
          %s200 = scalar_lea.sflag [#allocation4], %s199
          %s201 = sand.u32 %s72, 1
          %s202 = smul.addr %s201, 8192
          %s203 = scalar_lea.vmem [#allocation3], %s202
          %s204 = smul.u32 %s23, 2
          %s205 = sadd.s32 %s204, %s24
          %207 = vsyncadd %s200, 0
          %s208 = smul.addr %s25, 2048
          %s209 = smul.addr %s205, 4096
          %s210 = sadd.s32 %s208, %s209
          %s211 = smul.addr %s210, 4
          %s212 = scalar_lea.hbm %s1, %s211
          %s213 = sshll.u32 %s212, 4
          %s214 = int_to_ptr.hbm [resolvable:$true] %s213
          %s215 = sshll.u32 %s203, 4
          %s216 = int_to_ptr.vmem [resolvable:$true] %s215
          %221 = dma.hbm_to_vmem [thread:$0]  %s214, 131072, %s216, %s200, 512, 512, 32
        $region24: #{yolo_forward.1} parent=19 // pred_fallthru
          _
        // Predicated region
        $region25: #{yolo_forward.1} parent=19 // pred_check
          %p222 = pneg %p112
        $region26: #{yolo_forward.1} parent=19 // pred_check_branch
          %224 = sbr.rel (%p222) target = $region28
        $region27: #{yolo_forward.1} parent=19 // pred_region
          %s225 = sand.u32 %s16, 1
          %s226 = scalar_lea.sflag [#allocation6], %s225
          %s227 = sand.u32 %s102, 1
          %s228 = smul.addr %s227, 8
          %s229 = scalar_lea.vmem [#allocation5], %s228
          %s230 = smul.u32 %s23, 2
          %s231 = sadd.s32 %s230, %s24
          %s232 = smul.u32 8, %s231
          %234 = vsyncadd %s226, 0
          %s235 = scalar_lea.hbm %s2, %s232
          %s237 = sshll.u32 %s235, 4
          %s238 = int_to_ptr.hbm [resolvable:$true] %s237
          %s239 = sshll.u32 %s229, 4
          %s240 = int_to_ptr.vmem [resolvable:$true] %s239
          %242 = dma.hbm_to_vmem [thread:$0]  %s238, 128, %s240, %s226
        $region28: #{yolo_forward.1} parent=19 // pred_fallthru
          _
        // Predicated region
        $region29: #{yolo_forward.1} parent=19 // pred_check
          %p243 = pneg %p142
        $region30: #{yolo_forward.1} parent=19 // pred_check_branch
          %245 = sbr.rel (%p243) target = $region32
        $region31: #{yolo_forward.1} parent=19 // pred_region
          %s246 = sand.u32 %s16, 1
          %s247 = scalar_lea.sflag [#allocation6], %s246
          %s248 = sand.u32 %s132, 1
          %s249 = smul.addr %s248, 512
          %s250 = scalar_lea.vmem [#allocation7], %s249
          %s251 = smul.u32 %s23, 2
          %s252 = sadd.s32 %s251, %s24
          %s253 = smul.u32 128, %s252
          %255 = vsyncadd %s247, 0
          %s256 = smul.addr %s253, 4
          %s257 = scalar_lea.hbm %s3, %s256
          %s258 = sshll.u32 %s257, 4
          %s259 = int_to_ptr.hbm [resolvable:$true] %s258
          %s260 = sshll.u32 %s250, 4
          %s261 = int_to_ptr.vmem [resolvable:$true] %s260
          %266 = dma.hbm_to_vmem [thread:$0]  %s259, 8192, %s261, %s247, 64, 64, 4
        $region32: #{yolo_forward.1} parent=19 // pred_fallthru
          _
      $region20: #{yolo_forward.1} parent=5 // pred_fallthru
        _
      %p267 = scmp.le.s32.totalorder 1, %s16
      %p268 = scmp.lt.s32.totalorder %s16, 9
      %p269 = pnand %p267, %p268
      %p270 = pneg %p269
      // Predicated region
      $region33: #{yolo_forward.1} parent=5 // pred_check
        _
      $region34: #{yolo_forward.1} parent=5 // pred_check_branch
        %272 = sbr.rel (%p269) target = $region36
      $region35: #{yolo_forward.1} parent=5 // pred_region
        %s273 = ssub.s32 %s16, 1
        %s274 = sand.u32 %s75, 1
        %s275 = scalar_lea.sflag [#allocation4], %s274
        %s276 = sand.u32 %s75, 1
        %s277 = smul.addr %s276, 8192
        %s278 = scalar_lea.vmem [#allocation3], %s277
        // Predicated region
        $region37: #{yolo_forward.1} parent=35 // pred_check
          %p279 = pneg %p88
        $region38: #{yolo_forward.1} parent=35 // pred_check_branch
          %281 = sbr.rel (%p279) target = $region40
        $region39: #{yolo_forward.1} parent=35 // pred_region
          %283 = dma.done %s275, 131072
        $region40: #{yolo_forward.1} parent=35 // pred_fallthru
          _
        %s284 = sand.u32 %s21, 1
        %s285 = scalar_lea.sflag [#allocation6], %s284
        %s286 = sand.u32 %s105, 1
        %s287 = smul.addr %s286, 8
        %s288 = scalar_lea.vmem [#allocation5], %s287
        // Predicated region
        $region41: #{yolo_forward.1} parent=35 // pred_check
          %p289 = pneg %p118
        $region42: #{yolo_forward.1} parent=35 // pred_check_branch
          %291 = sbr.rel (%p289) target = $region44
        $region43: #{yolo_forward.1} parent=35 // pred_region
          %293 = dma.done %s285, 128
        $region44: #{yolo_forward.1} parent=35 // pred_fallthru
          _
        %s294 = sand.u32 %s21, 1
        %s295 = scalar_lea.sflag [#allocation6], %s294
        %s296 = sand.u32 %s135, 1
        %s297 = smul.addr %s296, 512
        %s298 = scalar_lea.vmem [#allocation7], %s297
        // Predicated region
        $region45: #{yolo_forward.1} parent=35 // pred_check
          %p299 = pneg %p148
        $region46: #{yolo_forward.1} parent=35 // pred_check_branch
          %301 = sbr.rel (%p299) target = $region48
        $region47: #{yolo_forward.1} parent=35 // pred_region
          %303 = dma.done %s295, 8192
        $region48: #{yolo_forward.1} parent=35 // pred_fallthru
          _
        %p304 = pneg %p56
        %p305 = pneg %p53
        %s306 = sand.u32 %s75, 1
        %s307 = scalar_lea.sflag [#allocation4], %s306
        %s308 = sand.u32 %s75, 1
        %s309 = smul.addr %s308, 8192
        %s310 = scalar_lea.vmem [#allocation3], %s309
        %p311 = pneg %p88
        %p312 = pneg %p85
        %s313 = sand.u32 %s21, 1
        %s314 = scalar_lea.sflag [#allocation6], %s313
        %s315 = sand.u32 %s105, 1
        %s316 = smul.addr %s315, 8
        %s317 = scalar_lea.vmem [#allocation5], %s316
        %p318 = pneg %p118
        %p319 = pneg %p115
        %s320 = sand.u32 %s21, 1
        %s321 = scalar_lea.sflag [#allocation6], %s320
        %s322 = sand.u32 %s135, 1
        %s323 = smul.addr %s322, 512
        %s324 = scalar_lea.vmem [#allocation7], %s323
        %p325 = pneg %p148
        %p326 = pneg %p145
        %p327 = pneg %p174
        %p328 = pneg %p171
        %p329 = scmp.lt.s32.totalorder %s26, 1
        %s330 = scalar_select %p329, %s26, 1
        %s331 = smul.addr %s330, 2
        %s332 = smul.addr %s331, 8
        %s333 = scalar_lea.vmem %s4, %s332
        %s334 = smul.u32 %s26, 2
        %s335 = sadd.s32 %s334, %s27
        %s336 = smul.u32 %s26, 2
        %s337 = sadd.s32 %s336, %s27
        %s338 = smul.u32 8, %s337
        %s339 = smul.u32 %s26, 2
        %s340 = sadd.s32 %s339, %s27
        %s341 = smul.u32 128, %s340
        %p342 = scmp.lt.s32.totalorder %s26, 1
        %s343 = scalar_select %p342, %s26, 1
        %s344 = smul.addr %s343, 2
        %s345 = smul.addr %s344, 8
        %s346 = scalar_lea.vmem %s4, %s345
        %p347 = scmp.eq.s32.totalorder %s27, 0
        %p348 = scmp.eq.s32.totalorder %s28, 0
        %p349 = pnand %p347, %p348
        %p350 = pneg %p349
        // Predicated region
        $region49: #{yolo_forward.1} parent=35 // pred_check
          _
        $region50: #{yolo_forward.1} parent=35 // pred_check_branch
          %352 = sbr.rel (%p349) target = $region52
        $region51: #{yolo_forward.1} parent=35 // pred_region
          %353 = vst [vmem:[%s346] sm:$0xff] 0.0
          %354 = vst [vmem:[%s346 + $0x8] sm:$0xff] 0.0
        $region52: #{yolo_forward.1} parent=35 // pred_fallthru
          _
        // Predicated region
        $region53: #{yolo_forward.1} parent=35 // pred_check
          %p355 = pneg %p348
        $region54: #{yolo_forward.1} parent=35 // pred_check_branch
          %357 = sbr.rel (%p355) target = $region56
        $region55: #{yolo_forward.1} parent=35 // pred_region
          %358 = vst [vmem:[#allocation2] sm:$0xff] 0.0
          %359 = vst [vmem:[#allocation2 + $0x8] sm:$0xff] 0.0
          %360 = vst [vmem:[#allocation2 + $0x10] sm:$0xff] 0.0
          %361 = vst [vmem:[#allocation2 + $0x18] sm:$0xff] 0.0
          %362 = vst [vmem:[#allocation2 + $0x20] sm:$0xff] 0.0
          %363 = vst [vmem:[#allocation2 + $0x28] sm:$0xff] 0.0
          %364 = vst [vmem:[#allocation2 + $0x30] sm:$0xff] 0.0
          %365 = vst [vmem:[#allocation2 + $0x38] sm:$0xff] 0.0
          %366 = vst [vmem:[#allocation2 + $0x40] sm:$0xff] 0.0
          %367 = vst [vmem:[#allocation2 + $0x48] sm:$0xff] 0.0
          %368 = vst [vmem:[#allocation2 + $0x50] sm:$0xff] 0.0
          %369 = vst [vmem:[#allocation2 + $0x58] sm:$0xff] 0.0
          %370 = vst [vmem:[#allocation2 + $0x60] sm:$0xff] 0.0
          %371 = vst [vmem:[#allocation2 + $0x68] sm:$0xff] 0.0
          %372 = vst [vmem:[#allocation2 + $0x70] sm:$0xff] 0.0
          %373 = vst [vmem:[#allocation2 + $0x78] sm:$0xff] 0.0
        $region56: #{yolo_forward.1} parent=35 // pred_fallthru
          _
        %s374 = smul.u32 %s28, 2048
        %s375 = sshra.s32 %s374, 7
        %s376 = sand.u32 %s374, 127
        %s377 = smul.addr %s375, 4
        %s378 = scalar_lea.vmem %s0, %s377
        %v379 = vld [vmem:[%s378] sm:$0xff]
        %v380 = vld [vmem:[%s378 + $0x8] sm:$0xff]
        %v381 = vld [vmem:[%s378 + $0x10] sm:$0xff]
        %v382 = vld [vmem:[%s378 + $0x18] sm:$0xff]
        %v383 = vld [vmem:[%s378 + $0x20] sm:$0xff]
        %v384 = vld [vmem:[%s378 + $0x28] sm:$0xff]
        %v385 = vld [vmem:[%s378 + $0x30] sm:$0xff]
        %v386 = vld [vmem:[%s378 + $0x38] sm:$0xff]
        %v387 = vld [vmem:[%s378 + $0x80] sm:$0xff]
        %v388 = vld [vmem:[%s378 + $0x88] sm:$0xff]
        %v389 = vld [vmem:[%s378 + $0x90] sm:$0xff]
        %v390 = vld [vmem:[%s378 + $0x98] sm:$0xff]
        %v391 = vld [vmem:[%s378 + $0xa0] sm:$0xff]
        %v392 = vld [vmem:[%s378 + $0xa8] sm:$0xff]
        %v393 = vld [vmem:[%s378 + $0xb0] sm:$0xff]
        %v394 = vld [vmem:[%s378 + $0xb8] sm:$0xff]
        %v395 = vld [vmem:[#allocation2] sm:$0xff]
        %v396 = vld [vmem:[#allocation2 + $0x8] sm:$0xff]
        %v397 = vld [vmem:[#allocation2 + $0x10] sm:$0xff]
        %v398 = vld [vmem:[#allocation2 + $0x18] sm:$0xff]
        %v399 = vld [vmem:[#allocation2 + $0x20] sm:$0xff]
        %v400 = vld [vmem:[#allocation2 + $0x28] sm:$0xff]
        %v401 = vld [vmem:[#allocation2 + $0x30] sm:$0xff]
        %v402 = vld [vmem:[#allocation2 + $0x38] sm:$0xff]
        %v403 = vld [vmem:[#allocation2 + $0x40] sm:$0xff]
        %v404 = vld [vmem:[#allocation2 + $0x48] sm:$0xff]
        %v405 = vld [vmem:[#allocation2 + $0x50] sm:$0xff]
        %v406 = vld [vmem:[#allocation2 + $0x58] sm:$0xff]
        %v407 = vld [vmem:[#allocation2 + $0x60] sm:$0xff]
        %v408 = vld [vmem:[#allocation2 + $0x68] sm:$0xff]
        %v409 = vld [vmem:[#allocation2 + $0x70] sm:$0xff]
        %v410 = vld [vmem:[#allocation2 + $0x78] sm:$0xff]
        %v411 = vld [vmem:[%s278] sm:$0xff]
        %v412 = vld [vmem:[%s278 + $0x8] sm:$0xff]
        %v413 = vld [vmem:[%s278 + $0x10] sm:$0xff]
        %v414 = vld [vmem:[%s278 + $0x18] sm:$0xff]
        %v415 = vld [vmem:[%s278 + $0x20] sm:$0xff]
        %v416 = vld [vmem:[%s278 + $0x28] sm:$0xff]
        %v417 = vld [vmem:[%s278 + $0x30] sm:$0xff]
        %v418 = vld [vmem:[%s278 + $0x38] sm:$0xff]
        %v419 = vld [vmem:[%s278 + $0x40] sm:$0xff]
        %v420 = vld [vmem:[%s278 + $0x48] sm:$0xff]
        %v421 = vld [vmem:[%s278 + $0x50] sm:$0xff]
        %v422 = vld [vmem:[%s278 + $0x58] sm:$0xff]
        %v423 = vld [vmem:[%s278 + $0x60] sm:$0xff]
        %v424 = vld [vmem:[%s278 + $0x68] sm:$0xff]
        %v425 = vld [vmem:[%s278 + $0x70] sm:$0xff]
        %v426 = vld [vmem:[%s278 + $0x78] sm:$0xff]
        %v427 = vld [vmem:[%s278 + $0x80] sm:$0xff]
        %v428 = vld [vmem:[%s278 + $0x88] sm:$0xff]
        %v429 = vld [vmem:[%s278 + $0x90] sm:$0xff]
        %v430 = vld [vmem:[%s278 + $0x98] sm:$0xff]
        %v431 = vld [vmem:[%s278 + $0xa0] sm:$0xff]
        %v432 = vld [vmem:[%s278 + $0xa8] sm:$0xff]
        %v433 = vld [vmem:[%s278 + $0xb0] sm:$0xff]
        %v434 = vld [vmem:[%s278 + $0xb8] sm:$0xff]
        %v435 = vld [vmem:[%s278 + $0xc0] sm:$0xff]
        %v436 = vld [vmem:[%s278 + $0xc8] sm:$0xff]
        %v437 = vld [vmem:[%s278 + $0xd0] sm:$0xff]
        %v438 = vld [vmem:[%s278 + $0xd8] sm:$0xff]
        %v439 = vld [vmem:[%s278 + $0xe0] sm:$0xff]
        %v440 = vld [vmem:[%s278 + $0xe8] sm:$0xff]
        %v441 = vld [vmem:[%s278 + $0xf0] sm:$0xff]
        %v442 = vld [vmem:[%s278 + $0xf8] sm:$0xff]
        %v443 = vld [vmem:[%s278 + $0x100] sm:$0xff]
        %v444 = vld [vmem:[%s278 + $0x108] sm:$0xff]
        %v445 = vld [vmem:[%s278 + $0x110] sm:$0xff]
        %v446 = vld [vmem:[%s278 + $0x118] sm:$0xff]
        %v447 = vld [vmem:[%s278 + $0x120] sm:$0xff]
        %v448 = vld [vmem:[%s278 + $0x128] sm:$0xff]
        %v449 = vld [vmem:[%s278 + $0x130] sm:$0xff]
        %v450 = vld [vmem:[%s278 + $0x138] sm:$0xff]
        %v451 = vld [vmem:[%s278 + $0x140] sm:$0xff]
        %v452 = vld [vmem:[%s278 + $0x148] sm:$0xff]
        %v453 = vld [vmem:[%s278 + $0x150] sm:$0xff]
        %v454 = vld [vmem:[%s278 + $0x158] sm:$0xff]
        %v455 = vld [vmem:[%s278 + $0x160] sm:$0xff]
        %v456 = vld [vmem:[%s278 + $0x168] sm:$0xff]
        %v457 = vld [vmem:[%s278 + $0x170] sm:$0xff]
        %v458 = vld [vmem:[%s278 + $0x178] sm:$0xff]
        %v459 = vld [vmem:[%s278 + $0x180] sm:$0xff]
        %v460 = vld [vmem:[%s278 + $0x188] sm:$0xff]
        %v461 = vld [vmem:[%s278 + $0x190] sm:$0xff]
        %v462 = vld [vmem:[%s278 + $0x198] sm:$0xff]
        %v463 = vld [vmem:[%s278 + $0x1a0] sm:$0xff]
        %v464 = vld [vmem:[%s278 + $0x1a8] sm:$0xff]
        %v465 = vld [vmem:[%s278 + $0x1b0] sm:$0xff]
        %v466 = vld [vmem:[%s278 + $0x1b8] sm:$0xff]
        %v467 = vld [vmem:[%s278 + $0x1c0] sm:$0xff]
        %v468 = vld [vmem:[%s278 + $0x1c8] sm:$0xff]
        %v469 = vld [vmem:[%s278 + $0x1d0] sm:$0xff]
        %v470 = vld [vmem:[%s278 + $0x1d8] sm:$0xff]
        %v471 = vld [vmem:[%s278 + $0x1e0] sm:$0xff]
        %v472 = vld [vmem:[%s278 + $0x1e8] sm:$0xff]
        %v473 = vld [vmem:[%s278 + $0x1f0] sm:$0xff]
        %v474 = vld [vmem:[%s278 + $0x1f8] sm:$0xff]
        %v475 = vld [vmem:[%s278 + $0x200] sm:$0xff]
        %v476 = vld [vmem:[%s278 + $0x208] sm:$0xff]
        %v477 = vld [vmem:[%s278 + $0x210] sm:$0xff]
        %v478 = vld [vmem:[%s278 + $0x218] sm:$0xff]
        %v479 = vld [vmem:[%s278 + $0x220] sm:$0xff]
        %v480 = vld [vmem:[%s278 + $0x228] sm:$0xff]
        %v481 = vld [vmem:[%s278 + $0x230] sm:$0xff]
        %v482 = vld [vmem:[%s278 + $0x238] sm:$0xff]
        %v483 = vld [vmem:[%s278 + $0x240] sm:$0xff]
        %v484 = vld [vmem:[%s278 + $0x248] sm:$0xff]
        %v485 = vld [vmem:[%s278 + $0x250] sm:$0xff]
        %v486 = vld [vmem:[%s278 + $0x258] sm:$0xff]
        %v487 = vld [vmem:[%s278 + $0x260] sm:$0xff]
        %v488 = vld [vmem:[%s278 + $0x268] sm:$0xff]
        %v489 = vld [vmem:[%s278 + $0x270] sm:$0xff]
        %v490 = vld [vmem:[%s278 + $0x278] sm:$0xff]
        %v491 = vld [vmem:[%s278 + $0x280] sm:$0xff]
        %v492 = vld [vmem:[%s278 + $0x288] sm:$0xff]
        %v493 = vld [vmem:[%s278 + $0x290] sm:$0xff]
        %v494 = vld [vmem:[%s278 + $0x298] sm:$0xff]
        %v495 = vld [vmem:[%s278 + $0x2a0] sm:$0xff]
        %v496 = vld [vmem:[%s278 + $0x2a8] sm:$0xff]
        %v497 = vld [vmem:[%s278 + $0x2b0] sm:$0xff]
        %v498 = vld [vmem:[%s278 + $0x2b8] sm:$0xff]
        %v499 = vld [vmem:[%s278 + $0x2c0] sm:$0xff]
        %v500 = vld [vmem:[%s278 + $0x2c8] sm:$0xff]
        %v501 = vld [vmem:[%s278 + $0x2d0] sm:$0xff]
        %v502 = vld [vmem:[%s278 + $0x2d8] sm:$0xff]
        %v503 = vld [vmem:[%s278 + $0x2e0] sm:$0xff]
        %v504 = vld [vmem:[%s278 + $0x2e8] sm:$0xff]
        %v505 = vld [vmem:[%s278 + $0x2f0] sm:$0xff]
        %v506 = vld [vmem:[%s278 + $0x2f8] sm:$0xff]
        %v507 = vld [vmem:[%s278 + $0x300] sm:$0xff]
        %v508 = vld [vmem:[%s278 + $0x308] sm:$0xff]
        %v509 = vld [vmem:[%s278 + $0x310] sm:$0xff]
        %v510 = vld [vmem:[%s278 + $0x318] sm:$0xff]
        %v511 = vld [vmem:[%s278 + $0x320] sm:$0xff]
        %v512 = vld [vmem:[%s278 + $0x328] sm:$0xff]
        %v513 = vld [vmem:[%s278 + $0x330] sm:$0xff]
        %v514 = vld [vmem:[%s278 + $0x338] sm:$0xff]
        %v515 = vld [vmem:[%s278 + $0x340] sm:$0xff]
        %v516 = vld [vmem:[%s278 + $0x348] sm:$0xff]
        %v517 = vld [vmem:[%s278 + $0x350] sm:$0xff]
        %v518 = vld [vmem:[%s278 + $0x358] sm:$0xff]
        %v519 = vld [vmem:[%s278 + $0x360] sm:$0xff]
        %v520 = vld [vmem:[%s278 + $0x368] sm:$0xff]
        %v521 = vld [vmem:[%s278 + $0x370] sm:$0xff]
        %v522 = vld [vmem:[%s278 + $0x378] sm:$0xff]
        %v523 = vld [vmem:[%s278 + $0x380] sm:$0xff]
        %v524 = vld [vmem:[%s278 + $0x388] sm:$0xff]
        %v525 = vld [vmem:[%s278 + $0x390] sm:$0xff]
        %v526 = vld [vmem:[%s278 + $0x398] sm:$0xff]
        %v527 = vld [vmem:[%s278 + $0x3a0] sm:$0xff]
        %v528 = vld [vmem:[%s278 + $0x3a8] sm:$0xff]
        %v529 = vld [vmem:[%s278 + $0x3b0] sm:$0xff]
        %v530 = vld [vmem:[%s278 + $0x3b8] sm:$0xff]
        %v531 = vld [vmem:[%s278 + $0x3c0] sm:$0xff]
        %v532 = vld [vmem:[%s278 + $0x3c8] sm:$0xff]
        %v533 = vld [vmem:[%s278 + $0x3d0] sm:$0xff]
        %v534 = vld [vmem:[%s278 + $0x3d8] sm:$0xff]
        %v535 = vld [vmem:[%s278 + $0x3e0] sm:$0xff]
        %v536 = vld [vmem:[%s278 + $0x3e8] sm:$0xff]
        %v537 = vld [vmem:[%s278 + $0x3f0] sm:$0xff]
        %v538 = vld [vmem:[%s278 + $0x3f8] sm:$0xff]
        %v539 = vld [vmem:[%s278 + $0x400] sm:$0xff]
        %v540 = vld [vmem:[%s278 + $0x408] sm:$0xff]
        %v541 = vld [vmem:[%s278 + $0x410] sm:$0xff]
        %v542 = vld [vmem:[%s278 + $0x418] sm:$0xff]
        %v543 = vld [vmem:[%s278 + $0x420] sm:$0xff]
        %v544 = vld [vmem:[%s278 + $0x428] sm:$0xff]
        %v545 = vld [vmem:[%s278 + $0x430] sm:$0xff]
        %v546 = vld [vmem:[%s278 + $0x438] sm:$0xff]
        %v547 = vld [vmem:[%s278 + $0x440] sm:$0xff]
        %v548 = vld [vmem:[%s278 + $0x448] sm:$0xff]
        %v549 = vld [vmem:[%s278 + $0x450] sm:$0xff]
        %v550 = vld [vmem:[%s278 + $0x458] sm:$0xff]
        %v551 = vld [vmem:[%s278 + $0x460] sm:$0xff]
        %v552 = vld [vmem:[%s278 + $0x468] sm:$0xff]
        %v553 = vld [vmem:[%s278 + $0x470] sm:$0xff]
        %v554 = vld [vmem:[%s278 + $0x478] sm:$0xff]
        %v555 = vld [vmem:[%s278 + $0x480] sm:$0xff]
        %v556 = vld [vmem:[%s278 + $0x488] sm:$0xff]
        %v557 = vld [vmem:[%s278 + $0x490] sm:$0xff]
        %v558 = vld [vmem:[%s278 + $0x498] sm:$0xff]
        %v559 = vld [vmem:[%s278 + $0x4a0] sm:$0xff]
        %v560 = vld [vmem:[%s278 + $0x4a8] sm:$0xff]
        %v561 = vld [vmem:[%s278 + $0x4b0] sm:$0xff]
        %v562 = vld [vmem:[%s278 + $0x4b8] sm:$0xff]
        %v563 = vld [vmem:[%s278 + $0x4c0] sm:$0xff]
        %v564 = vld [vmem:[%s278 + $0x4c8] sm:$0xff]
        %v565 = vld [vmem:[%s278 + $0x4d0] sm:$0xff]
        %v566 = vld [vmem:[%s278 + $0x4d8] sm:$0xff]
        %v567 = vld [vmem:[%s278 + $0x4e0] sm:$0xff]
        %v568 = vld [vmem:[%s278 + $0x4e8] sm:$0xff]
        %v569 = vld [vmem:[%s278 + $0x4f0] sm:$0xff]
        %v570 = vld [vmem:[%s278 + $0x4f8] sm:$0xff]
        %v571 = vld [vmem:[%s278 + $0x500] sm:$0xff]
        %v572 = vld [vmem:[%s278 + $0x508] sm:$0xff]
        %v573 = vld [vmem:[%s278 + $0x510] sm:$0xff]
        %v574 = vld [vmem:[%s278 + $0x518] sm:$0xff]
        %v575 = vld [vmem:[%s278 + $0x520] sm:$0xff]
        %v576 = vld [vmem:[%s278 + $0x528] sm:$0xff]
        %v577 = vld [vmem:[%s278 + $0x530] sm:$0xff]
        %v578 = vld [vmem:[%s278 + $0x538] sm:$0xff]
        %v579 = vld [vmem:[%s278 + $0x540] sm:$0xff]
        %v580 = vld [vmem:[%s278 + $0x548] sm:$0xff]
        %v581 = vld [vmem:[%s278 + $0x550] sm:$0xff]
        %v582 = vld [vmem:[%s278 + $0x558] sm:$0xff]
        %v583 = vld [vmem:[%s278 + $0x560] sm:$0xff]
        %v584 = vld [vmem:[%s278 + $0x568] sm:$0xff]
        %v585 = vld [vmem:[%s278 + $0x570] sm:$0xff]
        %v586 = vld [vmem:[%s278 + $0x578] sm:$0xff]
        %v587 = vld [vmem:[%s278 + $0x580] sm:$0xff]
        %v588 = vld [vmem:[%s278 + $0x588] sm:$0xff]
        %v589 = vld [vmem:[%s278 + $0x590] sm:$0xff]
        %v590 = vld [vmem:[%s278 + $0x598] sm:$0xff]
        %v591 = vld [vmem:[%s278 + $0x5a0] sm:$0xff]
        %v592 = vld [vmem:[%s278 + $0x5a8] sm:$0xff]
        %v593 = vld [vmem:[%s278 + $0x5b0] sm:$0xff]
        %v594 = vld [vmem:[%s278 + $0x5b8] sm:$0xff]
        %v595 = vld [vmem:[%s278 + $0x5c0] sm:$0xff]
        %v596 = vld [vmem:[%s278 + $0x5c8] sm:$0xff]
        %v597 = vld [vmem:[%s278 + $0x5d0] sm:$0xff]
        %v598 = vld [vmem:[%s278 + $0x5d8] sm:$0xff]
        %v599 = vld [vmem:[%s278 + $0x5e0] sm:$0xff]
        %v600 = vld [vmem:[%s278 + $0x5e8] sm:$0xff]
        %v601 = vld [vmem:[%s278 + $0x5f0] sm:$0xff]
        %v602 = vld [vmem:[%s278 + $0x5f8] sm:$0xff]
        %v603 = vld [vmem:[%s278 + $0x600] sm:$0xff]
        %v604 = vld [vmem:[%s278 + $0x608] sm:$0xff]
        %v605 = vld [vmem:[%s278 + $0x610] sm:$0xff]
        %v606 = vld [vmem:[%s278 + $0x618] sm:$0xff]
        %v607 = vld [vmem:[%s278 + $0x620] sm:$0xff]
        %v608 = vld [vmem:[%s278 + $0x628] sm:$0xff]
        %v609 = vld [vmem:[%s278 + $0x630] sm:$0xff]
        %v610 = vld [vmem:[%s278 + $0x638] sm:$0xff]
        %v611 = vld [vmem:[%s278 + $0x640] sm:$0xff]
        %v612 = vld [vmem:[%s278 + $0x648] sm:$0xff]
        %v613 = vld [vmem:[%s278 + $0x650] sm:$0xff]
        %v614 = vld [vmem:[%s278 + $0x658] sm:$0xff]
        %v615 = vld [vmem:[%s278 + $0x660] sm:$0xff]
        %v616 = vld [vmem:[%s278 + $0x668] sm:$0xff]
        %v617 = vld [vmem:[%s278 + $0x670] sm:$0xff]
        %v618 = vld [vmem:[%s278 + $0x678] sm:$0xff]
        %v619 = vld [vmem:[%s278 + $0x680] sm:$0xff]
        %v620 = vld [vmem:[%s278 + $0x688] sm:$0xff]
        %v621 = vld [vmem:[%s278 + $0x690] sm:$0xff]
        %v622 = vld [vmem:[%s278 + $0x698] sm:$0xff]
        %v623 = vld [vmem:[%s278 + $0x6a0] sm:$0xff]
        %v624 = vld [vmem:[%s278 + $0x6a8] sm:$0xff]
        %v625 = vld [vmem:[%s278 + $0x6b0] sm:$0xff]
        %v626 = vld [vmem:[%s278 + $0x6b8] sm:$0xff]
        %v627 = vld [vmem:[%s278 + $0x6c0] sm:$0xff]
        %v628 = vld [vmem:[%s278 + $0x6c8] sm:$0xff]
        %v629 = vld [vmem:[%s278 + $0x6d0] sm:$0xff]
        %v630 = vld [vmem:[%s278 + $0x6d8] sm:$0xff]
        %v631 = vld [vmem:[%s278 + $0x6e0] sm:$0xff]
        %v632 = vld [vmem:[%s278 + $0x6e8] sm:$0xff]
        %v633 = vld [vmem:[%s278 + $0x6f0] sm:$0xff]
        %v634 = vld [vmem:[%s278 + $0x6f8] sm:$0xff]
        %v635 = vld [vmem:[%s278 + $0x700] sm:$0xff]
        %v636 = vld [vmem:[%s278 + $0x708] sm:$0xff]
        %v637 = vld [vmem:[%s278 + $0x710] sm:$0xff]
        %v638 = vld [vmem:[%s278 + $0x718] sm:$0xff]
        %v639 = vld [vmem:[%s278 + $0x720] sm:$0xff]
        %v640 = vld [vmem:[%s278 + $0x728] sm:$0xff]
        %v641 = vld [vmem:[%s278 + $0x730] sm:$0xff]
        %v642 = vld [vmem:[%s278 + $0x738] sm:$0xff]
        %v643 = vld [vmem:[%s278 + $0x740] sm:$0xff]
        %v644 = vld [vmem:[%s278 + $0x748] sm:$0xff]
        %v645 = vld [vmem:[%s278 + $0x750] sm:$0xff]
        %v646 = vld [vmem:[%s278 + $0x758] sm:$0xff]
        %v647 = vld [vmem:[%s278 + $0x760] sm:$0xff]
        %v648 = vld [vmem:[%s278 + $0x768] sm:$0xff]
        %v649 = vld [vmem:[%s278 + $0x770] sm:$0xff]
        %v650 = vld [vmem:[%s278 + $0x778] sm:$0xff]
        %v651 = vld [vmem:[%s278 + $0x780] sm:$0xff]
        %v652 = vld [vmem:[%s278 + $0x788] sm:$0xff]
        %v653 = vld [vmem:[%s278 + $0x790] sm:$0xff]
        %v654 = vld [vmem:[%s278 + $0x798] sm:$0xff]
        %v655 = vld [vmem:[%s278 + $0x7a0] sm:$0xff]
        %v656 = vld [vmem:[%s278 + $0x7a8] sm:$0xff]
        %v657 = vld [vmem:[%s278 + $0x7b0] sm:$0xff]
        %v658 = vld [vmem:[%s278 + $0x7b8] sm:$0xff]
        %v659 = vld [vmem:[%s278 + $0x7c0] sm:$0xff]
        %v660 = vld [vmem:[%s278 + $0x7c8] sm:$0xff]
        %v661 = vld [vmem:[%s278 + $0x7d0] sm:$0xff]
        %v662 = vld [vmem:[%s278 + $0x7d8] sm:$0xff]
        %v663 = vld [vmem:[%s278 + $0x7e0] sm:$0xff]
        %v664 = vld [vmem:[%s278 + $0x7e8] sm:$0xff]
        %v665 = vld [vmem:[%s278 + $0x7f0] sm:$0xff]
        %v666 = vld [vmem:[%s278 + $0x7f8] sm:$0xff]
        %v667 = vld [vmem:[%s278 + $0x800] sm:$0xff]
        %v668 = vld [vmem:[%s278 + $0x808] sm:$0xff]
        %v669 = vld [vmem:[%s278 + $0x810] sm:$0xff]
        %v670 = vld [vmem:[%s278 + $0x818] sm:$0xff]
        %v671 = vld [vmem:[%s278 + $0x820] sm:$0xff]
        %v672 = vld [vmem:[%s278 + $0x828] sm:$0xff]
        %v673 = vld [vmem:[%s278 + $0x830] sm:$0xff]
        %v674 = vld [vmem:[%s278 + $0x838] sm:$0xff]
        %v675 = vld [vmem:[%s278 + $0x840] sm:$0xff]
        %v676 = vld [vmem:[%s278 + $0x848] sm:$0xff]
        %v677 = vld [vmem:[%s278 + $0x850] sm:$0xff]
        %v678 = vld [vmem:[%s278 + $0x858] sm:$0xff]
        %v679 = vld [vmem:[%s278 + $0x860] sm:$0xff]
        %v680 = vld [vmem:[%s278 + $0x868] sm:$0xff]
        %v681 = vld [vmem:[%s278 + $0x870] sm:$0xff]
        %v682 = vld [vmem:[%s278 + $0x878] sm:$0xff]
        %v683 = vld [vmem:[%s278 + $0x880] sm:$0xff]
        %v684 = vld [vmem:[%s278 + $0x888] sm:$0xff]
        %v685 = vld [vmem:[%s278 + $0x890] sm:$0xff]
        %v686 = vld [vmem:[%s278 + $0x898] sm:$0xff]
        %v687 = vld [vmem:[%s278 + $0x8a0] sm:$0xff]
        %v688 = vld [vmem:[%s278 + $0x8a8] sm:$0xff]
        %v689 = vld [vmem:[%s278 + $0x8b0] sm:$0xff]
        %v690 = vld [vmem:[%s278 + $0x8b8] sm:$0xff]
        %v691 = vld [vmem:[%s278 + $0x8c0] sm:$0xff]
        %v692 = vld [vmem:[%s278 + $0x8c8] sm:$0xff]
        %v693 = vld [vmem:[%s278 + $0x8d0] sm:$0xff]
        %v694 = vld [vmem:[%s278 + $0x8d8] sm:$0xff]
        %v695 = vld [vmem:[%s278 + $0x8e0] sm:$0xff]
        %v696 = vld [vmem:[%s278 + $0x8e8] sm:$0xff]
        %v697 = vld [vmem:[%s278 + $0x8f0] sm:$0xff]
        %v698 = vld [vmem:[%s278 + $0x8f8] sm:$0xff]
        %v699 = vld [vmem:[%s278 + $0x900] sm:$0xff]
        %v700 = vld [vmem:[%s278 + $0x908] sm:$0xff]
        %v701 = vld [vmem:[%s278 + $0x910] sm:$0xff]
        %v702 = vld [vmem:[%s278 + $0x918] sm:$0xff]
        %v703 = vld [vmem:[%s278 + $0x920] sm:$0xff]
        %v704 = vld [vmem:[%s278 + $0x928] sm:$0xff]
        %v705 = vld [vmem:[%s278 + $0x930] sm:$0xff]
        %v706 = vld [vmem:[%s278 + $0x938] sm:$0xff]
        %v707 = vld [vmem:[%s278 + $0x940] sm:$0xff]
        %v708 = vld [vmem:[%s278 + $0x948] sm:$0xff]
        %v709 = vld [vmem:[%s278 + $0x950] sm:$0xff]
        %v710 = vld [vmem:[%s278 + $0x958] sm:$0xff]
        %v711 = vld [vmem:[%s278 + $0x960] sm:$0xff]
        %v712 = vld [vmem:[%s278 + $0x968] sm:$0xff]
        %v713 = vld [vmem:[%s278 + $0x970] sm:$0xff]
        %v714 = vld [vmem:[%s278 + $0x978] sm:$0xff]
        %v715 = vld [vmem:[%s278 + $0x980] sm:$0xff]
        %v716 = vld [vmem:[%s278 + $0x988] sm:$0xff]
        %v717 = vld [vmem:[%s278 + $0x990] sm:$0xff]
        %v718 = vld [vmem:[%s278 + $0x998] sm:$0xff]
        %v719 = vld [vmem:[%s278 + $0x9a0] sm:$0xff]
        %v720 = vld [vmem:[%s278 + $0x9a8] sm:$0xff]
        %v721 = vld [vmem:[%s278 + $0x9b0] sm:$0xff]
        %v722 = vld [vmem:[%s278 + $0x9b8] sm:$0xff]
        %v723 = vld [vmem:[%s278 + $0x9c0] sm:$0xff]
        %v724 = vld [vmem:[%s278 + $0x9c8] sm:$0xff]
        %v725 = vld [vmem:[%s278 + $0x9d0] sm:$0xff]
        %v726 = vld [vmem:[%s278 + $0x9d8] sm:$0xff]
        %v727 = vld [vmem:[%s278 + $0x9e0] sm:$0xff]
        %v728 = vld [vmem:[%s278 + $0x9e8] sm:$0xff]
        %v729 = vld [vmem:[%s278 + $0x9f0] sm:$0xff]
        %v730 = vld [vmem:[%s278 + $0x9f8] sm:$0xff]
        %v731 = vld [vmem:[%s278 + $0xa00] sm:$0xff]
        %v732 = vld [vmem:[%s278 + $0xa08] sm:$0xff]
        %v733 = vld [vmem:[%s278 + $0xa10] sm:$0xff]
        %v734 = vld [vmem:[%s278 + $0xa18] sm:$0xff]
        %v735 = vld [vmem:[%s278 + $0xa20] sm:$0xff]
        %v736 = vld [vmem:[%s278 + $0xa28] sm:$0xff]
        %v737 = vld [vmem:[%s278 + $0xa30] sm:$0xff]
        %v738 = vld [vmem:[%s278 + $0xa38] sm:$0xff]
        %v739 = vld [vmem:[%s278 + $0xa40] sm:$0xff]
        %v740 = vld [vmem:[%s278 + $0xa48] sm:$0xff]
        %v741 = vld [vmem:[%s278 + $0xa50] sm:$0xff]
        %v742 = vld [vmem:[%s278 + $0xa58] sm:$0xff]
        %v743 = vld [vmem:[%s278 + $0xa60] sm:$0xff]
        %v744 = vld [vmem:[%s278 + $0xa68] sm:$0xff]
        %v745 = vld [vmem:[%s278 + $0xa70] sm:$0xff]
        %v746 = vld [vmem:[%s278 + $0xa78] sm:$0xff]
        %v747 = vld [vmem:[%s278 + $0xa80] sm:$0xff]
        %v748 = vld [vmem:[%s278 + $0xa88] sm:$0xff]
        %v749 = vld [vmem:[%s278 + $0xa90] sm:$0xff]
        %v750 = vld [vmem:[%s278 + $0xa98] sm:$0xff]
        %v751 = vld [vmem:[%s278 + $0xaa0] sm:$0xff]
        %v752 = vld [vmem:[%s278 + $0xaa8] sm:$0xff]
        %v753 = vld [vmem:[%s278 + $0xab0] sm:$0xff]
        %v754 = vld [vmem:[%s278 + $0xab8] sm:$0xff]
        %v755 = vld [vmem:[%s278 + $0xac0] sm:$0xff]
        %v756 = vld [vmem:[%s278 + $0xac8] sm:$0xff]
        %v757 = vld [vmem:[%s278 + $0xad0] sm:$0xff]
        %v758 = vld [vmem:[%s278 + $0xad8] sm:$0xff]
        %v759 = vld [vmem:[%s278 + $0xae0] sm:$0xff]
        %v760 = vld [vmem:[%s278 + $0xae8] sm:$0xff]
        %v761 = vld [vmem:[%s278 + $0xaf0] sm:$0xff]
        %v762 = vld [vmem:[%s278 + $0xaf8] sm:$0xff]
        %v763 = vld [vmem:[%s278 + $0xb00] sm:$0xff]
        %v764 = vld [vmem:[%s278 + $0xb08] sm:$0xff]
        %v765 = vld [vmem:[%s278 + $0xb10] sm:$0xff]
        %v766 = vld [vmem:[%s278 + $0xb18] sm:$0xff]
        %v767 = vld [vmem:[%s278 + $0xb20] sm:$0xff]
        %v768 = vld [vmem:[%s278 + $0xb28] sm:$0xff]
        %v769 = vld [vmem:[%s278 + $0xb30] sm:$0xff]
        %v770 = vld [vmem:[%s278 + $0xb38] sm:$0xff]
        %v771 = vld [vmem:[%s278 + $0xb40] sm:$0xff]
        %v772 = vld [vmem:[%s278 + $0xb48] sm:$0xff]
        %v773 = vld [vmem:[%s278 + $0xb50] sm:$0xff]
        %v774 = vld [vmem:[%s278 + $0xb58] sm:$0xff]
        %v775 = vld [vmem:[%s278 + $0xb60] sm:$0xff]
        %v776 = vld [vmem:[%s278 + $0xb68] sm:$0xff]
        %v777 = vld [vmem:[%s278 + $0xb70] sm:$0xff]
        %v778 = vld [vmem:[%s278 + $0xb78] sm:$0xff]
        %v779 = vld [vmem:[%s278 + $0xb80] sm:$0xff]
        %v780 = vld [vmem:[%s278 + $0xb88] sm:$0xff]
        %v781 = vld [vmem:[%s278 + $0xb90] sm:$0xff]
        %v782 = vld [vmem:[%s278 + $0xb98] sm:$0xff]
        %v783 = vld [vmem:[%s278 + $0xba0] sm:$0xff]
        %v784 = vld [vmem:[%s278 + $0xba8] sm:$0xff]
        %v785 = vld [vmem:[%s278 + $0xbb0] sm:$0xff]
        %v786 = vld [vmem:[%s278 + $0xbb8] sm:$0xff]
        %v787 = vld [vmem:[%s278 + $0xbc0] sm:$0xff]
        %v788 = vld [vmem:[%s278 + $0xbc8] sm:$0xff]
        %v789 = vld [vmem:[%s278 + $0xbd0] sm:$0xff]
        %v790 = vld [vmem:[%s278 + $0xbd8] sm:$0xff]
        %v791 = vld [vmem:[%s278 + $0xbe0] sm:$0xff]
        %v792 = vld [vmem:[%s278 + $0xbe8] sm:$0xff]
        %v793 = vld [vmem:[%s278 + $0xbf0] sm:$0xff]
        %v794 = vld [vmem:[%s278 + $0xbf8] sm:$0xff]
        %v795 = vld [vmem:[%s278 + $0xc00] sm:$0xff]
        %v796 = vld [vmem:[%s278 + $0xc08] sm:$0xff]
        %v797 = vld [vmem:[%s278 + $0xc10] sm:$0xff]
        %v798 = vld [vmem:[%s278 + $0xc18] sm:$0xff]
        %v799 = vld [vmem:[%s278 + $0xc20] sm:$0xff]
        %v800 = vld [vmem:[%s278 + $0xc28] sm:$0xff]
        %v801 = vld [vmem:[%s278 + $0xc30] sm:$0xff]
        %v802 = vld [vmem:[%s278 + $0xc38] sm:$0xff]
        %v803 = vld [vmem:[%s278 + $0xc40] sm:$0xff]
        %v804 = vld [vmem:[%s278 + $0xc48] sm:$0xff]
        %v805 = vld [vmem:[%s278 + $0xc50] sm:$0xff]
        %v806 = vld [vmem:[%s278 + $0xc58] sm:$0xff]
        %v807 = vld [vmem:[%s278 + $0xc60] sm:$0xff]
        %v808 = vld [vmem:[%s278 + $0xc68] sm:$0xff]
        %v809 = vld [vmem:[%s278 + $0xc70] sm:$0xff]
        %v810 = vld [vmem:[%s278 + $0xc78] sm:$0xff]
        %v811 = vld [vmem:[%s278 + $0xc80] sm:$0xff]
        %v812 = vld [vmem:[%s278 + $0xc88] sm:$0xff]
        %v813 = vld [vmem:[%s278 + $0xc90] sm:$0xff]
        %v814 = vld [vmem:[%s278 + $0xc98] sm:$0xff]
        %v815 = vld [vmem:[%s278 + $0xca0] sm:$0xff]
        %v816 = vld [vmem:[%s278 + $0xca8] sm:$0xff]
        %v817 = vld [vmem:[%s278 + $0xcb0] sm:$0xff]
        %v818 = vld [vmem:[%s278 + $0xcb8] sm:$0xff]
        %v819 = vld [vmem:[%s278 + $0xcc0] sm:$0xff]
        %v820 = vld [vmem:[%s278 + $0xcc8] sm:$0xff]
        %v821 = vld [vmem:[%s278 + $0xcd0] sm:$0xff]
        %v822 = vld [vmem:[%s278 + $0xcd8] sm:$0xff]
        %v823 = vld [vmem:[%s278 + $0xce0] sm:$0xff]
        %v824 = vld [vmem:[%s278 + $0xce8] sm:$0xff]
        %v825 = vld [vmem:[%s278 + $0xcf0] sm:$0xff]
        %v826 = vld [vmem:[%s278 + $0xcf8] sm:$0xff]
        %v827 = vld [vmem:[%s278 + $0xd00] sm:$0xff]
        %v828 = vld [vmem:[%s278 + $0xd08] sm:$0xff]
        %v829 = vld [vmem:[%s278 + $0xd10] sm:$0xff]
        %v830 = vld [vmem:[%s278 + $0xd18] sm:$0xff]
        %v831 = vld [vmem:[%s278 + $0xd20] sm:$0xff]
        %v832 = vld [vmem:[%s278 + $0xd28] sm:$0xff]
        %v833 = vld [vmem:[%s278 + $0xd30] sm:$0xff]
        %v834 = vld [vmem:[%s278 + $0xd38] sm:$0xff]
        %v835 = vld [vmem:[%s278 + $0xd40] sm:$0xff]
        %v836 = vld [vmem:[%s278 + $0xd48] sm:$0xff]
        %v837 = vld [vmem:[%s278 + $0xd50] sm:$0xff]
        %v838 = vld [vmem:[%s278 + $0xd58] sm:$0xff]
        %v839 = vld [vmem:[%s278 + $0xd60] sm:$0xff]
        %v840 = vld [vmem:[%s278 + $0xd68] sm:$0xff]
        %v841 = vld [vmem:[%s278 + $0xd70] sm:$0xff]
        %v842 = vld [vmem:[%s278 + $0xd78] sm:$0xff]
        %v843 = vld [vmem:[%s278 + $0xd80] sm:$0xff]
        %v844 = vld [vmem:[%s278 + $0xd88] sm:$0xff]
        %v845 = vld [vmem:[%s278 + $0xd90] sm:$0xff]
        %v846 = vld [vmem:[%s278 + $0xd98] sm:$0xff]
        %v847 = vld [vmem:[%s278 + $0xda0] sm:$0xff]
        %v848 = vld [vmem:[%s278 + $0xda8] sm:$0xff]
        %v849 = vld [vmem:[%s278 + $0xdb0] sm:$0xff]
        %v850 = vld [vmem:[%s278 + $0xdb8] sm:$0xff]
        %v851 = vld [vmem:[%s278 + $0xdc0] sm:$0xff]
        %v852 = vld [vmem:[%s278 + $0xdc8] sm:$0xff]
        %v853 = vld [vmem:[%s278 + $0xdd0] sm:$0xff]
        %v854 = vld [vmem:[%s278 + $0xdd8] sm:$0xff]
        %v855 = vld [vmem:[%s278 + $0xde0] sm:$0xff]
        %v856 = vld [vmem:[%s278 + $0xde8] sm:$0xff]
        %v857 = vld [vmem:[%s278 + $0xdf0] sm:$0xff]
        %v858 = vld [vmem:[%s278 + $0xdf8] sm:$0xff]
        %v859 = vld [vmem:[%s278 + $0xe00] sm:$0xff]
        %v860 = vld [vmem:[%s278 + $0xe08] sm:$0xff]
        %v861 = vld [vmem:[%s278 + $0xe10] sm:$0xff]
        %v862 = vld [vmem:[%s278 + $0xe18] sm:$0xff]
        %v863 = vld [vmem:[%s278 + $0xe20] sm:$0xff]
        %v864 = vld [vmem:[%s278 + $0xe28] sm:$0xff]
        %v865 = vld [vmem:[%s278 + $0xe30] sm:$0xff]
        %v866 = vld [vmem:[%s278 + $0xe38] sm:$0xff]
        %v867 = vld [vmem:[%s278 + $0xe40] sm:$0xff]
        %v868 = vld [vmem:[%s278 + $0xe48] sm:$0xff]
        %v869 = vld [vmem:[%s278 + $0xe50] sm:$0xff]
        %v870 = vld [vmem:[%s278 + $0xe58] sm:$0xff]
        %v871 = vld [vmem:[%s278 + $0xe60] sm:$0xff]
        %v872 = vld [vmem:[%s278 + $0xe68] sm:$0xff]
        %v873 = vld [vmem:[%s278 + $0xe70] sm:$0xff]
        %v874 = vld [vmem:[%s278 + $0xe78] sm:$0xff]
        %v875 = vld [vmem:[%s278 + $0xe80] sm:$0xff]
        %v876 = vld [vmem:[%s278 + $0xe88] sm:$0xff]
        %v877 = vld [vmem:[%s278 + $0xe90] sm:$0xff]
        %v878 = vld [vmem:[%s278 + $0xe98] sm:$0xff]
        %v879 = vld [vmem:[%s278 + $0xea0] sm:$0xff]
        %v880 = vld [vmem:[%s278 + $0xea8] sm:$0xff]
        %v881 = vld [vmem:[%s278 + $0xeb0] sm:$0xff]
        %v882 = vld [vmem:[%s278 + $0xeb8] sm:$0xff]
        %v883 = vld [vmem:[%s278 + $0xec0] sm:$0xff]
        %v884 = vld [vmem:[%s278 + $0xec8] sm:$0xff]
        %v885 = vld [vmem:[%s278 + $0xed0] sm:$0xff]
        %v886 = vld [vmem:[%s278 + $0xed8] sm:$0xff]
        %v887 = vld [vmem:[%s278 + $0xee0] sm:$0xff]
        %v888 = vld [vmem:[%s278 + $0xee8] sm:$0xff]
        %v889 = vld [vmem:[%s278 + $0xef0] sm:$0xff]
        %v890 = vld [vmem:[%s278 + $0xef8] sm:$0xff]
        %v891 = vld [vmem:[%s278 + $0xf00] sm:$0xff]
        %v892 = vld [vmem:[%s278 + $0xf08] sm:$0xff]
        %v893 = vld [vmem:[%s278 + $0xf10] sm:$0xff]
        %v894 = vld [vmem:[%s278 + $0xf18] sm:$0xff]
        %v895 = vld [vmem:[%s278 + $0xf20] sm:$0xff]
        %v896 = vld [vmem:[%s278 + $0xf28] sm:$0xff]
        %v897 = vld [vmem:[%s278 + $0xf30] sm:$0xff]
        %v898 = vld [vmem:[%s278 + $0xf38] sm:$0xff]
        %v899 = vld [vmem:[%s278 + $0xf40] sm:$0xff]
        %v900 = vld [vmem:[%s278 + $0xf48] sm:$0xff]
        %v901 = vld [vmem:[%s278 + $0xf50] sm:$0xff]
        %v902 = vld [vmem:[%s278 + $0xf58] sm:$0xff]
        %v903 = vld [vmem:[%s278 + $0xf60] sm:$0xff]
        %v904 = vld [vmem:[%s278 + $0xf68] sm:$0xff]
        %v905 = vld [vmem:[%s278 + $0xf70] sm:$0xff]
        %v906 = vld [vmem:[%s278 + $0xf78] sm:$0xff]
        %v907 = vld [vmem:[%s278 + $0xf80] sm:$0xff]
        %v908 = vld [vmem:[%s278 + $0xf88] sm:$0xff]
        %v909 = vld [vmem:[%s278 + $0xf90] sm:$0xff]
        %v910 = vld [vmem:[%s278 + $0xf98] sm:$0xff]
        %v911 = vld [vmem:[%s278 + $0xfa0] sm:$0xff]
        %v912 = vld [vmem:[%s278 + $0xfa8] sm:$0xff]
        %v913 = vld [vmem:[%s278 + $0xfb0] sm:$0xff]
        %v914 = vld [vmem:[%s278 + $0xfb8] sm:$0xff]
        %v915 = vld [vmem:[%s278 + $0xfc0] sm:$0xff]
        %v916 = vld [vmem:[%s278 + $0xfc8] sm:$0xff]
        %v917 = vld [vmem:[%s278 + $0xfd0] sm:$0xff]
        %v918 = vld [vmem:[%s278 + $0xfd8] sm:$0xff]
        %v919 = vld [vmem:[%s278 + $0xfe0] sm:$0xff]
        %v920 = vld [vmem:[%s278 + $0xfe8] sm:$0xff]
        %v921 = vld [vmem:[%s278 + $0xff0] sm:$0xff]
        %v922 = vld [vmem:[%s278 + $0xff8] sm:$0xff]
        %v923 = vld [vmem:[%s278 + $0x1000] sm:$0xff]
        %v924 = vld [vmem:[%s278 + $0x1008] sm:$0xff]
        %v925 = vld [vmem:[%s278 + $0x1010] sm:$0xff]
        %v926 = vld [vmem:[%s278 + $0x1018] sm:$0xff]
        %v927 = vld [vmem:[%s278 + $0x1020] sm:$0xff]
        %v928 = vld [vmem:[%s278 + $0x1028] sm:$0xff]
        %v929 = vld [vmem:[%s278 + $0x1030] sm:$0xff]
        %v930 = vld [vmem:[%s278 + $0x1038] sm:$0xff]
        %v931 = vld [vmem:[%s278 + $0x1040] sm:$0xff]
        %v932 = vld [vmem:[%s278 + $0x1048] sm:$0xff]
        %v933 = vld [vmem:[%s278 + $0x1050] sm:$0xff]
        %v934 = vld [vmem:[%s278 + $0x1058] sm:$0xff]
        %v935 = vld [vmem:[%s278 + $0x1060] sm:$0xff]
        %v936 = vld [vmem:[%s278 + $0x1068] sm:$0xff]
        %v937 = vld [vmem:[%s278 + $0x1070] sm:$0xff]
        %v938 = vld [vmem:[%s278 + $0x1078] sm:$0xff]
        %v939 = vld [vmem:[%s278 + $0x1080] sm:$0xff]
        %v940 = vld [vmem:[%s278 + $0x1088] sm:$0xff]
        %v941 = vld [vmem:[%s278 + $0x1090] sm:$0xff]
        %v942 = vld [vmem:[%s278 + $0x1098] sm:$0xff]
        %v943 = vld [vmem:[%s278 + $0x10a0] sm:$0xff]
        %v944 = vld [vmem:[%s278 + $0x10a8] sm:$0xff]
        %v945 = vld [vmem:[%s278 + $0x10b0] sm:$0xff]
        %v946 = vld [vmem:[%s278 + $0x10b8] sm:$0xff]
        %v947 = vld [vmem:[%s278 + $0x10c0] sm:$0xff]
        %v948 = vld [vmem:[%s278 + $0x10c8] sm:$0xff]
        %v949 = vld [vmem:[%s278 + $0x10d0] sm:$0xff]
        %v950 = vld [vmem:[%s278 + $0x10d8] sm:$0xff]
        %v951 = vld [vmem:[%s278 + $0x10e0] sm:$0xff]
        %v952 = vld [vmem:[%s278 + $0x10e8] sm:$0xff]
        %v953 = vld [vmem:[%s278 + $0x10f0] sm:$0xff]
        %v954 = vld [vmem:[%s278 + $0x10f8] sm:$0xff]
        %v955 = vld [vmem:[%s278 + $0x1100] sm:$0xff]
        %v956 = vld [vmem:[%s278 + $0x1108] sm:$0xff]
        %v957 = vld [vmem:[%s278 + $0x1110] sm:$0xff]
        %v958 = vld [vmem:[%s278 + $0x1118] sm:$0xff]
        %v959 = vld [vmem:[%s278 + $0x1120] sm:$0xff]
        %v960 = vld [vmem:[%s278 + $0x1128] sm:$0xff]
        %v961 = vld [vmem:[%s278 + $0x1130] sm:$0xff]
        %v962 = vld [vmem:[%s278 + $0x1138] sm:$0xff]
        %v963 = vld [vmem:[%s278 + $0x1140] sm:$0xff]
        %v964 = vld [vmem:[%s278 + $0x1148] sm:$0xff]
        %v965 = vld [vmem:[%s278 + $0x1150] sm:$0xff]
        %v966 = vld [vmem:[%s278 + $0x1158] sm:$0xff]
        %v967 = vld [vmem:[%s278 + $0x1160] sm:$0xff]
        %v968 = vld [vmem:[%s278 + $0x1168] sm:$0xff]
        %v969 = vld [vmem:[%s278 + $0x1170] sm:$0xff]
        %v970 = vld [vmem:[%s278 + $0x1178] sm:$0xff]
        %v971 = vld [vmem:[%s278 + $0x1180] sm:$0xff]
        %v972 = vld [vmem:[%s278 + $0x1188] sm:$0xff]
        %v973 = vld [vmem:[%s278 + $0x1190] sm:$0xff]
        %v974 = vld [vmem:[%s278 + $0x1198] sm:$0xff]
        %v975 = vld [vmem:[%s278 + $0x11a0] sm:$0xff]
        %v976 = vld [vmem:[%s278 + $0x11a8] sm:$0xff]
        %v977 = vld [vmem:[%s278 + $0x11b0] sm:$0xff]
        %v978 = vld [vmem:[%s278 + $0x11b8] sm:$0xff]
        %v979 = vld [vmem:[%s278 + $0x11c0] sm:$0xff]
        %v980 = vld [vmem:[%s278 + $0x11c8] sm:$0xff]
        %v981 = vld [vmem:[%s278 + $0x11d0] sm:$0xff]
        %v982 = vld [vmem:[%s278 + $0x11d8] sm:$0xff]
        %v983 = vld [vmem:[%s278 + $0x11e0] sm:$0xff]
        %v984 = vld [vmem:[%s278 + $0x11e8] sm:$0xff]
        %v985 = vld [vmem:[%s278 + $0x11f0] sm:$0xff]
        %v986 = vld [vmem:[%s278 + $0x11f8] sm:$0xff]
        %v987 = vld [vmem:[%s278 + $0x1200] sm:$0xff]
        %v988 = vld [vmem:[%s278 + $0x1208] sm:$0xff]
        %v989 = vld [vmem:[%s278 + $0x1210] sm:$0xff]
        %v990 = vld [vmem:[%s278 + $0x1218] sm:$0xff]
        %v991 = vld [vmem:[%s278 + $0x1220] sm:$0xff]
        %v992 = vld [vmem:[%s278 + $0x1228] sm:$0xff]
        %v993 = vld [vmem:[%s278 + $0x1230] sm:$0xff]
        %v994 = vld [vmem:[%s278 + $0x1238] sm:$0xff]
        %v995 = vld [vmem:[%s278 + $0x1240] sm:$0xff]
        %v996 = vld [vmem:[%s278 + $0x1248] sm:$0xff]
        %v997 = vld [vmem:[%s278 + $0x1250] sm:$0xff]
        %v998 = vld [vmem:[%s278 + $0x1258] sm:$0xff]
        %v999 = vld [vmem:[%s278 + $0x1260] sm:$0xff]
        %v1000 = vld [vmem:[%s278 + $0x1268] sm:$0xff]
        %v1001 = vld [vmem:[%s278 + $0x1270] sm:$0xff]
        %v1002 = vld [vmem:[%s278 + $0x1278] sm:$0xff]
        %v1003 = vld [vmem:[%s278 + $0x1280] sm:$0xff]
        %v1004 = vld [vmem:[%s278 + $0x1288] sm:$0xff]
        %v1005 = vld [vmem:[%s278 + $0x1290] sm:$0xff]
        %v1006 = vld [vmem:[%s278 + $0x1298] sm:$0xff]
        %v1007 = vld [vmem:[%s278 + $0x12a0] sm:$0xff]
        %v1008 = vld [vmem:[%s278 + $0x12a8] sm:$0xff]
        %v1009 = vld [vmem:[%s278 + $0x12b0] sm:$0xff]
        %v1010 = vld [vmem:[%s278 + $0x12b8] sm:$0xff]
        %v1011 = vld [vmem:[%s278 + $0x12c0] sm:$0xff]
        %v1012 = vld [vmem:[%s278 + $0x12c8] sm:$0xff]
        %v1013 = vld [vmem:[%s278 + $0x12d0] sm:$0xff]
        %v1014 = vld [vmem:[%s278 + $0x12d8] sm:$0xff]
        %v1015 = vld [vmem:[%s278 + $0x12e0] sm:$0xff]
        %v1016 = vld [vmem:[%s278 + $0x12e8] sm:$0xff]
        %v1017 = vld [vmem:[%s278 + $0x12f0] sm:$0xff]
        %v1018 = vld [vmem:[%s278 + $0x12f8] sm:$0xff]
        %v1019 = vld [vmem:[%s278 + $0x1300] sm:$0xff]
        %v1020 = vld [vmem:[%s278 + $0x1308] sm:$0xff]
        %v1021 = vld [vmem:[%s278 + $0x1310] sm:$0xff]
        %v1022 = vld [vmem:[%s278 + $0x1318] sm:$0xff]
        %v1023 = vld [vmem:[%s278 + $0x1320] sm:$0xff]
        %v1024 = vld [vmem:[%s278 + $0x1328] sm:$0xff]
        %v1025 = vld [vmem:[%s278 + $0x1330] sm:$0xff]
        %v1026 = vld [vmem:[%s278 + $0x1338] sm:$0xff]
        %v1027 = vld [vmem:[%s278 + $0x1340] sm:$0xff]
        %v1028 = vld [vmem:[%s278 + $0x1348] sm:$0xff]
        %v1029 = vld [vmem:[%s278 + $0x1350] sm:$0xff]
        %v1030 = vld [vmem:[%s278 + $0x1358] sm:$0xff]
        %v1031 = vld [vmem:[%s278 + $0x1360] sm:$0xff]
        %v1032 = vld [vmem:[%s278 + $0x1368] sm:$0xff]
        %v1033 = vld [vmem:[%s278 + $0x1370] sm:$0xff]
        %v1034 = vld [vmem:[%s278 + $0x1378] sm:$0xff]
        %v1035 = vld [vmem:[%s278 + $0x1380] sm:$0xff]
        %v1036 = vld [vmem:[%s278 + $0x1388] sm:$0xff]
        %v1037 = vld [vmem:[%s278 + $0x1390] sm:$0xff]
        %v1038 = vld [vmem:[%s278 + $0x1398] sm:$0xff]
        %v1039 = vld [vmem:[%s278 + $0x13a0] sm:$0xff]
        %v1040 = vld [vmem:[%s278 + $0x13a8] sm:$0xff]
        %v1041 = vld [vmem:[%s278 + $0x13b0] sm:$0xff]
        %v1042 = vld [vmem:[%s278 + $0x13b8] sm:$0xff]
        %v1043 = vld [vmem:[%s278 + $0x13c0] sm:$0xff]
        %v1044 = vld [vmem:[%s278 + $0x13c8] sm:$0xff]
        %v1045 = vld [vmem:[%s278 + $0x13d0] sm:$0xff]
        %v1046 = vld [vmem:[%s278 + $0x13d8] sm:$0xff]
        %v1047 = vld [vmem:[%s278 + $0x13e0] sm:$0xff]
        %v1048 = vld [vmem:[%s278 + $0x13e8] sm:$0xff]
        %v1049 = vld [vmem:[%s278 + $0x13f0] sm:$0xff]
        %v1050 = vld [vmem:[%s278 + $0x13f8] sm:$0xff]
        %v1051 = vld [vmem:[%s278 + $0x1400] sm:$0xff]
        %v1052 = vld [vmem:[%s278 + $0x1408] sm:$0xff]
        %v1053 = vld [vmem:[%s278 + $0x1410] sm:$0xff]
        %v1054 = vld [vmem:[%s278 + $0x1418] sm:$0xff]
        %v1055 = vld [vmem:[%s278 + $0x1420] sm:$0xff]
        %v1056 = vld [vmem:[%s278 + $0x1428] sm:$0xff]
        %v1057 = vld [vmem:[%s278 + $0x1430] sm:$0xff]
        %v1058 = vld [vmem:[%s278 + $0x1438] sm:$0xff]
        %v1059 = vld [vmem:[%s278 + $0x1440] sm:$0xff]
        %v1060 = vld [vmem:[%s278 + $0x1448] sm:$0xff]
        %v1061 = vld [vmem:[%s278 + $0x1450] sm:$0xff]
        %v1062 = vld [vmem:[%s278 + $0x1458] sm:$0xff]
        %v1063 = vld [vmem:[%s278 + $0x1460] sm:$0xff]
        %v1064 = vld [vmem:[%s278 + $0x1468] sm:$0xff]
        %v1065 = vld [vmem:[%s278 + $0x1470] sm:$0xff]
        %v1066 = vld [vmem:[%s278 + $0x1478] sm:$0xff]
        %v1067 = vld [vmem:[%s278 + $0x1480] sm:$0xff]
        %v1068 = vld [vmem:[%s278 + $0x1488] sm:$0xff]
        %v1069 = vld [vmem:[%s278 + $0x1490] sm:$0xff]
        %v1070 = vld [vmem:[%s278 + $0x1498] sm:$0xff]
        %v1071 = vld [vmem:[%s278 + $0x14a0] sm:$0xff]
        %v1072 = vld [vmem:[%s278 + $0x14a8] sm:$0xff]
        %v1073 = vld [vmem:[%s278 + $0x14b0] sm:$0xff]
        %v1074 = vld [vmem:[%s278 + $0x14b8] sm:$0xff]
        %v1075 = vld [vmem:[%s278 + $0x14c0] sm:$0xff]
        %v1076 = vld [vmem:[%s278 + $0x14c8] sm:$0xff]
        %v1077 = vld [vmem:[%s278 + $0x14d0] sm:$0xff]
        %v1078 = vld [vmem:[%s278 + $0x14d8] sm:$0xff]
        %v1079 = vld [vmem:[%s278 + $0x14e0] sm:$0xff]
        %v1080 = vld [vmem:[%s278 + $0x14e8] sm:$0xff]
        %v1081 = vld [vmem:[%s278 + $0x14f0] sm:$0xff]
        %v1082 = vld [vmem:[%s278 + $0x14f8] sm:$0xff]
        %v1083 = vld [vmem:[%s278 + $0x1500] sm:$0xff]
        %v1084 = vld [vmem:[%s278 + $0x1508] sm:$0xff]
        %v1085 = vld [vmem:[%s278 + $0x1510] sm:$0xff]
        %v1086 = vld [vmem:[%s278 + $0x1518] sm:$0xff]
        %v1087 = vld [vmem:[%s278 + $0x1520] sm:$0xff]
        %v1088 = vld [vmem:[%s278 + $0x1528] sm:$0xff]
        %v1089 = vld [vmem:[%s278 + $0x1530] sm:$0xff]
        %v1090 = vld [vmem:[%s278 + $0x1538] sm:$0xff]
        %v1091 = vld [vmem:[%s278 + $0x1540] sm:$0xff]
        %v1092 = vld [vmem:[%s278 + $0x1548] sm:$0xff]
        %v1093 = vld [vmem:[%s278 + $0x1550] sm:$0xff]
        %v1094 = vld [vmem:[%s278 + $0x1558] sm:$0xff]
        %v1095 = vld [vmem:[%s278 + $0x1560] sm:$0xff]
        %v1096 = vld [vmem:[%s278 + $0x1568] sm:$0xff]
        %v1097 = vld [vmem:[%s278 + $0x1570] sm:$0xff]
        %v1098 = vld [vmem:[%s278 + $0x1578] sm:$0xff]
        %v1099 = vld [vmem:[%s278 + $0x1580] sm:$0xff]
        %v1100 = vld [vmem:[%s278 + $0x1588] sm:$0xff]
        %v1101 = vld [vmem:[%s278 + $0x1590] sm:$0xff]
        %v1102 = vld [vmem:[%s278 + $0x1598] sm:$0xff]
        %v1103 = vld [vmem:[%s278 + $0x15a0] sm:$0xff]
        %v1104 = vld [vmem:[%s278 + $0x15a8] sm:$0xff]
        %v1105 = vld [vmem:[%s278 + $0x15b0] sm:$0xff]
        %v1106 = vld [vmem:[%s278 + $0x15b8] sm:$0xff]
        %v1107 = vld [vmem:[%s278 + $0x15c0] sm:$0xff]
        %v1108 = vld [vmem:[%s278 + $0x15c8] sm:$0xff]
        %v1109 = vld [vmem:[%s278 + $0x15d0] sm:$0xff]
        %v1110 = vld [vmem:[%s278 + $0x15d8] sm:$0xff]
        %v1111 = vld [vmem:[%s278 + $0x15e0] sm:$0xff]
        %v1112 = vld [vmem:[%s278 + $0x15e8] sm:$0xff]
        %v1113 = vld [vmem:[%s278 + $0x15f0] sm:$0xff]
        %v1114 = vld [vmem:[%s278 + $0x15f8] sm:$0xff]
        %v1115 = vld [vmem:[%s278 + $0x1600] sm:$0xff]
        %v1116 = vld [vmem:[%s278 + $0x1608] sm:$0xff]
        %v1117 = vld [vmem:[%s278 + $0x1610] sm:$0xff]
        %v1118 = vld [vmem:[%s278 + $0x1618] sm:$0xff]
        %v1119 = vld [vmem:[%s278 + $0x1620] sm:$0xff]
        %v1120 = vld [vmem:[%s278 + $0x1628] sm:$0xff]
        %v1121 = vld [vmem:[%s278 + $0x1630] sm:$0xff]
        %v1122 = vld [vmem:[%s278 + $0x1638] sm:$0xff]
        %v1123 = vld [vmem:[%s278 + $0x1640] sm:$0xff]
        %v1124 = vld [vmem:[%s278 + $0x1648] sm:$0xff]
        %v1125 = vld [vmem:[%s278 + $0x1650] sm:$0xff]
        %v1126 = vld [vmem:[%s278 + $0x1658] sm:$0xff]
        %v1127 = vld [vmem:[%s278 + $0x1660] sm:$0xff]
        %v1128 = vld [vmem:[%s278 + $0x1668] sm:$0xff]
        %v1129 = vld [vmem:[%s278 + $0x1670] sm:$0xff]
        %v1130 = vld [vmem:[%s278 + $0x1678] sm:$0xff]
        %v1131 = vld [vmem:[%s278 + $0x1680] sm:$0xff]
        %v1132 = vld [vmem:[%s278 + $0x1688] sm:$0xff]
        %v1133 = vld [vmem:[%s278 + $0x1690] sm:$0xff]
        %v1134 = vld [vmem:[%s278 + $0x1698] sm:$0xff]
        %v1135 = vld [vmem:[%s278 + $0x16a0] sm:$0xff]
        %v1136 = vld [vmem:[%s278 + $0x16a8] sm:$0xff]
        %v1137 = vld [vmem:[%s278 + $0x16b0] sm:$0xff]
        %v1138 = vld [vmem:[%s278 + $0x16b8] sm:$0xff]
        %v1139 = vld [vmem:[%s278 + $0x16c0] sm:$0xff]
        %v1140 = vld [vmem:[%s278 + $0x16c8] sm:$0xff]
        %v1141 = vld [vmem:[%s278 + $0x16d0] sm:$0xff]
        %v1142 = vld [vmem:[%s278 + $0x16d8] sm:$0xff]
        %v1143 = vld [vmem:[%s278 + $0x16e0] sm:$0xff]
        %v1144 = vld [vmem:[%s278 + $0x16e8] sm:$0xff]
        %v1145 = vld [vmem:[%s278 + $0x16f0] sm:$0xff]
        %v1146 = vld [vmem:[%s278 + $0x16f8] sm:$0xff]
        %v1147 = vld [vmem:[%s278 + $0x1700] sm:$0xff]
        %v1148 = vld [vmem:[%s278 + $0x1708] sm:$0xff]
        %v1149 = vld [vmem:[%s278 + $0x1710] sm:$0xff]
        %v1150 = vld [vmem:[%s278 + $0x1718] sm:$0xff]
        %v1151 = vld [vmem:[%s278 + $0x1720] sm:$0xff]
        %v1152 = vld [vmem:[%s278 + $0x1728] sm:$0xff]
        %v1153 = vld [vmem:[%s278 + $0x1730] sm:$0xff]
        %v1154 = vld [vmem:[%s278 + $0x1738] sm:$0xff]
        %v1155 = vld [vmem:[%s278 + $0x1740] sm:$0xff]
        %v1156 = vld [vmem:[%s278 + $0x1748] sm:$0xff]
        %v1157 = vld [vmem:[%s278 + $0x1750] sm:$0xff]
        %v1158 = vld [vmem:[%s278 + $0x1758] sm:$0xff]
        %v1159 = vld [vmem:[%s278 + $0x1760] sm:$0xff]
        %v1160 = vld [vmem:[%s278 + $0x1768] sm:$0xff]
        %v1161 = vld [vmem:[%s278 + $0x1770] sm:$0xff]
        %v1162 = vld [vmem:[%s278 + $0x1778] sm:$0xff]
        %v1163 = vld [vmem:[%s278 + $0x1780] sm:$0xff]
        %v1164 = vld [vmem:[%s278 + $0x1788] sm:$0xff]
        %v1165 = vld [vmem:[%s278 + $0x1790] sm:$0xff]
        %v1166 = vld [vmem:[%s278 + $0x1798] sm:$0xff]
        %v1167 = vld [vmem:[%s278 + $0x17a0] sm:$0xff]
        %v1168 = vld [vmem:[%s278 + $0x17a8] sm:$0xff]
        %v1169 = vld [vmem:[%s278 + $0x17b0] sm:$0xff]
        %v1170 = vld [vmem:[%s278 + $0x17b8] sm:$0xff]
        %v1171 = vld [vmem:[%s278 + $0x17c0] sm:$0xff]
        %v1172 = vld [vmem:[%s278 + $0x17c8] sm:$0xff]
        %v1173 = vld [vmem:[%s278 + $0x17d0] sm:$0xff]
        %v1174 = vld [vmem:[%s278 + $0x17d8] sm:$0xff]
        %v1175 = vld [vmem:[%s278 + $0x17e0] sm:$0xff]
        %v1176 = vld [vmem:[%s278 + $0x17e8] sm:$0xff]
        %v1177 = vld [vmem:[%s278 + $0x17f0] sm:$0xff]
        %v1178 = vld [vmem:[%s278 + $0x17f8] sm:$0xff]
        %v1179 = vld [vmem:[%s278 + $0x1800] sm:$0xff]
        %v1180 = vld [vmem:[%s278 + $0x1808] sm:$0xff]
        %v1181 = vld [vmem:[%s278 + $0x1810] sm:$0xff]
        %v1182 = vld [vmem:[%s278 + $0x1818] sm:$0xff]
        %v1183 = vld [vmem:[%s278 + $0x1820] sm:$0xff]
        %v1184 = vld [vmem:[%s278 + $0x1828] sm:$0xff]
        %v1185 = vld [vmem:[%s278 + $0x1830] sm:$0xff]
        %v1186 = vld [vmem:[%s278 + $0x1838] sm:$0xff]
        %v1187 = vld [vmem:[%s278 + $0x1840] sm:$0xff]
        %v1188 = vld [vmem:[%s278 + $0x1848] sm:$0xff]
        %v1189 = vld [vmem:[%s278 + $0x1850] sm:$0xff]
        %v1190 = vld [vmem:[%s278 + $0x1858] sm:$0xff]
        %v1191 = vld [vmem:[%s278 + $0x1860] sm:$0xff]
        %v1192 = vld [vmem:[%s278 + $0x1868] sm:$0xff]
        %v1193 = vld [vmem:[%s278 + $0x1870] sm:$0xff]
        %v1194 = vld [vmem:[%s278 + $0x1878] sm:$0xff]
        %v1195 = vld [vmem:[%s278 + $0x1880] sm:$0xff]
        %v1196 = vld [vmem:[%s278 + $0x1888] sm:$0xff]
        %v1197 = vld [vmem:[%s278 + $0x1890] sm:$0xff]
        %v1198 = vld [vmem:[%s278 + $0x1898] sm:$0xff]
        %v1199 = vld [vmem:[%s278 + $0x18a0] sm:$0xff]
        %v1200 = vld [vmem:[%s278 + $0x18a8] sm:$0xff]
        %v1201 = vld [vmem:[%s278 + $0x18b0] sm:$0xff]
        %v1202 = vld [vmem:[%s278 + $0x18b8] sm:$0xff]
        %v1203 = vld [vmem:[%s278 + $0x18c0] sm:$0xff]
        %v1204 = vld [vmem:[%s278 + $0x18c8] sm:$0xff]
        %v1205 = vld [vmem:[%s278 + $0x18d0] sm:$0xff]
        %v1206 = vld [vmem:[%s278 + $0x18d8] sm:$0xff]
        %v1207 = vld [vmem:[%s278 + $0x18e0] sm:$0xff]
        %v1208 = vld [vmem:[%s278 + $0x18e8] sm:$0xff]
        %v1209 = vld [vmem:[%s278 + $0x18f0] sm:$0xff]
        %v1210 = vld [vmem:[%s278 + $0x18f8] sm:$0xff]
        %v1211 = vld [vmem:[%s278 + $0x1900] sm:$0xff]
        %v1212 = vld [vmem:[%s278 + $0x1908] sm:$0xff]
        %v1213 = vld [vmem:[%s278 + $0x1910] sm:$0xff]
        %v1214 = vld [vmem:[%s278 + $0x1918] sm:$0xff]
        %v1215 = vld [vmem:[%s278 + $0x1920] sm:$0xff]
        %v1216 = vld [vmem:[%s278 + $0x1928] sm:$0xff]
        %v1217 = vld [vmem:[%s278 + $0x1930] sm:$0xff]
        %v1218 = vld [vmem:[%s278 + $0x1938] sm:$0xff]
        %v1219 = vld [vmem:[%s278 + $0x1940] sm:$0xff]
        %v1220 = vld [vmem:[%s278 + $0x1948] sm:$0xff]
        %v1221 = vld [vmem:[%s278 + $0x1950] sm:$0xff]
        %v1222 = vld [vmem:[%s278 + $0x1958] sm:$0xff]
        %v1223 = vld [vmem:[%s278 + $0x1960] sm:$0xff]
        %v1224 = vld [vmem:[%s278 + $0x1968] sm:$0xff]
        %v1225 = vld [vmem:[%s278 + $0x1970] sm:$0xff]
        %v1226 = vld [vmem:[%s278 + $0x1978] sm:$0xff]
        %v1227 = vld [vmem:[%s278 + $0x1980] sm:$0xff]
        %v1228 = vld [vmem:[%s278 + $0x1988] sm:$0xff]
        %v1229 = vld [vmem:[%s278 + $0x1990] sm:$0xff]
        %v1230 = vld [vmem:[%s278 + $0x1998] sm:$0xff]
        %v1231 = vld [vmem:[%s278 + $0x19a0] sm:$0xff]
        %v1232 = vld [vmem:[%s278 + $0x19a8] sm:$0xff]
        %v1233 = vld [vmem:[%s278 + $0x19b0] sm:$0xff]
        %v1234 = vld [vmem:[%s278 + $0x19b8] sm:$0xff]
        %v1235 = vld [vmem:[%s278 + $0x19c0] sm:$0xff]
        %v1236 = vld [vmem:[%s278 + $0x19c8] sm:$0xff]
        %v1237 = vld [vmem:[%s278 + $0x19d0] sm:$0xff]
        %v1238 = vld [vmem:[%s278 + $0x19d8] sm:$0xff]
        %v1239 = vld [vmem:[%s278 + $0x19e0] sm:$0xff]
        %v1240 = vld [vmem:[%s278 + $0x19e8] sm:$0xff]
        %v1241 = vld [vmem:[%s278 + $0x19f0] sm:$0xff]
        %v1242 = vld [vmem:[%s278 + $0x19f8] sm:$0xff]
        %v1243 = vld [vmem:[%s278 + $0x1a00] sm:$0xff]
        %v1244 = vld [vmem:[%s278 + $0x1a08] sm:$0xff]
        %v1245 = vld [vmem:[%s278 + $0x1a10] sm:$0xff]
        %v1246 = vld [vmem:[%s278 + $0x1a18] sm:$0xff]
        %v1247 = vld [vmem:[%s278 + $0x1a20] sm:$0xff]
        %v1248 = vld [vmem:[%s278 + $0x1a28] sm:$0xff]
        %v1249 = vld [vmem:[%s278 + $0x1a30] sm:$0xff]
        %v1250 = vld [vmem:[%s278 + $0x1a38] sm:$0xff]
        %v1251 = vld [vmem:[%s278 + $0x1a40] sm:$0xff]
        %v1252 = vld [vmem:[%s278 + $0x1a48] sm:$0xff]
        %v1253 = vld [vmem:[%s278 + $0x1a50] sm:$0xff]
        %v1254 = vld [vmem:[%s278 + $0x1a58] sm:$0xff]
        %v1255 = vld [vmem:[%s278 + $0x1a60] sm:$0xff]
        %v1256 = vld [vmem:[%s278 + $0x1a68] sm:$0xff]
        %v1257 = vld [vmem:[%s278 + $0x1a70] sm:$0xff]
        %v1258 = vld [vmem:[%s278 + $0x1a78] sm:$0xff]
        %v1259 = vld [vmem:[%s278 + $0x1a80] sm:$0xff]
        %v1260 = vld [vmem:[%s278 + $0x1a88] sm:$0xff]
        %v1261 = vld [vmem:[%s278 + $0x1a90] sm:$0xff]
        %v1262 = vld [vmem:[%s278 + $0x1a98] sm:$0xff]
        %v1263 = vld [vmem:[%s278 + $0x1aa0] sm:$0xff]
        %v1264 = vld [vmem:[%s278 + $0x1aa8] sm:$0xff]
        %v1265 = vld [vmem:[%s278 + $0x1ab0] sm:$0xff]
        %v1266 = vld [vmem:[%s278 + $0x1ab8] sm:$0xff]
        %v1267 = vld [vmem:[%s278 + $0x1ac0] sm:$0xff]
        %v1268 = vld [vmem:[%s278 + $0x1ac8] sm:$0xff]
        %v1269 = vld [vmem:[%s278 + $0x1ad0] sm:$0xff]
        %v1270 = vld [vmem:[%s278 + $0x1ad8] sm:$0xff]
        %v1271 = vld [vmem:[%s278 + $0x1ae0] sm:$0xff]
        %v1272 = vld [vmem:[%s278 + $0x1ae8] sm:$0xff]
        %v1273 = vld [vmem:[%s278 + $0x1af0] sm:$0xff]
        %v1274 = vld [vmem:[%s278 + $0x1af8] sm:$0xff]
        %v1275 = vld [vmem:[%s278 + $0x1b00] sm:$0xff]
        %v1276 = vld [vmem:[%s278 + $0x1b08] sm:$0xff]
        %v1277 = vld [vmem:[%s278 + $0x1b10] sm:$0xff]
        %v1278 = vld [vmem:[%s278 + $0x1b18] sm:$0xff]
        %v1279 = vld [vmem:[%s278 + $0x1b20] sm:$0xff]
        %v1280 = vld [vmem:[%s278 + $0x1b28] sm:$0xff]
        %v1281 = vld [vmem:[%s278 + $0x1b30] sm:$0xff]
        %v1282 = vld [vmem:[%s278 + $0x1b38] sm:$0xff]
        %v1283 = vld [vmem:[%s278 + $0x1b40] sm:$0xff]
        %v1284 = vld [vmem:[%s278 + $0x1b48] sm:$0xff]
        %v1285 = vld [vmem:[%s278 + $0x1b50] sm:$0xff]
        %v1286 = vld [vmem:[%s278 + $0x1b58] sm:$0xff]
        %v1287 = vld [vmem:[%s278 + $0x1b60] sm:$0xff]
        %v1288 = vld [vmem:[%s278 + $0x1b68] sm:$0xff]
        %v1289 = vld [vmem:[%s278 + $0x1b70] sm:$0xff]
        %v1290 = vld [vmem:[%s278 + $0x1b78] sm:$0xff]
        %v1291 = vld [vmem:[%s278 + $0x1b80] sm:$0xff]
        %v1292 = vld [vmem:[%s278 + $0x1b88] sm:$0xff]
        %v1293 = vld [vmem:[%s278 + $0x1b90] sm:$0xff]
        %v1294 = vld [vmem:[%s278 + $0x1b98] sm:$0xff]
        %v1295 = vld [vmem:[%s278 + $0x1ba0] sm:$0xff]
        %v1296 = vld [vmem:[%s278 + $0x1ba8] sm:$0xff]
        %v1297 = vld [vmem:[%s278 + $0x1bb0] sm:$0xff]
        %v1298 = vld [vmem:[%s278 + $0x1bb8] sm:$0xff]
        %v1299 = vld [vmem:[%s278 + $0x1bc0] sm:$0xff]
        %v1300 = vld [vmem:[%s278 + $0x1bc8] sm:$0xff]
        %v1301 = vld [vmem:[%s278 + $0x1bd0] sm:$0xff]
        %v1302 = vld [vmem:[%s278 + $0x1bd8] sm:$0xff]
        %v1303 = vld [vmem:[%s278 + $0x1be0] sm:$0xff]
        %v1304 = vld [vmem:[%s278 + $0x1be8] sm:$0xff]
        %v1305 = vld [vmem:[%s278 + $0x1bf0] sm:$0xff]
        %v1306 = vld [vmem:[%s278 + $0x1bf8] sm:$0xff]
        %v1307 = vld [vmem:[%s278 + $0x1c00] sm:$0xff]
        %v1308 = vld [vmem:[%s278 + $0x1c08] sm:$0xff]
        %v1309 = vld [vmem:[%s278 + $0x1c10] sm:$0xff]
        %v1310 = vld [vmem:[%s278 + $0x1c18] sm:$0xff]
        %v1311 = vld [vmem:[%s278 + $0x1c20] sm:$0xff]
        %v1312 = vld [vmem:[%s278 + $0x1c28] sm:$0xff]
        %v1313 = vld [vmem:[%s278 + $0x1c30] sm:$0xff]
        %v1314 = vld [vmem:[%s278 + $0x1c38] sm:$0xff]
        %v1315 = vld [vmem:[%s278 + $0x1c40] sm:$0xff]
        %v1316 = vld [vmem:[%s278 + $0x1c48] sm:$0xff]
        %v1317 = vld [vmem:[%s278 + $0x1c50] sm:$0xff]
        %v1318 = vld [vmem:[%s278 + $0x1c58] sm:$0xff]
        %v1319 = vld [vmem:[%s278 + $0x1c60] sm:$0xff]
        %v1320 = vld [vmem:[%s278 + $0x1c68] sm:$0xff]
        %v1321 = vld [vmem:[%s278 + $0x1c70] sm:$0xff]
        %v1322 = vld [vmem:[%s278 + $0x1c78] sm:$0xff]
        %v1323 = vld [vmem:[%s278 + $0x1c80] sm:$0xff]
        %v1324 = vld [vmem:[%s278 + $0x1c88] sm:$0xff]
        %v1325 = vld [vmem:[%s278 + $0x1c90] sm:$0xff]
        %v1326 = vld [vmem:[%s278 + $0x1c98] sm:$0xff]
        %v1327 = vld [vmem:[%s278 + $0x1ca0] sm:$0xff]
        %v1328 = vld [vmem:[%s278 + $0x1ca8] sm:$0xff]
        %v1329 = vld [vmem:[%s278 + $0x1cb0] sm:$0xff]
        %v1330 = vld [vmem:[%s278 + $0x1cb8] sm:$0xff]
        %v1331 = vld [vmem:[%s278 + $0x1cc0] sm:$0xff]
        %v1332 = vld [vmem:[%s278 + $0x1cc8] sm:$0xff]
        %v1333 = vld [vmem:[%s278 + $0x1cd0] sm:$0xff]
        %v1334 = vld [vmem:[%s278 + $0x1cd8] sm:$0xff]
        %v1335 = vld [vmem:[%s278 + $0x1ce0] sm:$0xff]
        %v1336 = vld [vmem:[%s278 + $0x1ce8] sm:$0xff]
        %v1337 = vld [vmem:[%s278 + $0x1cf0] sm:$0xff]
        %v1338 = vld [vmem:[%s278 + $0x1cf8] sm:$0xff]
        %v1339 = vld [vmem:[%s278 + $0x1d00] sm:$0xff]
        %v1340 = vld [vmem:[%s278 + $0x1d08] sm:$0xff]
        %v1341 = vld [vmem:[%s278 + $0x1d10] sm:$0xff]
        %v1342 = vld [vmem:[%s278 + $0x1d18] sm:$0xff]
        %v1343 = vld [vmem:[%s278 + $0x1d20] sm:$0xff]
        %v1344 = vld [vmem:[%s278 + $0x1d28] sm:$0xff]
        %v1345 = vld [vmem:[%s278 + $0x1d30] sm:$0xff]
        %v1346 = vld [vmem:[%s278 + $0x1d38] sm:$0xff]
        %v1347 = vld [vmem:[%s278 + $0x1d40] sm:$0xff]
        %v1348 = vld [vmem:[%s278 + $0x1d48] sm:$0xff]
        %v1349 = vld [vmem:[%s278 + $0x1d50] sm:$0xff]
        %v1350 = vld [vmem:[%s278 + $0x1d58] sm:$0xff]
        %v1351 = vld [vmem:[%s278 + $0x1d60] sm:$0xff]
        %v1352 = vld [vmem:[%s278 + $0x1d68] sm:$0xff]
        %v1353 = vld [vmem:[%s278 + $0x1d70] sm:$0xff]
        %v1354 = vld [vmem:[%s278 + $0x1d78] sm:$0xff]
        %v1355 = vld [vmem:[%s278 + $0x1d80] sm:$0xff]
        %v1356 = vld [vmem:[%s278 + $0x1d88] sm:$0xff]
        %v1357 = vld [vmem:[%s278 + $0x1d90] sm:$0xff]
        %v1358 = vld [vmem:[%s278 + $0x1d98] sm:$0xff]
        %v1359 = vld [vmem:[%s278 + $0x1da0] sm:$0xff]
        %v1360 = vld [vmem:[%s278 + $0x1da8] sm:$0xff]
        %v1361 = vld [vmem:[%s278 + $0x1db0] sm:$0xff]
        %v1362 = vld [vmem:[%s278 + $0x1db8] sm:$0xff]
        %v1363 = vld [vmem:[%s278 + $0x1dc0] sm:$0xff]
        %v1364 = vld [vmem:[%s278 + $0x1dc8] sm:$0xff]
        %v1365 = vld [vmem:[%s278 + $0x1dd0] sm:$0xff]
        %v1366 = vld [vmem:[%s278 + $0x1dd8] sm:$0xff]
        %v1367 = vld [vmem:[%s278 + $0x1de0] sm:$0xff]
        %v1368 = vld [vmem:[%s278 + $0x1de8] sm:$0xff]
        %v1369 = vld [vmem:[%s278 + $0x1df0] sm:$0xff]
        %v1370 = vld [vmem:[%s278 + $0x1df8] sm:$0xff]
        %v1371 = vld [vmem:[%s278 + $0x1e00] sm:$0xff]
        %v1372 = vld [vmem:[%s278 + $0x1e08] sm:$0xff]
        %v1373 = vld [vmem:[%s278 + $0x1e10] sm:$0xff]
        %v1374 = vld [vmem:[%s278 + $0x1e18] sm:$0xff]
        %v1375 = vld [vmem:[%s278 + $0x1e20] sm:$0xff]
        %v1376 = vld [vmem:[%s278 + $0x1e28] sm:$0xff]
        %v1377 = vld [vmem:[%s278 + $0x1e30] sm:$0xff]
        %v1378 = vld [vmem:[%s278 + $0x1e38] sm:$0xff]
        %v1379 = vld [vmem:[%s278 + $0x1e40] sm:$0xff]
        %v1380 = vld [vmem:[%s278 + $0x1e48] sm:$0xff]
        %v1381 = vld [vmem:[%s278 + $0x1e50] sm:$0xff]
        %v1382 = vld [vmem:[%s278 + $0x1e58] sm:$0xff]
        %v1383 = vld [vmem:[%s278 + $0x1e60] sm:$0xff]
        %v1384 = vld [vmem:[%s278 + $0x1e68] sm:$0xff]
        %v1385 = vld [vmem:[%s278 + $0x1e70] sm:$0xff]
        %v1386 = vld [vmem:[%s278 + $0x1e78] sm:$0xff]
        %v1387 = vld [vmem:[%s278 + $0x1e80] sm:$0xff]
        %v1388 = vld [vmem:[%s278 + $0x1e88] sm:$0xff]
        %v1389 = vld [vmem:[%s278 + $0x1e90] sm:$0xff]
        %v1390 = vld [vmem:[%s278 + $0x1e98] sm:$0xff]
        %v1391 = vld [vmem:[%s278 + $0x1ea0] sm:$0xff]
        %v1392 = vld [vmem:[%s278 + $0x1ea8] sm:$0xff]
        %v1393 = vld [vmem:[%s278 + $0x1eb0] sm:$0xff]
        %v1394 = vld [vmem:[%s278 + $0x1eb8] sm:$0xff]
        %v1395 = vld [vmem:[%s278 + $0x1ec0] sm:$0xff]
        %v1396 = vld [vmem:[%s278 + $0x1ec8] sm:$0xff]
        %v1397 = vld [vmem:[%s278 + $0x1ed0] sm:$0xff]
        %v1398 = vld [vmem:[%s278 + $0x1ed8] sm:$0xff]
        %v1399 = vld [vmem:[%s278 + $0x1ee0] sm:$0xff]
        %v1400 = vld [vmem:[%s278 + $0x1ee8] sm:$0xff]
        %v1401 = vld [vmem:[%s278 + $0x1ef0] sm:$0xff]
        %v1402 = vld [vmem:[%s278 + $0x1ef8] sm:$0xff]
        %v1403 = vld [vmem:[%s278 + $0x1f00] sm:$0xff]
        %v1404 = vld [vmem:[%s278 + $0x1f08] sm:$0xff]
        %v1405 = vld [vmem:[%s278 + $0x1f10] sm:$0xff]
        %v1406 = vld [vmem:[%s278 + $0x1f18] sm:$0xff]
        %v1407 = vld [vmem:[%s278 + $0x1f20] sm:$0xff]
        %v1408 = vld [vmem:[%s278 + $0x1f28] sm:$0xff]
        %v1409 = vld [vmem:[%s278 + $0x1f30] sm:$0xff]
        %v1410 = vld [vmem:[%s278 + $0x1f38] sm:$0xff]
        %v1411 = vld [vmem:[%s278 + $0x1f40] sm:$0xff]
        %v1412 = vld [vmem:[%s278 + $0x1f48] sm:$0xff]
        %v1413 = vld [vmem:[%s278 + $0x1f50] sm:$0xff]
        %v1414 = vld [vmem:[%s278 + $0x1f58] sm:$0xff]
        %v1415 = vld [vmem:[%s278 + $0x1f60] sm:$0xff]
        %v1416 = vld [vmem:[%s278 + $0x1f68] sm:$0xff]
        %v1417 = vld [vmem:[%s278 + $0x1f70] sm:$0xff]
        %v1418 = vld [vmem:[%s278 + $0x1f78] sm:$0xff]
        %v1419 = vld [vmem:[%s278 + $0x1f80] sm:$0xff]
        %v1420 = vld [vmem:[%s278 + $0x1f88] sm:$0xff]
        %v1421 = vld [vmem:[%s278 + $0x1f90] sm:$0xff]
        %v1422 = vld [vmem:[%s278 + $0x1f98] sm:$0xff]
        %v1423 = vld [vmem:[%s278 + $0x1fa0] sm:$0xff]
        %v1424 = vld [vmem:[%s278 + $0x1fa8] sm:$0xff]
        %v1425 = vld [vmem:[%s278 + $0x1fb0] sm:$0xff]
        %v1426 = vld [vmem:[%s278 + $0x1fb8] sm:$0xff]
        %v1427 = vld [vmem:[%s278 + $0x1fc0] sm:$0xff]
        %v1428 = vld [vmem:[%s278 + $0x1fc8] sm:$0xff]
        %v1429 = vld [vmem:[%s278 + $0x1fd0] sm:$0xff]
        %v1430 = vld [vmem:[%s278 + $0x1fd8] sm:$0xff]
        %v1431 = vld [vmem:[%s278 + $0x1fe0] sm:$0xff]
        %v1432 = vld [vmem:[%s278 + $0x1fe8] sm:$0xff]
        %v1433 = vld [vmem:[%s278 + $0x1ff0] sm:$0xff]
        %v1434 = vld [vmem:[%s278 + $0x1ff8] sm:$0xff]
        %v1451 = vunpack.c.l.b16 %v379
        %v1452 = vunpack.c.h.b16 %v379
        %v1453 = vunpack.c.l.b16 %v380
        %v1454 = vunpack.c.h.b16 %v380
        %v1455 = vunpack.c.l.b16 %v381
        %v1456 = vunpack.c.h.b16 %v381
        %v1457 = vunpack.c.l.b16 %v382
        %v1458 = vunpack.c.h.b16 %v382
        %v1459 = vunpack.c.l.b16 %v383
        %v1460 = vunpack.c.h.b16 %v383
        %v1461 = vunpack.c.l.b16 %v384
        %v1462 = vunpack.c.h.b16 %v384
        %v1463 = vunpack.c.l.b16 %v385
        %v1464 = vunpack.c.h.b16 %v385
        %v1465 = vunpack.c.l.b16 %v386
        %v1466 = vunpack.c.h.b16 %v386
        %v1467 = vunpack.c.l.b16 %v387
        %v1468 = vunpack.c.h.b16 %v387
        %v1469 = vunpack.c.l.b16 %v388
        %v1470 = vunpack.c.h.b16 %v388
        %v1471 = vunpack.c.l.b16 %v389
        %v1472 = vunpack.c.h.b16 %v389
        %v1473 = vunpack.c.l.b16 %v390
        %v1474 = vunpack.c.h.b16 %v390
        %v1475 = vunpack.c.l.b16 %v391
        %v1476 = vunpack.c.h.b16 %v391
        %v1477 = vunpack.c.l.b16 %v392
        %v1478 = vunpack.c.h.b16 %v392
        %v1479 = vunpack.c.l.b16 %v393
        %v1480 = vunpack.c.h.b16 %v393
        %v1481 = vunpack.c.l.b16 %v394
        %v1482 = vunpack.c.h.b16 %v394
        %v1483 = vpack.c.b16 %v1467, %v1451
        %v1484 = vpack.c.b16 %v1468, %v1452
        %v1485 = vpack.c.b16 %v1469, %v1453
        %v1486 = vpack.c.b16 %v1470, %v1454
        %v1487 = vpack.c.b16 %v1471, %v1455
        %v1488 = vpack.c.b16 %v1472, %v1456
        %v1489 = vpack.c.b16 %v1473, %v1457
        %v1490 = vpack.c.b16 %v1474, %v1458
        %v1491 = vpack.c.b16 %v1475, %v1459
        %v1492 = vpack.c.b16 %v1476, %v1460
        %v1493 = vpack.c.b16 %v1477, %v1461
        %v1494 = vpack.c.b16 %v1478, %v1462
        %v1495 = vpack.c.b16 %v1479, %v1463
        %v1496 = vpack.c.b16 %v1480, %v1464
        %v1497 = vpack.c.b16 %v1481, %v1465
        %v1498 = vpack.c.b16 %v1482, %v1466
        %v2539 = vunpack.c.l.b16 %v411
        %v2540 = vunpack.c.h.b16 %v411
        %v2541 = vunpack.c.l.b16 %v412
        %v2542 = vunpack.c.h.b16 %v412
        %v2543 = vunpack.c.l.b16 %v413
        %v2544 = vunpack.c.h.b16 %v413
        %v2545 = vunpack.c.l.b16 %v414
        %v2546 = vunpack.c.h.b16 %v414
        %v2547 = vunpack.c.l.b16 %v415
        %v2548 = vunpack.c.h.b16 %v415
        %v2549 = vunpack.c.l.b16 %v416
        %v2550 = vunpack.c.h.b16 %v416
        %v2551 = vunpack.c.l.b16 %v417
        %v2552 = vunpack.c.h.b16 %v417
        %v2553 = vunpack.c.l.b16 %v418
        %v2554 = vunpack.c.h.b16 %v418
        %v2555 = vunpack.c.l.b16 %v419
        %v2556 = vunpack.c.h.b16 %v419
        %v2557 = vunpack.c.l.b16 %v420
        %v2558 = vunpack.c.h.b16 %v420
        %v2559 = vunpack.c.l.b16 %v421
        %v2560 = vunpack.c.h.b16 %v421
        %v2561 = vunpack.c.l.b16 %v422
        %v2562 = vunpack.c.h.b16 %v422
        %v2563 = vunpack.c.l.b16 %v423
        %v2564 = vunpack.c.h.b16 %v423
        %v2565 = vunpack.c.l.b16 %v424
        %v2566 = vunpack.c.h.b16 %v424
        %v2567 = vunpack.c.l.b16 %v425
        %v2568 = vunpack.c.h.b16 %v425
        %v2569 = vunpack.c.l.b16 %v426
        %v2570 = vunpack.c.h.b16 %v426
        %v2571 = vunpack.c.l.b16 %v427
        %v2572 = vunpack.c.h.b16 %v427
        %v2573 = vunpack.c.l.b16 %v428
        %v2574 = vunpack.c.h.b16 %v428
        %v2575 = vunpack.c.l.b16 %v429
        %v2576 = vunpack.c.h.b16 %v429
        %v2577 = vunpack.c.l.b16 %v430
        %v2578 = vunpack.c.h.b16 %v430
        %v2579 = vunpack.c.l.b16 %v431
        %v2580 = vunpack.c.h.b16 %v431
        %v2581 = vunpack.c.l.b16 %v432
        %v2582 = vunpack.c.h.b16 %v432
        %v2583 = vunpack.c.l.b16 %v433
        %v2584 = vunpack.c.h.b16 %v433
        %v2585 = vunpack.c.l.b16 %v434
        %v2586 = vunpack.c.h.b16 %v434
        %v2587 = vunpack.c.l.b16 %v435
        %v2588 = vunpack.c.h.b16 %v435
        %v2589 = vunpack.c.l.b16 %v436
        %v2590 = vunpack.c.h.b16 %v436
        %v2591 = vunpack.c.l.b16 %v437
        %v2592 = vunpack.c.h.b16 %v437
        %v2593 = vunpack.c.l.b16 %v438
        %v2594 = vunpack.c.h.b16 %v438
        %v2595 = vunpack.c.l.b16 %v439
        %v2596 = vunpack.c.h.b16 %v439
        %v2597 = vunpack.c.l.b16 %v440
        %v2598 = vunpack.c.h.b16 %v440
        %v2599 = vunpack.c.l.b16 %v441
        %v2600 = vunpack.c.h.b16 %v441
        %v2601 = vunpack.c.l.b16 %v442
        %v2602 = vunpack.c.h.b16 %v442
        %v2603 = vunpack.c.l.b16 %v443
        %v2604 = vunpack.c.h.b16 %v443
        %v2605 = vunpack.c.l.b16 %v444
        %v2606 = vunpack.c.h.b16 %v444
        %v2607 = vunpack.c.l.b16 %v445
        %v2608 = vunpack.c.h.b16 %v445
        %v2609 = vunpack.c.l.b16 %v446
        %v2610 = vunpack.c.h.b16 %v446
        %v2611 = vunpack.c.l.b16 %v447
        %v2612 = vunpack.c.h.b16 %v447
        %v2613 = vunpack.c.l.b16 %v448
        %v2614 = vunpack.c.h.b16 %v448
        %v2615 = vunpack.c.l.b16 %v449
        %v2616 = vunpack.c.h.b16 %v449
        %v2617 = vunpack.c.l.b16 %v450
        %v2618 = vunpack.c.h.b16 %v450
        %v2619 = vunpack.c.l.b16 %v451
        %v2620 = vunpack.c.h.b16 %v451
        %v2621 = vunpack.c.l.b16 %v452
        %v2622 = vunpack.c.h.b16 %v452
        %v2623 = vunpack.c.l.b16 %v453
        %v2624 = vunpack.c.h.b16 %v453
        %v2625 = vunpack.c.l.b16 %v454
        %v2626 = vunpack.c.h.b16 %v454
        %v2627 = vunpack.c.l.b16 %v455
        %v2628 = vunpack.c.h.b16 %v455
        %v2629 = vunpack.c.l.b16 %v456
        %v2630 = vunpack.c.h.b16 %v456
        %v2631 = vunpack.c.l.b16 %v457
        %v2632 = vunpack.c.h.b16 %v457
        %v2633 = vunpack.c.l.b16 %v458
        %v2634 = vunpack.c.h.b16 %v458
        %v2635 = vunpack.c.l.b16 %v459
        %v2636 = vunpack.c.h.b16 %v459
        %v2637 = vunpack.c.l.b16 %v460
        %v2638 = vunpack.c.h.b16 %v460
        %v2639 = vunpack.c.l.b16 %v461
        %v2640 = vunpack.c.h.b16 %v461
        %v2641 = vunpack.c.l.b16 %v462
        %v2642 = vunpack.c.h.b16 %v462
        %v2643 = vunpack.c.l.b16 %v463
        %v2644 = vunpack.c.h.b16 %v463
        %v2645 = vunpack.c.l.b16 %v464
        %v2646 = vunpack.c.h.b16 %v464
        %v2647 = vunpack.c.l.b16 %v465
        %v2648 = vunpack.c.h.b16 %v465
        %v2649 = vunpack.c.l.b16 %v466
        %v2650 = vunpack.c.h.b16 %v466
        %v2651 = vunpack.c.l.b16 %v467
        %v2652 = vunpack.c.h.b16 %v467
        %v2653 = vunpack.c.l.b16 %v468
        %v2654 = vunpack.c.h.b16 %v468
        %v2655 = vunpack.c.l.b16 %v469
        %v2656 = vunpack.c.h.b16 %v469
        %v2657 = vunpack.c.l.b16 %v470
        %v2658 = vunpack.c.h.b16 %v470
        %v2659 = vunpack.c.l.b16 %v471
        %v2660 = vunpack.c.h.b16 %v471
        %v2661 = vunpack.c.l.b16 %v472
        %v2662 = vunpack.c.h.b16 %v472
        %v2663 = vunpack.c.l.b16 %v473
        %v2664 = vunpack.c.h.b16 %v473
        %v2665 = vunpack.c.l.b16 %v474
        %v2666 = vunpack.c.h.b16 %v474
        %v2667 = vunpack.c.l.b16 %v475
        %v2668 = vunpack.c.h.b16 %v475
        %v2669 = vunpack.c.l.b16 %v476
        %v2670 = vunpack.c.h.b16 %v476
        %v2671 = vunpack.c.l.b16 %v477
        %v2672 = vunpack.c.h.b16 %v477
        %v2673 = vunpack.c.l.b16 %v478
        %v2674 = vunpack.c.h.b16 %v478
        %v2675 = vunpack.c.l.b16 %v479
        %v2676 = vunpack.c.h.b16 %v479
        %v2677 = vunpack.c.l.b16 %v480
        %v2678 = vunpack.c.h.b16 %v480
        %v2679 = vunpack.c.l.b16 %v481
        %v2680 = vunpack.c.h.b16 %v481
        %v2681 = vunpack.c.l.b16 %v482
        %v2682 = vunpack.c.h.b16 %v482
        %v2683 = vunpack.c.l.b16 %v483
        %v2684 = vunpack.c.h.b16 %v483
        %v2685 = vunpack.c.l.b16 %v484
        %v2686 = vunpack.c.h.b16 %v484
        %v2687 = vunpack.c.l.b16 %v485
        %v2688 = vunpack.c.h.b16 %v485
        %v2689 = vunpack.c.l.b16 %v486
        %v2690 = vunpack.c.h.b16 %v486
        %v2691 = vunpack.c.l.b16 %v487
        %v2692 = vunpack.c.h.b16 %v487
        %v2693 = vunpack.c.l.b16 %v488
        %v2694 = vunpack.c.h.b16 %v488
        %v2695 = vunpack.c.l.b16 %v489
        %v2696 = vunpack.c.h.b16 %v489
        %v2697 = vunpack.c.l.b16 %v490
        %v2698 = vunpack.c.h.b16 %v490
        %v2699 = vunpack.c.l.b16 %v491
        %v2700 = vunpack.c.h.b16 %v491
        %v2701 = vunpack.c.l.b16 %v492
        %v2702 = vunpack.c.h.b16 %v492
        %v2703 = vunpack.c.l.b16 %v493
        %v2704 = vunpack.c.h.b16 %v493
        %v2705 = vunpack.c.l.b16 %v494
        %v2706 = vunpack.c.h.b16 %v494
        %v2707 = vunpack.c.l.b16 %v495
        %v2708 = vunpack.c.h.b16 %v495
        %v2709 = vunpack.c.l.b16 %v496
        %v2710 = vunpack.c.h.b16 %v496
        %v2711 = vunpack.c.l.b16 %v497
        %v2712 = vunpack.c.h.b16 %v497
        %v2713 = vunpack.c.l.b16 %v498
        %v2714 = vunpack.c.h.b16 %v498
        %v2715 = vunpack.c.l.b16 %v499
        %v2716 = vunpack.c.h.b16 %v499
        %v2717 = vunpack.c.l.b16 %v500
        %v2718 = vunpack.c.h.b16 %v500
        %v2719 = vunpack.c.l.b16 %v501
        %v2720 = vunpack.c.h.b16 %v501
        %v2721 = vunpack.c.l.b16 %v502
        %v2722 = vunpack.c.h.b16 %v502
        %v2723 = vunpack.c.l.b16 %v503
        %v2724 = vunpack.c.h.b16 %v503
        %v2725 = vunpack.c.l.b16 %v504
        %v2726 = vunpack.c.h.b16 %v504
        %v2727 = vunpack.c.l.b16 %v505
        %v2728 = vunpack.c.h.b16 %v505
        %v2729 = vunpack.c.l.b16 %v506
        %v2730 = vunpack.c.h.b16 %v506
        %v2731 = vunpack.c.l.b16 %v507
        %v2732 = vunpack.c.h.b16 %v507
        %v2733 = vunpack.c.l.b16 %v508
        %v2734 = vunpack.c.h.b16 %v508
        %v2735 = vunpack.c.l.b16 %v509
        %v2736 = vunpack.c.h.b16 %v509
        %v2737 = vunpack.c.l.b16 %v510
        %v2738 = vunpack.c.h.b16 %v510
        %v2739 = vunpack.c.l.b16 %v511
        %v2740 = vunpack.c.h.b16 %v511
        %v2741 = vunpack.c.l.b16 %v512
        %v2742 = vunpack.c.h.b16 %v512
        %v2743 = vunpack.c.l.b16 %v513
        %v2744 = vunpack.c.h.b16 %v513
        %v2745 = vunpack.c.l.b16 %v514
        %v2746 = vunpack.c.h.b16 %v514
        %v2747 = vunpack.c.l.b16 %v515
        %v2748 = vunpack.c.h.b16 %v515
        %v2749 = vunpack.c.l.b16 %v516
        %v2750 = vunpack.c.h.b16 %v516
        %v2751 = vunpack.c.l.b16 %v517
        %v2752 = vunpack.c.h.b16 %v517
        %v2753 = vunpack.c.l.b16 %v518
        %v2754 = vunpack.c.h.b16 %v518
        %v2755 = vunpack.c.l.b16 %v519
        %v2756 = vunpack.c.h.b16 %v519
        %v2757 = vunpack.c.l.b16 %v520
        %v2758 = vunpack.c.h.b16 %v520
        %v2759 = vunpack.c.l.b16 %v521
        %v2760 = vunpack.c.h.b16 %v521
        %v2761 = vunpack.c.l.b16 %v522
        %v2762 = vunpack.c.h.b16 %v522
        %v2763 = vunpack.c.l.b16 %v523
        %v2764 = vunpack.c.h.b16 %v523
        %v2765 = vunpack.c.l.b16 %v524
        %v2766 = vunpack.c.h.b16 %v524
        %v2767 = vunpack.c.l.b16 %v525
        %v2768 = vunpack.c.h.b16 %v525
        %v2769 = vunpack.c.l.b16 %v526
        %v2770 = vunpack.c.h.b16 %v526
        %v2771 = vunpack.c.l.b16 %v527
        %v2772 = vunpack.c.h.b16 %v527
        %v2773 = vunpack.c.l.b16 %v528
        %v2774 = vunpack.c.h.b16 %v528
        %v2775 = vunpack.c.l.b16 %v529
        %v2776 = vunpack.c.h.b16 %v529
        %v2777 = vunpack.c.l.b16 %v530
        %v2778 = vunpack.c.h.b16 %v530
        %v2779 = vunpack.c.l.b16 %v531
        %v2780 = vunpack.c.h.b16 %v531
        %v2781 = vunpack.c.l.b16 %v532
        %v2782 = vunpack.c.h.b16 %v532
        %v2783 = vunpack.c.l.b16 %v533
        %v2784 = vunpack.c.h.b16 %v533
        %v2785 = vunpack.c.l.b16 %v534
        %v2786 = vunpack.c.h.b16 %v534
        %v2787 = vunpack.c.l.b16 %v535
        %v2788 = vunpack.c.h.b16 %v535
        %v2789 = vunpack.c.l.b16 %v536
        %v2790 = vunpack.c.h.b16 %v536
        %v2791 = vunpack.c.l.b16 %v537
        %v2792 = vunpack.c.h.b16 %v537
        %v2793 = vunpack.c.l.b16 %v538
        %v2794 = vunpack.c.h.b16 %v538
        %v2795 = vunpack.c.l.b16 %v539
        %v2796 = vunpack.c.h.b16 %v539
        %v2797 = vunpack.c.l.b16 %v540
        %v2798 = vunpack.c.h.b16 %v540
        %v2799 = vunpack.c.l.b16 %v541
        %v2800 = vunpack.c.h.b16 %v541
        %v2801 = vunpack.c.l.b16 %v542
        %v2802 = vunpack.c.h.b16 %v542
        %v2803 = vunpack.c.l.b16 %v543
        %v2804 = vunpack.c.h.b16 %v543
        %v2805 = vunpack.c.l.b16 %v544
        %v2806 = vunpack.c.h.b16 %v544
        %v2807 = vunpack.c.l.b16 %v545
        %v2808 = vunpack.c.h.b16 %v545
        %v2809 = vunpack.c.l.b16 %v546
        %v2810 = vunpack.c.h.b16 %v546
        %v2811 = vunpack.c.l.b16 %v547
        %v2812 = vunpack.c.h.b16 %v547
        %v2813 = vunpack.c.l.b16 %v548
        %v2814 = vunpack.c.h.b16 %v548
        %v2815 = vunpack.c.l.b16 %v549
        %v2816 = vunpack.c.h.b16 %v549
        %v2817 = vunpack.c.l.b16 %v550
        %v2818 = vunpack.c.h.b16 %v550
        %v2819 = vunpack.c.l.b16 %v551
        %v2820 = vunpack.c.h.b16 %v551
        %v2821 = vunpack.c.l.b16 %v552
        %v2822 = vunpack.c.h.b16 %v552
        %v2823 = vunpack.c.l.b16 %v553
        %v2824 = vunpack.c.h.b16 %v553
        %v2825 = vunpack.c.l.b16 %v554
        %v2826 = vunpack.c.h.b16 %v554
        %v2827 = vunpack.c.l.b16 %v555
        %v2828 = vunpack.c.h.b16 %v555
        %v2829 = vunpack.c.l.b16 %v556
        %v2830 = vunpack.c.h.b16 %v556
        %v2831 = vunpack.c.l.b16 %v557
        %v2832 = vunpack.c.h.b16 %v557
        %v2833 = vunpack.c.l.b16 %v558
        %v2834 = vunpack.c.h.b16 %v558
        %v2835 = vunpack.c.l.b16 %v559
        %v2836 = vunpack.c.h.b16 %v559
        %v2837 = vunpack.c.l.b16 %v560
        %v2838 = vunpack.c.h.b16 %v560
        %v2839 = vunpack.c.l.b16 %v561
        %v2840 = vunpack.c.h.b16 %v561
        %v2841 = vunpack.c.l.b16 %v562
        %v2842 = vunpack.c.h.b16 %v562
        %v2843 = vunpack.c.l.b16 %v563
        %v2844 = vunpack.c.h.b16 %v563
        %v2845 = vunpack.c.l.b16 %v564
        %v2846 = vunpack.c.h.b16 %v564
        %v2847 = vunpack.c.l.b16 %v565
        %v2848 = vunpack.c.h.b16 %v565
        %v2849 = vunpack.c.l.b16 %v566
        %v2850 = vunpack.c.h.b16 %v566
        %v2851 = vunpack.c.l.b16 %v567
        %v2852 = vunpack.c.h.b16 %v567
        %v2853 = vunpack.c.l.b16 %v568
        %v2854 = vunpack.c.h.b16 %v568
        %v2855 = vunpack.c.l.b16 %v569
        %v2856 = vunpack.c.h.b16 %v569
        %v2857 = vunpack.c.l.b16 %v570
        %v2858 = vunpack.c.h.b16 %v570
        %v2859 = vunpack.c.l.b16 %v571
        %v2860 = vunpack.c.h.b16 %v571
        %v2861 = vunpack.c.l.b16 %v572
        %v2862 = vunpack.c.h.b16 %v572
        %v2863 = vunpack.c.l.b16 %v573
        %v2864 = vunpack.c.h.b16 %v573
        %v2865 = vunpack.c.l.b16 %v574
        %v2866 = vunpack.c.h.b16 %v574
        %v2867 = vunpack.c.l.b16 %v575
        %v2868 = vunpack.c.h.b16 %v575
        %v2869 = vunpack.c.l.b16 %v576
        %v2870 = vunpack.c.h.b16 %v576
        %v2871 = vunpack.c.l.b16 %v577
        %v2872 = vunpack.c.h.b16 %v577
        %v2873 = vunpack.c.l.b16 %v578
        %v2874 = vunpack.c.h.b16 %v578
        %v2875 = vunpack.c.l.b16 %v579
        %v2876 = vunpack.c.h.b16 %v579
        %v2877 = vunpack.c.l.b16 %v580
        %v2878 = vunpack.c.h.b16 %v580
        %v2879 = vunpack.c.l.b16 %v581
        %v2880 = vunpack.c.h.b16 %v581
        %v2881 = vunpack.c.l.b16 %v582
        %v2882 = vunpack.c.h.b16 %v582
        %v2883 = vunpack.c.l.b16 %v583
        %v2884 = vunpack.c.h.b16 %v583
        %v2885 = vunpack.c.l.b16 %v584
        %v2886 = vunpack.c.h.b16 %v584
        %v2887 = vunpack.c.l.b16 %v585
        %v2888 = vunpack.c.h.b16 %v585
        %v2889 = vunpack.c.l.b16 %v586
        %v2890 = vunpack.c.h.b16 %v586
        %v2891 = vunpack.c.l.b16 %v587
        %v2892 = vunpack.c.h.b16 %v587
        %v2893 = vunpack.c.l.b16 %v588
        %v2894 = vunpack.c.h.b16 %v588
        %v2895 = vunpack.c.l.b16 %v589
        %v2896 = vunpack.c.h.b16 %v589
        %v2897 = vunpack.c.l.b16 %v590
        %v2898 = vunpack.c.h.b16 %v590
        %v2899 = vunpack.c.l.b16 %v591
        %v2900 = vunpack.c.h.b16 %v591
        %v2901 = vunpack.c.l.b16 %v592
        %v2902 = vunpack.c.h.b16 %v592
        %v2903 = vunpack.c.l.b16 %v593
        %v2904 = vunpack.c.h.b16 %v593
        %v2905 = vunpack.c.l.b16 %v594
        %v2906 = vunpack.c.h.b16 %v594
        %v2907 = vunpack.c.l.b16 %v595
        %v2908 = vunpack.c.h.b16 %v595
        %v2909 = vunpack.c.l.b16 %v596
        %v2910 = vunpack.c.h.b16 %v596
        %v2911 = vunpack.c.l.b16 %v597
        %v2912 = vunpack.c.h.b16 %v597
        %v2913 = vunpack.c.l.b16 %v598
        %v2914 = vunpack.c.h.b16 %v598
        %v2915 = vunpack.c.l.b16 %v599
        %v2916 = vunpack.c.h.b16 %v599
        %v2917 = vunpack.c.l.b16 %v600
        %v2918 = vunpack.c.h.b16 %v600
        %v2919 = vunpack.c.l.b16 %v601
        %v2920 = vunpack.c.h.b16 %v601
        %v2921 = vunpack.c.l.b16 %v602
        %v2922 = vunpack.c.h.b16 %v602
        %v2923 = vunpack.c.l.b16 %v603
        %v2924 = vunpack.c.h.b16 %v603
        %v2925 = vunpack.c.l.b16 %v604
        %v2926 = vunpack.c.h.b16 %v604
        %v2927 = vunpack.c.l.b16 %v605
        %v2928 = vunpack.c.h.b16 %v605
        %v2929 = vunpack.c.l.b16 %v606
        %v2930 = vunpack.c.h.b16 %v606
        %v2931 = vunpack.c.l.b16 %v607
        %v2932 = vunpack.c.h.b16 %v607
        %v2933 = vunpack.c.l.b16 %v608
        %v2934 = vunpack.c.h.b16 %v608
        %v2935 = vunpack.c.l.b16 %v609
        %v2936 = vunpack.c.h.b16 %v609
        %v2937 = vunpack.c.l.b16 %v610
        %v2938 = vunpack.c.h.b16 %v610
        %v2939 = vunpack.c.l.b16 %v611
        %v2940 = vunpack.c.h.b16 %v611
        %v2941 = vunpack.c.l.b16 %v612
        %v2942 = vunpack.c.h.b16 %v612
        %v2943 = vunpack.c.l.b16 %v613
        %v2944 = vunpack.c.h.b16 %v613
        %v2945 = vunpack.c.l.b16 %v614
        %v2946 = vunpack.c.h.b16 %v614
        %v2947 = vunpack.c.l.b16 %v615
        %v2948 = vunpack.c.h.b16 %v615
        %v2949 = vunpack.c.l.b16 %v616
        %v2950 = vunpack.c.h.b16 %v616
        %v2951 = vunpack.c.l.b16 %v617
        %v2952 = vunpack.c.h.b16 %v617
        %v2953 = vunpack.c.l.b16 %v618
        %v2954 = vunpack.c.h.b16 %v618
        %v2955 = vunpack.c.l.b16 %v619
        %v2956 = vunpack.c.h.b16 %v619
        %v2957 = vunpack.c.l.b16 %v620
        %v2958 = vunpack.c.h.b16 %v620
        %v2959 = vunpack.c.l.b16 %v621
        %v2960 = vunpack.c.h.b16 %v621
        %v2961 = vunpack.c.l.b16 %v622
        %v2962 = vunpack.c.h.b16 %v622
        %v2963 = vunpack.c.l.b16 %v623
        %v2964 = vunpack.c.h.b16 %v623
        %v2965 = vunpack.c.l.b16 %v624
        %v2966 = vunpack.c.h.b16 %v624
        %v2967 = vunpack.c.l.b16 %v625
        %v2968 = vunpack.c.h.b16 %v625
        %v2969 = vunpack.c.l.b16 %v626
        %v2970 = vunpack.c.h.b16 %v626
        %v2971 = vunpack.c.l.b16 %v627
        %v2972 = vunpack.c.h.b16 %v627
        %v2973 = vunpack.c.l.b16 %v628
        %v2974 = vunpack.c.h.b16 %v628
        %v2975 = vunpack.c.l.b16 %v629
        %v2976 = vunpack.c.h.b16 %v629
        %v2977 = vunpack.c.l.b16 %v630
        %v2978 = vunpack.c.h.b16 %v630
        %v2979 = vunpack.c.l.b16 %v631
        %v2980 = vunpack.c.h.b16 %v631
        %v2981 = vunpack.c.l.b16 %v632
        %v2982 = vunpack.c.h.b16 %v632
        %v2983 = vunpack.c.l.b16 %v633
        %v2984 = vunpack.c.h.b16 %v633
        %v2985 = vunpack.c.l.b16 %v634
        %v2986 = vunpack.c.h.b16 %v634
        %v2987 = vunpack.c.l.b16 %v635
        %v2988 = vunpack.c.h.b16 %v635
        %v2989 = vunpack.c.l.b16 %v636
        %v2990 = vunpack.c.h.b16 %v636
        %v2991 = vunpack.c.l.b16 %v637
        %v2992 = vunpack.c.h.b16 %v637
        %v2993 = vunpack.c.l.b16 %v638
        %v2994 = vunpack.c.h.b16 %v638
        %v2995 = vunpack.c.l.b16 %v639
        %v2996 = vunpack.c.h.b16 %v639
        %v2997 = vunpack.c.l.b16 %v640
        %v2998 = vunpack.c.h.b16 %v640
        %v2999 = vunpack.c.l.b16 %v641
        %v3000 = vunpack.c.h.b16 %v641
        %v3001 = vunpack.c.l.b16 %v642
        %v3002 = vunpack.c.h.b16 %v642
        %v3003 = vunpack.c.l.b16 %v643
        %v3004 = vunpack.c.h.b16 %v643
        %v3005 = vunpack.c.l.b16 %v644
        %v3006 = vunpack.c.h.b16 %v644
        %v3007 = vunpack.c.l.b16 %v645
        %v3008 = vunpack.c.h.b16 %v645
        %v3009 = vunpack.c.l.b16 %v646
        %v3010 = vunpack.c.h.b16 %v646
        %v3011 = vunpack.c.l.b16 %v647
        %v3012 = vunpack.c.h.b16 %v647
        %v3013 = vunpack.c.l.b16 %v648
        %v3014 = vunpack.c.h.b16 %v648
        %v3015 = vunpack.c.l.b16 %v649
        %v3016 = vunpack.c.h.b16 %v649
        %v3017 = vunpack.c.l.b16 %v650
        %v3018 = vunpack.c.h.b16 %v650
        %v3019 = vunpack.c.l.b16 %v651
        %v3020 = vunpack.c.h.b16 %v651
        %v3021 = vunpack.c.l.b16 %v652
        %v3022 = vunpack.c.h.b16 %v652
        %v3023 = vunpack.c.l.b16 %v653
        %v3024 = vunpack.c.h.b16 %v653
        %v3025 = vunpack.c.l.b16 %v654
        %v3026 = vunpack.c.h.b16 %v654
        %v3027 = vunpack.c.l.b16 %v655
        %v3028 = vunpack.c.h.b16 %v655
        %v3029 = vunpack.c.l.b16 %v656
        %v3030 = vunpack.c.h.b16 %v656
        %v3031 = vunpack.c.l.b16 %v657
        %v3032 = vunpack.c.h.b16 %v657
        %v3033 = vunpack.c.l.b16 %v658
        %v3034 = vunpack.c.h.b16 %v658
        %v3035 = vunpack.c.l.b16 %v659
        %v3036 = vunpack.c.h.b16 %v659
        %v3037 = vunpack.c.l.b16 %v660
        %v3038 = vunpack.c.h.b16 %v660
        %v3039 = vunpack.c.l.b16 %v661
        %v3040 = vunpack.c.h.b16 %v661
        %v3041 = vunpack.c.l.b16 %v662
        %v3042 = vunpack.c.h.b16 %v662
        %v3043 = vunpack.c.l.b16 %v663
        %v3044 = vunpack.c.h.b16 %v663
        %v3045 = vunpack.c.l.b16 %v664
        %v3046 = vunpack.c.h.b16 %v664
        %v3047 = vunpack.c.l.b16 %v665
        %v3048 = vunpack.c.h.b16 %v665
        %v3049 = vunpack.c.l.b16 %v666
        %v3050 = vunpack.c.h.b16 %v666
        %v3051 = vunpack.c.l.b16 %v667
        %v3052 = vunpack.c.h.b16 %v667
        %v3053 = vunpack.c.l.b16 %v668
        %v3054 = vunpack.c.h.b16 %v668
        %v3055 = vunpack.c.l.b16 %v669
        %v3056 = vunpack.c.h.b16 %v669
        %v3057 = vunpack.c.l.b16 %v670
        %v3058 = vunpack.c.h.b16 %v670
        %v3059 = vunpack.c.l.b16 %v671
        %v3060 = vunpack.c.h.b16 %v671
        %v3061 = vunpack.c.l.b16 %v672
        %v3062 = vunpack.c.h.b16 %v672
        %v3063 = vunpack.c.l.b16 %v673
        %v3064 = vunpack.c.h.b16 %v673
        %v3065 = vunpack.c.l.b16 %v674
        %v3066 = vunpack.c.h.b16 %v674
        %v3067 = vunpack.c.l.b16 %v675
        %v3068 = vunpack.c.h.b16 %v675
        %v3069 = vunpack.c.l.b16 %v676
        %v3070 = vunpack.c.h.b16 %v676
        %v3071 = vunpack.c.l.b16 %v677
        %v3072 = vunpack.c.h.b16 %v677
        %v3073 = vunpack.c.l.b16 %v678
        %v3074 = vunpack.c.h.b16 %v678
        %v3075 = vunpack.c.l.b16 %v679
        %v3076 = vunpack.c.h.b16 %v679
        %v3077 = vunpack.c.l.b16 %v680
        %v3078 = vunpack.c.h.b16 %v680
        %v3079 = vunpack.c.l.b16 %v681
        %v3080 = vunpack.c.h.b16 %v681
        %v3081 = vunpack.c.l.b16 %v682
        %v3082 = vunpack.c.h.b16 %v682
        %v3083 = vunpack.c.l.b16 %v683
        %v3084 = vunpack.c.h.b16 %v683
        %v3085 = vunpack.c.l.b16 %v684
        %v3086 = vunpack.c.h.b16 %v684
        %v3087 = vunpack.c.l.b16 %v685
        %v3088 = vunpack.c.h.b16 %v685
        %v3089 = vunpack.c.l.b16 %v686
        %v3090 = vunpack.c.h.b16 %v686
        %v3091 = vunpack.c.l.b16 %v687
        %v3092 = vunpack.c.h.b16 %v687
        %v3093 = vunpack.c.l.b16 %v688
        %v3094 = vunpack.c.h.b16 %v688
        %v3095 = vunpack.c.l.b16 %v689
        %v3096 = vunpack.c.h.b16 %v689
        %v3097 = vunpack.c.l.b16 %v690
        %v3098 = vunpack.c.h.b16 %v690
        %v3099 = vunpack.c.l.b16 %v691
        %v3100 = vunpack.c.h.b16 %v691
        %v3101 = vunpack.c.l.b16 %v692
        %v3102 = vunpack.c.h.b16 %v692
        %v3103 = vunpack.c.l.b16 %v693
        %v3104 = vunpack.c.h.b16 %v693
        %v3105 = vunpack.c.l.b16 %v694
        %v3106 = vunpack.c.h.b16 %v694
        %v3107 = vunpack.c.l.b16 %v695
        %v3108 = vunpack.c.h.b16 %v695
        %v3109 = vunpack.c.l.b16 %v696
        %v3110 = vunpack.c.h.b16 %v696
        %v3111 = vunpack.c.l.b16 %v697
        %v3112 = vunpack.c.h.b16 %v697
        %v3113 = vunpack.c.l.b16 %v698
        %v3114 = vunpack.c.h.b16 %v698
        %v3115 = vunpack.c.l.b16 %v699
        %v3116 = vunpack.c.h.b16 %v699
        %v3117 = vunpack.c.l.b16 %v700
        %v3118 = vunpack.c.h.b16 %v700
        %v3119 = vunpack.c.l.b16 %v701
        %v3120 = vunpack.c.h.b16 %v701
        %v3121 = vunpack.c.l.b16 %v702
        %v3122 = vunpack.c.h.b16 %v702
        %v3123 = vunpack.c.l.b16 %v703
        %v3124 = vunpack.c.h.b16 %v703
        %v3125 = vunpack.c.l.b16 %v704
        %v3126 = vunpack.c.h.b16 %v704
        %v3127 = vunpack.c.l.b16 %v705
        %v3128 = vunpack.c.h.b16 %v705
        %v3129 = vunpack.c.l.b16 %v706
        %v3130 = vunpack.c.h.b16 %v706
        %v3131 = vunpack.c.l.b16 %v707
        %v3132 = vunpack.c.h.b16 %v707
        %v3133 = vunpack.c.l.b16 %v708
        %v3134 = vunpack.c.h.b16 %v708
        %v3135 = vunpack.c.l.b16 %v709
        %v3136 = vunpack.c.h.b16 %v709
        %v3137 = vunpack.c.l.b16 %v710
        %v3138 = vunpack.c.h.b16 %v710
        %v3139 = vunpack.c.l.b16 %v711
        %v3140 = vunpack.c.h.b16 %v711
        %v3141 = vunpack.c.l.b16 %v712
        %v3142 = vunpack.c.h.b16 %v712
        %v3143 = vunpack.c.l.b16 %v713
        %v3144 = vunpack.c.h.b16 %v713
        %v3145 = vunpack.c.l.b16 %v714
        %v3146 = vunpack.c.h.b16 %v714
        %v3147 = vunpack.c.l.b16 %v715
        %v3148 = vunpack.c.h.b16 %v715
        %v3149 = vunpack.c.l.b16 %v716
        %v3150 = vunpack.c.h.b16 %v716
        %v3151 = vunpack.c.l.b16 %v717
        %v3152 = vunpack.c.h.b16 %v717
        %v3153 = vunpack.c.l.b16 %v718
        %v3154 = vunpack.c.h.b16 %v718
        %v3155 = vunpack.c.l.b16 %v719
        %v3156 = vunpack.c.h.b16 %v719
        %v3157 = vunpack.c.l.b16 %v720
        %v3158 = vunpack.c.h.b16 %v720
        %v3159 = vunpack.c.l.b16 %v721
        %v3160 = vunpack.c.h.b16 %v721
        %v3161 = vunpack.c.l.b16 %v722
        %v3162 = vunpack.c.h.b16 %v722
        %v3163 = vunpack.c.l.b16 %v723
        %v3164 = vunpack.c.h.b16 %v723
        %v3165 = vunpack.c.l.b16 %v724
        %v3166 = vunpack.c.h.b16 %v724
        %v3167 = vunpack.c.l.b16 %v725
        %v3168 = vunpack.c.h.b16 %v725
        %v3169 = vunpack.c.l.b16 %v726
        %v3170 = vunpack.c.h.b16 %v726
        %v3171 = vunpack.c.l.b16 %v727
        %v3172 = vunpack.c.h.b16 %v727
        %v3173 = vunpack.c.l.b16 %v728
        %v3174 = vunpack.c.h.b16 %v728
        %v3175 = vunpack.c.l.b16 %v729
        %v3176 = vunpack.c.h.b16 %v729
        %v3177 = vunpack.c.l.b16 %v730
        %v3178 = vunpack.c.h.b16 %v730
        %v3179 = vunpack.c.l.b16 %v731
        %v3180 = vunpack.c.h.b16 %v731
        %v3181 = vunpack.c.l.b16 %v732
        %v3182 = vunpack.c.h.b16 %v732
        %v3183 = vunpack.c.l.b16 %v733
        %v3184 = vunpack.c.h.b16 %v733
        %v3185 = vunpack.c.l.b16 %v734
        %v3186 = vunpack.c.h.b16 %v734
        %v3187 = vunpack.c.l.b16 %v735
        %v3188 = vunpack.c.h.b16 %v735
        %v3189 = vunpack.c.l.b16 %v736
        %v3190 = vunpack.c.h.b16 %v736
        %v3191 = vunpack.c.l.b16 %v737
        %v3192 = vunpack.c.h.b16 %v737
        %v3193 = vunpack.c.l.b16 %v738
        %v3194 = vunpack.c.h.b16 %v738
        %v3195 = vunpack.c.l.b16 %v739
        %v3196 = vunpack.c.h.b16 %v739
        %v3197 = vunpack.c.l.b16 %v740
        %v3198 = vunpack.c.h.b16 %v740
        %v3199 = vunpack.c.l.b16 %v741
        %v3200 = vunpack.c.h.b16 %v741
        %v3201 = vunpack.c.l.b16 %v742
        %v3202 = vunpack.c.h.b16 %v742
        %v3203 = vunpack.c.l.b16 %v743
        %v3204 = vunpack.c.h.b16 %v743
        %v3205 = vunpack.c.l.b16 %v744
        %v3206 = vunpack.c.h.b16 %v744
        %v3207 = vunpack.c.l.b16 %v745
        %v3208 = vunpack.c.h.b16 %v745
        %v3209 = vunpack.c.l.b16 %v746
        %v3210 = vunpack.c.h.b16 %v746
        %v3211 = vunpack.c.l.b16 %v747
        %v3212 = vunpack.c.h.b16 %v747
        %v3213 = vunpack.c.l.b16 %v748
        %v3214 = vunpack.c.h.b16 %v748
        %v3215 = vunpack.c.l.b16 %v749
        %v3216 = vunpack.c.h.b16 %v749
        %v3217 = vunpack.c.l.b16 %v750
        %v3218 = vunpack.c.h.b16 %v750
        %v3219 = vunpack.c.l.b16 %v751
        %v3220 = vunpack.c.h.b16 %v751
        %v3221 = vunpack.c.l.b16 %v752
        %v3222 = vunpack.c.h.b16 %v752
        %v3223 = vunpack.c.l.b16 %v753
        %v3224 = vunpack.c.h.b16 %v753
        %v3225 = vunpack.c.l.b16 %v754
        %v3226 = vunpack.c.h.b16 %v754
        %v3227 = vunpack.c.l.b16 %v755
        %v3228 = vunpack.c.h.b16 %v755
        %v3229 = vunpack.c.l.b16 %v756
        %v3230 = vunpack.c.h.b16 %v756
        %v3231 = vunpack.c.l.b16 %v757
        %v3232 = vunpack.c.h.b16 %v757
        %v3233 = vunpack.c.l.b16 %v758
        %v3234 = vunpack.c.h.b16 %v758
        %v3235 = vunpack.c.l.b16 %v759
        %v3236 = vunpack.c.h.b16 %v759
        %v3237 = vunpack.c.l.b16 %v760
        %v3238 = vunpack.c.h.b16 %v760
        %v3239 = vunpack.c.l.b16 %v761
        %v3240 = vunpack.c.h.b16 %v761
        %v3241 = vunpack.c.l.b16 %v762
        %v3242 = vunpack.c.h.b16 %v762
        %v3243 = vunpack.c.l.b16 %v763
        %v3244 = vunpack.c.h.b16 %v763
        %v3245 = vunpack.c.l.b16 %v764
        %v3246 = vunpack.c.h.b16 %v764
        %v3247 = vunpack.c.l.b16 %v765
        %v3248 = vunpack.c.h.b16 %v765
        %v3249 = vunpack.c.l.b16 %v766
        %v3250 = vunpack.c.h.b16 %v766
        %v3251 = vunpack.c.l.b16 %v767
        %v3252 = vunpack.c.h.b16 %v767
        %v3253 = vunpack.c.l.b16 %v768
        %v3254 = vunpack.c.h.b16 %v768
        %v3255 = vunpack.c.l.b16 %v769
        %v3256 = vunpack.c.h.b16 %v769
        %v3257 = vunpack.c.l.b16 %v770
        %v3258 = vunpack.c.h.b16 %v770
        %v3259 = vunpack.c.l.b16 %v771
        %v3260 = vunpack.c.h.b16 %v771
        %v3261 = vunpack.c.l.b16 %v772
        %v3262 = vunpack.c.h.b16 %v772
        %v3263 = vunpack.c.l.b16 %v773
        %v3264 = vunpack.c.h.b16 %v773
        %v3265 = vunpack.c.l.b16 %v774
        %v3266 = vunpack.c.h.b16 %v774
        %v3267 = vunpack.c.l.b16 %v775
        %v3268 = vunpack.c.h.b16 %v775
        %v3269 = vunpack.c.l.b16 %v776
        %v3270 = vunpack.c.h.b16 %v776
        %v3271 = vunpack.c.l.b16 %v777
        %v3272 = vunpack.c.h.b16 %v777
        %v3273 = vunpack.c.l.b16 %v778
        %v3274 = vunpack.c.h.b16 %v778
        %v3275 = vunpack.c.l.b16 %v779
        %v3276 = vunpack.c.h.b16 %v779
        %v3277 = vunpack.c.l.b16 %v780
        %v3278 = vunpack.c.h.b16 %v780
        %v3279 = vunpack.c.l.b16 %v781
        %v3280 = vunpack.c.h.b16 %v781
        %v3281 = vunpack.c.l.b16 %v782
        %v3282 = vunpack.c.h.b16 %v782
        %v3283 = vunpack.c.l.b16 %v783
        %v3284 = vunpack.c.h.b16 %v783
        %v3285 = vunpack.c.l.b16 %v784
        %v3286 = vunpack.c.h.b16 %v784
        %v3287 = vunpack.c.l.b16 %v785
        %v3288 = vunpack.c.h.b16 %v785
        %v3289 = vunpack.c.l.b16 %v786
        %v3290 = vunpack.c.h.b16 %v786
        %v3291 = vunpack.c.l.b16 %v787
        %v3292 = vunpack.c.h.b16 %v787
        %v3293 = vunpack.c.l.b16 %v788
        %v3294 = vunpack.c.h.b16 %v788
        %v3295 = vunpack.c.l.b16 %v789
        %v3296 = vunpack.c.h.b16 %v789
        %v3297 = vunpack.c.l.b16 %v790
        %v3298 = vunpack.c.h.b16 %v790
        %v3299 = vunpack.c.l.b16 %v791
        %v3300 = vunpack.c.h.b16 %v791
        %v3301 = vunpack.c.l.b16 %v792
        %v3302 = vunpack.c.h.b16 %v792
        %v3303 = vunpack.c.l.b16 %v793
        %v3304 = vunpack.c.h.b16 %v793
        %v3305 = vunpack.c.l.b16 %v794
        %v3306 = vunpack.c.h.b16 %v794
        %v3307 = vunpack.c.l.b16 %v795
        %v3308 = vunpack.c.h.b16 %v795
        %v3309 = vunpack.c.l.b16 %v796
        %v3310 = vunpack.c.h.b16 %v796
        %v3311 = vunpack.c.l.b16 %v797
        %v3312 = vunpack.c.h.b16 %v797
        %v3313 = vunpack.c.l.b16 %v798
        %v3314 = vunpack.c.h.b16 %v798
        %v3315 = vunpack.c.l.b16 %v799
        %v3316 = vunpack.c.h.b16 %v799
        %v3317 = vunpack.c.l.b16 %v800
        %v3318 = vunpack.c.h.b16 %v800
        %v3319 = vunpack.c.l.b16 %v801
        %v3320 = vunpack.c.h.b16 %v801
        %v3321 = vunpack.c.l.b16 %v802
        %v3322 = vunpack.c.h.b16 %v802
        %v3323 = vunpack.c.l.b16 %v803
        %v3324 = vunpack.c.h.b16 %v803
        %v3325 = vunpack.c.l.b16 %v804
        %v3326 = vunpack.c.h.b16 %v804
        %v3327 = vunpack.c.l.b16 %v805
        %v3328 = vunpack.c.h.b16 %v805
        %v3329 = vunpack.c.l.b16 %v806
        %v3330 = vunpack.c.h.b16 %v806
        %v3331 = vunpack.c.l.b16 %v807
        %v3332 = vunpack.c.h.b16 %v807
        %v3333 = vunpack.c.l.b16 %v808
        %v3334 = vunpack.c.h.b16 %v808
        %v3335 = vunpack.c.l.b16 %v809
        %v3336 = vunpack.c.h.b16 %v809
        %v3337 = vunpack.c.l.b16 %v810
        %v3338 = vunpack.c.h.b16 %v810
        %v3339 = vunpack.c.l.b16 %v811
        %v3340 = vunpack.c.h.b16 %v811
        %v3341 = vunpack.c.l.b16 %v812
        %v3342 = vunpack.c.h.b16 %v812
        %v3343 = vunpack.c.l.b16 %v813
        %v3344 = vunpack.c.h.b16 %v813
        %v3345 = vunpack.c.l.b16 %v814
        %v3346 = vunpack.c.h.b16 %v814
        %v3347 = vunpack.c.l.b16 %v815
        %v3348 = vunpack.c.h.b16 %v815
        %v3349 = vunpack.c.l.b16 %v816
        %v3350 = vunpack.c.h.b16 %v816
        %v3351 = vunpack.c.l.b16 %v817
        %v3352 = vunpack.c.h.b16 %v817
        %v3353 = vunpack.c.l.b16 %v818
        %v3354 = vunpack.c.h.b16 %v818
        %v3355 = vunpack.c.l.b16 %v819
        %v3356 = vunpack.c.h.b16 %v819
        %v3357 = vunpack.c.l.b16 %v820
        %v3358 = vunpack.c.h.b16 %v820
        %v3359 = vunpack.c.l.b16 %v821
        %v3360 = vunpack.c.h.b16 %v821
        %v3361 = vunpack.c.l.b16 %v822
        %v3362 = vunpack.c.h.b16 %v822
        %v3363 = vunpack.c.l.b16 %v823
        %v3364 = vunpack.c.h.b16 %v823
        %v3365 = vunpack.c.l.b16 %v824
        %v3366 = vunpack.c.h.b16 %v824
        %v3367 = vunpack.c.l.b16 %v825
        %v3368 = vunpack.c.h.b16 %v825
        %v3369 = vunpack.c.l.b16 %v826
        %v3370 = vunpack.c.h.b16 %v826
        %v3371 = vunpack.c.l.b16 %v827
        %v3372 = vunpack.c.h.b16 %v827
        %v3373 = vunpack.c.l.b16 %v828
        %v3374 = vunpack.c.h.b16 %v828
        %v3375 = vunpack.c.l.b16 %v829
        %v3376 = vunpack.c.h.b16 %v829
        %v3377 = vunpack.c.l.b16 %v830
        %v3378 = vunpack.c.h.b16 %v830
        %v3379 = vunpack.c.l.b16 %v831
        %v3380 = vunpack.c.h.b16 %v831
        %v3381 = vunpack.c.l.b16 %v832
        %v3382 = vunpack.c.h.b16 %v832
        %v3383 = vunpack.c.l.b16 %v833
        %v3384 = vunpack.c.h.b16 %v833
        %v3385 = vunpack.c.l.b16 %v834
        %v3386 = vunpack.c.h.b16 %v834
        %v3387 = vunpack.c.l.b16 %v835
        %v3388 = vunpack.c.h.b16 %v835
        %v3389 = vunpack.c.l.b16 %v836
        %v3390 = vunpack.c.h.b16 %v836
        %v3391 = vunpack.c.l.b16 %v837
        %v3392 = vunpack.c.h.b16 %v837
        %v3393 = vunpack.c.l.b16 %v838
        %v3394 = vunpack.c.h.b16 %v838
        %v3395 = vunpack.c.l.b16 %v839
        %v3396 = vunpack.c.h.b16 %v839
        %v3397 = vunpack.c.l.b16 %v840
        %v3398 = vunpack.c.h.b16 %v840
        %v3399 = vunpack.c.l.b16 %v841
        %v3400 = vunpack.c.h.b16 %v841
        %v3401 = vunpack.c.l.b16 %v842
        %v3402 = vunpack.c.h.b16 %v842
        %v3403 = vunpack.c.l.b16 %v843
        %v3404 = vunpack.c.h.b16 %v843
        %v3405 = vunpack.c.l.b16 %v844
        %v3406 = vunpack.c.h.b16 %v844
        %v3407 = vunpack.c.l.b16 %v845
        %v3408 = vunpack.c.h.b16 %v845
        %v3409 = vunpack.c.l.b16 %v846
        %v3410 = vunpack.c.h.b16 %v846
        %v3411 = vunpack.c.l.b16 %v847
        %v3412 = vunpack.c.h.b16 %v847
        %v3413 = vunpack.c.l.b16 %v848
        %v3414 = vunpack.c.h.b16 %v848
        %v3415 = vunpack.c.l.b16 %v849
        %v3416 = vunpack.c.h.b16 %v849
        %v3417 = vunpack.c.l.b16 %v850
        %v3418 = vunpack.c.h.b16 %v850
        %v3419 = vunpack.c.l.b16 %v851
        %v3420 = vunpack.c.h.b16 %v851
        %v3421 = vunpack.c.l.b16 %v852
        %v3422 = vunpack.c.h.b16 %v852
        %v3423 = vunpack.c.l.b16 %v853
        %v3424 = vunpack.c.h.b16 %v853
        %v3425 = vunpack.c.l.b16 %v854
        %v3426 = vunpack.c.h.b16 %v854
        %v3427 = vunpack.c.l.b16 %v855
        %v3428 = vunpack.c.h.b16 %v855
        %v3429 = vunpack.c.l.b16 %v856
        %v3430 = vunpack.c.h.b16 %v856
        %v3431 = vunpack.c.l.b16 %v857
        %v3432 = vunpack.c.h.b16 %v857
        %v3433 = vunpack.c.l.b16 %v858
        %v3434 = vunpack.c.h.b16 %v858
        %v3435 = vunpack.c.l.b16 %v859
        %v3436 = vunpack.c.h.b16 %v859
        %v3437 = vunpack.c.l.b16 %v860
        %v3438 = vunpack.c.h.b16 %v860
        %v3439 = vunpack.c.l.b16 %v861
        %v3440 = vunpack.c.h.b16 %v861
        %v3441 = vunpack.c.l.b16 %v862
        %v3442 = vunpack.c.h.b16 %v862
        %v3443 = vunpack.c.l.b16 %v863
        %v3444 = vunpack.c.h.b16 %v863
        %v3445 = vunpack.c.l.b16 %v864
        %v3446 = vunpack.c.h.b16 %v864
        %v3447 = vunpack.c.l.b16 %v865
        %v3448 = vunpack.c.h.b16 %v865
        %v3449 = vunpack.c.l.b16 %v866
        %v3450 = vunpack.c.h.b16 %v866
        %v3451 = vunpack.c.l.b16 %v867
        %v3452 = vunpack.c.h.b16 %v867
        %v3453 = vunpack.c.l.b16 %v868
        %v3454 = vunpack.c.h.b16 %v868
        %v3455 = vunpack.c.l.b16 %v869
        %v3456 = vunpack.c.h.b16 %v869
        %v3457 = vunpack.c.l.b16 %v870
        %v3458 = vunpack.c.h.b16 %v870
        %v3459 = vunpack.c.l.b16 %v871
        %v3460 = vunpack.c.h.b16 %v871
        %v3461 = vunpack.c.l.b16 %v872
        %v3462 = vunpack.c.h.b16 %v872
        %v3463 = vunpack.c.l.b16 %v873
        %v3464 = vunpack.c.h.b16 %v873
        %v3465 = vunpack.c.l.b16 %v874
        %v3466 = vunpack.c.h.b16 %v874
        %v3467 = vunpack.c.l.b16 %v875
        %v3468 = vunpack.c.h.b16 %v875
        %v3469 = vunpack.c.l.b16 %v876
        %v3470 = vunpack.c.h.b16 %v876
        %v3471 = vunpack.c.l.b16 %v877
        %v3472 = vunpack.c.h.b16 %v877
        %v3473 = vunpack.c.l.b16 %v878
        %v3474 = vunpack.c.h.b16 %v878
        %v3475 = vunpack.c.l.b16 %v879
        %v3476 = vunpack.c.h.b16 %v879
        %v3477 = vunpack.c.l.b16 %v880
        %v3478 = vunpack.c.h.b16 %v880
        %v3479 = vunpack.c.l.b16 %v881
        %v3480 = vunpack.c.h.b16 %v881
        %v3481 = vunpack.c.l.b16 %v882
        %v3482 = vunpack.c.h.b16 %v882
        %v3483 = vunpack.c.l.b16 %v883
        %v3484 = vunpack.c.h.b16 %v883
        %v3485 = vunpack.c.l.b16 %v884
        %v3486 = vunpack.c.h.b16 %v884
        %v3487 = vunpack.c.l.b16 %v885
        %v3488 = vunpack.c.h.b16 %v885
        %v3489 = vunpack.c.l.b16 %v886
        %v3490 = vunpack.c.h.b16 %v886
        %v3491 = vunpack.c.l.b16 %v887
        %v3492 = vunpack.c.h.b16 %v887
        %v3493 = vunpack.c.l.b16 %v888
        %v3494 = vunpack.c.h.b16 %v888
        %v3495 = vunpack.c.l.b16 %v889
        %v3496 = vunpack.c.h.b16 %v889
        %v3497 = vunpack.c.l.b16 %v890
        %v3498 = vunpack.c.h.b16 %v890
        %v3499 = vunpack.c.l.b16 %v891
        %v3500 = vunpack.c.h.b16 %v891
        %v3501 = vunpack.c.l.b16 %v892
        %v3502 = vunpack.c.h.b16 %v892
        %v3503 = vunpack.c.l.b16 %v893
        %v3504 = vunpack.c.h.b16 %v893
        %v3505 = vunpack.c.l.b16 %v894
        %v3506 = vunpack.c.h.b16 %v894
        %v3507 = vunpack.c.l.b16 %v895
        %v3508 = vunpack.c.h.b16 %v895
        %v3509 = vunpack.c.l.b16 %v896
        %v3510 = vunpack.c.h.b16 %v896
        %v3511 = vunpack.c.l.b16 %v897
        %v3512 = vunpack.c.h.b16 %v897
        %v3513 = vunpack.c.l.b16 %v898
        %v3514 = vunpack.c.h.b16 %v898
        %v3515 = vunpack.c.l.b16 %v899
        %v3516 = vunpack.c.h.b16 %v899
        %v3517 = vunpack.c.l.b16 %v900
        %v3518 = vunpack.c.h.b16 %v900
        %v3519 = vunpack.c.l.b16 %v901
        %v3520 = vunpack.c.h.b16 %v901
        %v3521 = vunpack.c.l.b16 %v902
        %v3522 = vunpack.c.h.b16 %v902
        %v3523 = vunpack.c.l.b16 %v903
        %v3524 = vunpack.c.h.b16 %v903
        %v3525 = vunpack.c.l.b16 %v904
        %v3526 = vunpack.c.h.b16 %v904
        %v3527 = vunpack.c.l.b16 %v905
        %v3528 = vunpack.c.h.b16 %v905
        %v3529 = vunpack.c.l.b16 %v906
        %v3530 = vunpack.c.h.b16 %v906
        %v3531 = vunpack.c.l.b16 %v907
        %v3532 = vunpack.c.h.b16 %v907
        %v3533 = vunpack.c.l.b16 %v908
        %v3534 = vunpack.c.h.b16 %v908
        %v3535 = vunpack.c.l.b16 %v909
        %v3536 = vunpack.c.h.b16 %v909
        %v3537 = vunpack.c.l.b16 %v910
        %v3538 = vunpack.c.h.b16 %v910
        %v3539 = vunpack.c.l.b16 %v911
        %v3540 = vunpack.c.h.b16 %v911
        %v3541 = vunpack.c.l.b16 %v912
        %v3542 = vunpack.c.h.b16 %v912
        %v3543 = vunpack.c.l.b16 %v913
        %v3544 = vunpack.c.h.b16 %v913
        %v3545 = vunpack.c.l.b16 %v914
        %v3546 = vunpack.c.h.b16 %v914
        %v3547 = vunpack.c.l.b16 %v915
        %v3548 = vunpack.c.h.b16 %v915
        %v3549 = vunpack.c.l.b16 %v916
        %v3550 = vunpack.c.h.b16 %v916
        %v3551 = vunpack.c.l.b16 %v917
        %v3552 = vunpack.c.h.b16 %v917
        %v3553 = vunpack.c.l.b16 %v918
        %v3554 = vunpack.c.h.b16 %v918
        %v3555 = vunpack.c.l.b16 %v919
        %v3556 = vunpack.c.h.b16 %v919
        %v3557 = vunpack.c.l.b16 %v920
        %v3558 = vunpack.c.h.b16 %v920
        %v3559 = vunpack.c.l.b16 %v921
        %v3560 = vunpack.c.h.b16 %v921
        %v3561 = vunpack.c.l.b16 %v922
        %v3562 = vunpack.c.h.b16 %v922
        %v3563 = vunpack.c.l.b16 %v923
        %v3564 = vunpack.c.h.b16 %v923
        %v3565 = vunpack.c.l.b16 %v924
        %v3566 = vunpack.c.h.b16 %v924
        %v3567 = vunpack.c.l.b16 %v925
        %v3568 = vunpack.c.h.b16 %v925
        %v3569 = vunpack.c.l.b16 %v926
        %v3570 = vunpack.c.h.b16 %v926
        %v3571 = vunpack.c.l.b16 %v927
        %v3572 = vunpack.c.h.b16 %v927
        %v3573 = vunpack.c.l.b16 %v928
        %v3574 = vunpack.c.h.b16 %v928
        %v3575 = vunpack.c.l.b16 %v929
        %v3576 = vunpack.c.h.b16 %v929
        %v3577 = vunpack.c.l.b16 %v930
        %v3578 = vunpack.c.h.b16 %v930
        %v3579 = vunpack.c.l.b16 %v931
        %v3580 = vunpack.c.h.b16 %v931
        %v3581 = vunpack.c.l.b16 %v932
        %v3582 = vunpack.c.h.b16 %v932
        %v3583 = vunpack.c.l.b16 %v933
        %v3584 = vunpack.c.h.b16 %v933
        %v3585 = vunpack.c.l.b16 %v934
        %v3586 = vunpack.c.h.b16 %v934
        %v3587 = vunpack.c.l.b16 %v935
        %v3588 = vunpack.c.h.b16 %v935
        %v3589 = vunpack.c.l.b16 %v936
        %v3590 = vunpack.c.h.b16 %v936
        %v3591 = vunpack.c.l.b16 %v937
        %v3592 = vunpack.c.h.b16 %v937
        %v3593 = vunpack.c.l.b16 %v938
        %v3594 = vunpack.c.h.b16 %v938
        %v3595 = vunpack.c.l.b16 %v939
        %v3596 = vunpack.c.h.b16 %v939
        %v3597 = vunpack.c.l.b16 %v940
        %v3598 = vunpack.c.h.b16 %v940
        %v3599 = vunpack.c.l.b16 %v941
        %v3600 = vunpack.c.h.b16 %v941
        %v3601 = vunpack.c.l.b16 %v942
        %v3602 = vunpack.c.h.b16 %v942
        %v3603 = vunpack.c.l.b16 %v943
        %v3604 = vunpack.c.h.b16 %v943
        %v3605 = vunpack.c.l.b16 %v944
        %v3606 = vunpack.c.h.b16 %v944
        %v3607 = vunpack.c.l.b16 %v945
        %v3608 = vunpack.c.h.b16 %v945
        %v3609 = vunpack.c.l.b16 %v946
        %v3610 = vunpack.c.h.b16 %v946
        %v3611 = vunpack.c.l.b16 %v947
        %v3612 = vunpack.c.h.b16 %v947
        %v3613 = vunpack.c.l.b16 %v948
        %v3614 = vunpack.c.h.b16 %v948
        %v3615 = vunpack.c.l.b16 %v949
        %v3616 = vunpack.c.h.b16 %v949
        %v3617 = vunpack.c.l.b16 %v950
        %v3618 = vunpack.c.h.b16 %v950
        %v3619 = vunpack.c.l.b16 %v951
        %v3620 = vunpack.c.h.b16 %v951
        %v3621 = vunpack.c.l.b16 %v952
        %v3622 = vunpack.c.h.b16 %v952
        %v3623 = vunpack.c.l.b16 %v953
        %v3624 = vunpack.c.h.b16 %v953
        %v3625 = vunpack.c.l.b16 %v954
        %v3626 = vunpack.c.h.b16 %v954
        %v3627 = vunpack.c.l.b16 %v955
        %v3628 = vunpack.c.h.b16 %v955
        %v3629 = vunpack.c.l.b16 %v956
        %v3630 = vunpack.c.h.b16 %v956
        %v3631 = vunpack.c.l.b16 %v957
        %v3632 = vunpack.c.h.b16 %v957
        %v3633 = vunpack.c.l.b16 %v958
        %v3634 = vunpack.c.h.b16 %v958
        %v3635 = vunpack.c.l.b16 %v959
        %v3636 = vunpack.c.h.b16 %v959
        %v3637 = vunpack.c.l.b16 %v960
        %v3638 = vunpack.c.h.b16 %v960
        %v3639 = vunpack.c.l.b16 %v961
        %v3640 = vunpack.c.h.b16 %v961
        %v3641 = vunpack.c.l.b16 %v962
        %v3642 = vunpack.c.h.b16 %v962
        %v3643 = vunpack.c.l.b16 %v963
        %v3644 = vunpack.c.h.b16 %v963
        %v3645 = vunpack.c.l.b16 %v964
        %v3646 = vunpack.c.h.b16 %v964
        %v3647 = vunpack.c.l.b16 %v965
        %v3648 = vunpack.c.h.b16 %v965
        %v3649 = vunpack.c.l.b16 %v966
        %v3650 = vunpack.c.h.b16 %v966
        %v3651 = vunpack.c.l.b16 %v967
        %v3652 = vunpack.c.h.b16 %v967
        %v3653 = vunpack.c.l.b16 %v968
        %v3654 = vunpack.c.h.b16 %v968
        %v3655 = vunpack.c.l.b16 %v969
        %v3656 = vunpack.c.h.b16 %v969
        %v3657 = vunpack.c.l.b16 %v970
        %v3658 = vunpack.c.h.b16 %v970
        %v3659 = vunpack.c.l.b16 %v971
        %v3660 = vunpack.c.h.b16 %v971
        %v3661 = vunpack.c.l.b16 %v972
        %v3662 = vunpack.c.h.b16 %v972
        %v3663 = vunpack.c.l.b16 %v973
        %v3664 = vunpack.c.h.b16 %v973
        %v3665 = vunpack.c.l.b16 %v974
        %v3666 = vunpack.c.h.b16 %v974
        %v3667 = vunpack.c.l.b16 %v975
        %v3668 = vunpack.c.h.b16 %v975
        %v3669 = vunpack.c.l.b16 %v976
        %v3670 = vunpack.c.h.b16 %v976
        %v3671 = vunpack.c.l.b16 %v977
        %v3672 = vunpack.c.h.b16 %v977
        %v3673 = vunpack.c.l.b16 %v978
        %v3674 = vunpack.c.h.b16 %v978
        %v3675 = vunpack.c.l.b16 %v979
        %v3676 = vunpack.c.h.b16 %v979
        %v3677 = vunpack.c.l.b16 %v980
        %v3678 = vunpack.c.h.b16 %v980
        %v3679 = vunpack.c.l.b16 %v981
        %v3680 = vunpack.c.h.b16 %v981
        %v3681 = vunpack.c.l.b16 %v982
        %v3682 = vunpack.c.h.b16 %v982
        %v3683 = vunpack.c.l.b16 %v983
        %v3684 = vunpack.c.h.b16 %v983
        %v3685 = vunpack.c.l.b16 %v984
        %v3686 = vunpack.c.h.b16 %v984
        %v3687 = vunpack.c.l.b16 %v985
        %v3688 = vunpack.c.h.b16 %v985
        %v3689 = vunpack.c.l.b16 %v986
        %v3690 = vunpack.c.h.b16 %v986
        %v3691 = vunpack.c.l.b16 %v987
        %v3692 = vunpack.c.h.b16 %v987
        %v3693 = vunpack.c.l.b16 %v988
        %v3694 = vunpack.c.h.b16 %v988
        %v3695 = vunpack.c.l.b16 %v989
        %v3696 = vunpack.c.h.b16 %v989
        %v3697 = vunpack.c.l.b16 %v990
        %v3698 = vunpack.c.h.b16 %v990
        %v3699 = vunpack.c.l.b16 %v991
        %v3700 = vunpack.c.h.b16 %v991
        %v3701 = vunpack.c.l.b16 %v992
        %v3702 = vunpack.c.h.b16 %v992
        %v3703 = vunpack.c.l.b16 %v993
        %v3704 = vunpack.c.h.b16 %v993
        %v3705 = vunpack.c.l.b16 %v994
        %v3706 = vunpack.c.h.b16 %v994
        %v3707 = vunpack.c.l.b16 %v995
        %v3708 = vunpack.c.h.b16 %v995
        %v3709 = vunpack.c.l.b16 %v996
        %v3710 = vunpack.c.h.b16 %v996
        %v3711 = vunpack.c.l.b16 %v997
        %v3712 = vunpack.c.h.b16 %v997
        %v3713 = vunpack.c.l.b16 %v998
        %v3714 = vunpack.c.h.b16 %v998
        %v3715 = vunpack.c.l.b16 %v999
        %v3716 = vunpack.c.h.b16 %v999
        %v3717 = vunpack.c.l.b16 %v1000
        %v3718 = vunpack.c.h.b16 %v1000
        %v3719 = vunpack.c.l.b16 %v1001
        %v3720 = vunpack.c.h.b16 %v1001
        %v3721 = vunpack.c.l.b16 %v1002
        %v3722 = vunpack.c.h.b16 %v1002
        %v3723 = vunpack.c.l.b16 %v1003
        %v3724 = vunpack.c.h.b16 %v1003
        %v3725 = vunpack.c.l.b16 %v1004
        %v3726 = vunpack.c.h.b16 %v1004
        %v3727 = vunpack.c.l.b16 %v1005
        %v3728 = vunpack.c.h.b16 %v1005
        %v3729 = vunpack.c.l.b16 %v1006
        %v3730 = vunpack.c.h.b16 %v1006
        %v3731 = vunpack.c.l.b16 %v1007
        %v3732 = vunpack.c.h.b16 %v1007
        %v3733 = vunpack.c.l.b16 %v1008
        %v3734 = vunpack.c.h.b16 %v1008
        %v3735 = vunpack.c.l.b16 %v1009
        %v3736 = vunpack.c.h.b16 %v1009
        %v3737 = vunpack.c.l.b16 %v1010
        %v3738 = vunpack.c.h.b16 %v1010
        %v3739 = vunpack.c.l.b16 %v1011
        %v3740 = vunpack.c.h.b16 %v1011
        %v3741 = vunpack.c.l.b16 %v1012
        %v3742 = vunpack.c.h.b16 %v1012
        %v3743 = vunpack.c.l.b16 %v1013
        %v3744 = vunpack.c.h.b16 %v1013
        %v3745 = vunpack.c.l.b16 %v1014
        %v3746 = vunpack.c.h.b16 %v1014
        %v3747 = vunpack.c.l.b16 %v1015
        %v3748 = vunpack.c.h.b16 %v1015
        %v3749 = vunpack.c.l.b16 %v1016
        %v3750 = vunpack.c.h.b16 %v1016
        %v3751 = vunpack.c.l.b16 %v1017
        %v3752 = vunpack.c.h.b16 %v1017
        %v3753 = vunpack.c.l.b16 %v1018
        %v3754 = vunpack.c.h.b16 %v1018
        %v3755 = vunpack.c.l.b16 %v1019
        %v3756 = vunpack.c.h.b16 %v1019
        %v3757 = vunpack.c.l.b16 %v1020
        %v3758 = vunpack.c.h.b16 %v1020
        %v3759 = vunpack.c.l.b16 %v1021
        %v3760 = vunpack.c.h.b16 %v1021
        %v3761 = vunpack.c.l.b16 %v1022
        %v3762 = vunpack.c.h.b16 %v1022
        %v3763 = vunpack.c.l.b16 %v1023
        %v3764 = vunpack.c.h.b16 %v1023
        %v3765 = vunpack.c.l.b16 %v1024
        %v3766 = vunpack.c.h.b16 %v1024
        %v3767 = vunpack.c.l.b16 %v1025
        %v3768 = vunpack.c.h.b16 %v1025
        %v3769 = vunpack.c.l.b16 %v1026
        %v3770 = vunpack.c.h.b16 %v1026
        %v3771 = vunpack.c.l.b16 %v1027
        %v3772 = vunpack.c.h.b16 %v1027
        %v3773 = vunpack.c.l.b16 %v1028
        %v3774 = vunpack.c.h.b16 %v1028
        %v3775 = vunpack.c.l.b16 %v1029
        %v3776 = vunpack.c.h.b16 %v1029
        %v3777 = vunpack.c.l.b16 %v1030
        %v3778 = vunpack.c.h.b16 %v1030
        %v3779 = vunpack.c.l.b16 %v1031
        %v3780 = vunpack.c.h.b16 %v1031
        %v3781 = vunpack.c.l.b16 %v1032
        %v3782 = vunpack.c.h.b16 %v1032
        %v3783 = vunpack.c.l.b16 %v1033
        %v3784 = vunpack.c.h.b16 %v1033
        %v3785 = vunpack.c.l.b16 %v1034
        %v3786 = vunpack.c.h.b16 %v1034
        %v3787 = vunpack.c.l.b16 %v1035
        %v3788 = vunpack.c.h.b16 %v1035
        %v3789 = vunpack.c.l.b16 %v1036
        %v3790 = vunpack.c.h.b16 %v1036
        %v3791 = vunpack.c.l.b16 %v1037
        %v3792 = vunpack.c.h.b16 %v1037
        %v3793 = vunpack.c.l.b16 %v1038
        %v3794 = vunpack.c.h.b16 %v1038
        %v3795 = vunpack.c.l.b16 %v1039
        %v3796 = vunpack.c.h.b16 %v1039
        %v3797 = vunpack.c.l.b16 %v1040
        %v3798 = vunpack.c.h.b16 %v1040
        %v3799 = vunpack.c.l.b16 %v1041
        %v3800 = vunpack.c.h.b16 %v1041
        %v3801 = vunpack.c.l.b16 %v1042
        %v3802 = vunpack.c.h.b16 %v1042
        %v3803 = vunpack.c.l.b16 %v1043
        %v3804 = vunpack.c.h.b16 %v1043
        %v3805 = vunpack.c.l.b16 %v1044
        %v3806 = vunpack.c.h.b16 %v1044
        %v3807 = vunpack.c.l.b16 %v1045
        %v3808 = vunpack.c.h.b16 %v1045
        %v3809 = vunpack.c.l.b16 %v1046
        %v3810 = vunpack.c.h.b16 %v1046
        %v3811 = vunpack.c.l.b16 %v1047
        %v3812 = vunpack.c.h.b16 %v1047
        %v3813 = vunpack.c.l.b16 %v1048
        %v3814 = vunpack.c.h.b16 %v1048
        %v3815 = vunpack.c.l.b16 %v1049
        %v3816 = vunpack.c.h.b16 %v1049
        %v3817 = vunpack.c.l.b16 %v1050
        %v3818 = vunpack.c.h.b16 %v1050
        %v3819 = vunpack.c.l.b16 %v1051
        %v3820 = vunpack.c.h.b16 %v1051
        %v3821 = vunpack.c.l.b16 %v1052
        %v3822 = vunpack.c.h.b16 %v1052
        %v3823 = vunpack.c.l.b16 %v1053
        %v3824 = vunpack.c.h.b16 %v1053
        %v3825 = vunpack.c.l.b16 %v1054
        %v3826 = vunpack.c.h.b16 %v1054
        %v3827 = vunpack.c.l.b16 %v1055
        %v3828 = vunpack.c.h.b16 %v1055
        %v3829 = vunpack.c.l.b16 %v1056
        %v3830 = vunpack.c.h.b16 %v1056
        %v3831 = vunpack.c.l.b16 %v1057
        %v3832 = vunpack.c.h.b16 %v1057
        %v3833 = vunpack.c.l.b16 %v1058
        %v3834 = vunpack.c.h.b16 %v1058
        %v3835 = vunpack.c.l.b16 %v1059
        %v3836 = vunpack.c.h.b16 %v1059
        %v3837 = vunpack.c.l.b16 %v1060
        %v3838 = vunpack.c.h.b16 %v1060
        %v3839 = vunpack.c.l.b16 %v1061
        %v3840 = vunpack.c.h.b16 %v1061
        %v3841 = vunpack.c.l.b16 %v1062
        %v3842 = vunpack.c.h.b16 %v1062
        %v3843 = vunpack.c.l.b16 %v1063
        %v3844 = vunpack.c.h.b16 %v1063
        %v3845 = vunpack.c.l.b16 %v1064
        %v3846 = vunpack.c.h.b16 %v1064
        %v3847 = vunpack.c.l.b16 %v1065
        %v3848 = vunpack.c.h.b16 %v1065
        %v3849 = vunpack.c.l.b16 %v1066
        %v3850 = vunpack.c.h.b16 %v1066
        %v3851 = vunpack.c.l.b16 %v1067
        %v3852 = vunpack.c.h.b16 %v1067
        %v3853 = vunpack.c.l.b16 %v1068
        %v3854 = vunpack.c.h.b16 %v1068
        %v3855 = vunpack.c.l.b16 %v1069
        %v3856 = vunpack.c.h.b16 %v1069
        %v3857 = vunpack.c.l.b16 %v1070
        %v3858 = vunpack.c.h.b16 %v1070
        %v3859 = vunpack.c.l.b16 %v1071
        %v3860 = vunpack.c.h.b16 %v1071
        %v3861 = vunpack.c.l.b16 %v1072
        %v3862 = vunpack.c.h.b16 %v1072
        %v3863 = vunpack.c.l.b16 %v1073
        %v3864 = vunpack.c.h.b16 %v1073
        %v3865 = vunpack.c.l.b16 %v1074
        %v3866 = vunpack.c.h.b16 %v1074
        %v3867 = vunpack.c.l.b16 %v1075
        %v3868 = vunpack.c.h.b16 %v1075
        %v3869 = vunpack.c.l.b16 %v1076
        %v3870 = vunpack.c.h.b16 %v1076
        %v3871 = vunpack.c.l.b16 %v1077
        %v3872 = vunpack.c.h.b16 %v1077
        %v3873 = vunpack.c.l.b16 %v1078
        %v3874 = vunpack.c.h.b16 %v1078
        %v3875 = vunpack.c.l.b16 %v1079
        %v3876 = vunpack.c.h.b16 %v1079
        %v3877 = vunpack.c.l.b16 %v1080
        %v3878 = vunpack.c.h.b16 %v1080
        %v3879 = vunpack.c.l.b16 %v1081
        %v3880 = vunpack.c.h.b16 %v1081
        %v3881 = vunpack.c.l.b16 %v1082
        %v3882 = vunpack.c.h.b16 %v1082
        %v3883 = vunpack.c.l.b16 %v1083
        %v3884 = vunpack.c.h.b16 %v1083
        %v3885 = vunpack.c.l.b16 %v1084
        %v3886 = vunpack.c.h.b16 %v1084
        %v3887 = vunpack.c.l.b16 %v1085
        %v3888 = vunpack.c.h.b16 %v1085
        %v3889 = vunpack.c.l.b16 %v1086
        %v3890 = vunpack.c.h.b16 %v1086
        %v3891 = vunpack.c.l.b16 %v1087
        %v3892 = vunpack.c.h.b16 %v1087
        %v3893 = vunpack.c.l.b16 %v1088
        %v3894 = vunpack.c.h.b16 %v1088
        %v3895 = vunpack.c.l.b16 %v1089
        %v3896 = vunpack.c.h.b16 %v1089
        %v3897 = vunpack.c.l.b16 %v1090
        %v3898 = vunpack.c.h.b16 %v1090
        %v3899 = vunpack.c.l.b16 %v1091
        %v3900 = vunpack.c.h.b16 %v1091
        %v3901 = vunpack.c.l.b16 %v1092
        %v3902 = vunpack.c.h.b16 %v1092
        %v3903 = vunpack.c.l.b16 %v1093
        %v3904 = vunpack.c.h.b16 %v1093
        %v3905 = vunpack.c.l.b16 %v1094
        %v3906 = vunpack.c.h.b16 %v1094
        %v3907 = vunpack.c.l.b16 %v1095
        %v3908 = vunpack.c.h.b16 %v1095
        %v3909 = vunpack.c.l.b16 %v1096
        %v3910 = vunpack.c.h.b16 %v1096
        %v3911 = vunpack.c.l.b16 %v1097
        %v3912 = vunpack.c.h.b16 %v1097
        %v3913 = vunpack.c.l.b16 %v1098
        %v3914 = vunpack.c.h.b16 %v1098
        %v3915 = vunpack.c.l.b16 %v1099
        %v3916 = vunpack.c.h.b16 %v1099
        %v3917 = vunpack.c.l.b16 %v1100
        %v3918 = vunpack.c.h.b16 %v1100
        %v3919 = vunpack.c.l.b16 %v1101
        %v3920 = vunpack.c.h.b16 %v1101
        %v3921 = vunpack.c.l.b16 %v1102
        %v3922 = vunpack.c.h.b16 %v1102
        %v3923 = vunpack.c.l.b16 %v1103
        %v3924 = vunpack.c.h.b16 %v1103
        %v3925 = vunpack.c.l.b16 %v1104
        %v3926 = vunpack.c.h.b16 %v1104
        %v3927 = vunpack.c.l.b16 %v1105
        %v3928 = vunpack.c.h.b16 %v1105
        %v3929 = vunpack.c.l.b16 %v1106
        %v3930 = vunpack.c.h.b16 %v1106
        %v3931 = vunpack.c.l.b16 %v1107
        %v3932 = vunpack.c.h.b16 %v1107
        %v3933 = vunpack.c.l.b16 %v1108
        %v3934 = vunpack.c.h.b16 %v1108
        %v3935 = vunpack.c.l.b16 %v1109
        %v3936 = vunpack.c.h.b16 %v1109
        %v3937 = vunpack.c.l.b16 %v1110
        %v3938 = vunpack.c.h.b16 %v1110
        %v3939 = vunpack.c.l.b16 %v1111
        %v3940 = vunpack.c.h.b16 %v1111
        %v3941 = vunpack.c.l.b16 %v1112
        %v3942 = vunpack.c.h.b16 %v1112
        %v3943 = vunpack.c.l.b16 %v1113
        %v3944 = vunpack.c.h.b16 %v1113
        %v3945 = vunpack.c.l.b16 %v1114
        %v3946 = vunpack.c.h.b16 %v1114
        %v3947 = vunpack.c.l.b16 %v1115
        %v3948 = vunpack.c.h.b16 %v1115
        %v3949 = vunpack.c.l.b16 %v1116
        %v3950 = vunpack.c.h.b16 %v1116
        %v3951 = vunpack.c.l.b16 %v1117
        %v3952 = vunpack.c.h.b16 %v1117
        %v3953 = vunpack.c.l.b16 %v1118
        %v3954 = vunpack.c.h.b16 %v1118
        %v3955 = vunpack.c.l.b16 %v1119
        %v3956 = vunpack.c.h.b16 %v1119
        %v3957 = vunpack.c.l.b16 %v1120
        %v3958 = vunpack.c.h.b16 %v1120
        %v3959 = vunpack.c.l.b16 %v1121
        %v3960 = vunpack.c.h.b16 %v1121
        %v3961 = vunpack.c.l.b16 %v1122
        %v3962 = vunpack.c.h.b16 %v1122
        %v3963 = vunpack.c.l.b16 %v1123
        %v3964 = vunpack.c.h.b16 %v1123
        %v3965 = vunpack.c.l.b16 %v1124
        %v3966 = vunpack.c.h.b16 %v1124
        %v3967 = vunpack.c.l.b16 %v1125
        %v3968 = vunpack.c.h.b16 %v1125
        %v3969 = vunpack.c.l.b16 %v1126
        %v3970 = vunpack.c.h.b16 %v1126
        %v3971 = vunpack.c.l.b16 %v1127
        %v3972 = vunpack.c.h.b16 %v1127
        %v3973 = vunpack.c.l.b16 %v1128
        %v3974 = vunpack.c.h.b16 %v1128
        %v3975 = vunpack.c.l.b16 %v1129
        %v3976 = vunpack.c.h.b16 %v1129
        %v3977 = vunpack.c.l.b16 %v1130
        %v3978 = vunpack.c.h.b16 %v1130
        %v3979 = vunpack.c.l.b16 %v1131
        %v3980 = vunpack.c.h.b16 %v1131
        %v3981 = vunpack.c.l.b16 %v1132
        %v3982 = vunpack.c.h.b16 %v1132
        %v3983 = vunpack.c.l.b16 %v1133
        %v3984 = vunpack.c.h.b16 %v1133
        %v3985 = vunpack.c.l.b16 %v1134
        %v3986 = vunpack.c.h.b16 %v1134
        %v3987 = vunpack.c.l.b16 %v1135
        %v3988 = vunpack.c.h.b16 %v1135
        %v3989 = vunpack.c.l.b16 %v1136
        %v3990 = vunpack.c.h.b16 %v1136
        %v3991 = vunpack.c.l.b16 %v1137
        %v3992 = vunpack.c.h.b16 %v1137
        %v3993 = vunpack.c.l.b16 %v1138
        %v3994 = vunpack.c.h.b16 %v1138
        %v3995 = vunpack.c.l.b16 %v1139
        %v3996 = vunpack.c.h.b16 %v1139
        %v3997 = vunpack.c.l.b16 %v1140
        %v3998 = vunpack.c.h.b16 %v1140
        %v3999 = vunpack.c.l.b16 %v1141
        %v4000 = vunpack.c.h.b16 %v1141
        %v4001 = vunpack.c.l.b16 %v1142
        %v4002 = vunpack.c.h.b16 %v1142
        %v4003 = vunpack.c.l.b16 %v1143
        %v4004 = vunpack.c.h.b16 %v1143
        %v4005 = vunpack.c.l.b16 %v1144
        %v4006 = vunpack.c.h.b16 %v1144
        %v4007 = vunpack.c.l.b16 %v1145
        %v4008 = vunpack.c.h.b16 %v1145
        %v4009 = vunpack.c.l.b16 %v1146
        %v4010 = vunpack.c.h.b16 %v1146
        %v4011 = vunpack.c.l.b16 %v1147
        %v4012 = vunpack.c.h.b16 %v1147
        %v4013 = vunpack.c.l.b16 %v1148
        %v4014 = vunpack.c.h.b16 %v1148
        %v4015 = vunpack.c.l.b16 %v1149
        %v4016 = vunpack.c.h.b16 %v1149
        %v4017 = vunpack.c.l.b16 %v1150
        %v4018 = vunpack.c.h.b16 %v1150
        %v4019 = vunpack.c.l.b16 %v1151
        %v4020 = vunpack.c.h.b16 %v1151
        %v4021 = vunpack.c.l.b16 %v1152
        %v4022 = vunpack.c.h.b16 %v1152
        %v4023 = vunpack.c.l.b16 %v1153
        %v4024 = vunpack.c.h.b16 %v1153
        %v4025 = vunpack.c.l.b16 %v1154
        %v4026 = vunpack.c.h.b16 %v1154
        %v4027 = vunpack.c.l.b16 %v1155
        %v4028 = vunpack.c.h.b16 %v1155
        %v4029 = vunpack.c.l.b16 %v1156
        %v4030 = vunpack.c.h.b16 %v1156
        %v4031 = vunpack.c.l.b16 %v1157
        %v4032 = vunpack.c.h.b16 %v1157
        %v4033 = vunpack.c.l.b16 %v1158
        %v4034 = vunpack.c.h.b16 %v1158
        %v4035 = vunpack.c.l.b16 %v1159
        %v4036 = vunpack.c.h.b16 %v1159
        %v4037 = vunpack.c.l.b16 %v1160
        %v4038 = vunpack.c.h.b16 %v1160
        %v4039 = vunpack.c.l.b16 %v1161
        %v4040 = vunpack.c.h.b16 %v1161
        %v4041 = vunpack.c.l.b16 %v1162
        %v4042 = vunpack.c.h.b16 %v1162
        %v4043 = vunpack.c.l.b16 %v1163
        %v4044 = vunpack.c.h.b16 %v1163
        %v4045 = vunpack.c.l.b16 %v1164
        %v4046 = vunpack.c.h.b16 %v1164
        %v4047 = vunpack.c.l.b16 %v1165
        %v4048 = vunpack.c.h.b16 %v1165
        %v4049 = vunpack.c.l.b16 %v1166
        %v4050 = vunpack.c.h.b16 %v1166
        %v4051 = vunpack.c.l.b16 %v1167
        %v4052 = vunpack.c.h.b16 %v1167
        %v4053 = vunpack.c.l.b16 %v1168
        %v4054 = vunpack.c.h.b16 %v1168
        %v4055 = vunpack.c.l.b16 %v1169
        %v4056 = vunpack.c.h.b16 %v1169
        %v4057 = vunpack.c.l.b16 %v1170
        %v4058 = vunpack.c.h.b16 %v1170
        %v4059 = vunpack.c.l.b16 %v1171
        %v4060 = vunpack.c.h.b16 %v1171
        %v4061 = vunpack.c.l.b16 %v1172
        %v4062 = vunpack.c.h.b16 %v1172
        %v4063 = vunpack.c.l.b16 %v1173
        %v4064 = vunpack.c.h.b16 %v1173
        %v4065 = vunpack.c.l.b16 %v1174
        %v4066 = vunpack.c.h.b16 %v1174
        %v4067 = vunpack.c.l.b16 %v1175
        %v4068 = vunpack.c.h.b16 %v1175
        %v4069 = vunpack.c.l.b16 %v1176
        %v4070 = vunpack.c.h.b16 %v1176
        %v4071 = vunpack.c.l.b16 %v1177
        %v4072 = vunpack.c.h.b16 %v1177
        %v4073 = vunpack.c.l.b16 %v1178
        %v4074 = vunpack.c.h.b16 %v1178
        %v4075 = vunpack.c.l.b16 %v1179
        %v4076 = vunpack.c.h.b16 %v1179
        %v4077 = vunpack.c.l.b16 %v1180
        %v4078 = vunpack.c.h.b16 %v1180
        %v4079 = vunpack.c.l.b16 %v1181
        %v4080 = vunpack.c.h.b16 %v1181
        %v4081 = vunpack.c.l.b16 %v1182
        %v4082 = vunpack.c.h.b16 %v1182
        %v4083 = vunpack.c.l.b16 %v1183
        %v4084 = vunpack.c.h.b16 %v1183
        %v4085 = vunpack.c.l.b16 %v1184
        %v4086 = vunpack.c.h.b16 %v1184
        %v4087 = vunpack.c.l.b16 %v1185
        %v4088 = vunpack.c.h.b16 %v1185
        %v4089 = vunpack.c.l.b16 %v1186
        %v4090 = vunpack.c.h.b16 %v1186
        %v4091 = vunpack.c.l.b16 %v1187
        %v4092 = vunpack.c.h.b16 %v1187
        %v4093 = vunpack.c.l.b16 %v1188
        %v4094 = vunpack.c.h.b16 %v1188
        %v4095 = vunpack.c.l.b16 %v1189
        %v4096 = vunpack.c.h.b16 %v1189
        %v4097 = vunpack.c.l.b16 %v1190
        %v4098 = vunpack.c.h.b16 %v1190
        %v4099 = vunpack.c.l.b16 %v1191
        %v4100 = vunpack.c.h.b16 %v1191
        %v4101 = vunpack.c.l.b16 %v1192
        %v4102 = vunpack.c.h.b16 %v1192
        %v4103 = vunpack.c.l.b16 %v1193
        %v4104 = vunpack.c.h.b16 %v1193
        %v4105 = vunpack.c.l.b16 %v1194
        %v4106 = vunpack.c.h.b16 %v1194
        %v4107 = vunpack.c.l.b16 %v1195
        %v4108 = vunpack.c.h.b16 %v1195
        %v4109 = vunpack.c.l.b16 %v1196
        %v4110 = vunpack.c.h.b16 %v1196
        %v4111 = vunpack.c.l.b16 %v1197
        %v4112 = vunpack.c.h.b16 %v1197
        %v4113 = vunpack.c.l.b16 %v1198
        %v4114 = vunpack.c.h.b16 %v1198
        %v4115 = vunpack.c.l.b16 %v1199
        %v4116 = vunpack.c.h.b16 %v1199
        %v4117 = vunpack.c.l.b16 %v1200
        %v4118 = vunpack.c.h.b16 %v1200
        %v4119 = vunpack.c.l.b16 %v1201
        %v4120 = vunpack.c.h.b16 %v1201
        %v4121 = vunpack.c.l.b16 %v1202
        %v4122 = vunpack.c.h.b16 %v1202
        %v4123 = vunpack.c.l.b16 %v1203
        %v4124 = vunpack.c.h.b16 %v1203
        %v4125 = vunpack.c.l.b16 %v1204
        %v4126 = vunpack.c.h.b16 %v1204
        %v4127 = vunpack.c.l.b16 %v1205
        %v4128 = vunpack.c.h.b16 %v1205
        %v4129 = vunpack.c.l.b16 %v1206
        %v4130 = vunpack.c.h.b16 %v1206
        %v4131 = vunpack.c.l.b16 %v1207
        %v4132 = vunpack.c.h.b16 %v1207
        %v4133 = vunpack.c.l.b16 %v1208
        %v4134 = vunpack.c.h.b16 %v1208
        %v4135 = vunpack.c.l.b16 %v1209
        %v4136 = vunpack.c.h.b16 %v1209
        %v4137 = vunpack.c.l.b16 %v1210
        %v4138 = vunpack.c.h.b16 %v1210
        %v4139 = vunpack.c.l.b16 %v1211
        %v4140 = vunpack.c.h.b16 %v1211
        %v4141 = vunpack.c.l.b16 %v1212
        %v4142 = vunpack.c.h.b16 %v1212
        %v4143 = vunpack.c.l.b16 %v1213
        %v4144 = vunpack.c.h.b16 %v1213
        %v4145 = vunpack.c.l.b16 %v1214
        %v4146 = vunpack.c.h.b16 %v1214
        %v4147 = vunpack.c.l.b16 %v1215
        %v4148 = vunpack.c.h.b16 %v1215
        %v4149 = vunpack.c.l.b16 %v1216
        %v4150 = vunpack.c.h.b16 %v1216
        %v4151 = vunpack.c.l.b16 %v1217
        %v4152 = vunpack.c.h.b16 %v1217
        %v4153 = vunpack.c.l.b16 %v1218
        %v4154 = vunpack.c.h.b16 %v1218
        %v4155 = vunpack.c.l.b16 %v1219
        %v4156 = vunpack.c.h.b16 %v1219
        %v4157 = vunpack.c.l.b16 %v1220
        %v4158 = vunpack.c.h.b16 %v1220
        %v4159 = vunpack.c.l.b16 %v1221
        %v4160 = vunpack.c.h.b16 %v1221
        %v4161 = vunpack.c.l.b16 %v1222
        %v4162 = vunpack.c.h.b16 %v1222
        %v4163 = vunpack.c.l.b16 %v1223
        %v4164 = vunpack.c.h.b16 %v1223
        %v4165 = vunpack.c.l.b16 %v1224
        %v4166 = vunpack.c.h.b16 %v1224
        %v4167 = vunpack.c.l.b16 %v1225
        %v4168 = vunpack.c.h.b16 %v1225
        %v4169 = vunpack.c.l.b16 %v1226
        %v4170 = vunpack.c.h.b16 %v1226
        %v4171 = vunpack.c.l.b16 %v1227
        %v4172 = vunpack.c.h.b16 %v1227
        %v4173 = vunpack.c.l.b16 %v1228
        %v4174 = vunpack.c.h.b16 %v1228
        %v4175 = vunpack.c.l.b16 %v1229
        %v4176 = vunpack.c.h.b16 %v1229
        %v4177 = vunpack.c.l.b16 %v1230
        %v4178 = vunpack.c.h.b16 %v1230
        %v4179 = vunpack.c.l.b16 %v1231
        %v4180 = vunpack.c.h.b16 %v1231
        %v4181 = vunpack.c.l.b16 %v1232
        %v4182 = vunpack.c.h.b16 %v1232
        %v4183 = vunpack.c.l.b16 %v1233
        %v4184 = vunpack.c.h.b16 %v1233
        %v4185 = vunpack.c.l.b16 %v1234
        %v4186 = vunpack.c.h.b16 %v1234
        %v4187 = vunpack.c.l.b16 %v1235
        %v4188 = vunpack.c.h.b16 %v1235
        %v4189 = vunpack.c.l.b16 %v1236
        %v4190 = vunpack.c.h.b16 %v1236
        %v4191 = vunpack.c.l.b16 %v1237
        %v4192 = vunpack.c.h.b16 %v1237
        %v4193 = vunpack.c.l.b16 %v1238
        %v4194 = vunpack.c.h.b16 %v1238
        %v4195 = vunpack.c.l.b16 %v1239
        %v4196 = vunpack.c.h.b16 %v1239
        %v4197 = vunpack.c.l.b16 %v1240
        %v4198 = vunpack.c.h.b16 %v1240
        %v4199 = vunpack.c.l.b16 %v1241
        %v4200 = vunpack.c.h.b16 %v1241
        %v4201 = vunpack.c.l.b16 %v1242
        %v4202 = vunpack.c.h.b16 %v1242
        %v4203 = vunpack.c.l.b16 %v1243
        %v4204 = vunpack.c.h.b16 %v1243
        %v4205 = vunpack.c.l.b16 %v1244
        %v4206 = vunpack.c.h.b16 %v1244
        %v4207 = vunpack.c.l.b16 %v1245
        %v4208 = vunpack.c.h.b16 %v1245
        %v4209 = vunpack.c.l.b16 %v1246
        %v4210 = vunpack.c.h.b16 %v1246
        %v4211 = vunpack.c.l.b16 %v1247
        %v4212 = vunpack.c.h.b16 %v1247
        %v4213 = vunpack.c.l.b16 %v1248
        %v4214 = vunpack.c.h.b16 %v1248
        %v4215 = vunpack.c.l.b16 %v1249
        %v4216 = vunpack.c.h.b16 %v1249
        %v4217 = vunpack.c.l.b16 %v1250
        %v4218 = vunpack.c.h.b16 %v1250
        %v4219 = vunpack.c.l.b16 %v1251
        %v4220 = vunpack.c.h.b16 %v1251
        %v4221 = vunpack.c.l.b16 %v1252
        %v4222 = vunpack.c.h.b16 %v1252
        %v4223 = vunpack.c.l.b16 %v1253
        %v4224 = vunpack.c.h.b16 %v1253
        %v4225 = vunpack.c.l.b16 %v1254
        %v4226 = vunpack.c.h.b16 %v1254
        %v4227 = vunpack.c.l.b16 %v1255
        %v4228 = vunpack.c.h.b16 %v1255
        %v4229 = vunpack.c.l.b16 %v1256
        %v4230 = vunpack.c.h.b16 %v1256
        %v4231 = vunpack.c.l.b16 %v1257
        %v4232 = vunpack.c.h.b16 %v1257
        %v4233 = vunpack.c.l.b16 %v1258
        %v4234 = vunpack.c.h.b16 %v1258
        %v4235 = vunpack.c.l.b16 %v1259
        %v4236 = vunpack.c.h.b16 %v1259
        %v4237 = vunpack.c.l.b16 %v1260
        %v4238 = vunpack.c.h.b16 %v1260
        %v4239 = vunpack.c.l.b16 %v1261
        %v4240 = vunpack.c.h.b16 %v1261
        %v4241 = vunpack.c.l.b16 %v1262
        %v4242 = vunpack.c.h.b16 %v1262
        %v4243 = vunpack.c.l.b16 %v1263
        %v4244 = vunpack.c.h.b16 %v1263
        %v4245 = vunpack.c.l.b16 %v1264
        %v4246 = vunpack.c.h.b16 %v1264
        %v4247 = vunpack.c.l.b16 %v1265
        %v4248 = vunpack.c.h.b16 %v1265
        %v4249 = vunpack.c.l.b16 %v1266
        %v4250 = vunpack.c.h.b16 %v1266
        %v4251 = vunpack.c.l.b16 %v1267
        %v4252 = vunpack.c.h.b16 %v1267
        %v4253 = vunpack.c.l.b16 %v1268
        %v4254 = vunpack.c.h.b16 %v1268
        %v4255 = vunpack.c.l.b16 %v1269
        %v4256 = vunpack.c.h.b16 %v1269
        %v4257 = vunpack.c.l.b16 %v1270
        %v4258 = vunpack.c.h.b16 %v1270
        %v4259 = vunpack.c.l.b16 %v1271
        %v4260 = vunpack.c.h.b16 %v1271
        %v4261 = vunpack.c.l.b16 %v1272
        %v4262 = vunpack.c.h.b16 %v1272
        %v4263 = vunpack.c.l.b16 %v1273
        %v4264 = vunpack.c.h.b16 %v1273
        %v4265 = vunpack.c.l.b16 %v1274
        %v4266 = vunpack.c.h.b16 %v1274
        %v4267 = vunpack.c.l.b16 %v1275
        %v4268 = vunpack.c.h.b16 %v1275
        %v4269 = vunpack.c.l.b16 %v1276
        %v4270 = vunpack.c.h.b16 %v1276
        %v4271 = vunpack.c.l.b16 %v1277
        %v4272 = vunpack.c.h.b16 %v1277
        %v4273 = vunpack.c.l.b16 %v1278
        %v4274 = vunpack.c.h.b16 %v1278
        %v4275 = vunpack.c.l.b16 %v1279
        %v4276 = vunpack.c.h.b16 %v1279
        %v4277 = vunpack.c.l.b16 %v1280
        %v4278 = vunpack.c.h.b16 %v1280
        %v4279 = vunpack.c.l.b16 %v1281
        %v4280 = vunpack.c.h.b16 %v1281
        %v4281 = vunpack.c.l.b16 %v1282
        %v4282 = vunpack.c.h.b16 %v1282
        %v4283 = vunpack.c.l.b16 %v1283
        %v4284 = vunpack.c.h.b16 %v1283
        %v4285 = vunpack.c.l.b16 %v1284
        %v4286 = vunpack.c.h.b16 %v1284
        %v4287 = vunpack.c.l.b16 %v1285
        %v4288 = vunpack.c.h.b16 %v1285
        %v4289 = vunpack.c.l.b16 %v1286
        %v4290 = vunpack.c.h.b16 %v1286
        %v4291 = vunpack.c.l.b16 %v1287
        %v4292 = vunpack.c.h.b16 %v1287
        %v4293 = vunpack.c.l.b16 %v1288
        %v4294 = vunpack.c.h.b16 %v1288
        %v4295 = vunpack.c.l.b16 %v1289
        %v4296 = vunpack.c.h.b16 %v1289
        %v4297 = vunpack.c.l.b16 %v1290
        %v4298 = vunpack.c.h.b16 %v1290
        %v4299 = vunpack.c.l.b16 %v1291
        %v4300 = vunpack.c.h.b16 %v1291
        %v4301 = vunpack.c.l.b16 %v1292
        %v4302 = vunpack.c.h.b16 %v1292
        %v4303 = vunpack.c.l.b16 %v1293
        %v4304 = vunpack.c.h.b16 %v1293
        %v4305 = vunpack.c.l.b16 %v1294
        %v4306 = vunpack.c.h.b16 %v1294
        %v4307 = vunpack.c.l.b16 %v1295
        %v4308 = vunpack.c.h.b16 %v1295
        %v4309 = vunpack.c.l.b16 %v1296
        %v4310 = vunpack.c.h.b16 %v1296
        %v4311 = vunpack.c.l.b16 %v1297
        %v4312 = vunpack.c.h.b16 %v1297
        %v4313 = vunpack.c.l.b16 %v1298
        %v4314 = vunpack.c.h.b16 %v1298
        %v4315 = vunpack.c.l.b16 %v1299
        %v4316 = vunpack.c.h.b16 %v1299
        %v4317 = vunpack.c.l.b16 %v1300
        %v4318 = vunpack.c.h.b16 %v1300
        %v4319 = vunpack.c.l.b16 %v1301
        %v4320 = vunpack.c.h.b16 %v1301
        %v4321 = vunpack.c.l.b16 %v1302
        %v4322 = vunpack.c.h.b16 %v1302
        %v4323 = vunpack.c.l.b16 %v1303
        %v4324 = vunpack.c.h.b16 %v1303
        %v4325 = vunpack.c.l.b16 %v1304
        %v4326 = vunpack.c.h.b16 %v1304
        %v4327 = vunpack.c.l.b16 %v1305
        %v4328 = vunpack.c.h.b16 %v1305
        %v4329 = vunpack.c.l.b16 %v1306
        %v4330 = vunpack.c.h.b16 %v1306
        %v4331 = vunpack.c.l.b16 %v1307
        %v4332 = vunpack.c.h.b16 %v1307
        %v4333 = vunpack.c.l.b16 %v1308
        %v4334 = vunpack.c.h.b16 %v1308
        %v4335 = vunpack.c.l.b16 %v1309
        %v4336 = vunpack.c.h.b16 %v1309
        %v4337 = vunpack.c.l.b16 %v1310
        %v4338 = vunpack.c.h.b16 %v1310
        %v4339 = vunpack.c.l.b16 %v1311
        %v4340 = vunpack.c.h.b16 %v1311
        %v4341 = vunpack.c.l.b16 %v1312
        %v4342 = vunpack.c.h.b16 %v1312
        %v4343 = vunpack.c.l.b16 %v1313
        %v4344 = vunpack.c.h.b16 %v1313
        %v4345 = vunpack.c.l.b16 %v1314
        %v4346 = vunpack.c.h.b16 %v1314
        %v4347 = vunpack.c.l.b16 %v1315
        %v4348 = vunpack.c.h.b16 %v1315
        %v4349 = vunpack.c.l.b16 %v1316
        %v4350 = vunpack.c.h.b16 %v1316
        %v4351 = vunpack.c.l.b16 %v1317
        %v4352 = vunpack.c.h.b16 %v1317
        %v4353 = vunpack.c.l.b16 %v1318
        %v4354 = vunpack.c.h.b16 %v1318
        %v4355 = vunpack.c.l.b16 %v1319
        %v4356 = vunpack.c.h.b16 %v1319
        %v4357 = vunpack.c.l.b16 %v1320
        %v4358 = vunpack.c.h.b16 %v1320
        %v4359 = vunpack.c.l.b16 %v1321
        %v4360 = vunpack.c.h.b16 %v1321
        %v4361 = vunpack.c.l.b16 %v1322
        %v4362 = vunpack.c.h.b16 %v1322
        %v4363 = vunpack.c.l.b16 %v1323
        %v4364 = vunpack.c.h.b16 %v1323
        %v4365 = vunpack.c.l.b16 %v1324
        %v4366 = vunpack.c.h.b16 %v1324
        %v4367 = vunpack.c.l.b16 %v1325
        %v4368 = vunpack.c.h.b16 %v1325
        %v4369 = vunpack.c.l.b16 %v1326
        %v4370 = vunpack.c.h.b16 %v1326
        %v4371 = vunpack.c.l.b16 %v1327
        %v4372 = vunpack.c.h.b16 %v1327
        %v4373 = vunpack.c.l.b16 %v1328
        %v4374 = vunpack.c.h.b16 %v1328
        %v4375 = vunpack.c.l.b16 %v1329
        %v4376 = vunpack.c.h.b16 %v1329
        %v4377 = vunpack.c.l.b16 %v1330
        %v4378 = vunpack.c.h.b16 %v1330
        %v4379 = vunpack.c.l.b16 %v1331
        %v4380 = vunpack.c.h.b16 %v1331
        %v4381 = vunpack.c.l.b16 %v1332
        %v4382 = vunpack.c.h.b16 %v1332
        %v4383 = vunpack.c.l.b16 %v1333
        %v4384 = vunpack.c.h.b16 %v1333
        %v4385 = vunpack.c.l.b16 %v1334
        %v4386 = vunpack.c.h.b16 %v1334
        %v4387 = vunpack.c.l.b16 %v1335
        %v4388 = vunpack.c.h.b16 %v1335
        %v4389 = vunpack.c.l.b16 %v1336
        %v4390 = vunpack.c.h.b16 %v1336
        %v4391 = vunpack.c.l.b16 %v1337
        %v4392 = vunpack.c.h.b16 %v1337
        %v4393 = vunpack.c.l.b16 %v1338
        %v4394 = vunpack.c.h.b16 %v1338
        %v4395 = vunpack.c.l.b16 %v1339
        %v4396 = vunpack.c.h.b16 %v1339
        %v4397 = vunpack.c.l.b16 %v1340
        %v4398 = vunpack.c.h.b16 %v1340
        %v4399 = vunpack.c.l.b16 %v1341
        %v4400 = vunpack.c.h.b16 %v1341
        %v4401 = vunpack.c.l.b16 %v1342
        %v4402 = vunpack.c.h.b16 %v1342
        %v4403 = vunpack.c.l.b16 %v1343
        %v4404 = vunpack.c.h.b16 %v1343
        %v4405 = vunpack.c.l.b16 %v1344
        %v4406 = vunpack.c.h.b16 %v1344
        %v4407 = vunpack.c.l.b16 %v1345
        %v4408 = vunpack.c.h.b16 %v1345
        %v4409 = vunpack.c.l.b16 %v1346
        %v4410 = vunpack.c.h.b16 %v1346
        %v4411 = vunpack.c.l.b16 %v1347
        %v4412 = vunpack.c.h.b16 %v1347
        %v4413 = vunpack.c.l.b16 %v1348
        %v4414 = vunpack.c.h.b16 %v1348
        %v4415 = vunpack.c.l.b16 %v1349
        %v4416 = vunpack.c.h.b16 %v1349
        %v4417 = vunpack.c.l.b16 %v1350
        %v4418 = vunpack.c.h.b16 %v1350
        %v4419 = vunpack.c.l.b16 %v1351
        %v4420 = vunpack.c.h.b16 %v1351
        %v4421 = vunpack.c.l.b16 %v1352
        %v4422 = vunpack.c.h.b16 %v1352
        %v4423 = vunpack.c.l.b16 %v1353
        %v4424 = vunpack.c.h.b16 %v1353
        %v4425 = vunpack.c.l.b16 %v1354
        %v4426 = vunpack.c.h.b16 %v1354
        %v4427 = vunpack.c.l.b16 %v1355
        %v4428 = vunpack.c.h.b16 %v1355
        %v4429 = vunpack.c.l.b16 %v1356
        %v4430 = vunpack.c.h.b16 %v1356
        %v4431 = vunpack.c.l.b16 %v1357
        %v4432 = vunpack.c.h.b16 %v1357
        %v4433 = vunpack.c.l.b16 %v1358
        %v4434 = vunpack.c.h.b16 %v1358
        %v4435 = vunpack.c.l.b16 %v1359
        %v4436 = vunpack.c.h.b16 %v1359
        %v4437 = vunpack.c.l.b16 %v1360
        %v4438 = vunpack.c.h.b16 %v1360
        %v4439 = vunpack.c.l.b16 %v1361
        %v4440 = vunpack.c.h.b16 %v1361
        %v4441 = vunpack.c.l.b16 %v1362
        %v4442 = vunpack.c.h.b16 %v1362
        %v4443 = vunpack.c.l.b16 %v1363
        %v4444 = vunpack.c.h.b16 %v1363
        %v4445 = vunpack.c.l.b16 %v1364
        %v4446 = vunpack.c.h.b16 %v1364
        %v4447 = vunpack.c.l.b16 %v1365
        %v4448 = vunpack.c.h.b16 %v1365
        %v4449 = vunpack.c.l.b16 %v1366
        %v4450 = vunpack.c.h.b16 %v1366
        %v4451 = vunpack.c.l.b16 %v1367
        %v4452 = vunpack.c.h.b16 %v1367
        %v4453 = vunpack.c.l.b16 %v1368
        %v4454 = vunpack.c.h.b16 %v1368
        %v4455 = vunpack.c.l.b16 %v1369
        %v4456 = vunpack.c.h.b16 %v1369
        %v4457 = vunpack.c.l.b16 %v1370
        %v4458 = vunpack.c.h.b16 %v1370
        %v4459 = vunpack.c.l.b16 %v1371
        %v4460 = vunpack.c.h.b16 %v1371
        %v4461 = vunpack.c.l.b16 %v1372
        %v4462 = vunpack.c.h.b16 %v1372
        %v4463 = vunpack.c.l.b16 %v1373
        %v4464 = vunpack.c.h.b16 %v1373
        %v4465 = vunpack.c.l.b16 %v1374
        %v4466 = vunpack.c.h.b16 %v1374
        %v4467 = vunpack.c.l.b16 %v1375
        %v4468 = vunpack.c.h.b16 %v1375
        %v4469 = vunpack.c.l.b16 %v1376
        %v4470 = vunpack.c.h.b16 %v1376
        %v4471 = vunpack.c.l.b16 %v1377
        %v4472 = vunpack.c.h.b16 %v1377
        %v4473 = vunpack.c.l.b16 %v1378
        %v4474 = vunpack.c.h.b16 %v1378
        %v4475 = vunpack.c.l.b16 %v1379
        %v4476 = vunpack.c.h.b16 %v1379
        %v4477 = vunpack.c.l.b16 %v1380
        %v4478 = vunpack.c.h.b16 %v1380
        %v4479 = vunpack.c.l.b16 %v1381
        %v4480 = vunpack.c.h.b16 %v1381
        %v4481 = vunpack.c.l.b16 %v1382
        %v4482 = vunpack.c.h.b16 %v1382
        %v4483 = vunpack.c.l.b16 %v1383
        %v4484 = vunpack.c.h.b16 %v1383
        %v4485 = vunpack.c.l.b16 %v1384
        %v4486 = vunpack.c.h.b16 %v1384
        %v4487 = vunpack.c.l.b16 %v1385
        %v4488 = vunpack.c.h.b16 %v1385
        %v4489 = vunpack.c.l.b16 %v1386
        %v4490 = vunpack.c.h.b16 %v1386
        %v4491 = vunpack.c.l.b16 %v1387
        %v4492 = vunpack.c.h.b16 %v1387
        %v4493 = vunpack.c.l.b16 %v1388
        %v4494 = vunpack.c.h.b16 %v1388
        %v4495 = vunpack.c.l.b16 %v1389
        %v4496 = vunpack.c.h.b16 %v1389
        %v4497 = vunpack.c.l.b16 %v1390
        %v4498 = vunpack.c.h.b16 %v1390
        %v4499 = vunpack.c.l.b16 %v1391
        %v4500 = vunpack.c.h.b16 %v1391
        %v4501 = vunpack.c.l.b16 %v1392
        %v4502 = vunpack.c.h.b16 %v1392
        %v4503 = vunpack.c.l.b16 %v1393
        %v4504 = vunpack.c.h.b16 %v1393
        %v4505 = vunpack.c.l.b16 %v1394
        %v4506 = vunpack.c.h.b16 %v1394
        %v4507 = vunpack.c.l.b16 %v1395
        %v4508 = vunpack.c.h.b16 %v1395
        %v4509 = vunpack.c.l.b16 %v1396
        %v4510 = vunpack.c.h.b16 %v1396
        %v4511 = vunpack.c.l.b16 %v1397
        %v4512 = vunpack.c.h.b16 %v1397
        %v4513 = vunpack.c.l.b16 %v1398
        %v4514 = vunpack.c.h.b16 %v1398
        %v4515 = vunpack.c.l.b16 %v1399
        %v4516 = vunpack.c.h.b16 %v1399
        %v4517 = vunpack.c.l.b16 %v1400
        %v4518 = vunpack.c.h.b16 %v1400
        %v4519 = vunpack.c.l.b16 %v1401
        %v4520 = vunpack.c.h.b16 %v1401
        %v4521 = vunpack.c.l.b16 %v1402
        %v4522 = vunpack.c.h.b16 %v1402
        %v4523 = vunpack.c.l.b16 %v1403
        %v4524 = vunpack.c.h.b16 %v1403
        %v4525 = vunpack.c.l.b16 %v1404
        %v4526 = vunpack.c.h.b16 %v1404
        %v4527 = vunpack.c.l.b16 %v1405
        %v4528 = vunpack.c.h.b16 %v1405
        %v4529 = vunpack.c.l.b16 %v1406
        %v4530 = vunpack.c.h.b16 %v1406
        %v4531 = vunpack.c.l.b16 %v1407
        %v4532 = vunpack.c.h.b16 %v1407
        %v4533 = vunpack.c.l.b16 %v1408
        %v4534 = vunpack.c.h.b16 %v1408
        %v4535 = vunpack.c.l.b16 %v1409
        %v4536 = vunpack.c.h.b16 %v1409
        %v4537 = vunpack.c.l.b16 %v1410
        %v4538 = vunpack.c.h.b16 %v1410
        %v4539 = vunpack.c.l.b16 %v1411
        %v4540 = vunpack.c.h.b16 %v1411
        %v4541 = vunpack.c.l.b16 %v1412
        %v4542 = vunpack.c.h.b16 %v1412
        %v4543 = vunpack.c.l.b16 %v1413
        %v4544 = vunpack.c.h.b16 %v1413
        %v4545 = vunpack.c.l.b16 %v1414
        %v4546 = vunpack.c.h.b16 %v1414
        %v4547 = vunpack.c.l.b16 %v1415
        %v4548 = vunpack.c.h.b16 %v1415
        %v4549 = vunpack.c.l.b16 %v1416
        %v4550 = vunpack.c.h.b16 %v1416
        %v4551 = vunpack.c.l.b16 %v1417
        %v4552 = vunpack.c.h.b16 %v1417
        %v4553 = vunpack.c.l.b16 %v1418
        %v4554 = vunpack.c.h.b16 %v1418
        %v4555 = vunpack.c.l.b16 %v1419
        %v4556 = vunpack.c.h.b16 %v1419
        %v4557 = vunpack.c.l.b16 %v1420
        %v4558 = vunpack.c.h.b16 %v1420
        %v4559 = vunpack.c.l.b16 %v1421
        %v4560 = vunpack.c.h.b16 %v1421
        %v4561 = vunpack.c.l.b16 %v1422
        %v4562 = vunpack.c.h.b16 %v1422
        %v4563 = vunpack.c.l.b16 %v1423
        %v4564 = vunpack.c.h.b16 %v1423
        %v4565 = vunpack.c.l.b16 %v1424
        %v4566 = vunpack.c.h.b16 %v1424
        %v4567 = vunpack.c.l.b16 %v1425
        %v4568 = vunpack.c.h.b16 %v1425
        %v4569 = vunpack.c.l.b16 %v1426
        %v4570 = vunpack.c.h.b16 %v1426
        %v4571 = vunpack.c.l.b16 %v1427
        %v4572 = vunpack.c.h.b16 %v1427
        %v4573 = vunpack.c.l.b16 %v1428
        %v4574 = vunpack.c.h.b16 %v1428
        %v4575 = vunpack.c.l.b16 %v1429
        %v4576 = vunpack.c.h.b16 %v1429
        %v4577 = vunpack.c.l.b16 %v1430
        %v4578 = vunpack.c.h.b16 %v1430
        %v4579 = vunpack.c.l.b16 %v1431
        %v4580 = vunpack.c.h.b16 %v1431
        %v4581 = vunpack.c.l.b16 %v1432
        %v4582 = vunpack.c.h.b16 %v1432
        %v4583 = vunpack.c.l.b16 %v1433
        %v4584 = vunpack.c.h.b16 %v1433
        %v4585 = vunpack.c.l.b16 %v1434
        %v4586 = vunpack.c.h.b16 %v1434
        %v4587 = vpack.c.b16 %v2547, %v2539
        %v4588 = vpack.c.b16 %v2548, %v2540
        %v4589 = vpack.c.b16 %v2549, %v2541
        %v4590 = vpack.c.b16 %v2550, %v2542
        %v4591 = vpack.c.b16 %v2551, %v2543
        %v4592 = vpack.c.b16 %v2552, %v2544
        %v4593 = vpack.c.b16 %v2553, %v2545
        %v4594 = vpack.c.b16 %v2554, %v2546
        %v4595 = vpack.c.b16 %v2563, %v2555
        %v4596 = vpack.c.b16 %v2564, %v2556
        %v4597 = vpack.c.b16 %v2565, %v2557
        %v4598 = vpack.c.b16 %v2566, %v2558
        %v4599 = vpack.c.b16 %v2567, %v2559
        %v4600 = vpack.c.b16 %v2568, %v2560
        %v4601 = vpack.c.b16 %v2569, %v2561
        %v4602 = vpack.c.b16 %v2570, %v2562
        %v4603 = vpack.c.b16 %v2579, %v2571
        %v4604 = vpack.c.b16 %v2580, %v2572
        %v4605 = vpack.c.b16 %v2581, %v2573
        %v4606 = vpack.c.b16 %v2582, %v2574
        %v4607 = vpack.c.b16 %v2583, %v2575
        %v4608 = vpack.c.b16 %v2584, %v2576
        %v4609 = vpack.c.b16 %v2585, %v2577
        %v4610 = vpack.c.b16 %v2586, %v2578
        %v4611 = vpack.c.b16 %v2595, %v2587
        %v4612 = vpack.c.b16 %v2596, %v2588
        %v4613 = vpack.c.b16 %v2597, %v2589
        %v4614 = vpack.c.b16 %v2598, %v2590
        %v4615 = vpack.c.b16 %v2599, %v2591
        %v4616 = vpack.c.b16 %v2600, %v2592
        %v4617 = vpack.c.b16 %v2601, %v2593
        %v4618 = vpack.c.b16 %v2602, %v2594
        %v4619 = vpack.c.b16 %v2611, %v2603
        %v4620 = vpack.c.b16 %v2612, %v2604
        %v4621 = vpack.c.b16 %v2613, %v2605
        %v4622 = vpack.c.b16 %v2614, %v2606
        %v4623 = vpack.c.b16 %v2615, %v2607
        %v4624 = vpack.c.b16 %v2616, %v2608
        %v4625 = vpack.c.b16 %v2617, %v2609
        %v4626 = vpack.c.b16 %v2618, %v2610
        %v4627 = vpack.c.b16 %v2627, %v2619
        %v4628 = vpack.c.b16 %v2628, %v2620
        %v4629 = vpack.c.b16 %v2629, %v2621
        %v4630 = vpack.c.b16 %v2630, %v2622
        %v4631 = vpack.c.b16 %v2631, %v2623
        %v4632 = vpack.c.b16 %v2632, %v2624
        %v4633 = vpack.c.b16 %v2633, %v2625
        %v4634 = vpack.c.b16 %v2634, %v2626
        %v4635 = vpack.c.b16 %v2643, %v2635
        %v4636 = vpack.c.b16 %v2644, %v2636
        %v4637 = vpack.c.b16 %v2645, %v2637
        %v4638 = vpack.c.b16 %v2646, %v2638
        %v4639 = vpack.c.b16 %v2647, %v2639
        %v4640 = vpack.c.b16 %v2648, %v2640
        %v4641 = vpack.c.b16 %v2649, %v2641
        %v4642 = vpack.c.b16 %v2650, %v2642
        %v4643 = vpack.c.b16 %v2659, %v2651
        %v4644 = vpack.c.b16 %v2660, %v2652
        %v4645 = vpack.c.b16 %v2661, %v2653
        %v4646 = vpack.c.b16 %v2662, %v2654
        %v4647 = vpack.c.b16 %v2663, %v2655
        %v4648 = vpack.c.b16 %v2664, %v2656
        %v4649 = vpack.c.b16 %v2665, %v2657
        %v4650 = vpack.c.b16 %v2666, %v2658
        %v4651 = vpack.c.b16 %v2675, %v2667
        %v4652 = vpack.c.b16 %v2676, %v2668
        %v4653 = vpack.c.b16 %v2677, %v2669
        %v4654 = vpack.c.b16 %v2678, %v2670
        %v4655 = vpack.c.b16 %v2679, %v2671
        %v4656 = vpack.c.b16 %v2680, %v2672
        %v4657 = vpack.c.b16 %v2681, %v2673
        %v4658 = vpack.c.b16 %v2682, %v2674
        %v4659 = vpack.c.b16 %v2691, %v2683
        %v4660 = vpack.c.b16 %v2692, %v2684
        %v4661 = vpack.c.b16 %v2693, %v2685
        %v4662 = vpack.c.b16 %v2694, %v2686
        %v4663 = vpack.c.b16 %v2695, %v2687
        %v4664 = vpack.c.b16 %v2696, %v2688
        %v4665 = vpack.c.b16 %v2697, %v2689
        %v4666 = vpack.c.b16 %v2698, %v2690
        %v4667 = vpack.c.b16 %v2707, %v2699
        %v4668 = vpack.c.b16 %v2708, %v2700
        %v4669 = vpack.c.b16 %v2709, %v2701
        %v4670 = vpack.c.b16 %v2710, %v2702
        %v4671 = vpack.c.b16 %v2711, %v2703
        %v4672 = vpack.c.b16 %v2712, %v2704
        %v4673 = vpack.c.b16 %v2713, %v2705
        %v4674 = vpack.c.b16 %v2714, %v2706
        %v4675 = vpack.c.b16 %v2723, %v2715
        %v4676 = vpack.c.b16 %v2724, %v2716
        %v4677 = vpack.c.b16 %v2725, %v2717
        %v4678 = vpack.c.b16 %v2726, %v2718
        %v4679 = vpack.c.b16 %v2727, %v2719
        %v4680 = vpack.c.b16 %v2728, %v2720
        %v4681 = vpack.c.b16 %v2729, %v2721
        %v4682 = vpack.c.b16 %v2730, %v2722
        %v4683 = vpack.c.b16 %v2739, %v2731
        %v4684 = vpack.c.b16 %v2740, %v2732
        %v4685 = vpack.c.b16 %v2741, %v2733
        %v4686 = vpack.c.b16 %v2742, %v2734
        %v4687 = vpack.c.b16 %v2743, %v2735
        %v4688 = vpack.c.b16 %v2744, %v2736
        %v4689 = vpack.c.b16 %v2745, %v2737
        %v4690 = vpack.c.b16 %v2746, %v2738
        %v4691 = vpack.c.b16 %v2755, %v2747
        %v4692 = vpack.c.b16 %v2756, %v2748
        %v4693 = vpack.c.b16 %v2757, %v2749
        %v4694 = vpack.c.b16 %v2758, %v2750
        %v4695 = vpack.c.b16 %v2759, %v2751
        %v4696 = vpack.c.b16 %v2760, %v2752
        %v4697 = vpack.c.b16 %v2761, %v2753
        %v4698 = vpack.c.b16 %v2762, %v2754
        %v4699 = vpack.c.b16 %v2771, %v2763
        %v4700 = vpack.c.b16 %v2772, %v2764
        %v4701 = vpack.c.b16 %v2773, %v2765
        %v4702 = vpack.c.b16 %v2774, %v2766
        %v4703 = vpack.c.b16 %v2775, %v2767
        %v4704 = vpack.c.b16 %v2776, %v2768
        %v4705 = vpack.c.b16 %v2777, %v2769
        %v4706 = vpack.c.b16 %v2778, %v2770
        %v4707 = vpack.c.b16 %v2787, %v2779
        %v4708 = vpack.c.b16 %v2788, %v2780
        %v4709 = vpack.c.b16 %v2789, %v2781
        %v4710 = vpack.c.b16 %v2790, %v2782
        %v4711 = vpack.c.b16 %v2791, %v2783
        %v4712 = vpack.c.b16 %v2792, %v2784
        %v4713 = vpack.c.b16 %v2793, %v2785
        %v4714 = vpack.c.b16 %v2794, %v2786
        %v4715 = vpack.c.b16 %v2803, %v2795
        %v4716 = vpack.c.b16 %v2804, %v2796
        %v4717 = vpack.c.b16 %v2805, %v2797
        %v4718 = vpack.c.b16 %v2806, %v2798
        %v4719 = vpack.c.b16 %v2807, %v2799
        %v4720 = vpack.c.b16 %v2808, %v2800
        %v4721 = vpack.c.b16 %v2809, %v2801
        %v4722 = vpack.c.b16 %v2810, %v2802
        %v4723 = vpack.c.b16 %v2819, %v2811
        %v4724 = vpack.c.b16 %v2820, %v2812
        %v4725 = vpack.c.b16 %v2821, %v2813
        %v4726 = vpack.c.b16 %v2822, %v2814
        %v4727 = vpack.c.b16 %v2823, %v2815
        %v4728 = vpack.c.b16 %v2824, %v2816
        %v4729 = vpack.c.b16 %v2825, %v2817
        %v4730 = vpack.c.b16 %v2826, %v2818
        %v4731 = vpack.c.b16 %v2835, %v2827
        %v4732 = vpack.c.b16 %v2836, %v2828
        %v4733 = vpack.c.b16 %v2837, %v2829
        %v4734 = vpack.c.b16 %v2838, %v2830
        %v4735 = vpack.c.b16 %v2839, %v2831
        %v4736 = vpack.c.b16 %v2840, %v2832
        %v4737 = vpack.c.b16 %v2841, %v2833
        %v4738 = vpack.c.b16 %v2842, %v2834
        %v4739 = vpack.c.b16 %v2851, %v2843
        %v4740 = vpack.c.b16 %v2852, %v2844
        %v4741 = vpack.c.b16 %v2853, %v2845
        %v4742 = vpack.c.b16 %v2854, %v2846
        %v4743 = vpack.c.b16 %v2855, %v2847
        %v4744 = vpack.c.b16 %v2856, %v2848
        %v4745 = vpack.c.b16 %v2857, %v2849
        %v4746 = vpack.c.b16 %v2858, %v2850
        %v4747 = vpack.c.b16 %v2867, %v2859
        %v4748 = vpack.c.b16 %v2868, %v2860
        %v4749 = vpack.c.b16 %v2869, %v2861
        %v4750 = vpack.c.b16 %v2870, %v2862
        %v4751 = vpack.c.b16 %v2871, %v2863
        %v4752 = vpack.c.b16 %v2872, %v2864
        %v4753 = vpack.c.b16 %v2873, %v2865
        %v4754 = vpack.c.b16 %v2874, %v2866
        %v4755 = vpack.c.b16 %v2883, %v2875
        %v4756 = vpack.c.b16 %v2884, %v2876
        %v4757 = vpack.c.b16 %v2885, %v2877
        %v4758 = vpack.c.b16 %v2886, %v2878
        %v4759 = vpack.c.b16 %v2887, %v2879
        %v4760 = vpack.c.b16 %v2888, %v2880
        %v4761 = vpack.c.b16 %v2889, %v2881
        %v4762 = vpack.c.b16 %v2890, %v2882
        %v4763 = vpack.c.b16 %v2899, %v2891
        %v4764 = vpack.c.b16 %v2900, %v2892
        %v4765 = vpack.c.b16 %v2901, %v2893
        %v4766 = vpack.c.b16 %v2902, %v2894
        %v4767 = vpack.c.b16 %v2903, %v2895
        %v4768 = vpack.c.b16 %v2904, %v2896
        %v4769 = vpack.c.b16 %v2905, %v2897
        %v4770 = vpack.c.b16 %v2906, %v2898
        %v4771 = vpack.c.b16 %v2915, %v2907
        %v4772 = vpack.c.b16 %v2916, %v2908
        %v4773 = vpack.c.b16 %v2917, %v2909
        %v4774 = vpack.c.b16 %v2918, %v2910
        %v4775 = vpack.c.b16 %v2919, %v2911
        %v4776 = vpack.c.b16 %v2920, %v2912
        %v4777 = vpack.c.b16 %v2921, %v2913
        %v4778 = vpack.c.b16 %v2922, %v2914
        %v4779 = vpack.c.b16 %v2931, %v2923
        %v4780 = vpack.c.b16 %v2932, %v2924
        %v4781 = vpack.c.b16 %v2933, %v2925
        %v4782 = vpack.c.b16 %v2934, %v2926
        %v4783 = vpack.c.b16 %v2935, %v2927
        %v4784 = vpack.c.b16 %v2936, %v2928
        %v4785 = vpack.c.b16 %v2937, %v2929
        %v4786 = vpack.c.b16 %v2938, %v2930
        %v4787 = vpack.c.b16 %v2947, %v2939
        %v4788 = vpack.c.b16 %v2948, %v2940
        %v4789 = vpack.c.b16 %v2949, %v2941
        %v4790 = vpack.c.b16 %v2950, %v2942
        %v4791 = vpack.c.b16 %v2951, %v2943
        %v4792 = vpack.c.b16 %v2952, %v2944
        %v4793 = vpack.c.b16 %v2953, %v2945
        %v4794 = vpack.c.b16 %v2954, %v2946
        %v4795 = vpack.c.b16 %v2963, %v2955
        %v4796 = vpack.c.b16 %v2964, %v2956
        %v4797 = vpack.c.b16 %v2965, %v2957
        %v4798 = vpack.c.b16 %v2966, %v2958
        %v4799 = vpack.c.b16 %v2967, %v2959
        %v4800 = vpack.c.b16 %v2968, %v2960
        %v4801 = vpack.c.b16 %v2969, %v2961
        %v4802 = vpack.c.b16 %v2970, %v2962
        %v4803 = vpack.c.b16 %v2979, %v2971
        %v4804 = vpack.c.b16 %v2980, %v2972
        %v4805 = vpack.c.b16 %v2981, %v2973
        %v4806 = vpack.c.b16 %v2982, %v2974
        %v4807 = vpack.c.b16 %v2983, %v2975
        %v4808 = vpack.c.b16 %v2984, %v2976
        %v4809 = vpack.c.b16 %v2985, %v2977
        %v4810 = vpack.c.b16 %v2986, %v2978
        %v4811 = vpack.c.b16 %v2995, %v2987
        %v4812 = vpack.c.b16 %v2996, %v2988
        %v4813 = vpack.c.b16 %v2997, %v2989
        %v4814 = vpack.c.b16 %v2998, %v2990
        %v4815 = vpack.c.b16 %v2999, %v2991
        %v4816 = vpack.c.b16 %v3000, %v2992
        %v4817 = vpack.c.b16 %v3001, %v2993
        %v4818 = vpack.c.b16 %v3002, %v2994
        %v4819 = vpack.c.b16 %v3011, %v3003
        %v4820 = vpack.c.b16 %v3012, %v3004
        %v4821 = vpack.c.b16 %v3013, %v3005
        %v4822 = vpack.c.b16 %v3014, %v3006
        %v4823 = vpack.c.b16 %v3015, %v3007
        %v4824 = vpack.c.b16 %v3016, %v3008
        %v4825 = vpack.c.b16 %v3017, %v3009
        %v4826 = vpack.c.b16 %v3018, %v3010
        %v4827 = vpack.c.b16 %v3027, %v3019
        %v4828 = vpack.c.b16 %v3028, %v3020
        %v4829 = vpack.c.b16 %v3029, %v3021
        %v4830 = vpack.c.b16 %v3030, %v3022
        %v4831 = vpack.c.b16 %v3031, %v3023
        %v4832 = vpack.c.b16 %v3032, %v3024
        %v4833 = vpack.c.b16 %v3033, %v3025
        %v4834 = vpack.c.b16 %v3034, %v3026
        %v4835 = vpack.c.b16 %v3043, %v3035
        %v4836 = vpack.c.b16 %v3044, %v3036
        %v4837 = vpack.c.b16 %v3045, %v3037
        %v4838 = vpack.c.b16 %v3046, %v3038
        %v4839 = vpack.c.b16 %v3047, %v3039
        %v4840 = vpack.c.b16 %v3048, %v3040
        %v4841 = vpack.c.b16 %v3049, %v3041
        %v4842 = vpack.c.b16 %v3050, %v3042
        %v4843 = vpack.c.b16 %v3059, %v3051
        %v4844 = vpack.c.b16 %v3060, %v3052
        %v4845 = vpack.c.b16 %v3061, %v3053
        %v4846 = vpack.c.b16 %v3062, %v3054
        %v4847 = vpack.c.b16 %v3063, %v3055
        %v4848 = vpack.c.b16 %v3064, %v3056
        %v4849 = vpack.c.b16 %v3065, %v3057
        %v4850 = vpack.c.b16 %v3066, %v3058
        %v4851 = vpack.c.b16 %v3075, %v3067
        %v4852 = vpack.c.b16 %v3076, %v3068
        %v4853 = vpack.c.b16 %v3077, %v3069
        %v4854 = vpack.c.b16 %v3078, %v3070
        %v4855 = vpack.c.b16 %v3079, %v3071
        %v4856 = vpack.c.b16 %v3080, %v3072
        %v4857 = vpack.c.b16 %v3081, %v3073
        %v4858 = vpack.c.b16 %v3082, %v3074
        %v4859 = vpack.c.b16 %v3091, %v3083
        %v4860 = vpack.c.b16 %v3092, %v3084
        %v4861 = vpack.c.b16 %v3093, %v3085
        %v4862 = vpack.c.b16 %v3094, %v3086
        %v4863 = vpack.c.b16 %v3095, %v3087
        %v4864 = vpack.c.b16 %v3096, %v3088
        %v4865 = vpack.c.b16 %v3097, %v3089
        %v4866 = vpack.c.b16 %v3098, %v3090
        %v4867 = vpack.c.b16 %v3107, %v3099
        %v4868 = vpack.c.b16 %v3108, %v3100
        %v4869 = vpack.c.b16 %v3109, %v3101
        %v4870 = vpack.c.b16 %v3110, %v3102
        %v4871 = vpack.c.b16 %v3111, %v3103
        %v4872 = vpack.c.b16 %v3112, %v3104
        %v4873 = vpack.c.b16 %v3113, %v3105
        %v4874 = vpack.c.b16 %v3114, %v3106
        %v4875 = vpack.c.b16 %v3123, %v3115
        %v4876 = vpack.c.b16 %v3124, %v3116
        %v4877 = vpack.c.b16 %v3125, %v3117
        %v4878 = vpack.c.b16 %v3126, %v3118
        %v4879 = vpack.c.b16 %v3127, %v3119
        %v4880 = vpack.c.b16 %v3128, %v3120
        %v4881 = vpack.c.b16 %v3129, %v3121
        %v4882 = vpack.c.b16 %v3130, %v3122
        %v4883 = vpack.c.b16 %v3139, %v3131
        %v4884 = vpack.c.b16 %v3140, %v3132
        %v4885 = vpack.c.b16 %v3141, %v3133
        %v4886 = vpack.c.b16 %v3142, %v3134
        %v4887 = vpack.c.b16 %v3143, %v3135
        %v4888 = vpack.c.b16 %v3144, %v3136
        %v4889 = vpack.c.b16 %v3145, %v3137
        %v4890 = vpack.c.b16 %v3146, %v3138
        %v4891 = vpack.c.b16 %v3155, %v3147
        %v4892 = vpack.c.b16 %v3156, %v3148
        %v4893 = vpack.c.b16 %v3157, %v3149
        %v4894 = vpack.c.b16 %v3158, %v3150
        %v4895 = vpack.c.b16 %v3159, %v3151
        %v4896 = vpack.c.b16 %v3160, %v3152
        %v4897 = vpack.c.b16 %v3161, %v3153
        %v4898 = vpack.c.b16 %v3162, %v3154
        %v4899 = vpack.c.b16 %v3171, %v3163
        %v4900 = vpack.c.b16 %v3172, %v3164
        %v4901 = vpack.c.b16 %v3173, %v3165
        %v4902 = vpack.c.b16 %v3174, %v3166
        %v4903 = vpack.c.b16 %v3175, %v3167
        %v4904 = vpack.c.b16 %v3176, %v3168
        %v4905 = vpack.c.b16 %v3177, %v3169
        %v4906 = vpack.c.b16 %v3178, %v3170
        %v4907 = vpack.c.b16 %v3187, %v3179
        %v4908 = vpack.c.b16 %v3188, %v3180
        %v4909 = vpack.c.b16 %v3189, %v3181
        %v4910 = vpack.c.b16 %v3190, %v3182
        %v4911 = vpack.c.b16 %v3191, %v3183
        %v4912 = vpack.c.b16 %v3192, %v3184
        %v4913 = vpack.c.b16 %v3193, %v3185
        %v4914 = vpack.c.b16 %v3194, %v3186
        %v4915 = vpack.c.b16 %v3203, %v3195
        %v4916 = vpack.c.b16 %v3204, %v3196
        %v4917 = vpack.c.b16 %v3205, %v3197
        %v4918 = vpack.c.b16 %v3206, %v3198
        %v4919 = vpack.c.b16 %v3207, %v3199
        %v4920 = vpack.c.b16 %v3208, %v3200
        %v4921 = vpack.c.b16 %v3209, %v3201
        %v4922 = vpack.c.b16 %v3210, %v3202
        %v4923 = vpack.c.b16 %v3219, %v3211
        %v4924 = vpack.c.b16 %v3220, %v3212
        %v4925 = vpack.c.b16 %v3221, %v3213
        %v4926 = vpack.c.b16 %v3222, %v3214
        %v4927 = vpack.c.b16 %v3223, %v3215
        %v4928 = vpack.c.b16 %v3224, %v3216
        %v4929 = vpack.c.b16 %v3225, %v3217
        %v4930 = vpack.c.b16 %v3226, %v3218
        %v4931 = vpack.c.b16 %v3235, %v3227
        %v4932 = vpack.c.b16 %v3236, %v3228
        %v4933 = vpack.c.b16 %v3237, %v3229
        %v4934 = vpack.c.b16 %v3238, %v3230
        %v4935 = vpack.c.b16 %v3239, %v3231
        %v4936 = vpack.c.b16 %v3240, %v3232
        %v4937 = vpack.c.b16 %v3241, %v3233
        %v4938 = vpack.c.b16 %v3242, %v3234
        %v4939 = vpack.c.b16 %v3251, %v3243
        %v4940 = vpack.c.b16 %v3252, %v3244
        %v4941 = vpack.c.b16 %v3253, %v3245
        %v4942 = vpack.c.b16 %v3254, %v3246
        %v4943 = vpack.c.b16 %v3255, %v3247
        %v4944 = vpack.c.b16 %v3256, %v3248
        %v4945 = vpack.c.b16 %v3257, %v3249
        %v4946 = vpack.c.b16 %v3258, %v3250
        %v4947 = vpack.c.b16 %v3267, %v3259
        %v4948 = vpack.c.b16 %v3268, %v3260
        %v4949 = vpack.c.b16 %v3269, %v3261
        %v4950 = vpack.c.b16 %v3270, %v3262
        %v4951 = vpack.c.b16 %v3271, %v3263
        %v4952 = vpack.c.b16 %v3272, %v3264
        %v4953 = vpack.c.b16 %v3273, %v3265
        %v4954 = vpack.c.b16 %v3274, %v3266
        %v4955 = vpack.c.b16 %v3283, %v3275
        %v4956 = vpack.c.b16 %v3284, %v3276
        %v4957 = vpack.c.b16 %v3285, %v3277
        %v4958 = vpack.c.b16 %v3286, %v3278
        %v4959 = vpack.c.b16 %v3287, %v3279
        %v4960 = vpack.c.b16 %v3288, %v3280
        %v4961 = vpack.c.b16 %v3289, %v3281
        %v4962 = vpack.c.b16 %v3290, %v3282
        %v4963 = vpack.c.b16 %v3299, %v3291
        %v4964 = vpack.c.b16 %v3300, %v3292
        %v4965 = vpack.c.b16 %v3301, %v3293
        %v4966 = vpack.c.b16 %v3302, %v3294
        %v4967 = vpack.c.b16 %v3303, %v3295
        %v4968 = vpack.c.b16 %v3304, %v3296
        %v4969 = vpack.c.b16 %v3305, %v3297
        %v4970 = vpack.c.b16 %v3306, %v3298
        %v4971 = vpack.c.b16 %v3315, %v3307
        %v4972 = vpack.c.b16 %v3316, %v3308
        %v4973 = vpack.c.b16 %v3317, %v3309
        %v4974 = vpack.c.b16 %v3318, %v3310
        %v4975 = vpack.c.b16 %v3319, %v3311
        %v4976 = vpack.c.b16 %v3320, %v3312
        %v4977 = vpack.c.b16 %v3321, %v3313
        %v4978 = vpack.c.b16 %v3322, %v3314
        %v4979 = vpack.c.b16 %v3331, %v3323
        %v4980 = vpack.c.b16 %v3332, %v3324
        %v4981 = vpack.c.b16 %v3333, %v3325
        %v4982 = vpack.c.b16 %v3334, %v3326
        %v4983 = vpack.c.b16 %v3335, %v3327
        %v4984 = vpack.c.b16 %v3336, %v3328
        %v4985 = vpack.c.b16 %v3337, %v3329
        %v4986 = vpack.c.b16 %v3338, %v3330
        %v4987 = vpack.c.b16 %v3347, %v3339
        %v4988 = vpack.c.b16 %v3348, %v3340
        %v4989 = vpack.c.b16 %v3349, %v3341
        %v4990 = vpack.c.b16 %v3350, %v3342
        %v4991 = vpack.c.b16 %v3351, %v3343
        %v4992 = vpack.c.b16 %v3352, %v3344
        %v4993 = vpack.c.b16 %v3353, %v3345
        %v4994 = vpack.c.b16 %v3354, %v3346
        %v4995 = vpack.c.b16 %v3363, %v3355
        %v4996 = vpack.c.b16 %v3364, %v3356
        %v4997 = vpack.c.b16 %v3365, %v3357
        %v4998 = vpack.c.b16 %v3366, %v3358
        %v4999 = vpack.c.b16 %v3367, %v3359
        %v5000 = vpack.c.b16 %v3368, %v3360
        %v5001 = vpack.c.b16 %v3369, %v3361
        %v5002 = vpack.c.b16 %v3370, %v3362
        %v5003 = vpack.c.b16 %v3379, %v3371
        %v5004 = vpack.c.b16 %v3380, %v3372
        %v5005 = vpack.c.b16 %v3381, %v3373
        %v5006 = vpack.c.b16 %v3382, %v3374
        %v5007 = vpack.c.b16 %v3383, %v3375
        %v5008 = vpack.c.b16 %v3384, %v3376
        %v5009 = vpack.c.b16 %v3385, %v3377
        %v5010 = vpack.c.b16 %v3386, %v3378
        %v5011 = vpack.c.b16 %v3395, %v3387
        %v5012 = vpack.c.b16 %v3396, %v3388
        %v5013 = vpack.c.b16 %v3397, %v3389
        %v5014 = vpack.c.b16 %v3398, %v3390
        %v5015 = vpack.c.b16 %v3399, %v3391
        %v5016 = vpack.c.b16 %v3400, %v3392
        %v5017 = vpack.c.b16 %v3401, %v3393
        %v5018 = vpack.c.b16 %v3402, %v3394
        %v5019 = vpack.c.b16 %v3411, %v3403
        %v5020 = vpack.c.b16 %v3412, %v3404
        %v5021 = vpack.c.b16 %v3413, %v3405
        %v5022 = vpack.c.b16 %v3414, %v3406
        %v5023 = vpack.c.b16 %v3415, %v3407
        %v5024 = vpack.c.b16 %v3416, %v3408
        %v5025 = vpack.c.b16 %v3417, %v3409
        %v5026 = vpack.c.b16 %v3418, %v3410
        %v5027 = vpack.c.b16 %v3427, %v3419
        %v5028 = vpack.c.b16 %v3428, %v3420
        %v5029 = vpack.c.b16 %v3429, %v3421
        %v5030 = vpack.c.b16 %v3430, %v3422
        %v5031 = vpack.c.b16 %v3431, %v3423
        %v5032 = vpack.c.b16 %v3432, %v3424
        %v5033 = vpack.c.b16 %v3433, %v3425
        %v5034 = vpack.c.b16 %v3434, %v3426
        %v5035 = vpack.c.b16 %v3443, %v3435
        %v5036 = vpack.c.b16 %v3444, %v3436
        %v5037 = vpack.c.b16 %v3445, %v3437
        %v5038 = vpack.c.b16 %v3446, %v3438
        %v5039 = vpack.c.b16 %v3447, %v3439
        %v5040 = vpack.c.b16 %v3448, %v3440
        %v5041 = vpack.c.b16 %v3449, %v3441
        %v5042 = vpack.c.b16 %v3450, %v3442
        %v5043 = vpack.c.b16 %v3459, %v3451
        %v5044 = vpack.c.b16 %v3460, %v3452
        %v5045 = vpack.c.b16 %v3461, %v3453
        %v5046 = vpack.c.b16 %v3462, %v3454
        %v5047 = vpack.c.b16 %v3463, %v3455
        %v5048 = vpack.c.b16 %v3464, %v3456
        %v5049 = vpack.c.b16 %v3465, %v3457
        %v5050 = vpack.c.b16 %v3466, %v3458
        %v5051 = vpack.c.b16 %v3475, %v3467
        %v5052 = vpack.c.b16 %v3476, %v3468
        %v5053 = vpack.c.b16 %v3477, %v3469
        %v5054 = vpack.c.b16 %v3478, %v3470
        %v5055 = vpack.c.b16 %v3479, %v3471
        %v5056 = vpack.c.b16 %v3480, %v3472
        %v5057 = vpack.c.b16 %v3481, %v3473
        %v5058 = vpack.c.b16 %v3482, %v3474
        %v5059 = vpack.c.b16 %v3491, %v3483
        %v5060 = vpack.c.b16 %v3492, %v3484
        %v5061 = vpack.c.b16 %v3493, %v3485
        %v5062 = vpack.c.b16 %v3494, %v3486
        %v5063 = vpack.c.b16 %v3495, %v3487
        %v5064 = vpack.c.b16 %v3496, %v3488
        %v5065 = vpack.c.b16 %v3497, %v3489
        %v5066 = vpack.c.b16 %v3498, %v3490
        %v5067 = vpack.c.b16 %v3507, %v3499
        %v5068 = vpack.c.b16 %v3508, %v3500
        %v5069 = vpack.c.b16 %v3509, %v3501
        %v5070 = vpack.c.b16 %v3510, %v3502
        %v5071 = vpack.c.b16 %v3511, %v3503
        %v5072 = vpack.c.b16 %v3512, %v3504
        %v5073 = vpack.c.b16 %v3513, %v3505
        %v5074 = vpack.c.b16 %v3514, %v3506
        %v5075 = vpack.c.b16 %v3523, %v3515
        %v5076 = vpack.c.b16 %v3524, %v3516
        %v5077 = vpack.c.b16 %v3525, %v3517
        %v5078 = vpack.c.b16 %v3526, %v3518
        %v5079 = vpack.c.b16 %v3527, %v3519
        %v5080 = vpack.c.b16 %v3528, %v3520
        %v5081 = vpack.c.b16 %v3529, %v3521
        %v5082 = vpack.c.b16 %v3530, %v3522
        %v5083 = vpack.c.b16 %v3539, %v3531
        %v5084 = vpack.c.b16 %v3540, %v3532
        %v5085 = vpack.c.b16 %v3541, %v3533
        %v5086 = vpack.c.b16 %v3542, %v3534
        %v5087 = vpack.c.b16 %v3543, %v3535
        %v5088 = vpack.c.b16 %v3544, %v3536
        %v5089 = vpack.c.b16 %v3545, %v3537
        %v5090 = vpack.c.b16 %v3546, %v3538
        %v5091 = vpack.c.b16 %v3555, %v3547
        %v5092 = vpack.c.b16 %v3556, %v3548
        %v5093 = vpack.c.b16 %v3557, %v3549
        %v5094 = vpack.c.b16 %v3558, %v3550
        %v5095 = vpack.c.b16 %v3559, %v3551
        %v5096 = vpack.c.b16 %v3560, %v3552
        %v5097 = vpack.c.b16 %v3561, %v3553
        %v5098 = vpack.c.b16 %v3562, %v3554
        %v5099 = vpack.c.b16 %v3571, %v3563
        %v5100 = vpack.c.b16 %v3572, %v3564
        %v5101 = vpack.c.b16 %v3573, %v3565
        %v5102 = vpack.c.b16 %v3574, %v3566
        %v5103 = vpack.c.b16 %v3575, %v3567
        %v5104 = vpack.c.b16 %v3576, %v3568
        %v5105 = vpack.c.b16 %v3577, %v3569
        %v5106 = vpack.c.b16 %v3578, %v3570
        %v5107 = vpack.c.b16 %v3587, %v3579
        %v5108 = vpack.c.b16 %v3588, %v3580
        %v5109 = vpack.c.b16 %v3589, %v3581
        %v5110 = vpack.c.b16 %v3590, %v3582
        %v5111 = vpack.c.b16 %v3591, %v3583
        %v5112 = vpack.c.b16 %v3592, %v3584
        %v5113 = vpack.c.b16 %v3593, %v3585
        %v5114 = vpack.c.b16 %v3594, %v3586
        %v5115 = vpack.c.b16 %v3603, %v3595
        %v5116 = vpack.c.b16 %v3604, %v3596
        %v5117 = vpack.c.b16 %v3605, %v3597
        %v5118 = vpack.c.b16 %v3606, %v3598
        %v5119 = vpack.c.b16 %v3607, %v3599
        %v5120 = vpack.c.b16 %v3608, %v3600
        %v5121 = vpack.c.b16 %v3609, %v3601
        %v5122 = vpack.c.b16 %v3610, %v3602
        %v5123 = vpack.c.b16 %v3619, %v3611
        %v5124 = vpack.c.b16 %v3620, %v3612
        %v5125 = vpack.c.b16 %v3621, %v3613
        %v5126 = vpack.c.b16 %v3622, %v3614
        %v5127 = vpack.c.b16 %v3623, %v3615
        %v5128 = vpack.c.b16 %v3624, %v3616
        %v5129 = vpack.c.b16 %v3625, %v3617
        %v5130 = vpack.c.b16 %v3626, %v3618
        %v5131 = vpack.c.b16 %v3635, %v3627
        %v5132 = vpack.c.b16 %v3636, %v3628
        %v5133 = vpack.c.b16 %v3637, %v3629
        %v5134 = vpack.c.b16 %v3638, %v3630
        %v5135 = vpack.c.b16 %v3639, %v3631
        %v5136 = vpack.c.b16 %v3640, %v3632
        %v5137 = vpack.c.b16 %v3641, %v3633
        %v5138 = vpack.c.b16 %v3642, %v3634
        %v5139 = vpack.c.b16 %v3651, %v3643
        %v5140 = vpack.c.b16 %v3652, %v3644
        %v5141 = vpack.c.b16 %v3653, %v3645
        %v5142 = vpack.c.b16 %v3654, %v3646
        %v5143 = vpack.c.b16 %v3655, %v3647
        %v5144 = vpack.c.b16 %v3656, %v3648
        %v5145 = vpack.c.b16 %v3657, %v3649
        %v5146 = vpack.c.b16 %v3658, %v3650
        %v5147 = vpack.c.b16 %v3667, %v3659
        %v5148 = vpack.c.b16 %v3668, %v3660
        %v5149 = vpack.c.b16 %v3669, %v3661
        %v5150 = vpack.c.b16 %v3670, %v3662
        %v5151 = vpack.c.b16 %v3671, %v3663
        %v5152 = vpack.c.b16 %v3672, %v3664
        %v5153 = vpack.c.b16 %v3673, %v3665
        %v5154 = vpack.c.b16 %v3674, %v3666
        %v5155 = vpack.c.b16 %v3683, %v3675
        %v5156 = vpack.c.b16 %v3684, %v3676
        %v5157 = vpack.c.b16 %v3685, %v3677
        %v5158 = vpack.c.b16 %v3686, %v3678
        %v5159 = vpack.c.b16 %v3687, %v3679
        %v5160 = vpack.c.b16 %v3688, %v3680
        %v5161 = vpack.c.b16 %v3689, %v3681
        %v5162 = vpack.c.b16 %v3690, %v3682
        %v5163 = vpack.c.b16 %v3699, %v3691
        %v5164 = vpack.c.b16 %v3700, %v3692
        %v5165 = vpack.c.b16 %v3701, %v3693
        %v5166 = vpack.c.b16 %v3702, %v3694
        %v5167 = vpack.c.b16 %v3703, %v3695
        %v5168 = vpack.c.b16 %v3704, %v3696
        %v5169 = vpack.c.b16 %v3705, %v3697
        %v5170 = vpack.c.b16 %v3706, %v3698
        %v5171 = vpack.c.b16 %v3715, %v3707
        %v5172 = vpack.c.b16 %v3716, %v3708
        %v5173 = vpack.c.b16 %v3717, %v3709
        %v5174 = vpack.c.b16 %v3718, %v3710
        %v5175 = vpack.c.b16 %v3719, %v3711
        %v5176 = vpack.c.b16 %v3720, %v3712
        %v5177 = vpack.c.b16 %v3721, %v3713
        %v5178 = vpack.c.b16 %v3722, %v3714
        %v5179 = vpack.c.b16 %v3731, %v3723
        %v5180 = vpack.c.b16 %v3732, %v3724
        %v5181 = vpack.c.b16 %v3733, %v3725
        %v5182 = vpack.c.b16 %v3734, %v3726
        %v5183 = vpack.c.b16 %v3735, %v3727
        %v5184 = vpack.c.b16 %v3736, %v3728
        %v5185 = vpack.c.b16 %v3737, %v3729
        %v5186 = vpack.c.b16 %v3738, %v3730
        %v5187 = vpack.c.b16 %v3747, %v3739
        %v5188 = vpack.c.b16 %v3748, %v3740
        %v5189 = vpack.c.b16 %v3749, %v3741
        %v5190 = vpack.c.b16 %v3750, %v3742
        %v5191 = vpack.c.b16 %v3751, %v3743
        %v5192 = vpack.c.b16 %v3752, %v3744
        %v5193 = vpack.c.b16 %v3753, %v3745
        %v5194 = vpack.c.b16 %v3754, %v3746
        %v5195 = vpack.c.b16 %v3763, %v3755
        %v5196 = vpack.c.b16 %v3764, %v3756
        %v5197 = vpack.c.b16 %v3765, %v3757
        %v5198 = vpack.c.b16 %v3766, %v3758
        %v5199 = vpack.c.b16 %v3767, %v3759
        %v5200 = vpack.c.b16 %v3768, %v3760
        %v5201 = vpack.c.b16 %v3769, %v3761
        %v5202 = vpack.c.b16 %v3770, %v3762
        %v5203 = vpack.c.b16 %v3779, %v3771
        %v5204 = vpack.c.b16 %v3780, %v3772
        %v5205 = vpack.c.b16 %v3781, %v3773
        %v5206 = vpack.c.b16 %v3782, %v3774
        %v5207 = vpack.c.b16 %v3783, %v3775
        %v5208 = vpack.c.b16 %v3784, %v3776
        %v5209 = vpack.c.b16 %v3785, %v3777
        %v5210 = vpack.c.b16 %v3786, %v3778
        %v5211 = vpack.c.b16 %v3795, %v3787
        %v5212 = vpack.c.b16 %v3796, %v3788
        %v5213 = vpack.c.b16 %v3797, %v3789
        %v5214 = vpack.c.b16 %v3798, %v3790
        %v5215 = vpack.c.b16 %v3799, %v3791
        %v5216 = vpack.c.b16 %v3800, %v3792
        %v5217 = vpack.c.b16 %v3801, %v3793
        %v5218 = vpack.c.b16 %v3802, %v3794
        %v5219 = vpack.c.b16 %v3811, %v3803
        %v5220 = vpack.c.b16 %v3812, %v3804
        %v5221 = vpack.c.b16 %v3813, %v3805
        %v5222 = vpack.c.b16 %v3814, %v3806
        %v5223 = vpack.c.b16 %v3815, %v3807
        %v5224 = vpack.c.b16 %v3816, %v3808
        %v5225 = vpack.c.b16 %v3817, %v3809
        %v5226 = vpack.c.b16 %v3818, %v3810
        %v5227 = vpack.c.b16 %v3827, %v3819
        %v5228 = vpack.c.b16 %v3828, %v3820
        %v5229 = vpack.c.b16 %v3829, %v3821
        %v5230 = vpack.c.b16 %v3830, %v3822
        %v5231 = vpack.c.b16 %v3831, %v3823
        %v5232 = vpack.c.b16 %v3832, %v3824
        %v5233 = vpack.c.b16 %v3833, %v3825
        %v5234 = vpack.c.b16 %v3834, %v3826
        %v5235 = vpack.c.b16 %v3843, %v3835
        %v5236 = vpack.c.b16 %v3844, %v3836
        %v5237 = vpack.c.b16 %v3845, %v3837
        %v5238 = vpack.c.b16 %v3846, %v3838
        %v5239 = vpack.c.b16 %v3847, %v3839
        %v5240 = vpack.c.b16 %v3848, %v3840
        %v5241 = vpack.c.b16 %v3849, %v3841
        %v5242 = vpack.c.b16 %v3850, %v3842
        %v5243 = vpack.c.b16 %v3859, %v3851
        %v5244 = vpack.c.b16 %v3860, %v3852
        %v5245 = vpack.c.b16 %v3861, %v3853
        %v5246 = vpack.c.b16 %v3862, %v3854
        %v5247 = vpack.c.b16 %v3863, %v3855
        %v5248 = vpack.c.b16 %v3864, %v3856
        %v5249 = vpack.c.b16 %v3865, %v3857
        %v5250 = vpack.c.b16 %v3866, %v3858
        %v5251 = vpack.c.b16 %v3875, %v3867
        %v5252 = vpack.c.b16 %v3876, %v3868
        %v5253 = vpack.c.b16 %v3877, %v3869
        %v5254 = vpack.c.b16 %v3878, %v3870
        %v5255 = vpack.c.b16 %v3879, %v3871
        %v5256 = vpack.c.b16 %v3880, %v3872
        %v5257 = vpack.c.b16 %v3881, %v3873
        %v5258 = vpack.c.b16 %v3882, %v3874
        %v5259 = vpack.c.b16 %v3891, %v3883
        %v5260 = vpack.c.b16 %v3892, %v3884
        %v5261 = vpack.c.b16 %v3893, %v3885
        %v5262 = vpack.c.b16 %v3894, %v3886
        %v5263 = vpack.c.b16 %v3895, %v3887
        %v5264 = vpack.c.b16 %v3896, %v3888
        %v5265 = vpack.c.b16 %v3897, %v3889
        %v5266 = vpack.c.b16 %v3898, %v3890
        %v5267 = vpack.c.b16 %v3907, %v3899
        %v5268 = vpack.c.b16 %v3908, %v3900
        %v5269 = vpack.c.b16 %v3909, %v3901
        %v5270 = vpack.c.b16 %v3910, %v3902
        %v5271 = vpack.c.b16 %v3911, %v3903
        %v5272 = vpack.c.b16 %v3912, %v3904
        %v5273 = vpack.c.b16 %v3913, %v3905
        %v5274 = vpack.c.b16 %v3914, %v3906
        %v5275 = vpack.c.b16 %v3923, %v3915
        %v5276 = vpack.c.b16 %v3924, %v3916
        %v5277 = vpack.c.b16 %v3925, %v3917
        %v5278 = vpack.c.b16 %v3926, %v3918
        %v5279 = vpack.c.b16 %v3927, %v3919
        %v5280 = vpack.c.b16 %v3928, %v3920
        %v5281 = vpack.c.b16 %v3929, %v3921
        %v5282 = vpack.c.b16 %v3930, %v3922
        %v5283 = vpack.c.b16 %v3939, %v3931
        %v5284 = vpack.c.b16 %v3940, %v3932
        %v5285 = vpack.c.b16 %v3941, %v3933
        %v5286 = vpack.c.b16 %v3942, %v3934
        %v5287 = vpack.c.b16 %v3943, %v3935
        %v5288 = vpack.c.b16 %v3944, %v3936
        %v5289 = vpack.c.b16 %v3945, %v3937
        %v5290 = vpack.c.b16 %v3946, %v3938
        %v5291 = vpack.c.b16 %v3955, %v3947
        %v5292 = vpack.c.b16 %v3956, %v3948
        %v5293 = vpack.c.b16 %v3957, %v3949
        %v5294 = vpack.c.b16 %v3958, %v3950
        %v5295 = vpack.c.b16 %v3959, %v3951
        %v5296 = vpack.c.b16 %v3960, %v3952
        %v5297 = vpack.c.b16 %v3961, %v3953
        %v5298 = vpack.c.b16 %v3962, %v3954
        %v5299 = vpack.c.b16 %v3971, %v3963
        %v5300 = vpack.c.b16 %v3972, %v3964
        %v5301 = vpack.c.b16 %v3973, %v3965
        %v5302 = vpack.c.b16 %v3974, %v3966
        %v5303 = vpack.c.b16 %v3975, %v3967
        %v5304 = vpack.c.b16 %v3976, %v3968
        %v5305 = vpack.c.b16 %v3977, %v3969
        %v5306 = vpack.c.b16 %v3978, %v3970
        %v5307 = vpack.c.b16 %v3987, %v3979
        %v5308 = vpack.c.b16 %v3988, %v3980
        %v5309 = vpack.c.b16 %v3989, %v3981
        %v5310 = vpack.c.b16 %v3990, %v3982
        %v5311 = vpack.c.b16 %v3991, %v3983
        %v5312 = vpack.c.b16 %v3992, %v3984
        %v5313 = vpack.c.b16 %v3993, %v3985
        %v5314 = vpack.c.b16 %v3994, %v3986
        %v5315 = vpack.c.b16 %v4003, %v3995
        %v5316 = vpack.c.b16 %v4004, %v3996
        %v5317 = vpack.c.b16 %v4005, %v3997
        %v5318 = vpack.c.b16 %v4006, %v3998
        %v5319 = vpack.c.b16 %v4007, %v3999
        %v5320 = vpack.c.b16 %v4008, %v4000
        %v5321 = vpack.c.b16 %v4009, %v4001
        %v5322 = vpack.c.b16 %v4010, %v4002
        %v5323 = vpack.c.b16 %v4019, %v4011
        %v5324 = vpack.c.b16 %v4020, %v4012
        %v5325 = vpack.c.b16 %v4021, %v4013
        %v5326 = vpack.c.b16 %v4022, %v4014
        %v5327 = vpack.c.b16 %v4023, %v4015
        %v5328 = vpack.c.b16 %v4024, %v4016
        %v5329 = vpack.c.b16 %v4025, %v4017
        %v5330 = vpack.c.b16 %v4026, %v4018
        %v5331 = vpack.c.b16 %v4035, %v4027
        %v5332 = vpack.c.b16 %v4036, %v4028
        %v5333 = vpack.c.b16 %v4037, %v4029
        %v5334 = vpack.c.b16 %v4038, %v4030
        %v5335 = vpack.c.b16 %v4039, %v4031
        %v5336 = vpack.c.b16 %v4040, %v4032
        %v5337 = vpack.c.b16 %v4041, %v4033
        %v5338 = vpack.c.b16 %v4042, %v4034
        %v5339 = vpack.c.b16 %v4051, %v4043
        %v5340 = vpack.c.b16 %v4052, %v4044
        %v5341 = vpack.c.b16 %v4053, %v4045
        %v5342 = vpack.c.b16 %v4054, %v4046
        %v5343 = vpack.c.b16 %v4055, %v4047
        %v5344 = vpack.c.b16 %v4056, %v4048
        %v5345 = vpack.c.b16 %v4057, %v4049
        %v5346 = vpack.c.b16 %v4058, %v4050
        %v5347 = vpack.c.b16 %v4067, %v4059
        %v5348 = vpack.c.b16 %v4068, %v4060
        %v5349 = vpack.c.b16 %v4069, %v4061
        %v5350 = vpack.c.b16 %v4070, %v4062
        %v5351 = vpack.c.b16 %v4071, %v4063
        %v5352 = vpack.c.b16 %v4072, %v4064
        %v5353 = vpack.c.b16 %v4073, %v4065
        %v5354 = vpack.c.b16 %v4074, %v4066
        %v5355 = vpack.c.b16 %v4083, %v4075
        %v5356 = vpack.c.b16 %v4084, %v4076
        %v5357 = vpack.c.b16 %v4085, %v4077
        %v5358 = vpack.c.b16 %v4086, %v4078
        %v5359 = vpack.c.b16 %v4087, %v4079
        %v5360 = vpack.c.b16 %v4088, %v4080
        %v5361 = vpack.c.b16 %v4089, %v4081
        %v5362 = vpack.c.b16 %v4090, %v4082
        %v5363 = vpack.c.b16 %v4099, %v4091
        %v5364 = vpack.c.b16 %v4100, %v4092
        %v5365 = vpack.c.b16 %v4101, %v4093
        %v5366 = vpack.c.b16 %v4102, %v4094
        %v5367 = vpack.c.b16 %v4103, %v4095
        %v5368 = vpack.c.b16 %v4104, %v4096
        %v5369 = vpack.c.b16 %v4105, %v4097
        %v5370 = vpack.c.b16 %v4106, %v4098
        %v5371 = vpack.c.b16 %v4115, %v4107
        %v5372 = vpack.c.b16 %v4116, %v4108
        %v5373 = vpack.c.b16 %v4117, %v4109
        %v5374 = vpack.c.b16 %v4118, %v4110
        %v5375 = vpack.c.b16 %v4119, %v4111
        %v5376 = vpack.c.b16 %v4120, %v4112
        %v5377 = vpack.c.b16 %v4121, %v4113
        %v5378 = vpack.c.b16 %v4122, %v4114
        %v5379 = vpack.c.b16 %v4131, %v4123
        %v5380 = vpack.c.b16 %v4132, %v4124
        %v5381 = vpack.c.b16 %v4133, %v4125
        %v5382 = vpack.c.b16 %v4134, %v4126
        %v5383 = vpack.c.b16 %v4135, %v4127
        %v5384 = vpack.c.b16 %v4136, %v4128
        %v5385 = vpack.c.b16 %v4137, %v4129
        %v5386 = vpack.c.b16 %v4138, %v4130
        %v5387 = vpack.c.b16 %v4147, %v4139
        %v5388 = vpack.c.b16 %v4148, %v4140
        %v5389 = vpack.c.b16 %v4149, %v4141
        %v5390 = vpack.c.b16 %v4150, %v4142
        %v5391 = vpack.c.b16 %v4151, %v4143
        %v5392 = vpack.c.b16 %v4152, %v4144
        %v5393 = vpack.c.b16 %v4153, %v4145
        %v5394 = vpack.c.b16 %v4154, %v4146
        %v5395 = vpack.c.b16 %v4163, %v4155
        %v5396 = vpack.c.b16 %v4164, %v4156
        %v5397 = vpack.c.b16 %v4165, %v4157
        %v5398 = vpack.c.b16 %v4166, %v4158
        %v5399 = vpack.c.b16 %v4167, %v4159
        %v5400 = vpack.c.b16 %v4168, %v4160
        %v5401 = vpack.c.b16 %v4169, %v4161
        %v5402 = vpack.c.b16 %v4170, %v4162
        %v5403 = vpack.c.b16 %v4179, %v4171
        %v5404 = vpack.c.b16 %v4180, %v4172
        %v5405 = vpack.c.b16 %v4181, %v4173
        %v5406 = vpack.c.b16 %v4182, %v4174
        %v5407 = vpack.c.b16 %v4183, %v4175
        %v5408 = vpack.c.b16 %v4184, %v4176
        %v5409 = vpack.c.b16 %v4185, %v4177
        %v5410 = vpack.c.b16 %v4186, %v4178
        %v5411 = vpack.c.b16 %v4195, %v4187
        %v5412 = vpack.c.b16 %v4196, %v4188
        %v5413 = vpack.c.b16 %v4197, %v4189
        %v5414 = vpack.c.b16 %v4198, %v4190
        %v5415 = vpack.c.b16 %v4199, %v4191
        %v5416 = vpack.c.b16 %v4200, %v4192
        %v5417 = vpack.c.b16 %v4201, %v4193
        %v5418 = vpack.c.b16 %v4202, %v4194
        %v5419 = vpack.c.b16 %v4211, %v4203
        %v5420 = vpack.c.b16 %v4212, %v4204
        %v5421 = vpack.c.b16 %v4213, %v4205
        %v5422 = vpack.c.b16 %v4214, %v4206
        %v5423 = vpack.c.b16 %v4215, %v4207
        %v5424 = vpack.c.b16 %v4216, %v4208
        %v5425 = vpack.c.b16 %v4217, %v4209
        %v5426 = vpack.c.b16 %v4218, %v4210
        %v5427 = vpack.c.b16 %v4227, %v4219
        %v5428 = vpack.c.b16 %v4228, %v4220
        %v5429 = vpack.c.b16 %v4229, %v4221
        %v5430 = vpack.c.b16 %v4230, %v4222
        %v5431 = vpack.c.b16 %v4231, %v4223
        %v5432 = vpack.c.b16 %v4232, %v4224
        %v5433 = vpack.c.b16 %v4233, %v4225
        %v5434 = vpack.c.b16 %v4234, %v4226
        %v5435 = vpack.c.b16 %v4243, %v4235
        %v5436 = vpack.c.b16 %v4244, %v4236
        %v5437 = vpack.c.b16 %v4245, %v4237
        %v5438 = vpack.c.b16 %v4246, %v4238
        %v5439 = vpack.c.b16 %v4247, %v4239
        %v5440 = vpack.c.b16 %v4248, %v4240
        %v5441 = vpack.c.b16 %v4249, %v4241
        %v5442 = vpack.c.b16 %v4250, %v4242
        %v5443 = vpack.c.b16 %v4259, %v4251
        %v5444 = vpack.c.b16 %v4260, %v4252
        %v5445 = vpack.c.b16 %v4261, %v4253
        %v5446 = vpack.c.b16 %v4262, %v4254
        %v5447 = vpack.c.b16 %v4263, %v4255
        %v5448 = vpack.c.b16 %v4264, %v4256
        %v5449 = vpack.c.b16 %v4265, %v4257
        %v5450 = vpack.c.b16 %v4266, %v4258
        %v5451 = vpack.c.b16 %v4275, %v4267
        %v5452 = vpack.c.b16 %v4276, %v4268
        %v5453 = vpack.c.b16 %v4277, %v4269
        %v5454 = vpack.c.b16 %v4278, %v4270
        %v5455 = vpack.c.b16 %v4279, %v4271
        %v5456 = vpack.c.b16 %v4280, %v4272
        %v5457 = vpack.c.b16 %v4281, %v4273
        %v5458 = vpack.c.b16 %v4282, %v4274
        %v5459 = vpack.c.b16 %v4291, %v4283
        %v5460 = vpack.c.b16 %v4292, %v4284
        %v5461 = vpack.c.b16 %v4293, %v4285
        %v5462 = vpack.c.b16 %v4294, %v4286
        %v5463 = vpack.c.b16 %v4295, %v4287
        %v5464 = vpack.c.b16 %v4296, %v4288
        %v5465 = vpack.c.b16 %v4297, %v4289
        %v5466 = vpack.c.b16 %v4298, %v4290
        %v5467 = vpack.c.b16 %v4307, %v4299
        %v5468 = vpack.c.b16 %v4308, %v4300
        %v5469 = vpack.c.b16 %v4309, %v4301
        %v5470 = vpack.c.b16 %v4310, %v4302
        %v5471 = vpack.c.b16 %v4311, %v4303
        %v5472 = vpack.c.b16 %v4312, %v4304
        %v5473 = vpack.c.b16 %v4313, %v4305
        %v5474 = vpack.c.b16 %v4314, %v4306
        %v5475 = vpack.c.b16 %v4323, %v4315
        %v5476 = vpack.c.b16 %v4324, %v4316
        %v5477 = vpack.c.b16 %v4325, %v4317
        %v5478 = vpack.c.b16 %v4326, %v4318
        %v5479 = vpack.c.b16 %v4327, %v4319
        %v5480 = vpack.c.b16 %v4328, %v4320
        %v5481 = vpack.c.b16 %v4329, %v4321
        %v5482 = vpack.c.b16 %v4330, %v4322
        %v5483 = vpack.c.b16 %v4339, %v4331
        %v5484 = vpack.c.b16 %v4340, %v4332
        %v5485 = vpack.c.b16 %v4341, %v4333
        %v5486 = vpack.c.b16 %v4342, %v4334
        %v5487 = vpack.c.b16 %v4343, %v4335
        %v5488 = vpack.c.b16 %v4344, %v4336
        %v5489 = vpack.c.b16 %v4345, %v4337
        %v5490 = vpack.c.b16 %v4346, %v4338
        %v5491 = vpack.c.b16 %v4355, %v4347
        %v5492 = vpack.c.b16 %v4356, %v4348
        %v5493 = vpack.c.b16 %v4357, %v4349
        %v5494 = vpack.c.b16 %v4358, %v4350
        %v5495 = vpack.c.b16 %v4359, %v4351
        %v5496 = vpack.c.b16 %v4360, %v4352
        %v5497 = vpack.c.b16 %v4361, %v4353
        %v5498 = vpack.c.b16 %v4362, %v4354
        %v5499 = vpack.c.b16 %v4371, %v4363
        %v5500 = vpack.c.b16 %v4372, %v4364
        %v5501 = vpack.c.b16 %v4373, %v4365
        %v5502 = vpack.c.b16 %v4374, %v4366
        %v5503 = vpack.c.b16 %v4375, %v4367
        %v5504 = vpack.c.b16 %v4376, %v4368
        %v5505 = vpack.c.b16 %v4377, %v4369
        %v5506 = vpack.c.b16 %v4378, %v4370
        %v5507 = vpack.c.b16 %v4387, %v4379
        %v5508 = vpack.c.b16 %v4388, %v4380
        %v5509 = vpack.c.b16 %v4389, %v4381
        %v5510 = vpack.c.b16 %v4390, %v4382
        %v5511 = vpack.c.b16 %v4391, %v4383
        %v5512 = vpack.c.b16 %v4392, %v4384
        %v5513 = vpack.c.b16 %v4393, %v4385
        %v5514 = vpack.c.b16 %v4394, %v4386
        %v5515 = vpack.c.b16 %v4403, %v4395
        %v5516 = vpack.c.b16 %v4404, %v4396
        %v5517 = vpack.c.b16 %v4405, %v4397
        %v5518 = vpack.c.b16 %v4406, %v4398
        %v5519 = vpack.c.b16 %v4407, %v4399
        %v5520 = vpack.c.b16 %v4408, %v4400
        %v5521 = vpack.c.b16 %v4409, %v4401
        %v5522 = vpack.c.b16 %v4410, %v4402
        %v5523 = vpack.c.b16 %v4419, %v4411
        %v5524 = vpack.c.b16 %v4420, %v4412
        %v5525 = vpack.c.b16 %v4421, %v4413
        %v5526 = vpack.c.b16 %v4422, %v4414
        %v5527 = vpack.c.b16 %v4423, %v4415
        %v5528 = vpack.c.b16 %v4424, %v4416
        %v5529 = vpack.c.b16 %v4425, %v4417
        %v5530 = vpack.c.b16 %v4426, %v4418
        %v5531 = vpack.c.b16 %v4435, %v4427
        %v5532 = vpack.c.b16 %v4436, %v4428
        %v5533 = vpack.c.b16 %v4437, %v4429
        %v5534 = vpack.c.b16 %v4438, %v4430
        %v5535 = vpack.c.b16 %v4439, %v4431
        %v5536 = vpack.c.b16 %v4440, %v4432
        %v5537 = vpack.c.b16 %v4441, %v4433
        %v5538 = vpack.c.b16 %v4442, %v4434
        %v5539 = vpack.c.b16 %v4451, %v4443
        %v5540 = vpack.c.b16 %v4452, %v4444
        %v5541 = vpack.c.b16 %v4453, %v4445
        %v5542 = vpack.c.b16 %v4454, %v4446
        %v5543 = vpack.c.b16 %v4455, %v4447
        %v5544 = vpack.c.b16 %v4456, %v4448
        %v5545 = vpack.c.b16 %v4457, %v4449
        %v5546 = vpack.c.b16 %v4458, %v4450
        %v5547 = vpack.c.b16 %v4467, %v4459
        %v5548 = vpack.c.b16 %v4468, %v4460
        %v5549 = vpack.c.b16 %v4469, %v4461
        %v5550 = vpack.c.b16 %v4470, %v4462
        %v5551 = vpack.c.b16 %v4471, %v4463
        %v5552 = vpack.c.b16 %v4472, %v4464
        %v5553 = vpack.c.b16 %v4473, %v4465
        %v5554 = vpack.c.b16 %v4474, %v4466
        %v5555 = vpack.c.b16 %v4483, %v4475
        %v5556 = vpack.c.b16 %v4484, %v4476
        %v5557 = vpack.c.b16 %v4485, %v4477
        %v5558 = vpack.c.b16 %v4486, %v4478
        %v5559 = vpack.c.b16 %v4487, %v4479
        %v5560 = vpack.c.b16 %v4488, %v4480
        %v5561 = vpack.c.b16 %v4489, %v4481
        %v5562 = vpack.c.b16 %v4490, %v4482
        %v5563 = vpack.c.b16 %v4499, %v4491
        %v5564 = vpack.c.b16 %v4500, %v4492
        %v5565 = vpack.c.b16 %v4501, %v4493
        %v5566 = vpack.c.b16 %v4502, %v4494
        %v5567 = vpack.c.b16 %v4503, %v4495
        %v5568 = vpack.c.b16 %v4504, %v4496
        %v5569 = vpack.c.b16 %v4505, %v4497
        %v5570 = vpack.c.b16 %v4506, %v4498
        %v5571 = vpack.c.b16 %v4515, %v4507
        %v5572 = vpack.c.b16 %v4516, %v4508
        %v5573 = vpack.c.b16 %v4517, %v4509
        %v5574 = vpack.c.b16 %v4518, %v4510
        %v5575 = vpack.c.b16 %v4519, %v4511
        %v5576 = vpack.c.b16 %v4520, %v4512
        %v5577 = vpack.c.b16 %v4521, %v4513
        %v5578 = vpack.c.b16 %v4522, %v4514
        %v5579 = vpack.c.b16 %v4531, %v4523
        %v5580 = vpack.c.b16 %v4532, %v4524
        %v5581 = vpack.c.b16 %v4533, %v4525
        %v5582 = vpack.c.b16 %v4534, %v4526
        %v5583 = vpack.c.b16 %v4535, %v4527
        %v5584 = vpack.c.b16 %v4536, %v4528
        %v5585 = vpack.c.b16 %v4537, %v4529
        %v5586 = vpack.c.b16 %v4538, %v4530
        %v5587 = vpack.c.b16 %v4547, %v4539
        %v5588 = vpack.c.b16 %v4548, %v4540
        %v5589 = vpack.c.b16 %v4549, %v4541
        %v5590 = vpack.c.b16 %v4550, %v4542
        %v5591 = vpack.c.b16 %v4551, %v4543
        %v5592 = vpack.c.b16 %v4552, %v4544
        %v5593 = vpack.c.b16 %v4553, %v4545
        %v5594 = vpack.c.b16 %v4554, %v4546
        %v5595 = vpack.c.b16 %v4563, %v4555
        %v5596 = vpack.c.b16 %v4564, %v4556
        %v5597 = vpack.c.b16 %v4565, %v4557
        %v5598 = vpack.c.b16 %v4566, %v4558
        %v5599 = vpack.c.b16 %v4567, %v4559
        %v5600 = vpack.c.b16 %v4568, %v4560
        %v5601 = vpack.c.b16 %v4569, %v4561
        %v5602 = vpack.c.b16 %v4570, %v4562
        %v5603 = vpack.c.b16 %v4579, %v4571
        %v5604 = vpack.c.b16 %v4580, %v4572
        %v5605 = vpack.c.b16 %v4581, %v4573
        %v5606 = vpack.c.b16 %v4582, %v4574
        %v5607 = vpack.c.b16 %v4583, %v4575
        %v5608 = vpack.c.b16 %v4584, %v4576
        %v5609 = vpack.c.b16 %v4585, %v4577
        %v5610 = vpack.c.b16 %v4586, %v4578
        %6635 = vmatpush.bf16.msra.mxu0 %v4643
        %6636 = vmatpush.bf16.msra.mxu0 %v4635
        %6637 = vmatpush.bf16.msra.mxu0 %v4627
        %6638 = vmatpush.bf16.msra.mxu0 %v4619
        %6639 = vmatpush.bf16.msra.mxu0 %v4611
        %6640 = vmatpush.bf16.msra.mxu0 %v4603
        %6641 = vmatpush.bf16.msra.mxu0 %v4595
        %6642 = vmatpush.bf16.msra.mxu0 %v4587
        %6643 = vmatmul.bf16.gmra.mxu0 %v1483
        %v6644 = vpop.f32.mrf.mxu0
        %v6645 = vadd.f32 0.0, %v6644
        %v6646 = vpop.f32.mrf.mxu0
        %v6647 = vadd.f32 0.0, %v6646
        %6648 = vdwg.mxu0
        %6649 = vmatpush.bf16.msra.mxu0 %v4707
        %6650 = vmatpush.bf16.msra.mxu0 %v4699
        %6651 = vmatpush.bf16.msra.mxu0 %v4691
        %6652 = vmatpush.bf16.msra.mxu0 %v4683
        %6653 = vmatpush.bf16.msra.mxu0 %v4675
        %6654 = vmatpush.bf16.msra.mxu0 %v4667
        %6655 = vmatpush.bf16.msra.mxu0 %v4659
        %6656 = vmatpush.bf16.msra.mxu0 %v4651
        %6657 = vmatmul.bf16.gmra.mxu0 %v1484
        %v6658 = vpop.f32.mrf.mxu0
        %v6659 = vadd.f32 %v6645, %v6658
        %v6660 = vpop.f32.mrf.mxu0
        %v6661 = vadd.f32 %v6647, %v6660
        %6662 = vdwg.mxu0
        %6663 = vmatpush.bf16.msra.mxu0 %v4771
        %6664 = vmatpush.bf16.msra.mxu0 %v4763
        %6665 = vmatpush.bf16.msra.mxu0 %v4755
        %6666 = vmatpush.bf16.msra.mxu0 %v4747
        %6667 = vmatpush.bf16.msra.mxu0 %v4739
        %6668 = vmatpush.bf16.msra.mxu0 %v4731
        %6669 = vmatpush.bf16.msra.mxu0 %v4723
        %6670 = vmatpush.bf16.msra.mxu0 %v4715
        %6671 = vmatmul.bf16.gmra.mxu0 %v1485
        %v6672 = vpop.f32.mrf.mxu0
        %v6673 = vadd.f32 %v6659, %v6672
        %v6674 = vpop.f32.mrf.mxu0
        %v6675 = vadd.f32 %v6661, %v6674
        %6676 = vdwg.mxu0
        %6677 = vmatpush.bf16.msra.mxu0 %v4835
        %6678 = vmatpush.bf16.msra.mxu0 %v4827
        %6679 = vmatpush.bf16.msra.mxu0 %v4819
        %6680 = vmatpush.bf16.msra.mxu0 %v4811
        %6681 = vmatpush.bf16.msra.mxu0 %v4803
        %6682 = vmatpush.bf16.msra.mxu0 %v4795
        %6683 = vmatpush.bf16.msra.mxu0 %v4787
        %6684 = vmatpush.bf16.msra.mxu0 %v4779
        %6685 = vmatmul.bf16.gmra.mxu0 %v1486
        %v6686 = vpop.f32.mrf.mxu0
        %v6687 = vadd.f32 %v6673, %v6686
        %v6688 = vpop.f32.mrf.mxu0
        %v6689 = vadd.f32 %v6675, %v6688
        %6690 = vdwg.mxu0
        %6691 = vmatpush.bf16.msra.mxu0 %v4899
        %6692 = vmatpush.bf16.msra.mxu0 %v4891
        %6693 = vmatpush.bf16.msra.mxu0 %v4883
        %6694 = vmatpush.bf16.msra.mxu0 %v4875
        %6695 = vmatpush.bf16.msra.mxu0 %v4867
        %6696 = vmatpush.bf16.msra.mxu0 %v4859
        %6697 = vmatpush.bf16.msra.mxu0 %v4851
        %6698 = vmatpush.bf16.msra.mxu0 %v4843
        %6699 = vmatmul.bf16.gmra.mxu0 %v1487
        %v6700 = vpop.f32.mrf.mxu0
        %v6701 = vadd.f32 %v6687, %v6700
        %v6702 = vpop.f32.mrf.mxu0
        %v6703 = vadd.f32 %v6689, %v6702
        %6704 = vdwg.mxu0
        %6705 = vmatpush.bf16.msra.mxu0 %v4963
        %6706 = vmatpush.bf16.msra.mxu0 %v4955
        %6707 = vmatpush.bf16.msra.mxu0 %v4947
        %6708 = vmatpush.bf16.msra.mxu0 %v4939
        %6709 = vmatpush.bf16.msra.mxu0 %v4931
        %6710 = vmatpush.bf16.msra.mxu0 %v4923
        %6711 = vmatpush.bf16.msra.mxu0 %v4915
        %6712 = vmatpush.bf16.msra.mxu0 %v4907
        %6713 = vmatmul.bf16.gmra.mxu0 %v1488
        %v6714 = vpop.f32.mrf.mxu0
        %v6715 = vadd.f32 %v6701, %v6714
        %v6716 = vpop.f32.mrf.mxu0
        %v6717 = vadd.f32 %v6703, %v6716
        %6718 = vdwg.mxu0
        %6719 = vmatpush.bf16.msra.mxu0 %v5027
        %6720 = vmatpush.bf16.msra.mxu0 %v5019
        %6721 = vmatpush.bf16.msra.mxu0 %v5011
        %6722 = vmatpush.bf16.msra.mxu0 %v5003
        %6723 = vmatpush.bf16.msra.mxu0 %v4995
        %6724 = vmatpush.bf16.msra.mxu0 %v4987
        %6725 = vmatpush.bf16.msra.mxu0 %v4979
        %6726 = vmatpush.bf16.msra.mxu0 %v4971
        %6727 = vmatmul.bf16.gmra.mxu0 %v1489
        %v6728 = vpop.f32.mrf.mxu0
        %v6729 = vadd.f32 %v6715, %v6728
        %v6730 = vpop.f32.mrf.mxu0
        %v6731 = vadd.f32 %v6717, %v6730
        %6732 = vdwg.mxu0
        %6733 = vmatpush.bf16.msra.mxu0 %v5091
        %6734 = vmatpush.bf16.msra.mxu0 %v5083
        %6735 = vmatpush.bf16.msra.mxu0 %v5075
        %6736 = vmatpush.bf16.msra.mxu0 %v5067
        %6737 = vmatpush.bf16.msra.mxu0 %v5059
        %6738 = vmatpush.bf16.msra.mxu0 %v5051
        %6739 = vmatpush.bf16.msra.mxu0 %v5043
        %6740 = vmatpush.bf16.msra.mxu0 %v5035
        %6741 = vmatmul.bf16.gmra.mxu0 %v1490
        %v6742 = vpop.f32.mrf.mxu0
        %v6743 = vadd.f32 %v6729, %v6742
        %v6744 = vpop.f32.mrf.mxu0
        %v6745 = vadd.f32 %v6731, %v6744
        %6746 = vdwg.mxu0
        %6747 = vmatpush.bf16.msra.mxu0 %v5155
        %6748 = vmatpush.bf16.msra.mxu0 %v5147
        %6749 = vmatpush.bf16.msra.mxu0 %v5139
        %6750 = vmatpush.bf16.msra.mxu0 %v5131
        %6751 = vmatpush.bf16.msra.mxu0 %v5123
        %6752 = vmatpush.bf16.msra.mxu0 %v5115
        %6753 = vmatpush.bf16.msra.mxu0 %v5107
        %6754 = vmatpush.bf16.msra.mxu0 %v5099
        %6755 = vmatmul.bf16.gmra.mxu0 %v1491
        %v6756 = vpop.f32.mrf.mxu0
        %v6757 = vadd.f32 %v6743, %v6756
        %v6758 = vpop.f32.mrf.mxu0
        %v6759 = vadd.f32 %v6745, %v6758
        %6760 = vdwg.mxu0
        %6761 = vmatpush.bf16.msra.mxu0 %v5219
        %6762 = vmatpush.bf16.msra.mxu0 %v5211
        %6763 = vmatpush.bf16.msra.mxu0 %v5203
        %6764 = vmatpush.bf16.msra.mxu0 %v5195
        %6765 = vmatpush.bf16.msra.mxu0 %v5187
        %6766 = vmatpush.bf16.msra.mxu0 %v5179
        %6767 = vmatpush.bf16.msra.mxu0 %v5171
        %6768 = vmatpush.bf16.msra.mxu0 %v5163
        %6769 = vmatmul.bf16.gmra.mxu0 %v1492
        %v6770 = vpop.f32.mrf.mxu0
        %v6771 = vadd.f32 %v6757, %v6770
        %v6772 = vpop.f32.mrf.mxu0
        %v6773 = vadd.f32 %v6759, %v6772
        %6774 = vdwg.mxu0
        %6775 = vmatpush.bf16.msra.mxu0 %v5283
        %6776 = vmatpush.bf16.msra.mxu0 %v5275
        %6777 = vmatpush.bf16.msra.mxu0 %v5267
        %6778 = vmatpush.bf16.msra.mxu0 %v5259
        %6779 = vmatpush.bf16.msra.mxu0 %v5251
        %6780 = vmatpush.bf16.msra.mxu0 %v5243
        %6781 = vmatpush.bf16.msra.mxu0 %v5235
        %6782 = vmatpush.bf16.msra.mxu0 %v5227
        %6783 = vmatmul.bf16.gmra.mxu0 %v1493
        %v6784 = vpop.f32.mrf.mxu0
        %v6785 = vadd.f32 %v6771, %v6784
        %v6786 = vpop.f32.mrf.mxu0
        %v6787 = vadd.f32 %v6773, %v6786
        %6788 = vdwg.mxu0
        %6789 = vmatpush.bf16.msra.mxu0 %v5347
        %6790 = vmatpush.bf16.msra.mxu0 %v5339
        %6791 = vmatpush.bf16.msra.mxu0 %v5331
        %6792 = vmatpush.bf16.msra.mxu0 %v5323
        %6793 = vmatpush.bf16.msra.mxu0 %v5315
        %6794 = vmatpush.bf16.msra.mxu0 %v5307
        %6795 = vmatpush.bf16.msra.mxu0 %v5299
        %6796 = vmatpush.bf16.msra.mxu0 %v5291
        %6797 = vmatmul.bf16.gmra.mxu0 %v1494
        %v6798 = vpop.f32.mrf.mxu0
        %v6799 = vadd.f32 %v6785, %v6798
        %v6800 = vpop.f32.mrf.mxu0
        %v6801 = vadd.f32 %v6787, %v6800
        %6802 = vdwg.mxu0
        %6803 = vmatpush.bf16.msra.mxu0 %v5411
        %6804 = vmatpush.bf16.msra.mxu0 %v5403
        %6805 = vmatpush.bf16.msra.mxu0 %v5395
        %6806 = vmatpush.bf16.msra.mxu0 %v5387
        %6807 = vmatpush.bf16.msra.mxu0 %v5379
        %6808 = vmatpush.bf16.msra.mxu0 %v5371
        %6809 = vmatpush.bf16.msra.mxu0 %v5363
        %6810 = vmatpush.bf16.msra.mxu0 %v5355
        %6811 = vmatmul.bf16.gmra.mxu0 %v1495
        %v6812 = vpop.f32.mrf.mxu0
        %v6813 = vadd.f32 %v6799, %v6812
        %v6814 = vpop.f32.mrf.mxu0
        %v6815 = vadd.f32 %v6801, %v6814
        %6816 = vdwg.mxu0
        %6817 = vmatpush.bf16.msra.mxu0 %v5475
        %6818 = vmatpush.bf16.msra.mxu0 %v5467
        %6819 = vmatpush.bf16.msra.mxu0 %v5459
        %6820 = vmatpush.bf16.msra.mxu0 %v5451
        %6821 = vmatpush.bf16.msra.mxu0 %v5443
        %6822 = vmatpush.bf16.msra.mxu0 %v5435
        %6823 = vmatpush.bf16.msra.mxu0 %v5427
        %6824 = vmatpush.bf16.msra.mxu0 %v5419
        %6825 = vmatmul.bf16.gmra.mxu0 %v1496
        %v6826 = vpop.f32.mrf.mxu0
        %v6827 = vadd.f32 %v6813, %v6826
        %v6828 = vpop.f32.mrf.mxu0
        %v6829 = vadd.f32 %v6815, %v6828
        %6830 = vdwg.mxu0
        %6831 = vmatpush.bf16.msra.mxu0 %v5539
        %6832 = vmatpush.bf16.msra.mxu0 %v5531
        %6833 = vmatpush.bf16.msra.mxu0 %v5523
        %6834 = vmatpush.bf16.msra.mxu0 %v5515
        %6835 = vmatpush.bf16.msra.mxu0 %v5507
        %6836 = vmatpush.bf16.msra.mxu0 %v5499
        %6837 = vmatpush.bf16.msra.mxu0 %v5491
        %6838 = vmatpush.bf16.msra.mxu0 %v5483
        %6839 = vmatmul.bf16.gmra.mxu0 %v1497
        %v6840 = vpop.f32.mrf.mxu0
        %v6841 = vadd.f32 %v6827, %v6840
        %v6842 = vpop.f32.mrf.mxu0
        %v6843 = vadd.f32 %v6829, %v6842
        %6844 = vdwg.mxu0
        %6845 = vmatpush.bf16.msra.mxu0 %v5603
        %6846 = vmatpush.bf16.msra.mxu0 %v5595
        %6847 = vmatpush.bf16.msra.mxu0 %v5587
        %6848 = vmatpush.bf16.msra.mxu0 %v5579
        %6849 = vmatpush.bf16.msra.mxu0 %v5571
        %6850 = vmatpush.bf16.msra.mxu0 %v5563
        %6851 = vmatpush.bf16.msra.mxu0 %v5555
        %6852 = vmatpush.bf16.msra.mxu0 %v5547
        %6853 = vmatmul.bf16.gmra.mxu0 %v1498
        %v6854 = vpop.f32.mrf.mxu0
        %v6855 = vadd.f32 %v6841, %v6854
        %v6856 = vpop.f32.mrf.mxu0
        %v6857 = vadd.f32 %v6843, %v6856
        %6858 = vdwg.mxu0
        %6859 = vmatpush.bf16.msra.mxu0 %v4644
        %6860 = vmatpush.bf16.msra.mxu0 %v4636
        %6861 = vmatpush.bf16.msra.mxu0 %v4628
        %6862 = vmatpush.bf16.msra.mxu0 %v4620
        %6863 = vmatpush.bf16.msra.mxu0 %v4612
        %6864 = vmatpush.bf16.msra.mxu0 %v4604
        %6865 = vmatpush.bf16.msra.mxu0 %v4596
        %6866 = vmatpush.bf16.msra.mxu0 %v4588
        %6867 = vmatmul.bf16.gmra.mxu0 %v1483
        %v6868 = vpop.f32.mrf.mxu0
        %v6869 = vadd.f32 0.0, %v6868
        %v6870 = vpop.f32.mrf.mxu0
        %v6871 = vadd.f32 0.0, %v6870
        %6872 = vdwg.mxu0
        %6873 = vmatpush.bf16.msra.mxu0 %v4708
        %6874 = vmatpush.bf16.msra.mxu0 %v4700
        %6875 = vmatpush.bf16.msra.mxu0 %v4692
        %6876 = vmatpush.bf16.msra.mxu0 %v4684
        %6877 = vmatpush.bf16.msra.mxu0 %v4676
        %6878 = vmatpush.bf16.msra.mxu0 %v4668
        %6879 = vmatpush.bf16.msra.mxu0 %v4660
        %6880 = vmatpush.bf16.msra.mxu0 %v4652
        %6881 = vmatmul.bf16.gmra.mxu0 %v1484
        %v6882 = vpop.f32.mrf.mxu0
        %v6883 = vadd.f32 %v6869, %v6882
        %v6884 = vpop.f32.mrf.mxu0
        %v6885 = vadd.f32 %v6871, %v6884
        %6886 = vdwg.mxu0
        %6887 = vmatpush.bf16.msra.mxu0 %v4772
        %6888 = vmatpush.bf16.msra.mxu0 %v4764
        %6889 = vmatpush.bf16.msra.mxu0 %v4756
        %6890 = vmatpush.bf16.msra.mxu0 %v4748
        %6891 = vmatpush.bf16.msra.mxu0 %v4740
        %6892 = vmatpush.bf16.msra.mxu0 %v4732
        %6893 = vmatpush.bf16.msra.mxu0 %v4724
        %6894 = vmatpush.bf16.msra.mxu0 %v4716
        %6895 = vmatmul.bf16.gmra.mxu0 %v1485
        %v6896 = vpop.f32.mrf.mxu0
        %v6897 = vadd.f32 %v6883, %v6896
        %v6898 = vpop.f32.mrf.mxu0
        %v6899 = vadd.f32 %v6885, %v6898
        %6900 = vdwg.mxu0
        %6901 = vmatpush.bf16.msra.mxu0 %v4836
        %6902 = vmatpush.bf16.msra.mxu0 %v4828
        %6903 = vmatpush.bf16.msra.mxu0 %v4820
        %6904 = vmatpush.bf16.msra.mxu0 %v4812
        %6905 = vmatpush.bf16.msra.mxu0 %v4804
        %6906 = vmatpush.bf16.msra.mxu0 %v4796
        %6907 = vmatpush.bf16.msra.mxu0 %v4788
        %6908 = vmatpush.bf16.msra.mxu0 %v4780
        %6909 = vmatmul.bf16.gmra.mxu0 %v1486
        %v6910 = vpop.f32.mrf.mxu0
        %v6911 = vadd.f32 %v6897, %v6910
        %v6912 = vpop.f32.mrf.mxu0
        %v6913 = vadd.f32 %v6899, %v6912
        %6914 = vdwg.mxu0
        %6915 = vmatpush.bf16.msra.mxu0 %v4900
        %6916 = vmatpush.bf16.msra.mxu0 %v4892
        %6917 = vmatpush.bf16.msra.mxu0 %v4884
        %6918 = vmatpush.bf16.msra.mxu0 %v4876
        %6919 = vmatpush.bf16.msra.mxu0 %v4868
        %6920 = vmatpush.bf16.msra.mxu0 %v4860
        %6921 = vmatpush.bf16.msra.mxu0 %v4852
        %6922 = vmatpush.bf16.msra.mxu0 %v4844
        %6923 = vmatmul.bf16.gmra.mxu0 %v1487
        %v6924 = vpop.f32.mrf.mxu0
        %v6925 = vadd.f32 %v6911, %v6924
        %v6926 = vpop.f32.mrf.mxu0
        %v6927 = vadd.f32 %v6913, %v6926
        %6928 = vdwg.mxu0
        %6929 = vmatpush.bf16.msra.mxu0 %v4964
        %6930 = vmatpush.bf16.msra.mxu0 %v4956
        %6931 = vmatpush.bf16.msra.mxu0 %v4948
        %6932 = vmatpush.bf16.msra.mxu0 %v4940
        %6933 = vmatpush.bf16.msra.mxu0 %v4932
        %6934 = vmatpush.bf16.msra.mxu0 %v4924
        %6935 = vmatpush.bf16.msra.mxu0 %v4916
        %6936 = vmatpush.bf16.msra.mxu0 %v4908
        %6937 = vmatmul.bf16.gmra.mxu0 %v1488
        %v6938 = vpop.f32.mrf.mxu0
        %v6939 = vadd.f32 %v6925, %v6938
        %v6940 = vpop.f32.mrf.mxu0
        %v6941 = vadd.f32 %v6927, %v6940
        %6942 = vdwg.mxu0
        %6943 = vmatpush.bf16.msra.mxu0 %v5028
        %6944 = vmatpush.bf16.msra.mxu0 %v5020
        %6945 = vmatpush.bf16.msra.mxu0 %v5012
        %6946 = vmatpush.bf16.msra.mxu0 %v5004
        %6947 = vmatpush.bf16.msra.mxu0 %v4996
        %6948 = vmatpush.bf16.msra.mxu0 %v4988
        %6949 = vmatpush.bf16.msra.mxu0 %v4980
        %6950 = vmatpush.bf16.msra.mxu0 %v4972
        %6951 = vmatmul.bf16.gmra.mxu0 %v1489
        %v6952 = vpop.f32.mrf.mxu0
        %v6953 = vadd.f32 %v6939, %v6952
        %v6954 = vpop.f32.mrf.mxu0
        %v6955 = vadd.f32 %v6941, %v6954
        %6956 = vdwg.mxu0
        %6957 = vmatpush.bf16.msra.mxu0 %v5092
        %6958 = vmatpush.bf16.msra.mxu0 %v5084
        %6959 = vmatpush.bf16.msra.mxu0 %v5076
        %6960 = vmatpush.bf16.msra.mxu0 %v5068
        %6961 = vmatpush.bf16.msra.mxu0 %v5060
        %6962 = vmatpush.bf16.msra.mxu0 %v5052
        %6963 = vmatpush.bf16.msra.mxu0 %v5044
        %6964 = vmatpush.bf16.msra.mxu0 %v5036
        %6965 = vmatmul.bf16.gmra.mxu0 %v1490
        %v6966 = vpop.f32.mrf.mxu0
        %v6967 = vadd.f32 %v6953, %v6966
        %v6968 = vpop.f32.mrf.mxu0
        %v6969 = vadd.f32 %v6955, %v6968
        %6970 = vdwg.mxu0
        %6971 = vmatpush.bf16.msra.mxu0 %v5156
        %6972 = vmatpush.bf16.msra.mxu0 %v5148
        %6973 = vmatpush.bf16.msra.mxu0 %v5140
        %6974 = vmatpush.bf16.msra.mxu0 %v5132
        %6975 = vmatpush.bf16.msra.mxu0 %v5124
        %6976 = vmatpush.bf16.msra.mxu0 %v5116
        %6977 = vmatpush.bf16.msra.mxu0 %v5108
        %6978 = vmatpush.bf16.msra.mxu0 %v5100
        %6979 = vmatmul.bf16.gmra.mxu0 %v1491
        %v6980 = vpop.f32.mrf.mxu0
        %v6981 = vadd.f32 %v6967, %v6980
        %v6982 = vpop.f32.mrf.mxu0
        %v6983 = vadd.f32 %v6969, %v6982
        %6984 = vdwg.mxu0
        %6985 = vmatpush.bf16.msra.mxu0 %v5220
        %6986 = vmatpush.bf16.msra.mxu0 %v5212
        %6987 = vmatpush.bf16.msra.mxu0 %v5204
        %6988 = vmatpush.bf16.msra.mxu0 %v5196
        %6989 = vmatpush.bf16.msra.mxu0 %v5188
        %6990 = vmatpush.bf16.msra.mxu0 %v5180
        %6991 = vmatpush.bf16.msra.mxu0 %v5172
        %6992 = vmatpush.bf16.msra.mxu0 %v5164
        %6993 = vmatmul.bf16.gmra.mxu0 %v1492
        %v6994 = vpop.f32.mrf.mxu0
        %v6995 = vadd.f32 %v6981, %v6994
        %v6996 = vpop.f32.mrf.mxu0
        %v6997 = vadd.f32 %v6983, %v6996
        %6998 = vdwg.mxu0
        %6999 = vmatpush.bf16.msra.mxu0 %v5284
        %7000 = vmatpush.bf16.msra.mxu0 %v5276
        %7001 = vmatpush.bf16.msra.mxu0 %v5268
        %7002 = vmatpush.bf16.msra.mxu0 %v5260
        %7003 = vmatpush.bf16.msra.mxu0 %v5252
        %7004 = vmatpush.bf16.msra.mxu0 %v5244
        %7005 = vmatpush.bf16.msra.mxu0 %v5236
        %7006 = vmatpush.bf16.msra.mxu0 %v5228
        %7007 = vmatmul.bf16.gmra.mxu0 %v1493
        %v7008 = vpop.f32.mrf.mxu0
        %v7009 = vadd.f32 %v6995, %v7008
        %v7010 = vpop.f32.mrf.mxu0
        %v7011 = vadd.f32 %v6997, %v7010
        %7012 = vdwg.mxu0
        %7013 = vmatpush.bf16.msra.mxu0 %v5348
        %7014 = vmatpush.bf16.msra.mxu0 %v5340
        %7015 = vmatpush.bf16.msra.mxu0 %v5332
        %7016 = vmatpush.bf16.msra.mxu0 %v5324
        %7017 = vmatpush.bf16.msra.mxu0 %v5316
        %7018 = vmatpush.bf16.msra.mxu0 %v5308
        %7019 = vmatpush.bf16.msra.mxu0 %v5300
        %7020 = vmatpush.bf16.msra.mxu0 %v5292
        %7021 = vmatmul.bf16.gmra.mxu0 %v1494
        %v7022 = vpop.f32.mrf.mxu0
        %v7023 = vadd.f32 %v7009, %v7022
        %v7024 = vpop.f32.mrf.mxu0
        %v7025 = vadd.f32 %v7011, %v7024
        %7026 = vdwg.mxu0
        %7027 = vmatpush.bf16.msra.mxu0 %v5412
        %7028 = vmatpush.bf16.msra.mxu0 %v5404
        %7029 = vmatpush.bf16.msra.mxu0 %v5396
        %7030 = vmatpush.bf16.msra.mxu0 %v5388
        %7031 = vmatpush.bf16.msra.mxu0 %v5380
        %7032 = vmatpush.bf16.msra.mxu0 %v5372
        %7033 = vmatpush.bf16.msra.mxu0 %v5364
        %7034 = vmatpush.bf16.msra.mxu0 %v5356
        %7035 = vmatmul.bf16.gmra.mxu0 %v1495
        %v7036 = vpop.f32.mrf.mxu0
        %v7037 = vadd.f32 %v7023, %v7036
        %v7038 = vpop.f32.mrf.mxu0
        %v7039 = vadd.f32 %v7025, %v7038
        %7040 = vdwg.mxu0
        %7041 = vmatpush.bf16.msra.mxu0 %v5476
        %7042 = vmatpush.bf16.msra.mxu0 %v5468
        %7043 = vmatpush.bf16.msra.mxu0 %v5460
        %7044 = vmatpush.bf16.msra.mxu0 %v5452
        %7045 = vmatpush.bf16.msra.mxu0 %v5444
        %7046 = vmatpush.bf16.msra.mxu0 %v5436
        %7047 = vmatpush.bf16.msra.mxu0 %v5428
        %7048 = vmatpush.bf16.msra.mxu0 %v5420
        %7049 = vmatmul.bf16.gmra.mxu0 %v1496
        %v7050 = vpop.f32.mrf.mxu0
        %v7051 = vadd.f32 %v7037, %v7050
        %v7052 = vpop.f32.mrf.mxu0
        %v7053 = vadd.f32 %v7039, %v7052
        %7054 = vdwg.mxu0
        %7055 = vmatpush.bf16.msra.mxu0 %v5540
        %7056 = vmatpush.bf16.msra.mxu0 %v5532
        %7057 = vmatpush.bf16.msra.mxu0 %v5524
        %7058 = vmatpush.bf16.msra.mxu0 %v5516
        %7059 = vmatpush.bf16.msra.mxu0 %v5508
        %7060 = vmatpush.bf16.msra.mxu0 %v5500
        %7061 = vmatpush.bf16.msra.mxu0 %v5492
        %7062 = vmatpush.bf16.msra.mxu0 %v5484
        %7063 = vmatmul.bf16.gmra.mxu0 %v1497
        %v7064 = vpop.f32.mrf.mxu0
        %v7065 = vadd.f32 %v7051, %v7064
        %v7066 = vpop.f32.mrf.mxu0
        %v7067 = vadd.f32 %v7053, %v7066
        %7068 = vdwg.mxu0
        %7069 = vmatpush.bf16.msra.mxu0 %v5604
        %7070 = vmatpush.bf16.msra.mxu0 %v5596
        %7071 = vmatpush.bf16.msra.mxu0 %v5588
        %7072 = vmatpush.bf16.msra.mxu0 %v5580
        %7073 = vmatpush.bf16.msra.mxu0 %v5572
        %7074 = vmatpush.bf16.msra.mxu0 %v5564
        %7075 = vmatpush.bf16.msra.mxu0 %v5556
        %7076 = vmatpush.bf16.msra.mxu0 %v5548
        %7077 = vmatmul.bf16.gmra.mxu0 %v1498
        %v7078 = vpop.f32.mrf.mxu0
        %v7079 = vadd.f32 %v7065, %v7078
        %v7080 = vpop.f32.mrf.mxu0
        %v7081 = vadd.f32 %v7067, %v7080
        %7082 = vdwg.mxu0
        %7083 = vmatpush.bf16.msra.mxu0 %v4645
        %7084 = vmatpush.bf16.msra.mxu0 %v4637
        %7085 = vmatpush.bf16.msra.mxu0 %v4629
        %7086 = vmatpush.bf16.msra.mxu0 %v4621
        %7087 = vmatpush.bf16.msra.mxu0 %v4613
        %7088 = vmatpush.bf16.msra.mxu0 %v4605
        %7089 = vmatpush.bf16.msra.mxu0 %v4597
        %7090 = vmatpush.bf16.msra.mxu0 %v4589
        %7091 = vmatmul.bf16.gmra.mxu0 %v1483
        %v7092 = vpop.f32.mrf.mxu0
        %v7093 = vadd.f32 0.0, %v7092
        %v7094 = vpop.f32.mrf.mxu0
        %v7095 = vadd.f32 0.0, %v7094
        %7096 = vdwg.mxu0
        %7097 = vmatpush.bf16.msra.mxu0 %v4709
        %7098 = vmatpush.bf16.msra.mxu0 %v4701
        %7099 = vmatpush.bf16.msra.mxu0 %v4693
        %7100 = vmatpush.bf16.msra.mxu0 %v4685
        %7101 = vmatpush.bf16.msra.mxu0 %v4677
        %7102 = vmatpush.bf16.msra.mxu0 %v4669
        %7103 = vmatpush.bf16.msra.mxu0 %v4661
        %7104 = vmatpush.bf16.msra.mxu0 %v4653
        %7105 = vmatmul.bf16.gmra.mxu0 %v1484
        %v7106 = vpop.f32.mrf.mxu0
        %v7107 = vadd.f32 %v7093, %v7106
        %v7108 = vpop.f32.mrf.mxu0
        %v7109 = vadd.f32 %v7095, %v7108
        %7110 = vdwg.mxu0
        %7111 = vmatpush.bf16.msra.mxu0 %v4773
        %7112 = vmatpush.bf16.msra.mxu0 %v4765
        %7113 = vmatpush.bf16.msra.mxu0 %v4757
        %7114 = vmatpush.bf16.msra.mxu0 %v4749
        %7115 = vmatpush.bf16.msra.mxu0 %v4741
        %7116 = vmatpush.bf16.msra.mxu0 %v4733
        %7117 = vmatpush.bf16.msra.mxu0 %v4725
        %7118 = vmatpush.bf16.msra.mxu0 %v4717
        %7119 = vmatmul.bf16.gmra.mxu0 %v1485
        %v7120 = vpop.f32.mrf.mxu0
        %v7121 = vadd.f32 %v7107, %v7120
        %v7122 = vpop.f32.mrf.mxu0
        %v7123 = vadd.f32 %v7109, %v7122
        %7124 = vdwg.mxu0
        %7125 = vmatpush.bf16.msra.mxu0 %v4837
        %7126 = vmatpush.bf16.msra.mxu0 %v4829
        %7127 = vmatpush.bf16.msra.mxu0 %v4821
        %7128 = vmatpush.bf16.msra.mxu0 %v4813
        %7129 = vmatpush.bf16.msra.mxu0 %v4805
        %7130 = vmatpush.bf16.msra.mxu0 %v4797
        %7131 = vmatpush.bf16.msra.mxu0 %v4789
        %7132 = vmatpush.bf16.msra.mxu0 %v4781
        %7133 = vmatmul.bf16.gmra.mxu0 %v1486
        %v7134 = vpop.f32.mrf.mxu0
        %v7135 = vadd.f32 %v7121, %v7134
        %v7136 = vpop.f32.mrf.mxu0
        %v7137 = vadd.f32 %v7123, %v7136
        %7138 = vdwg.mxu0
        %7139 = vmatpush.bf16.msra.mxu0 %v4901
        %7140 = vmatpush.bf16.msra.mxu0 %v4893
        %7141 = vmatpush.bf16.msra.mxu0 %v4885
        %7142 = vmatpush.bf16.msra.mxu0 %v4877
        %7143 = vmatpush.bf16.msra.mxu0 %v4869
        %7144 = vmatpush.bf16.msra.mxu0 %v4861
        %7145 = vmatpush.bf16.msra.mxu0 %v4853
        %7146 = vmatpush.bf16.msra.mxu0 %v4845
        %7147 = vmatmul.bf16.gmra.mxu0 %v1487
        %v7148 = vpop.f32.mrf.mxu0
        %v7149 = vadd.f32 %v7135, %v7148
        %v7150 = vpop.f32.mrf.mxu0
        %v7151 = vadd.f32 %v7137, %v7150
        %7152 = vdwg.mxu0
        %7153 = vmatpush.bf16.msra.mxu0 %v4965
        %7154 = vmatpush.bf16.msra.mxu0 %v4957
        %7155 = vmatpush.bf16.msra.mxu0 %v4949
        %7156 = vmatpush.bf16.msra.mxu0 %v4941
        %7157 = vmatpush.bf16.msra.mxu0 %v4933
        %7158 = vmatpush.bf16.msra.mxu0 %v4925
        %7159 = vmatpush.bf16.msra.mxu0 %v4917
        %7160 = vmatpush.bf16.msra.mxu0 %v4909
        %7161 = vmatmul.bf16.gmra.mxu0 %v1488
        %v7162 = vpop.f32.mrf.mxu0
        %v7163 = vadd.f32 %v7149, %v7162
        %v7164 = vpop.f32.mrf.mxu0
        %v7165 = vadd.f32 %v7151, %v7164
        %7166 = vdwg.mxu0
        %7167 = vmatpush.bf16.msra.mxu0 %v5029
        %7168 = vmatpush.bf16.msra.mxu0 %v5021
        %7169 = vmatpush.bf16.msra.mxu0 %v5013
        %7170 = vmatpush.bf16.msra.mxu0 %v5005
        %7171 = vmatpush.bf16.msra.mxu0 %v4997
        %7172 = vmatpush.bf16.msra.mxu0 %v4989
        %7173 = vmatpush.bf16.msra.mxu0 %v4981
        %7174 = vmatpush.bf16.msra.mxu0 %v4973
        %7175 = vmatmul.bf16.gmra.mxu0 %v1489
        %v7176 = vpop.f32.mrf.mxu0
        %v7177 = vadd.f32 %v7163, %v7176
        %v7178 = vpop.f32.mrf.mxu0
        %v7179 = vadd.f32 %v7165, %v7178
        %7180 = vdwg.mxu0
        %7181 = vmatpush.bf16.msra.mxu0 %v5093
        %7182 = vmatpush.bf16.msra.mxu0 %v5085
        %7183 = vmatpush.bf16.msra.mxu0 %v5077
        %7184 = vmatpush.bf16.msra.mxu0 %v5069
        %7185 = vmatpush.bf16.msra.mxu0 %v5061
        %7186 = vmatpush.bf16.msra.mxu0 %v5053
        %7187 = vmatpush.bf16.msra.mxu0 %v5045
        %7188 = vmatpush.bf16.msra.mxu0 %v5037
        %7189 = vmatmul.bf16.gmra.mxu0 %v1490
        %v7190 = vpop.f32.mrf.mxu0
        %v7191 = vadd.f32 %v7177, %v7190
        %v7192 = vpop.f32.mrf.mxu0
        %v7193 = vadd.f32 %v7179, %v7192
        %7194 = vdwg.mxu0
        %7195 = vmatpush.bf16.msra.mxu0 %v5157
        %7196 = vmatpush.bf16.msra.mxu0 %v5149
        %7197 = vmatpush.bf16.msra.mxu0 %v5141
        %7198 = vmatpush.bf16.msra.mxu0 %v5133
        %7199 = vmatpush.bf16.msra.mxu0 %v5125
        %7200 = vmatpush.bf16.msra.mxu0 %v5117
        %7201 = vmatpush.bf16.msra.mxu0 %v5109
        %7202 = vmatpush.bf16.msra.mxu0 %v5101
        %7203 = vmatmul.bf16.gmra.mxu0 %v1491
        %v7204 = vpop.f32.mrf.mxu0
        %v7205 = vadd.f32 %v7191, %v7204
        %v7206 = vpop.f32.mrf.mxu0
        %v7207 = vadd.f32 %v7193, %v7206
        %7208 = vdwg.mxu0
        %7209 = vmatpush.bf16.msra.mxu0 %v5221
        %7210 = vmatpush.bf16.msra.mxu0 %v5213
        %7211 = vmatpush.bf16.msra.mxu0 %v5205
        %7212 = vmatpush.bf16.msra.mxu0 %v5197
        %7213 = vmatpush.bf16.msra.mxu0 %v5189
        %7214 = vmatpush.bf16.msra.mxu0 %v5181
        %7215 = vmatpush.bf16.msra.mxu0 %v5173
        %7216 = vmatpush.bf16.msra.mxu0 %v5165
        %7217 = vmatmul.bf16.gmra.mxu0 %v1492
        %v7218 = vpop.f32.mrf.mxu0
        %v7219 = vadd.f32 %v7205, %v7218
        %v7220 = vpop.f32.mrf.mxu0
        %v7221 = vadd.f32 %v7207, %v7220
        %7222 = vdwg.mxu0
        %7223 = vmatpush.bf16.msra.mxu0 %v5285
        %7224 = vmatpush.bf16.msra.mxu0 %v5277
        %7225 = vmatpush.bf16.msra.mxu0 %v5269
        %7226 = vmatpush.bf16.msra.mxu0 %v5261
        %7227 = vmatpush.bf16.msra.mxu0 %v5253
        %7228 = vmatpush.bf16.msra.mxu0 %v5245
        %7229 = vmatpush.bf16.msra.mxu0 %v5237
        %7230 = vmatpush.bf16.msra.mxu0 %v5229
        %7231 = vmatmul.bf16.gmra.mxu0 %v1493
        %v7232 = vpop.f32.mrf.mxu0
        %v7233 = vadd.f32 %v7219, %v7232
        %v7234 = vpop.f32.mrf.mxu0
        %v7235 = vadd.f32 %v7221, %v7234
        %7236 = vdwg.mxu0
        %7237 = vmatpush.bf16.msra.mxu0 %v5349
        %7238 = vmatpush.bf16.msra.mxu0 %v5341
        %7239 = vmatpush.bf16.msra.mxu0 %v5333
        %7240 = vmatpush.bf16.msra.mxu0 %v5325
        %7241 = vmatpush.bf16.msra.mxu0 %v5317
        %7242 = vmatpush.bf16.msra.mxu0 %v5309
        %7243 = vmatpush.bf16.msra.mxu0 %v5301
        %7244 = vmatpush.bf16.msra.mxu0 %v5293
        %7245 = vmatmul.bf16.gmra.mxu0 %v1494
        %v7246 = vpop.f32.mrf.mxu0
        %v7247 = vadd.f32 %v7233, %v7246
        %v7248 = vpop.f32.mrf.mxu0
        %v7249 = vadd.f32 %v7235, %v7248
        %7250 = vdwg.mxu0
        %7251 = vmatpush.bf16.msra.mxu0 %v5413
        %7252 = vmatpush.bf16.msra.mxu0 %v5405
        %7253 = vmatpush.bf16.msra.mxu0 %v5397
        %7254 = vmatpush.bf16.msra.mxu0 %v5389
        %7255 = vmatpush.bf16.msra.mxu0 %v5381
        %7256 = vmatpush.bf16.msra.mxu0 %v5373
        %7257 = vmatpush.bf16.msra.mxu0 %v5365
        %7258 = vmatpush.bf16.msra.mxu0 %v5357
        %7259 = vmatmul.bf16.gmra.mxu0 %v1495
        %v7260 = vpop.f32.mrf.mxu0
        %v7261 = vadd.f32 %v7247, %v7260
        %v7262 = vpop.f32.mrf.mxu0
        %v7263 = vadd.f32 %v7249, %v7262
        %7264 = vdwg.mxu0
        %7265 = vmatpush.bf16.msra.mxu0 %v5477
        %7266 = vmatpush.bf16.msra.mxu0 %v5469
        %7267 = vmatpush.bf16.msra.mxu0 %v5461
        %7268 = vmatpush.bf16.msra.mxu0 %v5453
        %7269 = vmatpush.bf16.msra.mxu0 %v5445
        %7270 = vmatpush.bf16.msra.mxu0 %v5437
        %7271 = vmatpush.bf16.msra.mxu0 %v5429
        %7272 = vmatpush.bf16.msra.mxu0 %v5421
        %7273 = vmatmul.bf16.gmra.mxu0 %v1496
        %v7274 = vpop.f32.mrf.mxu0
        %v7275 = vadd.f32 %v7261, %v7274
        %v7276 = vpop.f32.mrf.mxu0
        %v7277 = vadd.f32 %v7263, %v7276
        %7278 = vdwg.mxu0
        %7279 = vmatpush.bf16.msra.mxu0 %v5541
        %7280 = vmatpush.bf16.msra.mxu0 %v5533
        %7281 = vmatpush.bf16.msra.mxu0 %v5525
        %7282 = vmatpush.bf16.msra.mxu0 %v5517
        %7283 = vmatpush.bf16.msra.mxu0 %v5509
        %7284 = vmatpush.bf16.msra.mxu0 %v5501
        %7285 = vmatpush.bf16.msra.mxu0 %v5493
        %7286 = vmatpush.bf16.msra.mxu0 %v5485
        %7287 = vmatmul.bf16.gmra.mxu0 %v1497
        %v7288 = vpop.f32.mrf.mxu0
        %v7289 = vadd.f32 %v7275, %v7288
        %v7290 = vpop.f32.mrf.mxu0
        %v7291 = vadd.f32 %v7277, %v7290
        %7292 = vdwg.mxu0
        %7293 = vmatpush.bf16.msra.mxu0 %v5605
        %7294 = vmatpush.bf16.msra.mxu0 %v5597
        %7295 = vmatpush.bf16.msra.mxu0 %v5589
        %7296 = vmatpush.bf16.msra.mxu0 %v5581
        %7297 = vmatpush.bf16.msra.mxu0 %v5573
        %7298 = vmatpush.bf16.msra.mxu0 %v5565
        %7299 = vmatpush.bf16.msra.mxu0 %v5557
        %7300 = vmatpush.bf16.msra.mxu0 %v5549
        %7301 = vmatmul.bf16.gmra.mxu0 %v1498
        %v7302 = vpop.f32.mrf.mxu0
        %v7303 = vadd.f32 %v7289, %v7302
        %v7304 = vpop.f32.mrf.mxu0
        %v7305 = vadd.f32 %v7291, %v7304
        %7306 = vdwg.mxu0
        %7307 = vmatpush.bf16.msra.mxu0 %v4646
        %7308 = vmatpush.bf16.msra.mxu0 %v4638
        %7309 = vmatpush.bf16.msra.mxu0 %v4630
        %7310 = vmatpush.bf16.msra.mxu0 %v4622
        %7311 = vmatpush.bf16.msra.mxu0 %v4614
        %7312 = vmatpush.bf16.msra.mxu0 %v4606
        %7313 = vmatpush.bf16.msra.mxu0 %v4598
        %7314 = vmatpush.bf16.msra.mxu0 %v4590
        %7315 = vmatmul.bf16.gmra.mxu0 %v1483
        %v7316 = vpop.f32.mrf.mxu0
        %v7317 = vadd.f32 0.0, %v7316
        %v7318 = vpop.f32.mrf.mxu0
        %v7319 = vadd.f32 0.0, %v7318
        %7320 = vdwg.mxu0
        %7321 = vmatpush.bf16.msra.mxu0 %v4710
        %7322 = vmatpush.bf16.msra.mxu0 %v4702
        %7323 = vmatpush.bf16.msra.mxu0 %v4694
        %7324 = vmatpush.bf16.msra.mxu0 %v4686
        %7325 = vmatpush.bf16.msra.mxu0 %v4678
        %7326 = vmatpush.bf16.msra.mxu0 %v4670
        %7327 = vmatpush.bf16.msra.mxu0 %v4662
        %7328 = vmatpush.bf16.msra.mxu0 %v4654
        %7329 = vmatmul.bf16.gmra.mxu0 %v1484
        %v7330 = vpop.f32.mrf.mxu0
        %v7331 = vadd.f32 %v7317, %v7330
        %v7332 = vpop.f32.mrf.mxu0
        %v7333 = vadd.f32 %v7319, %v7332
        %7334 = vdwg.mxu0
        %7335 = vmatpush.bf16.msra.mxu0 %v4774
        %7336 = vmatpush.bf16.msra.mxu0 %v4766
        %7337 = vmatpush.bf16.msra.mxu0 %v4758
        %7338 = vmatpush.bf16.msra.mxu0 %v4750
        %7339 = vmatpush.bf16.msra.mxu0 %v4742
        %7340 = vmatpush.bf16.msra.mxu0 %v4734
        %7341 = vmatpush.bf16.msra.mxu0 %v4726
        %7342 = vmatpush.bf16.msra.mxu0 %v4718
        %7343 = vmatmul.bf16.gmra.mxu0 %v1485
        %v7344 = vpop.f32.mrf.mxu0
        %v7345 = vadd.f32 %v7331, %v7344
        %v7346 = vpop.f32.mrf.mxu0
        %v7347 = vadd.f32 %v7333, %v7346
        %7348 = vdwg.mxu0
        %7349 = vmatpush.bf16.msra.mxu0 %v4838
        %7350 = vmatpush.bf16.msra.mxu0 %v4830
        %7351 = vmatpush.bf16.msra.mxu0 %v4822
        %7352 = vmatpush.bf16.msra.mxu0 %v4814
        %7353 = vmatpush.bf16.msra.mxu0 %v4806
        %7354 = vmatpush.bf16.msra.mxu0 %v4798
        %7355 = vmatpush.bf16.msra.mxu0 %v4790
        %7356 = vmatpush.bf16.msra.mxu0 %v4782
        %7357 = vmatmul.bf16.gmra.mxu0 %v1486
        %v7358 = vpop.f32.mrf.mxu0
        %v7359 = vadd.f32 %v7345, %v7358
        %v7360 = vpop.f32.mrf.mxu0
        %v7361 = vadd.f32 %v7347, %v7360
        %7362 = vdwg.mxu0
        %7363 = vmatpush.bf16.msra.mxu0 %v4902
        %7364 = vmatpush.bf16.msra.mxu0 %v4894
        %7365 = vmatpush.bf16.msra.mxu0 %v4886
        %7366 = vmatpush.bf16.msra.mxu0 %v4878
        %7367 = vmatpush.bf16.msra.mxu0 %v4870
        %7368 = vmatpush.bf16.msra.mxu0 %v4862
        %7369 = vmatpush.bf16.msra.mxu0 %v4854
        %7370 = vmatpush.bf16.msra.mxu0 %v4846
        %7371 = vmatmul.bf16.gmra.mxu0 %v1487
        %v7372 = vpop.f32.mrf.mxu0
        %v7373 = vadd.f32 %v7359, %v7372
        %v7374 = vpop.f32.mrf.mxu0
        %v7375 = vadd.f32 %v7361, %v7374
        %7376 = vdwg.mxu0
        %7377 = vmatpush.bf16.msra.mxu0 %v4966
        %7378 = vmatpush.bf16.msra.mxu0 %v4958
        %7379 = vmatpush.bf16.msra.mxu0 %v4950
        %7380 = vmatpush.bf16.msra.mxu0 %v4942
        %7381 = vmatpush.bf16.msra.mxu0 %v4934
        %7382 = vmatpush.bf16.msra.mxu0 %v4926
        %7383 = vmatpush.bf16.msra.mxu0 %v4918
        %7384 = vmatpush.bf16.msra.mxu0 %v4910
        %7385 = vmatmul.bf16.gmra.mxu0 %v1488
        %v7386 = vpop.f32.mrf.mxu0
        %v7387 = vadd.f32 %v7373, %v7386
        %v7388 = vpop.f32.mrf.mxu0
        %v7389 = vadd.f32 %v7375, %v7388
        %7390 = vdwg.mxu0
        %7391 = vmatpush.bf16.msra.mxu0 %v5030
        %7392 = vmatpush.bf16.msra.mxu0 %v5022
        %7393 = vmatpush.bf16.msra.mxu0 %v5014
        %7394 = vmatpush.bf16.msra.mxu0 %v5006
        %7395 = vmatpush.bf16.msra.mxu0 %v4998
        %7396 = vmatpush.bf16.msra.mxu0 %v4990
        %7397 = vmatpush.bf16.msra.mxu0 %v4982
        %7398 = vmatpush.bf16.msra.mxu0 %v4974
        %7399 = vmatmul.bf16.gmra.mxu0 %v1489
        %v7400 = vpop.f32.mrf.mxu0
        %v7401 = vadd.f32 %v7387, %v7400
        %v7402 = vpop.f32.mrf.mxu0
        %v7403 = vadd.f32 %v7389, %v7402
        %7404 = vdwg.mxu0
        %7405 = vmatpush.bf16.msra.mxu0 %v5094
        %7406 = vmatpush.bf16.msra.mxu0 %v5086
        %7407 = vmatpush.bf16.msra.mxu0 %v5078
        %7408 = vmatpush.bf16.msra.mxu0 %v5070
        %7409 = vmatpush.bf16.msra.mxu0 %v5062
        %7410 = vmatpush.bf16.msra.mxu0 %v5054
        %7411 = vmatpush.bf16.msra.mxu0 %v5046
        %7412 = vmatpush.bf16.msra.mxu0 %v5038
        %7413 = vmatmul.bf16.gmra.mxu0 %v1490
        %v7414 = vpop.f32.mrf.mxu0
        %v7415 = vadd.f32 %v7401, %v7414
        %v7416 = vpop.f32.mrf.mxu0
        %v7417 = vadd.f32 %v7403, %v7416
        %7418 = vdwg.mxu0
        %7419 = vmatpush.bf16.msra.mxu0 %v5158
        %7420 = vmatpush.bf16.msra.mxu0 %v5150
        %7421 = vmatpush.bf16.msra.mxu0 %v5142
        %7422 = vmatpush.bf16.msra.mxu0 %v5134
        %7423 = vmatpush.bf16.msra.mxu0 %v5126
        %7424 = vmatpush.bf16.msra.mxu0 %v5118
        %7425 = vmatpush.bf16.msra.mxu0 %v5110
        %7426 = vmatpush.bf16.msra.mxu0 %v5102
        %7427 = vmatmul.bf16.gmra.mxu0 %v1491
        %v7428 = vpop.f32.mrf.mxu0
        %v7429 = vadd.f32 %v7415, %v7428
        %v7430 = vpop.f32.mrf.mxu0
        %v7431 = vadd.f32 %v7417, %v7430
        %7432 = vdwg.mxu0
        %7433 = vmatpush.bf16.msra.mxu0 %v5222
        %7434 = vmatpush.bf16.msra.mxu0 %v5214
        %7435 = vmatpush.bf16.msra.mxu0 %v5206
        %7436 = vmatpush.bf16.msra.mxu0 %v5198
        %7437 = vmatpush.bf16.msra.mxu0 %v5190
        %7438 = vmatpush.bf16.msra.mxu0 %v5182
        %7439 = vmatpush.bf16.msra.mxu0 %v5174
        %7440 = vmatpush.bf16.msra.mxu0 %v5166
        %7441 = vmatmul.bf16.gmra.mxu0 %v1492
        %v7442 = vpop.f32.mrf.mxu0
        %v7443 = vadd.f32 %v7429, %v7442
        %v7444 = vpop.f32.mrf.mxu0
        %v7445 = vadd.f32 %v7431, %v7444
        %7446 = vdwg.mxu0
        %7447 = vmatpush.bf16.msra.mxu0 %v5286
        %7448 = vmatpush.bf16.msra.mxu0 %v5278
        %7449 = vmatpush.bf16.msra.mxu0 %v5270
        %7450 = vmatpush.bf16.msra.mxu0 %v5262
        %7451 = vmatpush.bf16.msra.mxu0 %v5254
        %7452 = vmatpush.bf16.msra.mxu0 %v5246
        %7453 = vmatpush.bf16.msra.mxu0 %v5238
        %7454 = vmatpush.bf16.msra.mxu0 %v5230
        %7455 = vmatmul.bf16.gmra.mxu0 %v1493
        %v7456 = vpop.f32.mrf.mxu0
        %v7457 = vadd.f32 %v7443, %v7456
        %v7458 = vpop.f32.mrf.mxu0
        %v7459 = vadd.f32 %v7445, %v7458
        %7460 = vdwg.mxu0
        %7461 = vmatpush.bf16.msra.mxu0 %v5350
        %7462 = vmatpush.bf16.msra.mxu0 %v5342
        %7463 = vmatpush.bf16.msra.mxu0 %v5334
        %7464 = vmatpush.bf16.msra.mxu0 %v5326
        %7465 = vmatpush.bf16.msra.mxu0 %v5318
        %7466 = vmatpush.bf16.msra.mxu0 %v5310
        %7467 = vmatpush.bf16.msra.mxu0 %v5302
        %7468 = vmatpush.bf16.msra.mxu0 %v5294
        %7469 = vmatmul.bf16.gmra.mxu0 %v1494
        %v7470 = vpop.f32.mrf.mxu0
        %v7471 = vadd.f32 %v7457, %v7470
        %v7472 = vpop.f32.mrf.mxu0
        %v7473 = vadd.f32 %v7459, %v7472
        %7474 = vdwg.mxu0
        %7475 = vmatpush.bf16.msra.mxu0 %v5414
        %7476 = vmatpush.bf16.msra.mxu0 %v5406
        %7477 = vmatpush.bf16.msra.mxu0 %v5398
        %7478 = vmatpush.bf16.msra.mxu0 %v5390
        %7479 = vmatpush.bf16.msra.mxu0 %v5382
        %7480 = vmatpush.bf16.msra.mxu0 %v5374
        %7481 = vmatpush.bf16.msra.mxu0 %v5366
        %7482 = vmatpush.bf16.msra.mxu0 %v5358
        %7483 = vmatmul.bf16.gmra.mxu0 %v1495
        %v7484 = vpop.f32.mrf.mxu0
        %v7485 = vadd.f32 %v7471, %v7484
        %v7486 = vpop.f32.mrf.mxu0
        %v7487 = vadd.f32 %v7473, %v7486
        %7488 = vdwg.mxu0
        %7489 = vmatpush.bf16.msra.mxu0 %v5478
        %7490 = vmatpush.bf16.msra.mxu0 %v5470
        %7491 = vmatpush.bf16.msra.mxu0 %v5462
        %7492 = vmatpush.bf16.msra.mxu0 %v5454
        %7493 = vmatpush.bf16.msra.mxu0 %v5446
        %7494 = vmatpush.bf16.msra.mxu0 %v5438
        %7495 = vmatpush.bf16.msra.mxu0 %v5430
        %7496 = vmatpush.bf16.msra.mxu0 %v5422
        %7497 = vmatmul.bf16.gmra.mxu0 %v1496
        %v7498 = vpop.f32.mrf.mxu0
        %v7499 = vadd.f32 %v7485, %v7498
        %v7500 = vpop.f32.mrf.mxu0
        %v7501 = vadd.f32 %v7487, %v7500
        %7502 = vdwg.mxu0
        %7503 = vmatpush.bf16.msra.mxu0 %v5542
        %7504 = vmatpush.bf16.msra.mxu0 %v5534
        %7505 = vmatpush.bf16.msra.mxu0 %v5526
        %7506 = vmatpush.bf16.msra.mxu0 %v5518
        %7507 = vmatpush.bf16.msra.mxu0 %v5510
        %7508 = vmatpush.bf16.msra.mxu0 %v5502
        %7509 = vmatpush.bf16.msra.mxu0 %v5494
        %7510 = vmatpush.bf16.msra.mxu0 %v5486
        %7511 = vmatmul.bf16.gmra.mxu0 %v1497
        %v7512 = vpop.f32.mrf.mxu0
        %v7513 = vadd.f32 %v7499, %v7512
        %v7514 = vpop.f32.mrf.mxu0
        %v7515 = vadd.f32 %v7501, %v7514
        %7516 = vdwg.mxu0
        %7517 = vmatpush.bf16.msra.mxu0 %v5606
        %7518 = vmatpush.bf16.msra.mxu0 %v5598
        %7519 = vmatpush.bf16.msra.mxu0 %v5590
        %7520 = vmatpush.bf16.msra.mxu0 %v5582
        %7521 = vmatpush.bf16.msra.mxu0 %v5574
        %7522 = vmatpush.bf16.msra.mxu0 %v5566
        %7523 = vmatpush.bf16.msra.mxu0 %v5558
        %7524 = vmatpush.bf16.msra.mxu0 %v5550
        %7525 = vmatmul.bf16.gmra.mxu0 %v1498
        %v7526 = vpop.f32.mrf.mxu0
        %v7527 = vadd.f32 %v7513, %v7526
        %v7528 = vpop.f32.mrf.mxu0
        %v7529 = vadd.f32 %v7515, %v7528
        %7530 = vdwg.mxu0
        %7531 = vmatpush.bf16.msra.mxu0 %v4647
        %7532 = vmatpush.bf16.msra.mxu0 %v4639
        %7533 = vmatpush.bf16.msra.mxu0 %v4631
        %7534 = vmatpush.bf16.msra.mxu0 %v4623
        %7535 = vmatpush.bf16.msra.mxu0 %v4615
        %7536 = vmatpush.bf16.msra.mxu0 %v4607
        %7537 = vmatpush.bf16.msra.mxu0 %v4599
        %7538 = vmatpush.bf16.msra.mxu0 %v4591
        %7539 = vmatmul.bf16.gmra.mxu0 %v1483
        %v7540 = vpop.f32.mrf.mxu0
        %v7541 = vadd.f32 0.0, %v7540
        %v7542 = vpop.f32.mrf.mxu0
        %v7543 = vadd.f32 0.0, %v7542
        %7544 = vdwg.mxu0
        %7545 = vmatpush.bf16.msra.mxu0 %v4711
        %7546 = vmatpush.bf16.msra.mxu0 %v4703
        %7547 = vmatpush.bf16.msra.mxu0 %v4695
        %7548 = vmatpush.bf16.msra.mxu0 %v4687
        %7549 = vmatpush.bf16.msra.mxu0 %v4679
        %7550 = vmatpush.bf16.msra.mxu0 %v4671
        %7551 = vmatpush.bf16.msra.mxu0 %v4663
        %7552 = vmatpush.bf16.msra.mxu0 %v4655
        %7553 = vmatmul.bf16.gmra.mxu0 %v1484
        %v7554 = vpop.f32.mrf.mxu0
        %v7555 = vadd.f32 %v7541, %v7554
        %v7556 = vpop.f32.mrf.mxu0
        %v7557 = vadd.f32 %v7543, %v7556
        %7558 = vdwg.mxu0
        %7559 = vmatpush.bf16.msra.mxu0 %v4775
        %7560 = vmatpush.bf16.msra.mxu0 %v4767
        %7561 = vmatpush.bf16.msra.mxu0 %v4759
        %7562 = vmatpush.bf16.msra.mxu0 %v4751
        %7563 = vmatpush.bf16.msra.mxu0 %v4743
        %7564 = vmatpush.bf16.msra.mxu0 %v4735
        %7565 = vmatpush.bf16.msra.mxu0 %v4727
        %7566 = vmatpush.bf16.msra.mxu0 %v4719
        %7567 = vmatmul.bf16.gmra.mxu0 %v1485
        %v7568 = vpop.f32.mrf.mxu0
        %v7569 = vadd.f32 %v7555, %v7568
        %v7570 = vpop.f32.mrf.mxu0
        %v7571 = vadd.f32 %v7557, %v7570
        %7572 = vdwg.mxu0
        %7573 = vmatpush.bf16.msra.mxu0 %v4839
        %7574 = vmatpush.bf16.msra.mxu0 %v4831
        %7575 = vmatpush.bf16.msra.mxu0 %v4823
        %7576 = vmatpush.bf16.msra.mxu0 %v4815
        %7577 = vmatpush.bf16.msra.mxu0 %v4807
        %7578 = vmatpush.bf16.msra.mxu0 %v4799
        %7579 = vmatpush.bf16.msra.mxu0 %v4791
        %7580 = vmatpush.bf16.msra.mxu0 %v4783
        %7581 = vmatmul.bf16.gmra.mxu0 %v1486
        %v7582 = vpop.f32.mrf.mxu0
        %v7583 = vadd.f32 %v7569, %v7582
        %v7584 = vpop.f32.mrf.mxu0
        %v7585 = vadd.f32 %v7571, %v7584
        %7586 = vdwg.mxu0
        %7587 = vmatpush.bf16.msra.mxu0 %v4903
        %7588 = vmatpush.bf16.msra.mxu0 %v4895
        %7589 = vmatpush.bf16.msra.mxu0 %v4887
        %7590 = vmatpush.bf16.msra.mxu0 %v4879
        %7591 = vmatpush.bf16.msra.mxu0 %v4871
        %7592 = vmatpush.bf16.msra.mxu0 %v4863
        %7593 = vmatpush.bf16.msra.mxu0 %v4855
        %7594 = vmatpush.bf16.msra.mxu0 %v4847
        %7595 = vmatmul.bf16.gmra.mxu0 %v1487
        %v7596 = vpop.f32.mrf.mxu0
        %v7597 = vadd.f32 %v7583, %v7596
        %v7598 = vpop.f32.mrf.mxu0
        %v7599 = vadd.f32 %v7585, %v7598
        %7600 = vdwg.mxu0
        %7601 = vmatpush.bf16.msra.mxu0 %v4967
        %7602 = vmatpush.bf16.msra.mxu0 %v4959
        %7603 = vmatpush.bf16.msra.mxu0 %v4951
        %7604 = vmatpush.bf16.msra.mxu0 %v4943
        %7605 = vmatpush.bf16.msra.mxu0 %v4935
        %7606 = vmatpush.bf16.msra.mxu0 %v4927
        %7607 = vmatpush.bf16.msra.mxu0 %v4919
        %7608 = vmatpush.bf16.msra.mxu0 %v4911
        %7609 = vmatmul.bf16.gmra.mxu0 %v1488
        %v7610 = vpop.f32.mrf.mxu0
        %v7611 = vadd.f32 %v7597, %v7610
        %v7612 = vpop.f32.mrf.mxu0
        %v7613 = vadd.f32 %v7599, %v7612
        %7614 = vdwg.mxu0
        %7615 = vmatpush.bf16.msra.mxu0 %v5031
        %7616 = vmatpush.bf16.msra.mxu0 %v5023
        %7617 = vmatpush.bf16.msra.mxu0 %v5015
        %7618 = vmatpush.bf16.msra.mxu0 %v5007
        %7619 = vmatpush.bf16.msra.mxu0 %v4999
        %7620 = vmatpush.bf16.msra.mxu0 %v4991
        %7621 = vmatpush.bf16.msra.mxu0 %v4983
        %7622 = vmatpush.bf16.msra.mxu0 %v4975
        %7623 = vmatmul.bf16.gmra.mxu0 %v1489
        %v7624 = vpop.f32.mrf.mxu0
        %v7625 = vadd.f32 %v7611, %v7624
        %v7626 = vpop.f32.mrf.mxu0
        %v7627 = vadd.f32 %v7613, %v7626
        %7628 = vdwg.mxu0
        %7629 = vmatpush.bf16.msra.mxu0 %v5095
        %7630 = vmatpush.bf16.msra.mxu0 %v5087
        %7631 = vmatpush.bf16.msra.mxu0 %v5079
        %7632 = vmatpush.bf16.msra.mxu0 %v5071
        %7633 = vmatpush.bf16.msra.mxu0 %v5063
        %7634 = vmatpush.bf16.msra.mxu0 %v5055
        %7635 = vmatpush.bf16.msra.mxu0 %v5047
        %7636 = vmatpush.bf16.msra.mxu0 %v5039
        %7637 = vmatmul.bf16.gmra.mxu0 %v1490
        %v7638 = vpop.f32.mrf.mxu0
        %v7639 = vadd.f32 %v7625, %v7638
        %v7640 = vpop.f32.mrf.mxu0
        %v7641 = vadd.f32 %v7627, %v7640
        %7642 = vdwg.mxu0
        %7643 = vmatpush.bf16.msra.mxu0 %v5159
        %7644 = vmatpush.bf16.msra.mxu0 %v5151
        %7645 = vmatpush.bf16.msra.mxu0 %v5143
        %7646 = vmatpush.bf16.msra.mxu0 %v5135
        %7647 = vmatpush.bf16.msra.mxu0 %v5127
        %7648 = vmatpush.bf16.msra.mxu0 %v5119
        %7649 = vmatpush.bf16.msra.mxu0 %v5111
        %7650 = vmatpush.bf16.msra.mxu0 %v5103
        %7651 = vmatmul.bf16.gmra.mxu0 %v1491
        %v7652 = vpop.f32.mrf.mxu0
        %v7653 = vadd.f32 %v7639, %v7652
        %v7654 = vpop.f32.mrf.mxu0
        %v7655 = vadd.f32 %v7641, %v7654
        %7656 = vdwg.mxu0
        %7657 = vmatpush.bf16.msra.mxu0 %v5223
        %7658 = vmatpush.bf16.msra.mxu0 %v5215
        %7659 = vmatpush.bf16.msra.mxu0 %v5207
        %7660 = vmatpush.bf16.msra.mxu0 %v5199
        %7661 = vmatpush.bf16.msra.mxu0 %v5191
        %7662 = vmatpush.bf16.msra.mxu0 %v5183
        %7663 = vmatpush.bf16.msra.mxu0 %v5175
        %7664 = vmatpush.bf16.msra.mxu0 %v5167
        %7665 = vmatmul.bf16.gmra.mxu0 %v1492
        %v7666 = vpop.f32.mrf.mxu0
        %v7667 = vadd.f32 %v7653, %v7666
        %v7668 = vpop.f32.mrf.mxu0
        %v7669 = vadd.f32 %v7655, %v7668
        %7670 = vdwg.mxu0
        %7671 = vmatpush.bf16.msra.mxu0 %v5287
        %7672 = vmatpush.bf16.msra.mxu0 %v5279
        %7673 = vmatpush.bf16.msra.mxu0 %v5271
        %7674 = vmatpush.bf16.msra.mxu0 %v5263
        %7675 = vmatpush.bf16.msra.mxu0 %v5255
        %7676 = vmatpush.bf16.msra.mxu0 %v5247
        %7677 = vmatpush.bf16.msra.mxu0 %v5239
        %7678 = vmatpush.bf16.msra.mxu0 %v5231
        %7679 = vmatmul.bf16.gmra.mxu0 %v1493
        %v7680 = vpop.f32.mrf.mxu0
        %v7681 = vadd.f32 %v7667, %v7680
        %v7682 = vpop.f32.mrf.mxu0
        %v7683 = vadd.f32 %v7669, %v7682
        %7684 = vdwg.mxu0
        %7685 = vmatpush.bf16.msra.mxu0 %v5351
        %7686 = vmatpush.bf16.msra.mxu0 %v5343
        %7687 = vmatpush.bf16.msra.mxu0 %v5335
        %7688 = vmatpush.bf16.msra.mxu0 %v5327
        %7689 = vmatpush.bf16.msra.mxu0 %v5319
        %7690 = vmatpush.bf16.msra.mxu0 %v5311
        %7691 = vmatpush.bf16.msra.mxu0 %v5303
        %7692 = vmatpush.bf16.msra.mxu0 %v5295
        %7693 = vmatmul.bf16.gmra.mxu0 %v1494
        %v7694 = vpop.f32.mrf.mxu0
        %v7695 = vadd.f32 %v7681, %v7694
        %v7696 = vpop.f32.mrf.mxu0
        %v7697 = vadd.f32 %v7683, %v7696
        %7698 = vdwg.mxu0
        %7699 = vmatpush.bf16.msra.mxu0 %v5415
        %7700 = vmatpush.bf16.msra.mxu0 %v5407
        %7701 = vmatpush.bf16.msra.mxu0 %v5399
        %7702 = vmatpush.bf16.msra.mxu0 %v5391
        %7703 = vmatpush.bf16.msra.mxu0 %v5383
        %7704 = vmatpush.bf16.msra.mxu0 %v5375
        %7705 = vmatpush.bf16.msra.mxu0 %v5367
        %7706 = vmatpush.bf16.msra.mxu0 %v5359
        %7707 = vmatmul.bf16.gmra.mxu0 %v1495
        %v7708 = vpop.f32.mrf.mxu0
        %v7709 = vadd.f32 %v7695, %v7708
        %v7710 = vpop.f32.mrf.mxu0
        %v7711 = vadd.f32 %v7697, %v7710
        %7712 = vdwg.mxu0
        %7713 = vmatpush.bf16.msra.mxu0 %v5479
        %7714 = vmatpush.bf16.msra.mxu0 %v5471
        %7715 = vmatpush.bf16.msra.mxu0 %v5463
        %7716 = vmatpush.bf16.msra.mxu0 %v5455
        %7717 = vmatpush.bf16.msra.mxu0 %v5447
        %7718 = vmatpush.bf16.msra.mxu0 %v5439
        %7719 = vmatpush.bf16.msra.mxu0 %v5431
        %7720 = vmatpush.bf16.msra.mxu0 %v5423
        %7721 = vmatmul.bf16.gmra.mxu0 %v1496
        %v7722 = vpop.f32.mrf.mxu0
        %v7723 = vadd.f32 %v7709, %v7722
        %v7724 = vpop.f32.mrf.mxu0
        %v7725 = vadd.f32 %v7711, %v7724
        %7726 = vdwg.mxu0
        %7727 = vmatpush.bf16.msra.mxu0 %v5543
        %7728 = vmatpush.bf16.msra.mxu0 %v5535
        %7729 = vmatpush.bf16.msra.mxu0 %v5527
        %7730 = vmatpush.bf16.msra.mxu0 %v5519
        %7731 = vmatpush.bf16.msra.mxu0 %v5511
        %7732 = vmatpush.bf16.msra.mxu0 %v5503
        %7733 = vmatpush.bf16.msra.mxu0 %v5495
        %7734 = vmatpush.bf16.msra.mxu0 %v5487
        %7735 = vmatmul.bf16.gmra.mxu0 %v1497
        %v7736 = vpop.f32.mrf.mxu0
        %v7737 = vadd.f32 %v7723, %v7736
        %v7738 = vpop.f32.mrf.mxu0
        %v7739 = vadd.f32 %v7725, %v7738
        %7740 = vdwg.mxu0
        %7741 = vmatpush.bf16.msra.mxu0 %v5607
        %7742 = vmatpush.bf16.msra.mxu0 %v5599
        %7743 = vmatpush.bf16.msra.mxu0 %v5591
        %7744 = vmatpush.bf16.msra.mxu0 %v5583
        %7745 = vmatpush.bf16.msra.mxu0 %v5575
        %7746 = vmatpush.bf16.msra.mxu0 %v5567
        %7747 = vmatpush.bf16.msra.mxu0 %v5559
        %7748 = vmatpush.bf16.msra.mxu0 %v5551
        %7749 = vmatmul.bf16.gmra.mxu0 %v1498
        %v7750 = vpop.f32.mrf.mxu0
        %v7751 = vadd.f32 %v7737, %v7750
        %v7752 = vpop.f32.mrf.mxu0
        %v7753 = vadd.f32 %v7739, %v7752
        %7754 = vdwg.mxu0
        %7755 = vmatpush.bf16.msra.mxu0 %v4648
        %7756 = vmatpush.bf16.msra.mxu0 %v4640
        %7757 = vmatpush.bf16.msra.mxu0 %v4632
        %7758 = vmatpush.bf16.msra.mxu0 %v4624
        %7759 = vmatpush.bf16.msra.mxu0 %v4616
        %7760 = vmatpush.bf16.msra.mxu0 %v4608
        %7761 = vmatpush.bf16.msra.mxu0 %v4600
        %7762 = vmatpush.bf16.msra.mxu0 %v4592
        %7763 = vmatmul.bf16.gmra.mxu0 %v1483
        %v7764 = vpop.f32.mrf.mxu0
        %v7765 = vadd.f32 0.0, %v7764
        %v7766 = vpop.f32.mrf.mxu0
        %v7767 = vadd.f32 0.0, %v7766
        %7768 = vdwg.mxu0
        %7769 = vmatpush.bf16.msra.mxu0 %v4712
        %7770 = vmatpush.bf16.msra.mxu0 %v4704
        %7771 = vmatpush.bf16.msra.mxu0 %v4696
        %7772 = vmatpush.bf16.msra.mxu0 %v4688
        %7773 = vmatpush.bf16.msra.mxu0 %v4680
        %7774 = vmatpush.bf16.msra.mxu0 %v4672
        %7775 = vmatpush.bf16.msra.mxu0 %v4664
        %7776 = vmatpush.bf16.msra.mxu0 %v4656
        %7777 = vmatmul.bf16.gmra.mxu0 %v1484
        %v7778 = vpop.f32.mrf.mxu0
        %v7779 = vadd.f32 %v7765, %v7778
        %v7780 = vpop.f32.mrf.mxu0
        %v7781 = vadd.f32 %v7767, %v7780
        %7782 = vdwg.mxu0
        %7783 = vmatpush.bf16.msra.mxu0 %v4776
        %7784 = vmatpush.bf16.msra.mxu0 %v4768
        %7785 = vmatpush.bf16.msra.mxu0 %v4760
        %7786 = vmatpush.bf16.msra.mxu0 %v4752
        %7787 = vmatpush.bf16.msra.mxu0 %v4744
        %7788 = vmatpush.bf16.msra.mxu0 %v4736
        %7789 = vmatpush.bf16.msra.mxu0 %v4728
        %7790 = vmatpush.bf16.msra.mxu0 %v4720
        %7791 = vmatmul.bf16.gmra.mxu0 %v1485
        %v7792 = vpop.f32.mrf.mxu0
        %v7793 = vadd.f32 %v7779, %v7792
        %v7794 = vpop.f32.mrf.mxu0
        %v7795 = vadd.f32 %v7781, %v7794
        %7796 = vdwg.mxu0
        %7797 = vmatpush.bf16.msra.mxu0 %v4840
        %7798 = vmatpush.bf16.msra.mxu0 %v4832
        %7799 = vmatpush.bf16.msra.mxu0 %v4824
        %7800 = vmatpush.bf16.msra.mxu0 %v4816
        %7801 = vmatpush.bf16.msra.mxu0 %v4808
        %7802 = vmatpush.bf16.msra.mxu0 %v4800
        %7803 = vmatpush.bf16.msra.mxu0 %v4792
        %7804 = vmatpush.bf16.msra.mxu0 %v4784
        %7805 = vmatmul.bf16.gmra.mxu0 %v1486
        %v7806 = vpop.f32.mrf.mxu0
        %v7807 = vadd.f32 %v7793, %v7806
        %v7808 = vpop.f32.mrf.mxu0
        %v7809 = vadd.f32 %v7795, %v7808
        %7810 = vdwg.mxu0
        %7811 = vmatpush.bf16.msra.mxu0 %v4904
        %7812 = vmatpush.bf16.msra.mxu0 %v4896
        %7813 = vmatpush.bf16.msra.mxu0 %v4888
        %7814 = vmatpush.bf16.msra.mxu0 %v4880
        %7815 = vmatpush.bf16.msra.mxu0 %v4872
        %7816 = vmatpush.bf16.msra.mxu0 %v4864
        %7817 = vmatpush.bf16.msra.mxu0 %v4856
        %7818 = vmatpush.bf16.msra.mxu0 %v4848
        %7819 = vmatmul.bf16.gmra.mxu0 %v1487
        %v7820 = vpop.f32.mrf.mxu0
        %v7821 = vadd.f32 %v7807, %v7820
        %v7822 = vpop.f32.mrf.mxu0
        %v7823 = vadd.f32 %v7809, %v7822
        %7824 = vdwg.mxu0
        %7825 = vmatpush.bf16.msra.mxu0 %v4968
        %7826 = vmatpush.bf16.msra.mxu0 %v4960
        %7827 = vmatpush.bf16.msra.mxu0 %v4952
        %7828 = vmatpush.bf16.msra.mxu0 %v4944
        %7829 = vmatpush.bf16.msra.mxu0 %v4936
        %7830 = vmatpush.bf16.msra.mxu0 %v4928
        %7831 = vmatpush.bf16.msra.mxu0 %v4920
        %7832 = vmatpush.bf16.msra.mxu0 %v4912
        %7833 = vmatmul.bf16.gmra.mxu0 %v1488
        %v7834 = vpop.f32.mrf.mxu0
        %v7835 = vadd.f32 %v7821, %v7834
        %v7836 = vpop.f32.mrf.mxu0
        %v7837 = vadd.f32 %v7823, %v7836
        %7838 = vdwg.mxu0
        %7839 = vmatpush.bf16.msra.mxu0 %v5032
        %7840 = vmatpush.bf16.msra.mxu0 %v5024
        %7841 = vmatpush.bf16.msra.mxu0 %v5016
        %7842 = vmatpush.bf16.msra.mxu0 %v5008
        %7843 = vmatpush.bf16.msra.mxu0 %v5000
        %7844 = vmatpush.bf16.msra.mxu0 %v4992
        %7845 = vmatpush.bf16.msra.mxu0 %v4984
        %7846 = vmatpush.bf16.msra.mxu0 %v4976
        %7847 = vmatmul.bf16.gmra.mxu0 %v1489
        %v7848 = vpop.f32.mrf.mxu0
        %v7849 = vadd.f32 %v7835, %v7848
        %v7850 = vpop.f32.mrf.mxu0
        %v7851 = vadd.f32 %v7837, %v7850
        %7852 = vdwg.mxu0
        %7853 = vmatpush.bf16.msra.mxu0 %v5096
        %7854 = vmatpush.bf16.msra.mxu0 %v5088
        %7855 = vmatpush.bf16.msra.mxu0 %v5080
        %7856 = vmatpush.bf16.msra.mxu0 %v5072
        %7857 = vmatpush.bf16.msra.mxu0 %v5064
        %7858 = vmatpush.bf16.msra.mxu0 %v5056
        %7859 = vmatpush.bf16.msra.mxu0 %v5048
        %7860 = vmatpush.bf16.msra.mxu0 %v5040
        %7861 = vmatmul.bf16.gmra.mxu0 %v1490
        %v7862 = vpop.f32.mrf.mxu0
        %v7863 = vadd.f32 %v7849, %v7862
        %v7864 = vpop.f32.mrf.mxu0
        %v7865 = vadd.f32 %v7851, %v7864
        %7866 = vdwg.mxu0
        %7867 = vmatpush.bf16.msra.mxu0 %v5160
        %7868 = vmatpush.bf16.msra.mxu0 %v5152
        %7869 = vmatpush.bf16.msra.mxu0 %v5144
        %7870 = vmatpush.bf16.msra.mxu0 %v5136
        %7871 = vmatpush.bf16.msra.mxu0 %v5128
        %7872 = vmatpush.bf16.msra.mxu0 %v5120
        %7873 = vmatpush.bf16.msra.mxu0 %v5112
        %7874 = vmatpush.bf16.msra.mxu0 %v5104
        %7875 = vmatmul.bf16.gmra.mxu0 %v1491
        %v7876 = vpop.f32.mrf.mxu0
        %v7877 = vadd.f32 %v7863, %v7876
        %v7878 = vpop.f32.mrf.mxu0
        %v7879 = vadd.f32 %v7865, %v7878
        %7880 = vdwg.mxu0
        %7881 = vmatpush.bf16.msra.mxu0 %v5224
        %7882 = vmatpush.bf16.msra.mxu0 %v5216
        %7883 = vmatpush.bf16.msra.mxu0 %v5208
        %7884 = vmatpush.bf16.msra.mxu0 %v5200
        %7885 = vmatpush.bf16.msra.mxu0 %v5192
        %7886 = vmatpush.bf16.msra.mxu0 %v5184
        %7887 = vmatpush.bf16.msra.mxu0 %v5176
        %7888 = vmatpush.bf16.msra.mxu0 %v5168
        %7889 = vmatmul.bf16.gmra.mxu0 %v1492
        %v7890 = vpop.f32.mrf.mxu0
        %v7891 = vadd.f32 %v7877, %v7890
        %v7892 = vpop.f32.mrf.mxu0
        %v7893 = vadd.f32 %v7879, %v7892
        %7894 = vdwg.mxu0
        %7895 = vmatpush.bf16.msra.mxu0 %v5288
        %7896 = vmatpush.bf16.msra.mxu0 %v5280
        %7897 = vmatpush.bf16.msra.mxu0 %v5272
        %7898 = vmatpush.bf16.msra.mxu0 %v5264
        %7899 = vmatpush.bf16.msra.mxu0 %v5256
        %7900 = vmatpush.bf16.msra.mxu0 %v5248
        %7901 = vmatpush.bf16.msra.mxu0 %v5240
        %7902 = vmatpush.bf16.msra.mxu0 %v5232
        %7903 = vmatmul.bf16.gmra.mxu0 %v1493
        %v7904 = vpop.f32.mrf.mxu0
        %v7905 = vadd.f32 %v7891, %v7904
        %v7906 = vpop.f32.mrf.mxu0
        %v7907 = vadd.f32 %v7893, %v7906
        %7908 = vdwg.mxu0
        %7909 = vmatpush.bf16.msra.mxu0 %v5352
        %7910 = vmatpush.bf16.msra.mxu0 %v5344
        %7911 = vmatpush.bf16.msra.mxu0 %v5336
        %7912 = vmatpush.bf16.msra.mxu0 %v5328
        %7913 = vmatpush.bf16.msra.mxu0 %v5320
        %7914 = vmatpush.bf16.msra.mxu0 %v5312
        %7915 = vmatpush.bf16.msra.mxu0 %v5304
        %7916 = vmatpush.bf16.msra.mxu0 %v5296
        %7917 = vmatmul.bf16.gmra.mxu0 %v1494
        %v7918 = vpop.f32.mrf.mxu0
        %v7919 = vadd.f32 %v7905, %v7918
        %v7920 = vpop.f32.mrf.mxu0
        %v7921 = vadd.f32 %v7907, %v7920
        %7922 = vdwg.mxu0
        %7923 = vmatpush.bf16.msra.mxu0 %v5416
        %7924 = vmatpush.bf16.msra.mxu0 %v5408
        %7925 = vmatpush.bf16.msra.mxu0 %v5400
        %7926 = vmatpush.bf16.msra.mxu0 %v5392
        %7927 = vmatpush.bf16.msra.mxu0 %v5384
        %7928 = vmatpush.bf16.msra.mxu0 %v5376
        %7929 = vmatpush.bf16.msra.mxu0 %v5368
        %7930 = vmatpush.bf16.msra.mxu0 %v5360
        %7931 = vmatmul.bf16.gmra.mxu0 %v1495
        %v7932 = vpop.f32.mrf.mxu0
        %v7933 = vadd.f32 %v7919, %v7932
        %v7934 = vpop.f32.mrf.mxu0
        %v7935 = vadd.f32 %v7921, %v7934
        %7936 = vdwg.mxu0
        %7937 = vmatpush.bf16.msra.mxu0 %v5480
        %7938 = vmatpush.bf16.msra.mxu0 %v5472
        %7939 = vmatpush.bf16.msra.mxu0 %v5464
        %7940 = vmatpush.bf16.msra.mxu0 %v5456
        %7941 = vmatpush.bf16.msra.mxu0 %v5448
        %7942 = vmatpush.bf16.msra.mxu0 %v5440
        %7943 = vmatpush.bf16.msra.mxu0 %v5432
        %7944 = vmatpush.bf16.msra.mxu0 %v5424
        %7945 = vmatmul.bf16.gmra.mxu0 %v1496
        %v7946 = vpop.f32.mrf.mxu0
        %v7947 = vadd.f32 %v7933, %v7946
        %v7948 = vpop.f32.mrf.mxu0
        %v7949 = vadd.f32 %v7935, %v7948
        %7950 = vdwg.mxu0
        %7951 = vmatpush.bf16.msra.mxu0 %v5544
        %7952 = vmatpush.bf16.msra.mxu0 %v5536
        %7953 = vmatpush.bf16.msra.mxu0 %v5528
        %7954 = vmatpush.bf16.msra.mxu0 %v5520
        %7955 = vmatpush.bf16.msra.mxu0 %v5512
        %7956 = vmatpush.bf16.msra.mxu0 %v5504
        %7957 = vmatpush.bf16.msra.mxu0 %v5496
        %7958 = vmatpush.bf16.msra.mxu0 %v5488
        %7959 = vmatmul.bf16.gmra.mxu0 %v1497
        %v7960 = vpop.f32.mrf.mxu0
        %v7961 = vadd.f32 %v7947, %v7960
        %v7962 = vpop.f32.mrf.mxu0
        %v7963 = vadd.f32 %v7949, %v7962
        %7964 = vdwg.mxu0
        %7965 = vmatpush.bf16.msra.mxu0 %v5608
        %7966 = vmatpush.bf16.msra.mxu0 %v5600
        %7967 = vmatpush.bf16.msra.mxu0 %v5592
        %7968 = vmatpush.bf16.msra.mxu0 %v5584
        %7969 = vmatpush.bf16.msra.mxu0 %v5576
        %7970 = vmatpush.bf16.msra.mxu0 %v5568
        %7971 = vmatpush.bf16.msra.mxu0 %v5560
        %7972 = vmatpush.bf16.msra.mxu0 %v5552
        %7973 = vmatmul.bf16.gmra.mxu0 %v1498
        %v7974 = vpop.f32.mrf.mxu0
        %v7975 = vadd.f32 %v7961, %v7974
        %v7976 = vpop.f32.mrf.mxu0
        %v7977 = vadd.f32 %v7963, %v7976
        %7978 = vdwg.mxu0
        %7979 = vmatpush.bf16.msra.mxu0 %v4649
        %7980 = vmatpush.bf16.msra.mxu0 %v4641
        %7981 = vmatpush.bf16.msra.mxu0 %v4633
        %7982 = vmatpush.bf16.msra.mxu0 %v4625
        %7983 = vmatpush.bf16.msra.mxu0 %v4617
        %7984 = vmatpush.bf16.msra.mxu0 %v4609
        %7985 = vmatpush.bf16.msra.mxu0 %v4601
        %7986 = vmatpush.bf16.msra.mxu0 %v4593
        %7987 = vmatmul.bf16.gmra.mxu0 %v1483
        %v7988 = vpop.f32.mrf.mxu0
        %v7989 = vadd.f32 0.0, %v7988
        %v7990 = vpop.f32.mrf.mxu0
        %v7991 = vadd.f32 0.0, %v7990
        %7992 = vdwg.mxu0
        %7993 = vmatpush.bf16.msra.mxu0 %v4713
        %7994 = vmatpush.bf16.msra.mxu0 %v4705
        %7995 = vmatpush.bf16.msra.mxu0 %v4697
        %7996 = vmatpush.bf16.msra.mxu0 %v4689
        %7997 = vmatpush.bf16.msra.mxu0 %v4681
        %7998 = vmatpush.bf16.msra.mxu0 %v4673
        %7999 = vmatpush.bf16.msra.mxu0 %v4665
        %8000 = vmatpush.bf16.msra.mxu0 %v4657
        %8001 = vmatmul.bf16.gmra.mxu0 %v1484
        %v8002 = vpop.f32.mrf.mxu0
        %v8003 = vadd.f32 %v7989, %v8002
        %v8004 = vpop.f32.mrf.mxu0
        %v8005 = vadd.f32 %v7991, %v8004
        %8006 = vdwg.mxu0
        %8007 = vmatpush.bf16.msra.mxu0 %v4777
        %8008 = vmatpush.bf16.msra.mxu0 %v4769
        %8009 = vmatpush.bf16.msra.mxu0 %v4761
        %8010 = vmatpush.bf16.msra.mxu0 %v4753
        %8011 = vmatpush.bf16.msra.mxu0 %v4745
        %8012 = vmatpush.bf16.msra.mxu0 %v4737
        %8013 = vmatpush.bf16.msra.mxu0 %v4729
        %8014 = vmatpush.bf16.msra.mxu0 %v4721
        %8015 = vmatmul.bf16.gmra.mxu0 %v1485
        %v8016 = vpop.f32.mrf.mxu0
        %v8017 = vadd.f32 %v8003, %v8016
        %v8018 = vpop.f32.mrf.mxu0
        %v8019 = vadd.f32 %v8005, %v8018
        %8020 = vdwg.mxu0
        %8021 = vmatpush.bf16.msra.mxu0 %v4841
        %8022 = vmatpush.bf16.msra.mxu0 %v4833
        %8023 = vmatpush.bf16.msra.mxu0 %v4825
        %8024 = vmatpush.bf16.msra.mxu0 %v4817
        %8025 = vmatpush.bf16.msra.mxu0 %v4809
        %8026 = vmatpush.bf16.msra.mxu0 %v4801
        %8027 = vmatpush.bf16.msra.mxu0 %v4793
        %8028 = vmatpush.bf16.msra.mxu0 %v4785
        %8029 = vmatmul.bf16.gmra.mxu0 %v1486
        %v8030 = vpop.f32.mrf.mxu0
        %v8031 = vadd.f32 %v8017, %v8030
        %v8032 = vpop.f32.mrf.mxu0
        %v8033 = vadd.f32 %v8019, %v8032
        %8034 = vdwg.mxu0
        %8035 = vmatpush.bf16.msra.mxu0 %v4905
        %8036 = vmatpush.bf16.msra.mxu0 %v4897
        %8037 = vmatpush.bf16.msra.mxu0 %v4889
        %8038 = vmatpush.bf16.msra.mxu0 %v4881
        %8039 = vmatpush.bf16.msra.mxu0 %v4873
        %8040 = vmatpush.bf16.msra.mxu0 %v4865
        %8041 = vmatpush.bf16.msra.mxu0 %v4857
        %8042 = vmatpush.bf16.msra.mxu0 %v4849
        %8043 = vmatmul.bf16.gmra.mxu0 %v1487
        %v8044 = vpop.f32.mrf.mxu0
        %v8045 = vadd.f32 %v8031, %v8044
        %v8046 = vpop.f32.mrf.mxu0
        %v8047 = vadd.f32 %v8033, %v8046
        %8048 = vdwg.mxu0
        %8049 = vmatpush.bf16.msra.mxu0 %v4969
        %8050 = vmatpush.bf16.msra.mxu0 %v4961
        %8051 = vmatpush.bf16.msra.mxu0 %v4953
        %8052 = vmatpush.bf16.msra.mxu0 %v4945
        %8053 = vmatpush.bf16.msra.mxu0 %v4937
        %8054 = vmatpush.bf16.msra.mxu0 %v4929
        %8055 = vmatpush.bf16.msra.mxu0 %v4921
        %8056 = vmatpush.bf16.msra.mxu0 %v4913
        %8057 = vmatmul.bf16.gmra.mxu0 %v1488
        %v8058 = vpop.f32.mrf.mxu0
        %v8059 = vadd.f32 %v8045, %v8058
        %v8060 = vpop.f32.mrf.mxu0
        %v8061 = vadd.f32 %v8047, %v8060
        %8062 = vdwg.mxu0
        %8063 = vmatpush.bf16.msra.mxu0 %v5033
        %8064 = vmatpush.bf16.msra.mxu0 %v5025
        %8065 = vmatpush.bf16.msra.mxu0 %v5017
        %8066 = vmatpush.bf16.msra.mxu0 %v5009
        %8067 = vmatpush.bf16.msra.mxu0 %v5001
        %8068 = vmatpush.bf16.msra.mxu0 %v4993
        %8069 = vmatpush.bf16.msra.mxu0 %v4985
        %8070 = vmatpush.bf16.msra.mxu0 %v4977
        %8071 = vmatmul.bf16.gmra.mxu0 %v1489
        %v8072 = vpop.f32.mrf.mxu0
        %v8073 = vadd.f32 %v8059, %v8072
        %v8074 = vpop.f32.mrf.mxu0
        %v8075 = vadd.f32 %v8061, %v8074
        %8076 = vdwg.mxu0
        %8077 = vmatpush.bf16.msra.mxu0 %v5097
        %8078 = vmatpush.bf16.msra.mxu0 %v5089
        %8079 = vmatpush.bf16.msra.mxu0 %v5081
        %8080 = vmatpush.bf16.msra.mxu0 %v5073
        %8081 = vmatpush.bf16.msra.mxu0 %v5065
        %8082 = vmatpush.bf16.msra.mxu0 %v5057
        %8083 = vmatpush.bf16.msra.mxu0 %v5049
        %8084 = vmatpush.bf16.msra.mxu0 %v5041
        %8085 = vmatmul.bf16.gmra.mxu0 %v1490
        %v8086 = vpop.f32.mrf.mxu0
        %v8087 = vadd.f32 %v8073, %v8086
        %v8088 = vpop.f32.mrf.mxu0
        %v8089 = vadd.f32 %v8075, %v8088
        %8090 = vdwg.mxu0
        %8091 = vmatpush.bf16.msra.mxu0 %v5161
        %8092 = vmatpush.bf16.msra.mxu0 %v5153
        %8093 = vmatpush.bf16.msra.mxu0 %v5145
        %8094 = vmatpush.bf16.msra.mxu0 %v5137
        %8095 = vmatpush.bf16.msra.mxu0 %v5129
        %8096 = vmatpush.bf16.msra.mxu0 %v5121
        %8097 = vmatpush.bf16.msra.mxu0 %v5113
        %8098 = vmatpush.bf16.msra.mxu0 %v5105
        %8099 = vmatmul.bf16.gmra.mxu0 %v1491
        %v8100 = vpop.f32.mrf.mxu0
        %v8101 = vadd.f32 %v8087, %v8100
        %v8102 = vpop.f32.mrf.mxu0
        %v8103 = vadd.f32 %v8089, %v8102
        %8104 = vdwg.mxu0
        %8105 = vmatpush.bf16.msra.mxu0 %v5225
        %8106 = vmatpush.bf16.msra.mxu0 %v5217
        %8107 = vmatpush.bf16.msra.mxu0 %v5209
        %8108 = vmatpush.bf16.msra.mxu0 %v5201
        %8109 = vmatpush.bf16.msra.mxu0 %v5193
        %8110 = vmatpush.bf16.msra.mxu0 %v5185
        %8111 = vmatpush.bf16.msra.mxu0 %v5177
        %8112 = vmatpush.bf16.msra.mxu0 %v5169
        %8113 = vmatmul.bf16.gmra.mxu0 %v1492
        %v8114 = vpop.f32.mrf.mxu0
        %v8115 = vadd.f32 %v8101, %v8114
        %v8116 = vpop.f32.mrf.mxu0
        %v8117 = vadd.f32 %v8103, %v8116
        %8118 = vdwg.mxu0
        %8119 = vmatpush.bf16.msra.mxu0 %v5289
        %8120 = vmatpush.bf16.msra.mxu0 %v5281
        %8121 = vmatpush.bf16.msra.mxu0 %v5273
        %8122 = vmatpush.bf16.msra.mxu0 %v5265
        %8123 = vmatpush.bf16.msra.mxu0 %v5257
        %8124 = vmatpush.bf16.msra.mxu0 %v5249
        %8125 = vmatpush.bf16.msra.mxu0 %v5241
        %8126 = vmatpush.bf16.msra.mxu0 %v5233
        %8127 = vmatmul.bf16.gmra.mxu0 %v1493
        %v8128 = vpop.f32.mrf.mxu0
        %v8129 = vadd.f32 %v8115, %v8128
        %v8130 = vpop.f32.mrf.mxu0
        %v8131 = vadd.f32 %v8117, %v8130
        %8132 = vdwg.mxu0
        %8133 = vmatpush.bf16.msra.mxu0 %v5353
        %8134 = vmatpush.bf16.msra.mxu0 %v5345
        %8135 = vmatpush.bf16.msra.mxu0 %v5337
        %8136 = vmatpush.bf16.msra.mxu0 %v5329
        %8137 = vmatpush.bf16.msra.mxu0 %v5321
        %8138 = vmatpush.bf16.msra.mxu0 %v5313
        %8139 = vmatpush.bf16.msra.mxu0 %v5305
        %8140 = vmatpush.bf16.msra.mxu0 %v5297
        %8141 = vmatmul.bf16.gmra.mxu0 %v1494
        %v8142 = vpop.f32.mrf.mxu0
        %v8143 = vadd.f32 %v8129, %v8142
        %v8144 = vpop.f32.mrf.mxu0
        %v8145 = vadd.f32 %v8131, %v8144
        %8146 = vdwg.mxu0
        %8147 = vmatpush.bf16.msra.mxu0 %v5417
        %8148 = vmatpush.bf16.msra.mxu0 %v5409
        %8149 = vmatpush.bf16.msra.mxu0 %v5401
        %8150 = vmatpush.bf16.msra.mxu0 %v5393
        %8151 = vmatpush.bf16.msra.mxu0 %v5385
        %8152 = vmatpush.bf16.msra.mxu0 %v5377
        %8153 = vmatpush.bf16.msra.mxu0 %v5369
        %8154 = vmatpush.bf16.msra.mxu0 %v5361
        %8155 = vmatmul.bf16.gmra.mxu0 %v1495
        %v8156 = vpop.f32.mrf.mxu0
        %v8157 = vadd.f32 %v8143, %v8156
        %v8158 = vpop.f32.mrf.mxu0
        %v8159 = vadd.f32 %v8145, %v8158
        %8160 = vdwg.mxu0
        %8161 = vmatpush.bf16.msra.mxu0 %v5481
        %8162 = vmatpush.bf16.msra.mxu0 %v5473
        %8163 = vmatpush.bf16.msra.mxu0 %v5465
        %8164 = vmatpush.bf16.msra.mxu0 %v5457
        %8165 = vmatpush.bf16.msra.mxu0 %v5449
        %8166 = vmatpush.bf16.msra.mxu0 %v5441
        %8167 = vmatpush.bf16.msra.mxu0 %v5433
        %8168 = vmatpush.bf16.msra.mxu0 %v5425
        %8169 = vmatmul.bf16.gmra.mxu0 %v1496
        %v8170 = vpop.f32.mrf.mxu0
        %v8171 = vadd.f32 %v8157, %v8170
        %v8172 = vpop.f32.mrf.mxu0
        %v8173 = vadd.f32 %v8159, %v8172
        %8174 = vdwg.mxu0
        %8175 = vmatpush.bf16.msra.mxu0 %v5545
        %8176 = vmatpush.bf16.msra.mxu0 %v5537
        %8177 = vmatpush.bf16.msra.mxu0 %v5529
        %8178 = vmatpush.bf16.msra.mxu0 %v5521
        %8179 = vmatpush.bf16.msra.mxu0 %v5513
        %8180 = vmatpush.bf16.msra.mxu0 %v5505
        %8181 = vmatpush.bf16.msra.mxu0 %v5497
        %8182 = vmatpush.bf16.msra.mxu0 %v5489
        %8183 = vmatmul.bf16.gmra.mxu0 %v1497
        %v8184 = vpop.f32.mrf.mxu0
        %v8185 = vadd.f32 %v8171, %v8184
        %v8186 = vpop.f32.mrf.mxu0
        %v8187 = vadd.f32 %v8173, %v8186
        %8188 = vdwg.mxu0
        %8189 = vmatpush.bf16.msra.mxu0 %v5609
        %8190 = vmatpush.bf16.msra.mxu0 %v5601
        %8191 = vmatpush.bf16.msra.mxu0 %v5593
        %8192 = vmatpush.bf16.msra.mxu0 %v5585
        %8193 = vmatpush.bf16.msra.mxu0 %v5577
        %8194 = vmatpush.bf16.msra.mxu0 %v5569
        %8195 = vmatpush.bf16.msra.mxu0 %v5561
        %8196 = vmatpush.bf16.msra.mxu0 %v5553
        %8197 = vmatmul.bf16.gmra.mxu0 %v1498
        %v8198 = vpop.f32.mrf.mxu0
        %v8199 = vadd.f32 %v8185, %v8198
        %v8200 = vpop.f32.mrf.mxu0
        %v8201 = vadd.f32 %v8187, %v8200
        %8202 = vdwg.mxu0
        %8203 = vmatpush.bf16.msra.mxu0 %v4650
        %8204 = vmatpush.bf16.msra.mxu0 %v4642
        %8205 = vmatpush.bf16.msra.mxu0 %v4634
        %8206 = vmatpush.bf16.msra.mxu0 %v4626
        %8207 = vmatpush.bf16.msra.mxu0 %v4618
        %8208 = vmatpush.bf16.msra.mxu0 %v4610
        %8209 = vmatpush.bf16.msra.mxu0 %v4602
        %8210 = vmatpush.bf16.msra.mxu0 %v4594
        %8211 = vmatmul.bf16.gmra.mxu0 %v1483
        %v8212 = vpop.f32.mrf.mxu0
        %v8213 = vadd.f32 0.0, %v8212
        %v8214 = vpop.f32.mrf.mxu0
        %v8215 = vadd.f32 0.0, %v8214
        %8216 = vdwg.mxu0
        %8217 = vmatpush.bf16.msra.mxu0 %v4714
        %8218 = vmatpush.bf16.msra.mxu0 %v4706
        %8219 = vmatpush.bf16.msra.mxu0 %v4698
        %8220 = vmatpush.bf16.msra.mxu0 %v4690
        %8221 = vmatpush.bf16.msra.mxu0 %v4682
        %8222 = vmatpush.bf16.msra.mxu0 %v4674
        %8223 = vmatpush.bf16.msra.mxu0 %v4666
        %8224 = vmatpush.bf16.msra.mxu0 %v4658
        %8225 = vmatmul.bf16.gmra.mxu0 %v1484
        %v8226 = vpop.f32.mrf.mxu0
        %v8227 = vadd.f32 %v8213, %v8226
        %v8228 = vpop.f32.mrf.mxu0
        %v8229 = vadd.f32 %v8215, %v8228
        %8230 = vdwg.mxu0
        %8231 = vmatpush.bf16.msra.mxu0 %v4778
        %8232 = vmatpush.bf16.msra.mxu0 %v4770
        %8233 = vmatpush.bf16.msra.mxu0 %v4762
        %8234 = vmatpush.bf16.msra.mxu0 %v4754
        %8235 = vmatpush.bf16.msra.mxu0 %v4746
        %8236 = vmatpush.bf16.msra.mxu0 %v4738
        %8237 = vmatpush.bf16.msra.mxu0 %v4730
        %8238 = vmatpush.bf16.msra.mxu0 %v4722
        %8239 = vmatmul.bf16.gmra.mxu0 %v1485
        %v8240 = vpop.f32.mrf.mxu0
        %v8241 = vadd.f32 %v8227, %v8240
        %v8242 = vpop.f32.mrf.mxu0
        %v8243 = vadd.f32 %v8229, %v8242
        %8244 = vdwg.mxu0
        %8245 = vmatpush.bf16.msra.mxu0 %v4842
        %8246 = vmatpush.bf16.msra.mxu0 %v4834
        %8247 = vmatpush.bf16.msra.mxu0 %v4826
        %8248 = vmatpush.bf16.msra.mxu0 %v4818
        %8249 = vmatpush.bf16.msra.mxu0 %v4810
        %8250 = vmatpush.bf16.msra.mxu0 %v4802
        %8251 = vmatpush.bf16.msra.mxu0 %v4794
        %8252 = vmatpush.bf16.msra.mxu0 %v4786
        %8253 = vmatmul.bf16.gmra.mxu0 %v1486
        %v8254 = vpop.f32.mrf.mxu0
        %v8255 = vadd.f32 %v8241, %v8254
        %v8256 = vpop.f32.mrf.mxu0
        %v8257 = vadd.f32 %v8243, %v8256
        %8258 = vdwg.mxu0
        %8259 = vmatpush.bf16.msra.mxu0 %v4906
        %8260 = vmatpush.bf16.msra.mxu0 %v4898
        %8261 = vmatpush.bf16.msra.mxu0 %v4890
        %8262 = vmatpush.bf16.msra.mxu0 %v4882
        %8263 = vmatpush.bf16.msra.mxu0 %v4874
        %8264 = vmatpush.bf16.msra.mxu0 %v4866
        %8265 = vmatpush.bf16.msra.mxu0 %v4858
        %8266 = vmatpush.bf16.msra.mxu0 %v4850
        %8267 = vmatmul.bf16.gmra.mxu0 %v1487
        %v8268 = vpop.f32.mrf.mxu0
        %v8269 = vadd.f32 %v8255, %v8268
        %v8270 = vpop.f32.mrf.mxu0
        %v8271 = vadd.f32 %v8257, %v8270
        %8272 = vdwg.mxu0
        %8273 = vmatpush.bf16.msra.mxu0 %v4970
        %8274 = vmatpush.bf16.msra.mxu0 %v4962
        %8275 = vmatpush.bf16.msra.mxu0 %v4954
        %8276 = vmatpush.bf16.msra.mxu0 %v4946
        %8277 = vmatpush.bf16.msra.mxu0 %v4938
        %8278 = vmatpush.bf16.msra.mxu0 %v4930
        %8279 = vmatpush.bf16.msra.mxu0 %v4922
        %8280 = vmatpush.bf16.msra.mxu0 %v4914
        %8281 = vmatmul.bf16.gmra.mxu0 %v1488
        %v8282 = vpop.f32.mrf.mxu0
        %v8283 = vadd.f32 %v8269, %v8282
        %v8284 = vpop.f32.mrf.mxu0
        %v8285 = vadd.f32 %v8271, %v8284
        %8286 = vdwg.mxu0
        %8287 = vmatpush.bf16.msra.mxu0 %v5034
        %8288 = vmatpush.bf16.msra.mxu0 %v5026
        %8289 = vmatpush.bf16.msra.mxu0 %v5018
        %8290 = vmatpush.bf16.msra.mxu0 %v5010
        %8291 = vmatpush.bf16.msra.mxu0 %v5002
        %8292 = vmatpush.bf16.msra.mxu0 %v4994
        %8293 = vmatpush.bf16.msra.mxu0 %v4986
        %8294 = vmatpush.bf16.msra.mxu0 %v4978
        %8295 = vmatmul.bf16.gmra.mxu0 %v1489
        %v8296 = vpop.f32.mrf.mxu0
        %v8297 = vadd.f32 %v8283, %v8296
        %v8298 = vpop.f32.mrf.mxu0
        %v8299 = vadd.f32 %v8285, %v8298
        %8300 = vdwg.mxu0
        %8301 = vmatpush.bf16.msra.mxu0 %v5098
        %8302 = vmatpush.bf16.msra.mxu0 %v5090
        %8303 = vmatpush.bf16.msra.mxu0 %v5082
        %8304 = vmatpush.bf16.msra.mxu0 %v5074
        %8305 = vmatpush.bf16.msra.mxu0 %v5066
        %8306 = vmatpush.bf16.msra.mxu0 %v5058
        %8307 = vmatpush.bf16.msra.mxu0 %v5050
        %8308 = vmatpush.bf16.msra.mxu0 %v5042
        %8309 = vmatmul.bf16.gmra.mxu0 %v1490
        %v8310 = vpop.f32.mrf.mxu0
        %v8311 = vadd.f32 %v8297, %v8310
        %v8312 = vpop.f32.mrf.mxu0
        %v8313 = vadd.f32 %v8299, %v8312
        %8314 = vdwg.mxu0
        %8315 = vmatpush.bf16.msra.mxu0 %v5162
        %8316 = vmatpush.bf16.msra.mxu0 %v5154
        %8317 = vmatpush.bf16.msra.mxu0 %v5146
        %8318 = vmatpush.bf16.msra.mxu0 %v5138
        %8319 = vmatpush.bf16.msra.mxu0 %v5130
        %8320 = vmatpush.bf16.msra.mxu0 %v5122
        %8321 = vmatpush.bf16.msra.mxu0 %v5114
        %8322 = vmatpush.bf16.msra.mxu0 %v5106
        %8323 = vmatmul.bf16.gmra.mxu0 %v1491
        %v8324 = vpop.f32.mrf.mxu0
        %v8325 = vadd.f32 %v8311, %v8324
        %v8326 = vpop.f32.mrf.mxu0
        %v8327 = vadd.f32 %v8313, %v8326
        %8328 = vdwg.mxu0
        %8329 = vmatpush.bf16.msra.mxu0 %v5226
        %8330 = vmatpush.bf16.msra.mxu0 %v5218
        %8331 = vmatpush.bf16.msra.mxu0 %v5210
        %8332 = vmatpush.bf16.msra.mxu0 %v5202
        %8333 = vmatpush.bf16.msra.mxu0 %v5194
        %8334 = vmatpush.bf16.msra.mxu0 %v5186
        %8335 = vmatpush.bf16.msra.mxu0 %v5178
        %8336 = vmatpush.bf16.msra.mxu0 %v5170
        %8337 = vmatmul.bf16.gmra.mxu0 %v1492
        %v8338 = vpop.f32.mrf.mxu0
        %v8339 = vadd.f32 %v8325, %v8338
        %v8340 = vpop.f32.mrf.mxu0
        %v8341 = vadd.f32 %v8327, %v8340
        %8342 = vdwg.mxu0
        %8343 = vmatpush.bf16.msra.mxu0 %v5290
        %8344 = vmatpush.bf16.msra.mxu0 %v5282
        %8345 = vmatpush.bf16.msra.mxu0 %v5274
        %8346 = vmatpush.bf16.msra.mxu0 %v5266
        %8347 = vmatpush.bf16.msra.mxu0 %v5258
        %8348 = vmatpush.bf16.msra.mxu0 %v5250
        %8349 = vmatpush.bf16.msra.mxu0 %v5242
        %8350 = vmatpush.bf16.msra.mxu0 %v5234
        %8351 = vmatmul.bf16.gmra.mxu0 %v1493
        %v8352 = vpop.f32.mrf.mxu0
        %v8353 = vadd.f32 %v8339, %v8352
        %v8354 = vpop.f32.mrf.mxu0
        %v8355 = vadd.f32 %v8341, %v8354
        %8356 = vdwg.mxu0
        %8357 = vmatpush.bf16.msra.mxu0 %v5354
        %8358 = vmatpush.bf16.msra.mxu0 %v5346
        %8359 = vmatpush.bf16.msra.mxu0 %v5338
        %8360 = vmatpush.bf16.msra.mxu0 %v5330
        %8361 = vmatpush.bf16.msra.mxu0 %v5322
        %8362 = vmatpush.bf16.msra.mxu0 %v5314
        %8363 = vmatpush.bf16.msra.mxu0 %v5306
        %8364 = vmatpush.bf16.msra.mxu0 %v5298
        %8365 = vmatmul.bf16.gmra.mxu0 %v1494
        %v8366 = vpop.f32.mrf.mxu0
        %v8367 = vadd.f32 %v8353, %v8366
        %v8368 = vpop.f32.mrf.mxu0
        %v8369 = vadd.f32 %v8355, %v8368
        %8370 = vdwg.mxu0
        %8371 = vmatpush.bf16.msra.mxu0 %v5418
        %8372 = vmatpush.bf16.msra.mxu0 %v5410
        %8373 = vmatpush.bf16.msra.mxu0 %v5402
        %8374 = vmatpush.bf16.msra.mxu0 %v5394
        %8375 = vmatpush.bf16.msra.mxu0 %v5386
        %8376 = vmatpush.bf16.msra.mxu0 %v5378
        %8377 = vmatpush.bf16.msra.mxu0 %v5370
        %8378 = vmatpush.bf16.msra.mxu0 %v5362
        %8379 = vmatmul.bf16.gmra.mxu0 %v1495
        %v8380 = vpop.f32.mrf.mxu0
        %v8381 = vadd.f32 %v8367, %v8380
        %v8382 = vpop.f32.mrf.mxu0
        %v8383 = vadd.f32 %v8369, %v8382
        %8384 = vdwg.mxu0
        %8385 = vmatpush.bf16.msra.mxu0 %v5482
        %8386 = vmatpush.bf16.msra.mxu0 %v5474
        %8387 = vmatpush.bf16.msra.mxu0 %v5466
        %8388 = vmatpush.bf16.msra.mxu0 %v5458
        %8389 = vmatpush.bf16.msra.mxu0 %v5450
        %8390 = vmatpush.bf16.msra.mxu0 %v5442
        %8391 = vmatpush.bf16.msra.mxu0 %v5434
        %8392 = vmatpush.bf16.msra.mxu0 %v5426
        %8393 = vmatmul.bf16.gmra.mxu0 %v1496
        %v8394 = vpop.f32.mrf.mxu0
        %v8395 = vadd.f32 %v8381, %v8394
        %v8396 = vpop.f32.mrf.mxu0
        %v8397 = vadd.f32 %v8383, %v8396
        %8398 = vdwg.mxu0
        %8399 = vmatpush.bf16.msra.mxu0 %v5546
        %8400 = vmatpush.bf16.msra.mxu0 %v5538
        %8401 = vmatpush.bf16.msra.mxu0 %v5530
        %8402 = vmatpush.bf16.msra.mxu0 %v5522
        %8403 = vmatpush.bf16.msra.mxu0 %v5514
        %8404 = vmatpush.bf16.msra.mxu0 %v5506
        %8405 = vmatpush.bf16.msra.mxu0 %v5498
        %8406 = vmatpush.bf16.msra.mxu0 %v5490
        %8407 = vmatmul.bf16.gmra.mxu0 %v1497
        %v8408 = vpop.f32.mrf.mxu0
        %v8409 = vadd.f32 %v8395, %v8408
        %v8410 = vpop.f32.mrf.mxu0
        %v8411 = vadd.f32 %v8397, %v8410
        %8412 = vdwg.mxu0
        %8413 = vmatpush.bf16.msra.mxu0 %v5610
        %8414 = vmatpush.bf16.msra.mxu0 %v5602
        %8415 = vmatpush.bf16.msra.mxu0 %v5594
        %8416 = vmatpush.bf16.msra.mxu0 %v5586
        %8417 = vmatpush.bf16.msra.mxu0 %v5578
        %8418 = vmatpush.bf16.msra.mxu0 %v5570
        %8419 = vmatpush.bf16.msra.mxu0 %v5562
        %8420 = vmatpush.bf16.msra.mxu0 %v5554
        %8421 = vmatmul.bf16.gmra.mxu0 %v1498
        %v8422 = vpop.f32.mrf.mxu0
        %v8423 = vadd.f32 %v8409, %v8422
        %v8424 = vpop.f32.mrf.mxu0
        %v8425 = vadd.f32 %v8411, %v8424
        %8426 = vdwg.mxu0
        %v8427 = vadd.f32 %v395, %v6855
        %v8428 = vadd.f32 %v396, %v7079
        %v8429 = vadd.f32 %v397, %v7303
        %v8430 = vadd.f32 %v398, %v7527
        %v8431 = vadd.f32 %v399, %v7751
        %v8432 = vadd.f32 %v400, %v7975
        %v8433 = vadd.f32 %v401, %v8199
        %v8434 = vadd.f32 %v402, %v8423
        %v8435 = vadd.f32 %v403, %v6857
        %v8436 = vadd.f32 %v404, %v7081
        %v8437 = vadd.f32 %v405, %v7305
        %v8438 = vadd.f32 %v406, %v7529
        %v8439 = vadd.f32 %v407, %v7753
        %v8440 = vadd.f32 %v408, %v7977
        %v8441 = vadd.f32 %v409, %v8201
        %v8442 = vadd.f32 %v410, %v8425
        %8443 = vst [vmem:[#allocation2] sm:$0xff] %v8427
        %8444 = vst [vmem:[#allocation2 + $0x8] sm:$0xff] %v8428
        %8445 = vst [vmem:[#allocation2 + $0x10] sm:$0xff] %v8429
        %8446 = vst [vmem:[#allocation2 + $0x18] sm:$0xff] %v8430
        %8447 = vst [vmem:[#allocation2 + $0x20] sm:$0xff] %v8431
        %8448 = vst [vmem:[#allocation2 + $0x28] sm:$0xff] %v8432
        %8449 = vst [vmem:[#allocation2 + $0x30] sm:$0xff] %v8433
        %8450 = vst [vmem:[#allocation2 + $0x38] sm:$0xff] %v8434
        %8451 = vst [vmem:[#allocation2 + $0x40] sm:$0xff] %v8435
        %8452 = vst [vmem:[#allocation2 + $0x48] sm:$0xff] %v8436
        %8453 = vst [vmem:[#allocation2 + $0x50] sm:$0xff] %v8437
        %8454 = vst [vmem:[#allocation2 + $0x58] sm:$0xff] %v8438
        %8455 = vst [vmem:[#allocation2 + $0x60] sm:$0xff] %v8439
        %8456 = vst [vmem:[#allocation2 + $0x68] sm:$0xff] %v8440
        %8457 = vst [vmem:[#allocation2 + $0x70] sm:$0xff] %v8441
        %8458 = vst [vmem:[#allocation2 + $0x78] sm:$0xff] %v8442
        %p8459 = scmp.eq.s32.totalorder %s28, 1
        // Predicated region
        $region57: #{yolo_forward.1} parent=35 // pred_check
          %p8460 = pneg %p8459
        $region58: #{yolo_forward.1} parent=35 // pred_check_branch
          %8462 = sbr.rel (%p8460) target = $region60
        $region59: #{yolo_forward.1} parent=35 // pred_region
          %v8463 = vld [vmem:[#allocation2] sm:$0xff]
          %v8464 = vld [vmem:[#allocation2 + $0x8] sm:$0xff]
          %v8465 = vld [vmem:[#allocation2 + $0x10] sm:$0xff]
          %v8466 = vld [vmem:[#allocation2 + $0x18] sm:$0xff]
          %v8467 = vld [vmem:[#allocation2 + $0x20] sm:$0xff]
          %v8468 = vld [vmem:[#allocation2 + $0x28] sm:$0xff]
          %v8469 = vld [vmem:[#allocation2 + $0x30] sm:$0xff]
          %v8470 = vld [vmem:[#allocation2 + $0x38] sm:$0xff]
          %v8471 = vld [vmem:[#allocation2 + $0x40] sm:$0xff]
          %v8472 = vld [vmem:[#allocation2 + $0x48] sm:$0xff]
          %v8473 = vld [vmem:[#allocation2 + $0x50] sm:$0xff]
          %v8474 = vld [vmem:[#allocation2 + $0x58] sm:$0xff]
          %v8475 = vld [vmem:[#allocation2 + $0x60] sm:$0xff]
          %v8476 = vld [vmem:[#allocation2 + $0x68] sm:$0xff]
          %v8477 = vld [vmem:[#allocation2 + $0x70] sm:$0xff]
          %v8478 = vld [vmem:[#allocation2 + $0x78] sm:$0xff]
          %v8479 = vld [vmem:[%s288] sm:$0xff]
          %v8481 = vperm.slane %v8479, 0
          %v8482 = vperm.slane %v8479, 1
          %v8483 = vperm.slane %v8479, 2
          %v8484 = vperm.slane %v8479, 3
          %v8485 = vperm.slane %v8479, 4
          %v8486 = vperm.slane %v8479, 5
          %v8487 = vperm.slane %v8479, 6
          %v8488 = vperm.slane %v8479, 7
          %v8497 = vadd.f32 %v8463, %v8481
          %v8498 = vadd.f32 %v8464, %v8482
          %v8499 = vadd.f32 %v8465, %v8483
          %v8500 = vadd.f32 %v8466, %v8484
          %v8501 = vadd.f32 %v8467, %v8485
          %v8502 = vadd.f32 %v8468, %v8486
          %v8503 = vadd.f32 %v8469, %v8487
          %v8504 = vadd.f32 %v8470, %v8488
          %v8505 = vadd.f32 %v8471, %v8481
          %v8506 = vadd.f32 %v8472, %v8482
          %v8507 = vadd.f32 %v8473, %v8483
          %v8508 = vadd.f32 %v8474, %v8484
          %v8509 = vadd.f32 %v8475, %v8485
          %v8510 = vadd.f32 %v8476, %v8486
          %v8511 = vadd.f32 %v8477, %v8487
          %v8512 = vadd.f32 %v8478, %v8488
          %vm8513 = vcmp.gt.f32.partialorder %v8497, 0.0
          %vm8514 = vcmp.gt.f32.partialorder %v8498, 0.0
          %vm8515 = vcmp.gt.f32.partialorder %v8499, 0.0
          %vm8516 = vcmp.gt.f32.partialorder %v8500, 0.0
          %vm8517 = vcmp.gt.f32.partialorder %v8501, 0.0
          %vm8518 = vcmp.gt.f32.partialorder %v8502, 0.0
          %vm8519 = vcmp.gt.f32.partialorder %v8503, 0.0
          %vm8520 = vcmp.gt.f32.partialorder %v8504, 0.0
          %vm8521 = vcmp.gt.f32.partialorder %v8505, 0.0
          %vm8522 = vcmp.gt.f32.partialorder %v8506, 0.0
          %vm8523 = vcmp.gt.f32.partialorder %v8507, 0.0
          %vm8524 = vcmp.gt.f32.partialorder %v8508, 0.0
          %vm8525 = vcmp.gt.f32.partialorder %v8509, 0.0
          %vm8526 = vcmp.gt.f32.partialorder %v8510, 0.0
          %vm8527 = vcmp.gt.f32.partialorder %v8511, 0.0
          %vm8528 = vcmp.gt.f32.partialorder %v8512, 0.0
          %v8529 = vmul.f32 %v8497, 0.1
          %v8530 = vmul.f32 %v8498, 0.1
          %v8531 = vmul.f32 %v8499, 0.1
          %v8532 = vmul.f32 %v8500, 0.1
          %v8533 = vmul.f32 %v8501, 0.1
          %v8534 = vmul.f32 %v8502, 0.1
          %v8535 = vmul.f32 %v8503, 0.1
          %v8536 = vmul.f32 %v8504, 0.1
          %v8537 = vmul.f32 %v8505, 0.1
          %v8538 = vmul.f32 %v8506, 0.1
          %v8539 = vmul.f32 %v8507, 0.1
          %v8540 = vmul.f32 %v8508, 0.1
          %v8541 = vmul.f32 %v8509, 0.1
          %v8542 = vmul.f32 %v8510, 0.1
          %v8543 = vmul.f32 %v8511, 0.1
          %v8544 = vmul.f32 %v8512, 0.1
          %v8545 = vsel %vm8513, %v8497, %v8529
          %v8546 = vsel %vm8514, %v8498, %v8530
          %v8547 = vsel %vm8515, %v8499, %v8531
          %v8548 = vsel %vm8516, %v8500, %v8532
          %v8549 = vsel %vm8517, %v8501, %v8533
          %v8550 = vsel %vm8518, %v8502, %v8534
          %v8551 = vsel %vm8519, %v8503, %v8535
          %v8552 = vsel %vm8520, %v8504, %v8536
          %v8553 = vsel %vm8521, %v8505, %v8537
          %v8554 = vsel %vm8522, %v8506, %v8538
          %v8555 = vsel %vm8523, %v8507, %v8539
          %v8556 = vsel %vm8524, %v8508, %v8540
          %v8557 = vsel %vm8525, %v8509, %v8541
          %v8558 = vsel %vm8526, %v8510, %v8542
          %v8559 = vsel %vm8527, %v8511, %v8543
          %v8560 = vsel %vm8528, %v8512, %v8544
          %v8561 = vld [vmem:[%s346] sm:$0xff]
          %v8562 = vld [vmem:[%s346 + $0x8] sm:$0xff]
          %v8563 = vpack.c.bf16 %v8553, %v8545
          %v8564 = vpack.c.bf16 %v8554, %v8546
          %v8565 = vpack.c.bf16 %v8555, %v8547
          %v8566 = vpack.c.bf16 %v8556, %v8548
          %v8567 = vpack.c.bf16 %v8557, %v8549
          %v8568 = vpack.c.bf16 %v8558, %v8550
          %v8569 = vpack.c.bf16 %v8559, %v8551
          %v8570 = vpack.c.bf16 %v8560, %v8552
          %v8571 = vld [vmem:[%s298] sm:$0xf]
          %v8572 = vld [vmem:[%s298 + $0x4] sm:$0xf]
          %v8573 = vld [vmem:[%s298 + $0x8] sm:$0xf]
          %v8574 = vld [vmem:[%s298 + $0xc] sm:$0xf]
          %v8575 = vld [vmem:[%s298 + $0x10] sm:$0xf]
          %v8576 = vld [vmem:[%s298 + $0x14] sm:$0xf]
          %v8577 = vld [vmem:[%s298 + $0x18] sm:$0xf]
          %v8578 = vld [vmem:[%s298 + $0x1c] sm:$0xf]
          %v8579 = vld [vmem:[%s298 + $0x20] sm:$0xf]
          %v8580 = vld [vmem:[%s298 + $0x24] sm:$0xf]
          %v8581 = vld [vmem:[%s298 + $0x28] sm:$0xf]
          %v8582 = vld [vmem:[%s298 + $0x2c] sm:$0xf]
          %v8583 = vld [vmem:[%s298 + $0x30] sm:$0xf]
          %v8584 = vld [vmem:[%s298 + $0x34] sm:$0xf]
          %v8585 = vld [vmem:[%s298 + $0x38] sm:$0xf]
          %v8586 = vld [vmem:[%s298 + $0x3c] sm:$0xf]
          %v8587 = vld [vmem:[%s298 + $0x40] sm:$0xf]
          %v8588 = vld [vmem:[%s298 + $0x44] sm:$0xf]
          %v8589 = vld [vmem:[%s298 + $0x48] sm:$0xf]
          %v8590 = vld [vmem:[%s298 + $0x4c] sm:$0xf]
          %v8591 = vld [vmem:[%s298 + $0x50] sm:$0xf]
          %v8592 = vld [vmem:[%s298 + $0x54] sm:$0xf]
          %v8593 = vld [vmem:[%s298 + $0x58] sm:$0xf]
          %v8594 = vld [vmem:[%s298 + $0x5c] sm:$0xf]
          %v8595 = vld [vmem:[%s298 + $0x60] sm:$0xf]
          %v8596 = vld [vmem:[%s298 + $0x64] sm:$0xf]
          %v8597 = vld [vmem:[%s298 + $0x68] sm:$0xf]
          %v8598 = vld [vmem:[%s298 + $0x6c] sm:$0xf]
          %v8599 = vld [vmem:[%s298 + $0x70] sm:$0xf]
          %v8600 = vld [vmem:[%s298 + $0x74] sm:$0xf]
          %v8601 = vld [vmem:[%s298 + $0x78] sm:$0xf]
          %v8602 = vld [vmem:[%s298 + $0x7c] sm:$0xf]
          %v8603 = vld [vmem:[%s298 + $0x80] sm:$0xf]
          %v8604 = vld [vmem:[%s298 + $0x84] sm:$0xf]
          %v8605 = vld [vmem:[%s298 + $0x88] sm:$0xf]
          %v8606 = vld [vmem:[%s298 + $0x8c] sm:$0xf]
          %v8607 = vld [vmem:[%s298 + $0x90] sm:$0xf]
          %v8608 = vld [vmem:[%s298 + $0x94] sm:$0xf]
          %v8609 = vld [vmem:[%s298 + $0x98] sm:$0xf]
          %v8610 = vld [vmem:[%s298 + $0x9c] sm:$0xf]
          %v8611 = vld [vmem:[%s298 + $0xa0] sm:$0xf]
          %v8612 = vld [vmem:[%s298 + $0xa4] sm:$0xf]
          %v8613 = vld [vmem:[%s298 + $0xa8] sm:$0xf]
          %v8614 = vld [vmem:[%s298 + $0xac] sm:$0xf]
          %v8615 = vld [vmem:[%s298 + $0xb0] sm:$0xf]
          %v8616 = vld [vmem:[%s298 + $0xb4] sm:$0xf]
          %v8617 = vld [vmem:[%s298 + $0xb8] sm:$0xf]
          %v8618 = vld [vmem:[%s298 + $0xbc] sm:$0xf]
          %v8619 = vld [vmem:[%s298 + $0xc0] sm:$0xf]
          %v8620 = vld [vmem:[%s298 + $0xc4] sm:$0xf]
          %v8621 = vld [vmem:[%s298 + $0xc8] sm:$0xf]
          %v8622 = vld [vmem:[%s298 + $0xcc] sm:$0xf]
          %v8623 = vld [vmem:[%s298 + $0xd0] sm:$0xf]
          %v8624 = vld [vmem:[%s298 + $0xd4] sm:$0xf]
          %v8625 = vld [vmem:[%s298 + $0xd8] sm:$0xf]
          %v8626 = vld [vmem:[%s298 + $0xdc] sm:$0xf]
          %v8627 = vld [vmem:[%s298 + $0xe0] sm:$0xf]
          %v8628 = vld [vmem:[%s298 + $0xe4] sm:$0xf]
          %v8629 = vld [vmem:[%s298 + $0xe8] sm:$0xf]
          %v8630 = vld [vmem:[%s298 + $0xec] sm:$0xf]
          %v8631 = vld [vmem:[%s298 + $0xf0] sm:$0xf]
          %v8632 = vld [vmem:[%s298 + $0xf4] sm:$0xf]
          %v8633 = vld [vmem:[%s298 + $0xf8] sm:$0xf]
          %v8634 = vld [vmem:[%s298 + $0xfc] sm:$0xf]
          %v8635 = vld [vmem:[%s298 + $0x100] sm:$0xf]
          %v8636 = vld [vmem:[%s298 + $0x104] sm:$0xf]
          %v8637 = vld [vmem:[%s298 + $0x108] sm:$0xf]
          %v8638 = vld [vmem:[%s298 + $0x10c] sm:$0xf]
          %v8639 = vld [vmem:[%s298 + $0x110] sm:$0xf]
          %v8640 = vld [vmem:[%s298 + $0x114] sm:$0xf]
          %v8641 = vld [vmem:[%s298 + $0x118] sm:$0xf]
          %v8642 = vld [vmem:[%s298 + $0x11c] sm:$0xf]
          %v8643 = vld [vmem:[%s298 + $0x120] sm:$0xf]
          %v8644 = vld [vmem:[%s298 + $0x124] sm:$0xf]
          %v8645 = vld [vmem:[%s298 + $0x128] sm:$0xf]
          %v8646 = vld [vmem:[%s298 + $0x12c] sm:$0xf]
          %v8647 = vld [vmem:[%s298 + $0x130] sm:$0xf]
          %v8648 = vld [vmem:[%s298 + $0x134] sm:$0xf]
          %v8649 = vld [vmem:[%s298 + $0x138] sm:$0xf]
          %v8650 = vld [vmem:[%s298 + $0x13c] sm:$0xf]
          %v8651 = vld [vmem:[%s298 + $0x140] sm:$0xf]
          %v8652 = vld [vmem:[%s298 + $0x144] sm:$0xf]
          %v8653 = vld [vmem:[%s298 + $0x148] sm:$0xf]
          %v8654 = vld [vmem:[%s298 + $0x14c] sm:$0xf]
          %v8655 = vld [vmem:[%s298 + $0x150] sm:$0xf]
          %v8656 = vld [vmem:[%s298 + $0x154] sm:$0xf]
          %v8657 = vld [vmem:[%s298 + $0x158] sm:$0xf]
          %v8658 = vld [vmem:[%s298 + $0x15c] sm:$0xf]
          %v8659 = vld [vmem:[%s298 + $0x160] sm:$0xf]
          %v8660 = vld [vmem:[%s298 + $0x164] sm:$0xf]
          %v8661 = vld [vmem:[%s298 + $0x168] sm:$0xf]
          %v8662 = vld [vmem:[%s298 + $0x16c] sm:$0xf]
          %v8663 = vld [vmem:[%s298 + $0x170] sm:$0xf]
          %v8664 = vld [vmem:[%s298 + $0x174] sm:$0xf]
          %v8665 = vld [vmem:[%s298 + $0x178] sm:$0xf]
          %v8666 = vld [vmem:[%s298 + $0x17c] sm:$0xf]
          %v8667 = vld [vmem:[%s298 + $0x180] sm:$0xf]
          %v8668 = vld [vmem:[%s298 + $0x184] sm:$0xf]
          %v8669 = vld [vmem:[%s298 + $0x188] sm:$0xf]
          %v8670 = vld [vmem:[%s298 + $0x18c] sm:$0xf]
          %v8671 = vld [vmem:[%s298 + $0x190] sm:$0xf]
          %v8672 = vld [vmem:[%s298 + $0x194] sm:$0xf]
          %v8673 = vld [vmem:[%s298 + $0x198] sm:$0xf]
          %v8674 = vld [vmem:[%s298 + $0x19c] sm:$0xf]
          %v8675 = vld [vmem:[%s298 + $0x1a0] sm:$0xf]
          %v8676 = vld [vmem:[%s298 + $0x1a4] sm:$0xf]
          %v8677 = vld [vmem:[%s298 + $0x1a8] sm:$0xf]
          %v8678 = vld [vmem:[%s298 + $0x1ac] sm:$0xf]
          %v8679 = vld [vmem:[%s298 + $0x1b0] sm:$0xf]
          %v8680 = vld [vmem:[%s298 + $0x1b4] sm:$0xf]
          %v8681 = vld [vmem:[%s298 + $0x1b8] sm:$0xf]
          %v8682 = vld [vmem:[%s298 + $0x1bc] sm:$0xf]
          %v8683 = vld [vmem:[%s298 + $0x1c0] sm:$0xf]
          %v8684 = vld [vmem:[%s298 + $0x1c4] sm:$0xf]
          %v8685 = vld [vmem:[%s298 + $0x1c8] sm:$0xf]
          %v8686 = vld [vmem:[%s298 + $0x1cc] sm:$0xf]
          %v8687 = vld [vmem:[%s298 + $0x1d0] sm:$0xf]
          %v8688 = vld [vmem:[%s298 + $0x1d4] sm:$0xf]
          %v8689 = vld [vmem:[%s298 + $0x1d8] sm:$0xf]
          %v8690 = vld [vmem:[%s298 + $0x1dc] sm:$0xf]
          %v8691 = vld [vmem:[%s298 + $0x1e0] sm:$0xf]
          %v8692 = vld [vmem:[%s298 + $0x1e4] sm:$0xf]
          %v8693 = vld [vmem:[%s298 + $0x1e8] sm:$0xf]
          %v8694 = vld [vmem:[%s298 + $0x1ec] sm:$0xf]
          %v8695 = vld [vmem:[%s298 + $0x1f0] sm:$0xf]
          %v8696 = vld [vmem:[%s298 + $0x1f4] sm:$0xf]
          %v8697 = vld [vmem:[%s298 + $0x1f8] sm:$0xf]
          %v8698 = vld [vmem:[%s298 + $0x1fc] sm:$0xf]
          %v8827 = vunpack.c.l.b16 %v8571
          %v8828 = vunpack.c.l.b16 %v8572
          %v8829 = vunpack.c.l.b16 %v8573
          %v8830 = vunpack.c.l.b16 %v8574
          %v8831 = vunpack.c.l.b16 %v8575
          %v8832 = vunpack.c.l.b16 %v8576
          %v8833 = vunpack.c.l.b16 %v8577
          %v8834 = vunpack.c.l.b16 %v8578
          %v8835 = vunpack.c.l.b16 %v8579
          %v8836 = vunpack.c.l.b16 %v8580
          %v8837 = vunpack.c.l.b16 %v8581
          %v8838 = vunpack.c.l.b16 %v8582
          %v8839 = vunpack.c.l.b16 %v8583
          %v8840 = vunpack.c.l.b16 %v8584
          %v8841 = vunpack.c.l.b16 %v8585
          %v8842 = vunpack.c.l.b16 %v8586
          %v8843 = vunpack.c.l.b16 %v8587
          %v8844 = vunpack.c.l.b16 %v8588
          %v8845 = vunpack.c.l.b16 %v8589
          %v8846 = vunpack.c.l.b16 %v8590
          %v8847 = vunpack.c.l.b16 %v8591
          %v8848 = vunpack.c.l.b16 %v8592
          %v8849 = vunpack.c.l.b16 %v8593
          %v8850 = vunpack.c.l.b16 %v8594
          %v8851 = vunpack.c.l.b16 %v8595
          %v8852 = vunpack.c.l.b16 %v8596
          %v8853 = vunpack.c.l.b16 %v8597
          %v8854 = vunpack.c.l.b16 %v8598
          %v8855 = vunpack.c.l.b16 %v8599
          %v8856 = vunpack.c.l.b16 %v8600
          %v8857 = vunpack.c.l.b16 %v8601
          %v8858 = vunpack.c.l.b16 %v8602
          %v8859 = vunpack.c.l.b16 %v8603
          %v8860 = vunpack.c.l.b16 %v8604
          %v8861 = vunpack.c.l.b16 %v8605
          %v8862 = vunpack.c.l.b16 %v8606
          %v8863 = vunpack.c.l.b16 %v8607
          %v8864 = vunpack.c.l.b16 %v8608
          %v8865 = vunpack.c.l.b16 %v8609
          %v8866 = vunpack.c.l.b16 %v8610
          %v8867 = vunpack.c.l.b16 %v8611
          %v8868 = vunpack.c.l.b16 %v8612
          %v8869 = vunpack.c.l.b16 %v8613
          %v8870 = vunpack.c.l.b16 %v8614
          %v8871 = vunpack.c.l.b16 %v8615
          %v8872 = vunpack.c.l.b16 %v8616
          %v8873 = vunpack.c.l.b16 %v8617
          %v8874 = vunpack.c.l.b16 %v8618
          %v8875 = vunpack.c.l.b16 %v8619
          %v8876 = vunpack.c.l.b16 %v8620
          %v8877 = vunpack.c.l.b16 %v8621
          %v8878 = vunpack.c.l.b16 %v8622
          %v8879 = vunpack.c.l.b16 %v8623
          %v8880 = vunpack.c.l.b16 %v8624
          %v8881 = vunpack.c.l.b16 %v8625
          %v8882 = vunpack.c.l.b16 %v8626
          %v8883 = vunpack.c.l.b16 %v8627
          %v8884 = vunpack.c.l.b16 %v8628
          %v8885 = vunpack.c.l.b16 %v8629
          %v8886 = vunpack.c.l.b16 %v8630
          %v8887 = vunpack.c.l.b16 %v8631
          %v8888 = vunpack.c.l.b16 %v8632
          %v8889 = vunpack.c.l.b16 %v8633
          %v8890 = vunpack.c.l.b16 %v8634
          %v8891 = vunpack.c.l.b16 %v8635
          %v8892 = vunpack.c.l.b16 %v8636
          %v8893 = vunpack.c.l.b16 %v8637
          %v8894 = vunpack.c.l.b16 %v8638
          %v8895 = vunpack.c.l.b16 %v8639
          %v8896 = vunpack.c.l.b16 %v8640
          %v8897 = vunpack.c.l.b16 %v8641
          %v8898 = vunpack.c.l.b16 %v8642
          %v8899 = vunpack.c.l.b16 %v8643
          %v8900 = vunpack.c.l.b16 %v8644
          %v8901 = vunpack.c.l.b16 %v8645
          %v8902 = vunpack.c.l.b16 %v8646
          %v8903 = vunpack.c.l.b16 %v8647
          %v8904 = vunpack.c.l.b16 %v8648
          %v8905 = vunpack.c.l.b16 %v8649
          %v8906 = vunpack.c.l.b16 %v8650
          %v8907 = vunpack.c.l.b16 %v8651
          %v8908 = vunpack.c.l.b16 %v8652
          %v8909 = vunpack.c.l.b16 %v8653
          %v8910 = vunpack.c.l.b16 %v8654
          %v8911 = vunpack.c.l.b16 %v8655
          %v8912 = vunpack.c.l.b16 %v8656
          %v8913 = vunpack.c.l.b16 %v8657
          %v8914 = vunpack.c.l.b16 %v8658
          %v8915 = vunpack.c.l.b16 %v8659
          %v8916 = vunpack.c.l.b16 %v8660
          %v8917 = vunpack.c.l.b16 %v8661
          %v8918 = vunpack.c.l.b16 %v8662
          %v8919 = vunpack.c.l.b16 %v8663
          %v8920 = vunpack.c.l.b16 %v8664
          %v8921 = vunpack.c.l.b16 %v8665
          %v8922 = vunpack.c.l.b16 %v8666
          %v8923 = vunpack.c.l.b16 %v8667
          %v8924 = vunpack.c.l.b16 %v8668
          %v8925 = vunpack.c.l.b16 %v8669
          %v8926 = vunpack.c.l.b16 %v8670
          %v8927 = vunpack.c.l.b16 %v8671
          %v8928 = vunpack.c.l.b16 %v8672
          %v8929 = vunpack.c.l.b16 %v8673
          %v8930 = vunpack.c.l.b16 %v8674
          %v8931 = vunpack.c.l.b16 %v8675
          %v8932 = vunpack.c.l.b16 %v8676
          %v8933 = vunpack.c.l.b16 %v8677
          %v8934 = vunpack.c.l.b16 %v8678
          %v8935 = vunpack.c.l.b16 %v8679
          %v8936 = vunpack.c.l.b16 %v8680
          %v8937 = vunpack.c.l.b16 %v8681
          %v8938 = vunpack.c.l.b16 %v8682
          %v8939 = vunpack.c.l.b16 %v8683
          %v8940 = vunpack.c.l.b16 %v8684
          %v8941 = vunpack.c.l.b16 %v8685
          %v8942 = vunpack.c.l.b16 %v8686
          %v8943 = vunpack.c.l.b16 %v8687
          %v8944 = vunpack.c.l.b16 %v8688
          %v8945 = vunpack.c.l.b16 %v8689
          %v8946 = vunpack.c.l.b16 %v8690
          %v8947 = vunpack.c.l.b16 %v8691
          %v8948 = vunpack.c.l.b16 %v8692
          %v8949 = vunpack.c.l.b16 %v8693
          %v8950 = vunpack.c.l.b16 %v8694
          %v8951 = vunpack.c.l.b16 %v8695
          %v8952 = vunpack.c.l.b16 %v8696
          %v8953 = vunpack.c.l.b16 %v8697
          %v8954 = vunpack.c.l.b16 %v8698
          %v8955 = vpack.c.b16 %v8828, %v8827
          %v8956 = vpack.c.b16 %v8830, %v8829
          %v8957 = vpack.c.b16 %v8832, %v8831
          %v8958 = vpack.c.b16 %v8834, %v8833
          %v8959 = vpack.c.b16 %v8836, %v8835
          %v8960 = vpack.c.b16 %v8838, %v8837
          %v8961 = vpack.c.b16 %v8840, %v8839
          %v8962 = vpack.c.b16 %v8842, %v8841
          %v8963 = vpack.c.b16 %v8844, %v8843
          %v8964 = vpack.c.b16 %v8846, %v8845
          %v8965 = vpack.c.b16 %v8848, %v8847
          %v8966 = vpack.c.b16 %v8850, %v8849
          %v8967 = vpack.c.b16 %v8852, %v8851
          %v8968 = vpack.c.b16 %v8854, %v8853
          %v8969 = vpack.c.b16 %v8856, %v8855
          %v8970 = vpack.c.b16 %v8858, %v8857
          %v8971 = vpack.c.b16 %v8860, %v8859
          %v8972 = vpack.c.b16 %v8862, %v8861
          %v8973 = vpack.c.b16 %v8864, %v8863
          %v8974 = vpack.c.b16 %v8866, %v8865
          %v8975 = vpack.c.b16 %v8868, %v8867
          %v8976 = vpack.c.b16 %v8870, %v8869
          %v8977 = vpack.c.b16 %v8872, %v8871
          %v8978 = vpack.c.b16 %v8874, %v8873
          %v8979 = vpack.c.b16 %v8876, %v8875
          %v8980 = vpack.c.b16 %v8878, %v8877
          %v8981 = vpack.c.b16 %v8880, %v8879
          %v8982 = vpack.c.b16 %v8882, %v8881
          %v8983 = vpack.c.b16 %v8884, %v8883
          %v8984 = vpack.c.b16 %v8886, %v8885
          %v8985 = vpack.c.b16 %v8888, %v8887
          %v8986 = vpack.c.b16 %v8890, %v8889
          %v8987 = vpack.c.b16 %v8892, %v8891
          %v8988 = vpack.c.b16 %v8894, %v8893
          %v8989 = vpack.c.b16 %v8896, %v8895
          %v8990 = vpack.c.b16 %v8898, %v8897
          %v8991 = vpack.c.b16 %v8900, %v8899
          %v8992 = vpack.c.b16 %v8902, %v8901
          %v8993 = vpack.c.b16 %v8904, %v8903
          %v8994 = vpack.c.b16 %v8906, %v8905
          %v8995 = vpack.c.b16 %v8908, %v8907
          %v8996 = vpack.c.b16 %v8910, %v8909
          %v8997 = vpack.c.b16 %v8912, %v8911
          %v8998 = vpack.c.b16 %v8914, %v8913
          %v8999 = vpack.c.b16 %v8916, %v8915
          %v9000 = vpack.c.b16 %v8918, %v8917
          %v9001 = vpack.c.b16 %v8920, %v8919
          %v9002 = vpack.c.b16 %v8922, %v8921
          %v9003 = vpack.c.b16 %v8924, %v8923
          %v9004 = vpack.c.b16 %v8926, %v8925
          %v9005 = vpack.c.b16 %v8928, %v8927
          %v9006 = vpack.c.b16 %v8930, %v8929
          %v9007 = vpack.c.b16 %v8932, %v8931
          %v9008 = vpack.c.b16 %v8934, %v8933
          %v9009 = vpack.c.b16 %v8936, %v8935
          %v9010 = vpack.c.b16 %v8938, %v8937
          %v9011 = vpack.c.b16 %v8940, %v8939
          %v9012 = vpack.c.b16 %v8942, %v8941
          %v9013 = vpack.c.b16 %v8944, %v8943
          %v9014 = vpack.c.b16 %v8946, %v8945
          %v9015 = vpack.c.b16 %v8948, %v8947
          %v9016 = vpack.c.b16 %v8950, %v8949
          %v9017 = vpack.c.b16 %v8952, %v8951
          %v9018 = vpack.c.b16 %v8954, %v8953
          %9083 = vmatpush.bf16.msra.mxu0 %v8962
          %9084 = vmatpush.bf16.msra.mxu0 %v8961
          %9085 = vmatpush.bf16.msra.mxu0 %v8960
          %9086 = vmatpush.bf16.msra.mxu0 %v8959
          %9087 = vmatpush.bf16.msra.mxu0 %v8958
          %9088 = vmatpush.bf16.msra.mxu0 %v8957
          %9089 = vmatpush.bf16.msra.mxu0 %v8956
          %9090 = vmatpush.bf16.msra.mxu0 %v8955
          %9091 = vmatmul.bf16.gmra.mxu0 %v8563
          %v9092 = vpop.f32.mrf.mxu0
          %v9093 = vadd.f32 0.0, %v9092
          %v9094 = vpop.f32.mrf.mxu0
          %v9095 = vadd.f32 0.0, %v9094
          %9096 = vdwg.mxu0
          %9097 = vmatpush.bf16.msra.mxu0 %v8970
          %9098 = vmatpush.bf16.msra.mxu0 %v8969
          %9099 = vmatpush.bf16.msra.mxu0 %v8968
          %9100 = vmatpush.bf16.msra.mxu0 %v8967
          %9101 = vmatpush.bf16.msra.mxu0 %v8966
          %9102 = vmatpush.bf16.msra.mxu0 %v8965
          %9103 = vmatpush.bf16.msra.mxu0 %v8964
          %9104 = vmatpush.bf16.msra.mxu0 %v8963
          %9105 = vmatmul.bf16.gmra.mxu0 %v8564
          %v9106 = vpop.f32.mrf.mxu0
          %v9107 = vadd.f32 %v9093, %v9106
          %v9108 = vpop.f32.mrf.mxu0
          %v9109 = vadd.f32 %v9095, %v9108
          %9110 = vdwg.mxu0
          %9111 = vmatpush.bf16.msra.mxu0 %v8978
          %9112 = vmatpush.bf16.msra.mxu0 %v8977
          %9113 = vmatpush.bf16.msra.mxu0 %v8976
          %9114 = vmatpush.bf16.msra.mxu0 %v8975
          %9115 = vmatpush.bf16.msra.mxu0 %v8974
          %9116 = vmatpush.bf16.msra.mxu0 %v8973
          %9117 = vmatpush.bf16.msra.mxu0 %v8972
          %9118 = vmatpush.bf16.msra.mxu0 %v8971
          %9119 = vmatmul.bf16.gmra.mxu0 %v8565
          %v9120 = vpop.f32.mrf.mxu0
          %v9121 = vadd.f32 %v9107, %v9120
          %v9122 = vpop.f32.mrf.mxu0
          %v9123 = vadd.f32 %v9109, %v9122
          %9124 = vdwg.mxu0
          %9125 = vmatpush.bf16.msra.mxu0 %v8986
          %9126 = vmatpush.bf16.msra.mxu0 %v8985
          %9127 = vmatpush.bf16.msra.mxu0 %v8984
          %9128 = vmatpush.bf16.msra.mxu0 %v8983
          %9129 = vmatpush.bf16.msra.mxu0 %v8982
          %9130 = vmatpush.bf16.msra.mxu0 %v8981
          %9131 = vmatpush.bf16.msra.mxu0 %v8980
          %9132 = vmatpush.bf16.msra.mxu0 %v8979
          %9133 = vmatmul.bf16.gmra.mxu0 %v8566
          %v9134 = vpop.f32.mrf.mxu0
          %v9135 = vadd.f32 %v9121, %v9134
          %v9136 = vpop.f32.mrf.mxu0
          %v9137 = vadd.f32 %v9123, %v9136
          %9138 = vdwg.mxu0
          %9139 = vmatpush.bf16.msra.mxu0 %v8994
          %9140 = vmatpush.bf16.msra.mxu0 %v8993
          %9141 = vmatpush.bf16.msra.mxu0 %v8992
          %9142 = vmatpush.bf16.msra.mxu0 %v8991
          %9143 = vmatpush.bf16.msra.mxu0 %v8990
          %9144 = vmatpush.bf16.msra.mxu0 %v8989
          %9145 = vmatpush.bf16.msra.mxu0 %v8988
          %9146 = vmatpush.bf16.msra.mxu0 %v8987
          %9147 = vmatmul.bf16.gmra.mxu0 %v8567
          %v9148 = vpop.f32.mrf.mxu0
          %v9149 = vadd.f32 %v9135, %v9148
          %v9150 = vpop.f32.mrf.mxu0
          %v9151 = vadd.f32 %v9137, %v9150
          %9152 = vdwg.mxu0
          %9153 = vmatpush.bf16.msra.mxu0 %v9002
          %9154 = vmatpush.bf16.msra.mxu0 %v9001
          %9155 = vmatpush.bf16.msra.mxu0 %v9000
          %9156 = vmatpush.bf16.msra.mxu0 %v8999
          %9157 = vmatpush.bf16.msra.mxu0 %v8998
          %9158 = vmatpush.bf16.msra.mxu0 %v8997
          %9159 = vmatpush.bf16.msra.mxu0 %v8996
          %9160 = vmatpush.bf16.msra.mxu0 %v8995
          %9161 = vmatmul.bf16.gmra.mxu0 %v8568
          %v9162 = vpop.f32.mrf.mxu0
          %v9163 = vadd.f32 %v9149, %v9162
          %v9164 = vpop.f32.mrf.mxu0
          %v9165 = vadd.f32 %v9151, %v9164
          %9166 = vdwg.mxu0
          %9167 = vmatpush.bf16.msra.mxu0 %v9010
          %9168 = vmatpush.bf16.msra.mxu0 %v9009
          %9169 = vmatpush.bf16.msra.mxu0 %v9008
          %9170 = vmatpush.bf16.msra.mxu0 %v9007
          %9171 = vmatpush.bf16.msra.mxu0 %v9006
          %9172 = vmatpush.bf16.msra.mxu0 %v9005
          %9173 = vmatpush.bf16.msra.mxu0 %v9004
          %9174 = vmatpush.bf16.msra.mxu0 %v9003
          %9175 = vmatmul.bf16.gmra.mxu0 %v8569
          %v9176 = vpop.f32.mrf.mxu0
          %v9177 = vadd.f32 %v9163, %v9176
          %v9178 = vpop.f32.mrf.mxu0
          %v9179 = vadd.f32 %v9165, %v9178
          %9180 = vdwg.mxu0
          %9181 = vmatpush.bf16.msra.mxu0 %v9018
          %9182 = vmatpush.bf16.msra.mxu0 %v9017
          %9183 = vmatpush.bf16.msra.mxu0 %v9016
          %9184 = vmatpush.bf16.msra.mxu0 %v9015
          %9185 = vmatpush.bf16.msra.mxu0 %v9014
          %9186 = vmatpush.bf16.msra.mxu0 %v9013
          %9187 = vmatpush.bf16.msra.mxu0 %v9012
          %9188 = vmatpush.bf16.msra.mxu0 %v9011
          %9189 = vmatmul.bf16.gmra.mxu0 %v8570
          %v9190 = vpop.f32.mrf.mxu0
          %v9191 = vadd.f32 %v9177, %v9190
          %v9192 = vpop.f32.mrf.mxu0
          %v9193 = vadd.f32 %v9179, %v9192
          %9194 = vdwg.mxu0
          %v9195 = vadd.f32 %v8561, %v9191
          %v9196 = vadd.f32 %v8562, %v9193
          %9197 = vst [vmem:[%s346] sm:$0xff] %v9195
          %9198 = vst [vmem:[%s346 + $0x8] sm:$0xff] %v9196
        $region60: #{yolo_forward.1} parent=35 // pred_fallthru
          _
        %p9199 = scmp.lt.s32.totalorder %s26, 1
        %s9200 = scalar_select %p9199, %s26, 1
        %s9201 = smul.addr %s9200, 2
        %s9202 = smul.addr %s9201, 8
        %s9203 = scalar_lea.vmem %s4, %s9202
        // Predicated region
        $region61: #{yolo_forward.1} parent=35 // pred_check
          %p9204 = pneg %p171
        $region62: #{yolo_forward.1} parent=35 // pred_check_branch
          %9206 = sbr.rel (%p9204) target = $region64
        $region63: #{yolo_forward.1} parent=35 // pred_region
          _
        $region64: #{yolo_forward.1} parent=35 // pred_fallthru
          _
      $region36: #{yolo_forward.1} parent=5 // pred_fallthru
        _
      %p9207 = scmp.le.s32.totalorder 2, %s16
      // Predicated region
      $region65: #{yolo_forward.1} parent=5 // pred_check
        %p9208 = pneg %p9207
      $region66: #{yolo_forward.1} parent=5 // pred_check_branch
        %9210 = sbr.rel (%p9208) target = $region68
      $region67: #{yolo_forward.1} parent=5 // pred_region
        %s9211 = ssub.s32 %s16, 2
        // Predicated region
        $region69: #{yolo_forward.1} parent=67 // pred_check
          %p9212 = pneg %p177
        $region70: #{yolo_forward.1} parent=67 // pred_check_branch
          %9214 = sbr.rel (%p9212) target = $region72
        $region71: #{yolo_forward.1} parent=67 // pred_region
          %p9215 = scmp.lt.s32.totalorder %s29, 1
          %s9216 = scalar_select %p9215, %s29, 1
          %s9217 = smul.addr %s9216, 2
          %s9218 = smul.addr %s9217, 8
          %s9219 = scalar_lea.vmem %s4, %s9218
        $region72: #{yolo_forward.1} parent=67 // pred_fallthru
          _
      $region68: #{yolo_forward.1} parent=5 // pred_fallthru
        _
    $region6: #{yolo_forward.1} parent=1 // loop_footer
      %s20 = sadd.s32 1, %s16
    $region7: #{yolo_forward.1} parent=1 // loop_footer_branch
      %15 = sbr.rel target = $region3
    $region8: #{yolo_forward.1} parent=1 // loop_exit
      _
    %9220 = vsyncpa [#allocation4], 1
    %s9221 = scalar_lea.sflag [#allocation4], 1
    %9222 = vsyncpa %s9221, 1
    %9223 = vsyncpa [#allocation6], 1
    %s9224 = scalar_lea.sflag [#allocation6], 1
    %9225 = vsyncpa %s9224, 1

</llo_original>
